<compile_context>
chip_gen: v7x
topology: tpu7x:2x2x1
jax: 0.10.0
libtpu: 0.0.40
codegen_flags: <defaults>
</compile_context>

<pallas_src>
import functools

import jax
import jax.numpy as jnp
from jax.experimental import pallas as pl
from jax.experimental.pallas import tpu as pltpu


def _attn_kernel(q_ref, k_ref, v_ref, bits_ref, o_ref, *, scale, dropout_p):
    # q_ref: (S, D); k_ref: (H, Dk, D); v_ref: (H, Dk, Dv)
    # bits_ref: (S, H*Dk) uint32; o_ref: (S, H*Dv) lane-dense output slab.
    q = q_ref[...]
    k = k_ref[...]
    v = v_ref[...]

    S, D = q.shape
    H, Dk, Dv = v.shape

    # Fold scale into the tiny query: (scale*q) @ K^T == scale * (q @ K^T).
    q_s = q * jnp.float32(scale)

    # One wide, lane-dense MXU matmul: (S, D) x (H*Dk, D)^T -> (S, H*Dk).
    k2 = k.reshape(H * Dk, D)
    s = jax.lax.dot_general(
        q_s, k2, (((1,), (1,)), ((), ())), preferred_element_type=jnp.float32
    )

    # Per-head softmax over Dk (== softmax(dim=-1) of the (G, H, S, Dk) logits).
    s3 = s.reshape(S, H, Dk)
    s3 = s3 - jnp.max(s3, axis=-1, keepdims=True)
    e = jnp.exp(s3)
    p = e / jnp.sum(e, axis=-1, keepdims=True)

    # Dropout (training mode): drop w.p. dropout_p via an integer threshold
    # compare on precomputed uniform uint32 bits; scale survivors by 1/(1-p).
    thresh = jnp.uint32(int(dropout_p * 4294967296.0))
    keep = bits_ref[...].reshape(S, H, Dk) >= thresh
    p = jnp.where(keep, p * jnp.float32(1.0 / (1.0 - dropout_p)), jnp.float32(0.0))

    # Batched PV matmul over heads: (S, H, Dk) x (H, Dk, Dv) -> (H, S, Dv).
    o = jax.lax.dot_general(
        p, v, (((2,), (1,)), ((1,), (0,))), preferred_element_type=jnp.float32
    )
    # Lane-dense store: last dim H*Dv = 1024 (multiple of 128, no masked vst).
    o_ref[...] = jnp.transpose(o, (1, 0, 2)).reshape(S, H * Dv)


def model_forward(x1, key_p, value_p, dropout_bits, *, scale=10000.0, dropout_p=0.1):
    B, S, D = x1.shape
    G, H, Dk, D2 = key_p.shape
    assert B == 1 and D == D2, "query must broadcast over key's batch dims"
    Dv = value_p.shape[-1]
    assert dropout_bits.shape == (G, S, H * Dk)

    kernel = functools.partial(_attn_kernel, scale=scale, dropout_p=dropout_p)

    out_slab = pl.pallas_call(
        kernel,
        out_shape=jax.ShapeDtypeStruct((G, S, H * Dv), jnp.float32),
        grid=(G,),
        in_specs=[
            # query: same (S, D) tile every step (broadcast batch)
            pl.BlockSpec((None, S, D), lambda g: (0, 0, 0)),
            # all H heads of group g
            pl.BlockSpec((None, H, Dk, D), lambda g: (g, 0, 0, 0)),
            pl.BlockSpec((None, H, Dk, Dv), lambda g: (g, 0, 0, 0)),
            # dropout bits for group g (lane-dense)
            pl.BlockSpec((None, S, H * Dk), lambda g: (g, 0, 0)),
        ],
        out_specs=pl.BlockSpec((None, S, H * Dv), lambda g: (g, 0, 0)),
        compiler_params=pltpu.CompilerParams(dimension_semantics=("parallel",)),
    )(x1, key_p, value_p, dropout_bits)

    # Layout plumbing back to the PyTorch output shape (G, H, S, Dv).
    return out_slab.reshape(G, S, H, Dv).transpose(0, 2, 1, 3)


if __name__ == "__main__":
    rng = jax.random.PRNGKey(0)
    k1, k2, k3, k4 = jax.random.split(rng, 4)

    B, S, D = 1, 10, 32      # batch_size, seq_len, feature (feature -> 32, see TODO)
    G, H, Dk = 8, 32, 32     # key / value parameter shape (8, 32, 32, 32)
    Dv = 32

    x1 = jax.random.normal(k1, (B, S, D), dtype=jnp.float32)
    key_param = jax.random.normal(k2, (G, H, Dk, D), dtype=jnp.float32)
    value_param = jax.random.normal(k3, (G, H, Dk, Dv), dtype=jnp.float32)
    # Uniform uint32 bits for dropout, generated host-side (portable across
    # compiled TPU and interpret mode).
    dropout_bits = jax.random.bits(k4, (G, S, H * Dk), dtype=jnp.uint32)

    out = model_forward(x1, key_param, value_param, dropout_bits)
    out = jax.block_until_ready(out)
    assert out.shape == (G, H, S, Dv)
    assert bool(jnp.isfinite(out).all())
    print("KERNEL_OK")
</pallas_src>

<mosaic_0001>
module attributes {stable_mosaic.version = 11 : i64} {
  func.func @_attn_kernel(%arg0: i32, %arg1: memref<1x10x32xf32, #tpu.memory_space<vmem>>, %arg2: memref<1x32x32x32xf32, #tpu.memory_space<vmem>>, %arg3: memref<1x32x32x32xf32, #tpu.memory_space<vmem>>, %arg4: memref<1x10x1024xi32, #tpu.memory_space<vmem>>, %arg5: memref<1x10x1024xf32, #tpu.memory_space<vmem>>) attributes {dimension_semantics = [#tpu.dimension_semantics<parallel>], iteration_bounds = array<i64: 8>, scalar_prefetch = 0 : i64, scratch_operands = 0 : i64, tpu.core_type = #tpu.core_type<tc>, window_params = [{pipeline_mode = #tpu.pipeline_mode<synchronous>, transform_indices = @transform_0, window_bounds = array<i64: 1, 10, 32>}, {transform_indices = @transform_1, window_bounds = array<i64: 1, 32, 32, 32>}, {transform_indices = @transform_2, window_bounds = array<i64: 1, 32, 32, 32>}, {transform_indices = @transform_3, window_bounds = array<i64: 1, 10, 1024>}, {transform_indices = @transform_4, window_bounds = array<i64: 1, 10, 1024>}]} {
    %c0 = arith.constant 0 : index
    %c0_0 = arith.constant 0 : index
    %c0_1 = arith.constant 0 : index
    %0 = vector.load %arg1[%c0, %c0_0, %c0_1] : memref<1x10x32xf32, #tpu.memory_space<vmem>>, vector<1x10x32xf32>
    %1 = vector.shape_cast %0 : vector<1x10x32xf32> to vector<10x32xf32>
    %c0_2 = arith.constant 0 : index
    %c0_3 = arith.constant 0 : index
    %c0_4 = arith.constant 0 : index
    %c0_5 = arith.constant 0 : index
    %2 = vector.load %arg2[%c0_2, %c0_3, %c0_4, %c0_5] : memref<1x32x32x32xf32, #tpu.memory_space<vmem>>, vector<1x32x32x32xf32>
    %3 = vector.shape_cast %2 : vector<1x32x32x32xf32> to vector<32x32x32xf32>
    %c0_6 = arith.constant 0 : index
    %c0_7 = arith.constant 0 : index
    %c0_8 = arith.constant 0 : index
    %c0_9 = arith.constant 0 : index
    %4 = vector.load %arg3[%c0_6, %c0_7, %c0_8, %c0_9] : memref<1x32x32x32xf32, #tpu.memory_space<vmem>>, vector<1x32x32x32xf32>
    %5 = vector.shape_cast %4 : vector<1x32x32x32xf32> to vector<32x32x32xf32>
    %cst = arith.constant 1.000000e+04 : f32
    %6 = vector.broadcast %cst : f32 to vector<10x32xf32>
    %7 = arith.mulf %1, %6 : vector<10x32xf32>
    %8 = vector.shape_cast %3 : vector<32x32x32xf32> to vector<1024x32xf32>
    %cst_10 = arith.constant dense<0.000000e+00> : vector<10x1024xf32>
    %9 = tpu.matmul %7, %8, %cst_10 {dimension_numbers = #tpu.dot_dimension_numbers<[1], [1], [0], [0], [0, 0, 1, 0], [], []>} : vector<10x32xf32>, vector<1024x32xf32>, vector<10x1024xf32> -> vector<10x1024xf32>
    %10 = vector.shape_cast %9 : vector<10x1024xf32> to vector<10x32x32xf32>
    %cst_11 = arith.constant dense<0xFF800000> : vector<10x32xf32>
    %11 = vector.multi_reduction <maximumf>, %10, %cst_11 [2] : vector<10x32x32xf32> to vector<10x32xf32>
    %12 = vector.shape_cast %11 : vector<10x32xf32> to vector<10x32x1xf32>
    %13 = vector.broadcast %12 : vector<10x32x1xf32> to vector<10x32x32xf32>
    %14 = arith.subf %10, %13 : vector<10x32x32xf32>
    %15 = math.exp %14 : vector<10x32x32xf32>
    %cst_12 = arith.constant dense<0.000000e+00> : vector<10x32xf32>
    %16 = vector.multi_reduction <add>, %15, %cst_12 [2] : vector<10x32x32xf32> to vector<10x32xf32>
    %17 = vector.shape_cast %16 : vector<10x32xf32> to vector<10x32x1xf32>
    %18 = vector.broadcast %17 : vector<10x32x1xf32> to vector<10x32x32xf32>
    %19 = arith.divf %15, %18 : vector<10x32x32xf32>
    %c0_13 = arith.constant 0 : index
    %c0_14 = arith.constant 0 : index
    %c0_15 = arith.constant 0 : index
    %20 = vector.load %arg4[%c0_13, %c0_14, %c0_15] : memref<1x10x1024xi32, #tpu.memory_space<vmem>>, vector<1x10x1024xi32>
    %21 = vector.shape_cast %20 : vector<1x10x1024xi32> to vector<10x1024xi32>
    %22 = vector.shape_cast %21 : vector<10x1024xi32> to vector<10x32x32xi32>
    %c429496729_i32 = arith.constant 429496729 : i32
    %23 = vector.broadcast %c429496729_i32 : i32 to vector<10x32x32xi32>
    %24 = arith.cmpi uge, %22, %23 : vector<10x32x32xi32>
    %cst_16 = arith.constant 1.11111116 : f32
    %25 = vector.broadcast %cst_16 : f32 to vector<10x32x32xf32>
    %26 = arith.mulf %19, %25 : vector<10x32x32xf32>
    %cst_17 = arith.constant 0.000000e+00 : f32
    %27 = vector.broadcast %cst_17 : f32 to vector<10x32x32xf32>
    %28 = arith.select %24, %26, %27 : vector<10x32x32xi1>, vector<10x32x32xf32>
    %cst_18 = arith.constant dense<0.000000e+00> : vector<32x10x32xf32>
    %29 = tpu.matmul %28, %5, %cst_18 {dimension_numbers = #tpu.dot_dimension_numbers<[2], [1], [0], [2], [0, 1, 0, 0, 1, 2], [1], [0]>} : vector<10x32x32xf32>, vector<32x32x32xf32>, vector<32x10x32xf32> -> vector<32x10x32xf32>
    %30 = tpu.transpose %29, [1, 0, 2] : vector<32x10x32xf32> -> vector<10x32x32xf32>
    %31 = vector.shape_cast %30 : vector<10x32x32xf32> to vector<10x1024xf32>
    %c0_19 = arith.constant 0 : index
    %c0_20 = arith.constant 0 : index
    %c0_21 = arith.constant 0 : index
    %32 = vector.load %arg5[%c0_19, %c0_20, %c0_21] : memref<1x10x1024xf32, #tpu.memory_space<vmem>>, vector<1x10x1024xf32>
    %33 = vector.shape_cast %32 : vector<1x10x1024xf32> to vector<10x1024xf32>
    %34 = vector.shape_cast %31 : vector<10x1024xf32> to vector<1x10x1024xf32>
    tpu.vector_store %arg5[%c0_19, %c0_20, %c0_21], %34 {strides = array<i32>} : memref<1x10x1024xf32, #tpu.memory_space<vmem>>, vector<1x10x1024xf32>,
    return
  }
  func.func @transform_0(%arg0: i32) -> (i32, i32, i32) {
    %c0_i32 = arith.constant 0 : i32
    %c0_i32_0 = arith.constant 0 : i32
    %c0_i32_1 = arith.constant 0 : i32
    %c0_i32_2 = arith.constant 0 : i32
    return %c0_i32, %c0_i32_0, %c0_i32_1 : i32, i32, i32
  }
  func.func @transform_1(%arg0: i32) -> (i32, i32, i32, i32) {
    %c0_i32 = arith.constant 0 : i32
    %c0_i32_0 = arith.constant 0 : i32
    %c0_i32_1 = arith.constant 0 : i32
    %c0_i32_2 = arith.constant 0 : i32
    return %arg0, %c0_i32, %c0_i32_0, %c0_i32_1 : i32, i32, i32, i32
  }
  func.func @transform_2(%arg0: i32) -> (i32, i32, i32, i32) {
    %c0_i32 = arith.constant 0 : i32
    %c0_i32_0 = arith.constant 0 : i32
    %c0_i32_1 = arith.constant 0 : i32
    %c0_i32_2 = arith.constant 0 : i32
    return %arg0, %c0_i32, %c0_i32_0, %c0_i32_1 : i32, i32, i32, i32
  }
  func.func @transform_3(%arg0: i32) -> (i32, i32, i32) {
    %c0_i32 = arith.constant 0 : i32
    %c0_i32_0 = arith.constant 0 : i32
    %c0_i32_1 = arith.constant 0 : i32
    return %arg0, %c0_i32, %c0_i32_0 : i32, i32, i32
  }
  func.func @transform_4(%arg0: i32) -> (i32, i32, i32) {
    %c0_i32 = arith.constant 0 : i32
    %c0_i32_0 = arith.constant 0 : i32
    %c0_i32_1 = arith.constant 0 : i32
    return %arg0, %c0_i32, %c0_i32_0 : i32, i32, i32
  }
}

</mosaic_0001>

<llo_original>
// kernel: tpu_custom_call.1
$region0: #{tpu_custom_call.1}
  #allocation0 [shape = 'u32[]', space=smem, size = 0x4, offset = 0x4, fixed_abs, tag = 'smem constant byte address 0x4 - core index']
  #allocation1 [shape = 'u32[144,128]{1,0:T(1,128)}', space=vmem, size = 0x12000, scoped, tag = 'internal scratch']
  %s0 = inlined_call_operand.vmem [shape: f32[1,10,32], index: 0, kind: input, shape index: {}]
  %s1 = inlined_call_operand.hbm [shape: f32[8,32,32,32], index: 1, kind: input, shape index: {}]
  %s2 = inlined_call_operand.hbm [shape: f32[8,32,32,32], index: 2, kind: input, shape index: {}]
  %s3 = inlined_call_operand.vmem [shape: u32[8,10,1024], index: 3, kind: input, shape index: {}]
  %s4 = inlined_call_operand.vmem [shape: f32[8,10,1024], index: 4, kind: output, shape index: {}]
  %s5 = sld [smem:[#allocation0]]
  $region57: #{tpu_custom_call.1} parent=0
    _
  %s7 = ssub.s32 1, %s5
  %s8 = scalar_select 0, %s7, %s5
  $region1: #{tpu_custom_call.1} parent=0
    #allocation2 [shape = 'u8[1048576]{0}', space=vmem, size = 0x100000, scoped, tag = 'input window, operand 1']
    #allocation3 [shape = 's32[2]{0}', space=sflag, size = 0x8, scoped, tag = 'scoped memory for tpu_custom_call.1']
    #allocation4 [shape = 'u8[1048576]{0}', space=vmem, size = 0x100000, scoped, tag = 'input window, operand 2']
    #allocation5 [shape = 's32[2]{0}', space=sflag, size = 0x8, scoped, tag = 'scoped memory for tpu_custom_call.1']
    %9 = vsyncpa [#allocation3], 0
    %s10 = scalar_lea.sflag [#allocation3], 1
    %11 = vsyncpa %s10, 0
    %12 = vsyncpa [#allocation5], 0
    %s13 = scalar_lea.sflag [#allocation5], 1
    %14 = vsyncpa %s13, 0
    loop: start=0, step=1, limit=10
    $region2: #{tpu_custom_call.1} parent=1 // loop_pre_header
      _
    $region3: #{tpu_custom_call.1} parent=1 // loop_header
      %s16 = sphi 0, %s20
      %p17 = scmp.ge.s32.totalorder %s16, 10
      %s24 = sphi 0, %s24
      %s26 = sphi 0, %s24
      %s27 = sphi 0, %s26
      %s41 = sphi 0, %s27
      %s47 = sphi 0, %s49
      %s50 = sphi 0, %s47
      %s51 = sphi 0, %s50
      %s67 = sphi 0, %s51
      %s73 = sphi 0, %s75
      %s76 = sphi 0, %s73
      %s77 = sphi 0, %s76
      %s93 = sphi 0, %s77
      %s99 = sphi 0, %s101
      %s102 = sphi 0, %s99
      %s103 = sphi 0, %s102
      %s119 = sphi 0, %s103
      %s125 = sphi 0, %s127
      %s128 = sphi 0, %s125
      %s129 = sphi 0, %s128
      %s145 = sphi 0, %s129
    $region4: #{tpu_custom_call.1} parent=1 // loop_header_branch
      %19 = sbr.rel (%p17) target = $region8
    $region5: #{tpu_custom_call.1} parent=1 // loop_body
      %s21 = ssub.s32 %s16, 1
      %s22 = ssub.s32 %s16, 2
      %s23 = sadd.s32 %s16, 1
      %s25 = sadd.s32 %s24, 1
      %p28 = scmp.eq.s32.totalorder %s16, 7
      %p29 = scmp.ne.s32.totalorder %s24, %s26
      %p30 = scmp.eq.s32.totalorder %s16, 0
      %p31 = por %p29, %p30
      %p32 = scmp.ne.s32.totalorder %s24, %s26
      %p33 = scmp.eq.s32.totalorder %s21, 7
      %p34 = por %p32, %p33
      %p35 = scmp.ne.s32.totalorder %s26, %s27
      %p36 = scmp.eq.s32.totalorder %s21, 0
      %p37 = por %p35, %p36
      %p38 = scmp.ne.s32.totalorder %s26, %s27
      %p39 = scmp.eq.s32.totalorder %s22, 7
      %p40 = por %p38, %p39
      %p42 = scmp.ne.s32.totalorder %s27, %s41
      %p43 = scmp.eq.s32.totalorder %s22, 0
      %p44 = por %p42, %p43
      %s45 = ssub.s32 %s16, %s23
      %p46 = scmp.eq.s32.totalorder %s45, 0
      %s48 = sadd.s32 %s47, 1
      %s49 = scalar_select %p46, %s47, %s48
      %p52 = pneg %p46
      %p53 = scmp.eq.s32.totalorder %s16, 7
      %p54 = por %p52, %p53
      %p55 = scmp.ne.s32.totalorder %s47, %s50
      %p56 = scmp.eq.s32.totalorder %s16, 0
      %p57 = por %p55, %p56
      %p58 = scmp.ne.s32.totalorder %s47, %s50
      %p59 = scmp.eq.s32.totalorder %s21, 7
      %p60 = por %p58, %p59
      %p61 = scmp.ne.s32.totalorder %s50, %s51
      %p62 = scmp.eq.s32.totalorder %s21, 0
      %p63 = por %p61, %p62
      %p64 = scmp.ne.s32.totalorder %s50, %s51
      %p65 = scmp.eq.s32.totalorder %s22, 7
      %p66 = por %p64, %p65
      %p68 = scmp.ne.s32.totalorder %s51, %s67
      %p69 = scmp.eq.s32.totalorder %s22, 0
      %p70 = por %p68, %p69
      %s71 = ssub.s32 %s16, %s23
      %p72 = scmp.eq.s32.totalorder %s71, 0
      %s74 = sadd.s32 %s73, 1
      %s75 = scalar_select %p72, %s73, %s74
      %p78 = pneg %p72
      %p79 = scmp.eq.s32.totalorder %s16, 7
      %p80 = por %p78, %p79
      %p81 = scmp.ne.s32.totalorder %s73, %s76
      %p82 = scmp.eq.s32.totalorder %s16, 0
      %p83 = por %p81, %p82
      %p84 = scmp.ne.s32.totalorder %s73, %s76
      %p85 = scmp.eq.s32.totalorder %s21, 7
      %p86 = por %p84, %p85
      %p87 = scmp.ne.s32.totalorder %s76, %s77
      %p88 = scmp.eq.s32.totalorder %s21, 0
      %p89 = por %p87, %p88
      %p90 = scmp.ne.s32.totalorder %s76, %s77
      %p91 = scmp.eq.s32.totalorder %s22, 7
      %p92 = por %p90, %p91
      %p94 = scmp.ne.s32.totalorder %s77, %s93
      %p95 = scmp.eq.s32.totalorder %s22, 0
      %p96 = por %p94, %p95
      %s97 = ssub.s32 %s16, %s23
      %p98 = scmp.eq.s32.totalorder %s97, 0
      %s100 = sadd.s32 %s99, 1
      %s101 = scalar_select %p98, %s99, %s100
      %p104 = pneg %p98
      %p105 = scmp.eq.s32.totalorder %s16, 7
      %p106 = por %p104, %p105
      %p107 = scmp.ne.s32.totalorder %s99, %s102
      %p108 = scmp.eq.s32.totalorder %s16, 0
      %p109 = por %p107, %p108
      %p110 = scmp.ne.s32.totalorder %s99, %s102
      %p111 = scmp.eq.s32.totalorder %s21, 7
      %p112 = por %p110, %p111
      %p113 = scmp.ne.s32.totalorder %s102, %s103
      %p114 = scmp.eq.s32.totalorder %s21, 0
      %p115 = por %p113, %p114
      %p116 = scmp.ne.s32.totalorder %s102, %s103
      %p117 = scmp.eq.s32.totalorder %s22, 7
      %p118 = por %p116, %p117
      %p120 = scmp.ne.s32.totalorder %s103, %s119
      %p121 = scmp.eq.s32.totalorder %s22, 0
      %p122 = por %p120, %p121
      %s123 = ssub.s32 %s16, %s23
      %p124 = scmp.eq.s32.totalorder %s123, 0
      %s126 = sadd.s32 %s125, 1
      %s127 = scalar_select %p124, %s125, %s126
      %p130 = pneg %p124
      %p131 = scmp.eq.s32.totalorder %s16, 7
      %p132 = por %p130, %p131
      %p133 = scmp.ne.s32.totalorder %s125, %s128
      %p134 = scmp.eq.s32.totalorder %s16, 0
      %p135 = por %p133, %p134
      %p136 = scmp.ne.s32.totalorder %s125, %s128
      %p137 = scmp.eq.s32.totalorder %s21, 7
      %p138 = por %p136, %p137
      %p139 = scmp.ne.s32.totalorder %s128, %s129
      %p140 = scmp.eq.s32.totalorder %s21, 0
      %p141 = por %p139, %p140
      %p142 = scmp.ne.s32.totalorder %s128, %s129
      %p143 = scmp.eq.s32.totalorder %s22, 7
      %p144 = por %p142, %p143
      %p146 = scmp.ne.s32.totalorder %s129, %s145
      %p147 = scmp.eq.s32.totalorder %s22, 0
      %p148 = por %p146, %p147
      %p149 = scmp.le.s32.totalorder 1, %s16
      %p150 = scmp.lt.s32.totalorder %s16, 9
      %p151 = pnand %p149, %p150
      %p152 = pneg %p151
      // Predicated region
      $region9: #{tpu_custom_call.1} parent=5 // pred_check
        _
      $region10: #{tpu_custom_call.1} parent=5 // pred_check_branch
        %154 = sbr.rel (%p151) target = $region12
      $region11: #{tpu_custom_call.1} parent=5 // pred_region
        %s155 = ssub.s32 %s16, 1
        // Predicated region
        $region13: #{tpu_custom_call.1} parent=11 // pred_check
          %p156 = pneg %p37
        $region14: #{tpu_custom_call.1} parent=11 // pred_check_branch
          %158 = sbr.rel (%p156) target = $region16
        $region15: #{tpu_custom_call.1} parent=11 // pred_region
          _
        $region16: #{tpu_custom_call.1} parent=11 // pred_fallthru
          _
      $region12: #{tpu_custom_call.1} parent=5 // pred_fallthru
        _
      %p159 = scmp.lt.s32.totalorder %s16, 8
      // Predicated region
      $region17: #{tpu_custom_call.1} parent=5 // pred_check
        %p160 = pneg %p159
      $region18: #{tpu_custom_call.1} parent=5 // pred_check_branch
        %162 = sbr.rel (%p160) target = $region20
      $region19: #{tpu_custom_call.1} parent=5 // pred_region
        // Predicated region
        $region21: #{tpu_custom_call.1} parent=19 // pred_check
          %p163 = pneg %p57
        $region22: #{tpu_custom_call.1} parent=19 // pred_check_branch
          %165 = sbr.rel (%p163) target = $region24
        $region23: #{tpu_custom_call.1} parent=19 // pred_region
          %s166 = sand.u32 %s47, 1
          %s167 = scalar_lea.sflag [#allocation3], %s166
          %s168 = sand.u32 %s47, 1
          %s169 = smul.addr %s168, 1024
          %s170 = scalar_lea.vmem [#allocation2], %s169
          %s172 = ssub.s32 16384, 16384
          %173 = vsyncadd %s167, %s172
          %s174 = smul.addr %s16, 128
          %s175 = smul.addr %s174, 128
          %s176 = scalar_lea.hbm %s1, %s175
          %s177 = sshll.u32 %s170, 4
          %s178 = int_to_ptr.vmem [resolvable:$true] %s177
          %183 = dma.hbm_to_vmem [thread:$0]  %s176, 16384, %s178, %s167, 128, 128, 8
        $region24: #{tpu_custom_call.1} parent=19 // pred_fallthru
          _
        // Predicated region
        $region25: #{tpu_custom_call.1} parent=19 // pred_check
          %p184 = pneg %p83
        $region26: #{tpu_custom_call.1} parent=19 // pred_check_branch
          %186 = sbr.rel (%p184) target = $region28
        $region27: #{tpu_custom_call.1} parent=19 // pred_region
          %s187 = sand.u32 %s73, 1
          %s188 = scalar_lea.sflag [#allocation5], %s187
          %s189 = sand.u32 %s73, 1
          %s190 = smul.addr %s189, 1024
          %s191 = scalar_lea.vmem [#allocation4], %s190
          %s193 = ssub.s32 16384, 16384
          %194 = vsyncadd %s188, %s193
          %s195 = smul.addr %s16, 128
          %s196 = smul.addr %s195, 128
          %s197 = scalar_lea.hbm %s2, %s196
          %s198 = sshll.u32 %s191, 4
          %s199 = int_to_ptr.vmem [resolvable:$true] %s198
          %204 = dma.hbm_to_vmem [thread:$0]  %s197, 16384, %s199, %s188, 128, 128, 8
        $region28: #{tpu_custom_call.1} parent=19 // pred_fallthru
          _
        // Predicated region
        $region29: #{tpu_custom_call.1} parent=19 // pred_check
          %p205 = pneg %p109
        $region30: #{tpu_custom_call.1} parent=19 // pred_check_branch
          %207 = sbr.rel (%p205) target = $region32
        $region31: #{tpu_custom_call.1} parent=19 // pred_region
          %p208 = scmp.lt.s32.totalorder %s16, 7
          %s209 = scalar_select %p208, %s16, 7
          %s210 = smul.addr %s209, 16
          %s211 = smul.addr %s210, 8
          %s212 = scalar_lea.vmem %s3, %s211
        $region32: #{tpu_custom_call.1} parent=19 // pred_fallthru
          _
      $region20: #{tpu_custom_call.1} parent=5 // pred_fallthru
        _
      %p213 = scmp.le.s32.totalorder 1, %s16
      %p214 = scmp.lt.s32.totalorder %s16, 9
      %p215 = pnand %p213, %p214
      %p216 = pneg %p215
      // Predicated region
      $region33: #{tpu_custom_call.1} parent=5 // pred_check
        _
      $region34: #{tpu_custom_call.1} parent=5 // pred_check_branch
        %218 = sbr.rel (%p215) target = $region36
      $region35: #{tpu_custom_call.1} parent=5 // pred_region
        %s219 = ssub.s32 %s16, 1
        %s220 = sand.u32 %s50, 1
        %s221 = scalar_lea.sflag [#allocation3], %s220
        %s222 = sand.u32 %s50, 1
        %s223 = smul.addr %s222, 1024
        %s224 = scalar_lea.vmem [#allocation2], %s223
        // Predicated region
        $region37: #{tpu_custom_call.1} parent=35 // pred_check
          %p225 = pneg %p63
        $region38: #{tpu_custom_call.1} parent=35 // pred_check_branch
          %227 = sbr.rel (%p225) target = $region40
        $region39: #{tpu_custom_call.1} parent=35 // pred_region
          %228 = dma.done %s221, 16384
        $region40: #{tpu_custom_call.1} parent=35 // pred_fallthru
          _
        %s229 = sand.u32 %s76, 1
        %s230 = scalar_lea.sflag [#allocation5], %s229
        %s231 = sand.u32 %s76, 1
        %s232 = smul.addr %s231, 1024
        %s233 = scalar_lea.vmem [#allocation4], %s232
        // Predicated region
        $region41: #{tpu_custom_call.1} parent=35 // pred_check
          %p234 = pneg %p89
        $region42: #{tpu_custom_call.1} parent=35 // pred_check_branch
          %236 = sbr.rel (%p234) target = $region44
        $region43: #{tpu_custom_call.1} parent=35 // pred_region
          %237 = dma.done %s230, 16384
        $region44: #{tpu_custom_call.1} parent=35 // pred_fallthru
          _
        %p238 = pneg %p37
        %p239 = pneg %p34
        %s240 = sand.u32 %s50, 1
        %s241 = scalar_lea.sflag [#allocation3], %s240
        %s242 = sand.u32 %s50, 1
        %s243 = smul.addr %s242, 1024
        %s244 = scalar_lea.vmem [#allocation2], %s243
        %p245 = pneg %p63
        %p246 = pneg %p60
        %s247 = sand.u32 %s76, 1
        %s248 = scalar_lea.sflag [#allocation5], %s247
        %s249 = sand.u32 %s76, 1
        %s250 = smul.addr %s249, 1024
        %s251 = scalar_lea.vmem [#allocation4], %s250
        %p252 = pneg %p89
        %p253 = pneg %p86
        %p254 = scmp.lt.s32.totalorder %s21, 7
        %s255 = scalar_select %p254, %s21, 7
        %s256 = smul.addr %s255, 16
        %s257 = smul.addr %s256, 8
        %s258 = scalar_lea.vmem %s3, %s257
        %p259 = pneg %p115
        %p260 = pneg %p112
        %p261 = pneg %p141
        %p262 = pneg %p138
        %p263 = scmp.lt.s32.totalorder %s21, 7
        %s264 = scalar_select %p263, %s21, 7
        %s265 = smul.addr %s264, 16
        %s266 = smul.addr %s265, 8
        %s267 = scalar_lea.vmem %s4, %s266
        %p268 = scmp.lt.s32.totalorder %s21, 7
        %s269 = scalar_select %p268, %s21, 7
        %s270 = smul.addr %s269, 16
        %s271 = smul.addr %s270, 8
        %s272 = scalar_lea.vmem %s3, %s271
        %p273 = scmp.lt.s32.totalorder %s21, 7
        %s274 = scalar_select %p273, %s21, 7
        %s275 = smul.addr %s274, 16
        %s276 = smul.addr %s275, 8
        %s277 = scalar_lea.vmem %s4, %s276
        %v278 = vld [vmem:[%s0] sm:$0xff]
        %v279 = vld [vmem:[%s0 + $0x8] sm:$0x3]
        %v280 = vld [vmem:[%s224] sm:$0xff]
        %v281 = vld [vmem:[%s224 + $0x8] sm:$0xff]
        %v282 = vld [vmem:[%s224 + $0x10] sm:$0xff]
        %v283 = vld [vmem:[%s224 + $0x18] sm:$0xff]
        %v284 = vld [vmem:[%s224 + $0x20] sm:$0xff]
        %v285 = vld [vmem:[%s224 + $0x28] sm:$0xff]
        %v286 = vld [vmem:[%s224 + $0x30] sm:$0xff]
        %v287 = vld [vmem:[%s224 + $0x38] sm:$0xff]
        %v288 = vld [vmem:[%s224 + $0x40] sm:$0xff]
        %v289 = vld [vmem:[%s224 + $0x48] sm:$0xff]
        %v290 = vld [vmem:[%s224 + $0x50] sm:$0xff]
        %v291 = vld [vmem:[%s224 + $0x58] sm:$0xff]
        %v292 = vld [vmem:[%s224 + $0x60] sm:$0xff]
        %v293 = vld [vmem:[%s224 + $0x68] sm:$0xff]
        %v294 = vld [vmem:[%s224 + $0x70] sm:$0xff]
        %v295 = vld [vmem:[%s224 + $0x78] sm:$0xff]
        %v296 = vld [vmem:[%s224 + $0x80] sm:$0xff]
        %v297 = vld [vmem:[%s224 + $0x88] sm:$0xff]
        %v298 = vld [vmem:[%s224 + $0x90] sm:$0xff]
        %v299 = vld [vmem:[%s224 + $0x98] sm:$0xff]
        %v300 = vld [vmem:[%s224 + $0xa0] sm:$0xff]
        %v301 = vld [vmem:[%s224 + $0xa8] sm:$0xff]
        %v302 = vld [vmem:[%s224 + $0xb0] sm:$0xff]
        %v303 = vld [vmem:[%s224 + $0xb8] sm:$0xff]
        %v304 = vld [vmem:[%s224 + $0xc0] sm:$0xff]
        %v305 = vld [vmem:[%s224 + $0xc8] sm:$0xff]
        %v306 = vld [vmem:[%s224 + $0xd0] sm:$0xff]
        %v307 = vld [vmem:[%s224 + $0xd8] sm:$0xff]
        %v308 = vld [vmem:[%s224 + $0xe0] sm:$0xff]
        %v309 = vld [vmem:[%s224 + $0xe8] sm:$0xff]
        %v310 = vld [vmem:[%s224 + $0xf0] sm:$0xff]
        %v311 = vld [vmem:[%s224 + $0xf8] sm:$0xff]
        %v312 = vld [vmem:[%s224 + $0x100] sm:$0xff]
        %v313 = vld [vmem:[%s224 + $0x108] sm:$0xff]
        %v314 = vld [vmem:[%s224 + $0x110] sm:$0xff]
        %v315 = vld [vmem:[%s224 + $0x118] sm:$0xff]
        %v316 = vld [vmem:[%s224 + $0x120] sm:$0xff]
        %v317 = vld [vmem:[%s224 + $0x128] sm:$0xff]
        %v318 = vld [vmem:[%s224 + $0x130] sm:$0xff]
        %v319 = vld [vmem:[%s224 + $0x138] sm:$0xff]
        %v320 = vld [vmem:[%s224 + $0x140] sm:$0xff]
        %v321 = vld [vmem:[%s224 + $0x148] sm:$0xff]
        %v322 = vld [vmem:[%s224 + $0x150] sm:$0xff]
        %v323 = vld [vmem:[%s224 + $0x158] sm:$0xff]
        %v324 = vld [vmem:[%s224 + $0x160] sm:$0xff]
        %v325 = vld [vmem:[%s224 + $0x168] sm:$0xff]
        %v326 = vld [vmem:[%s224 + $0x170] sm:$0xff]
        %v327 = vld [vmem:[%s224 + $0x178] sm:$0xff]
        %v328 = vld [vmem:[%s224 + $0x180] sm:$0xff]
        %v329 = vld [vmem:[%s224 + $0x188] sm:$0xff]
        %v330 = vld [vmem:[%s224 + $0x190] sm:$0xff]
        %v331 = vld [vmem:[%s224 + $0x198] sm:$0xff]
        %v332 = vld [vmem:[%s224 + $0x1a0] sm:$0xff]
        %v333 = vld [vmem:[%s224 + $0x1a8] sm:$0xff]
        %v334 = vld [vmem:[%s224 + $0x1b0] sm:$0xff]
        %v335 = vld [vmem:[%s224 + $0x1b8] sm:$0xff]
        %v336 = vld [vmem:[%s224 + $0x1c0] sm:$0xff]
        %v337 = vld [vmem:[%s224 + $0x1c8] sm:$0xff]
        %v338 = vld [vmem:[%s224 + $0x1d0] sm:$0xff]
        %v339 = vld [vmem:[%s224 + $0x1d8] sm:$0xff]
        %v340 = vld [vmem:[%s224 + $0x1e0] sm:$0xff]
        %v341 = vld [vmem:[%s224 + $0x1e8] sm:$0xff]
        %v342 = vld [vmem:[%s224 + $0x1f0] sm:$0xff]
        %v343 = vld [vmem:[%s224 + $0x1f8] sm:$0xff]
        %v344 = vld [vmem:[%s224 + $0x200] sm:$0xff]
        %v345 = vld [vmem:[%s224 + $0x208] sm:$0xff]
        %v346 = vld [vmem:[%s224 + $0x210] sm:$0xff]
        %v347 = vld [vmem:[%s224 + $0x218] sm:$0xff]
        %v348 = vld [vmem:[%s224 + $0x220] sm:$0xff]
        %v349 = vld [vmem:[%s224 + $0x228] sm:$0xff]
        %v350 = vld [vmem:[%s224 + $0x230] sm:$0xff]
        %v351 = vld [vmem:[%s224 + $0x238] sm:$0xff]
        %v352 = vld [vmem:[%s224 + $0x240] sm:$0xff]
        %v353 = vld [vmem:[%s224 + $0x248] sm:$0xff]
        %v354 = vld [vmem:[%s224 + $0x250] sm:$0xff]
        %v355 = vld [vmem:[%s224 + $0x258] sm:$0xff]
        %v356 = vld [vmem:[%s224 + $0x260] sm:$0xff]
        %v357 = vld [vmem:[%s224 + $0x268] sm:$0xff]
        %v358 = vld [vmem:[%s224 + $0x270] sm:$0xff]
        %v359 = vld [vmem:[%s224 + $0x278] sm:$0xff]
        %v360 = vld [vmem:[%s224 + $0x280] sm:$0xff]
        %v361 = vld [vmem:[%s224 + $0x288] sm:$0xff]
        %v362 = vld [vmem:[%s224 + $0x290] sm:$0xff]
        %v363 = vld [vmem:[%s224 + $0x298] sm:$0xff]
        %v364 = vld [vmem:[%s224 + $0x2a0] sm:$0xff]
        %v365 = vld [vmem:[%s224 + $0x2a8] sm:$0xff]
        %v366 = vld [vmem:[%s224 + $0x2b0] sm:$0xff]
        %v367 = vld [vmem:[%s224 + $0x2b8] sm:$0xff]
        %v368 = vld [vmem:[%s224 + $0x2c0] sm:$0xff]
        %v369 = vld [vmem:[%s224 + $0x2c8] sm:$0xff]
        %v370 = vld [vmem:[%s224 + $0x2d0] sm:$0xff]
        %v371 = vld [vmem:[%s224 + $0x2d8] sm:$0xff]
        %v372 = vld [vmem:[%s224 + $0x2e0] sm:$0xff]
        %v373 = vld [vmem:[%s224 + $0x2e8] sm:$0xff]
        %v374 = vld [vmem:[%s224 + $0x2f0] sm:$0xff]
        %v375 = vld [vmem:[%s224 + $0x2f8] sm:$0xff]
        %v376 = vld [vmem:[%s224 + $0x300] sm:$0xff]
        %v377 = vld [vmem:[%s224 + $0x308] sm:$0xff]
        %v378 = vld [vmem:[%s224 + $0x310] sm:$0xff]
        %v379 = vld [vmem:[%s224 + $0x318] sm:$0xff]
        %v380 = vld [vmem:[%s224 + $0x320] sm:$0xff]
        %v381 = vld [vmem:[%s224 + $0x328] sm:$0xff]
        %v382 = vld [vmem:[%s224 + $0x330] sm:$0xff]
        %v383 = vld [vmem:[%s224 + $0x338] sm:$0xff]
        %v384 = vld [vmem:[%s224 + $0x340] sm:$0xff]
        %v385 = vld [vmem:[%s224 + $0x348] sm:$0xff]
        %v386 = vld [vmem:[%s224 + $0x350] sm:$0xff]
        %v387 = vld [vmem:[%s224 + $0x358] sm:$0xff]
        %v388 = vld [vmem:[%s224 + $0x360] sm:$0xff]
        %v389 = vld [vmem:[%s224 + $0x368] sm:$0xff]
        %v390 = vld [vmem:[%s224 + $0x370] sm:$0xff]
        %v391 = vld [vmem:[%s224 + $0x378] sm:$0xff]
        %v392 = vld [vmem:[%s224 + $0x380] sm:$0xff]
        %v393 = vld [vmem:[%s224 + $0x388] sm:$0xff]
        %v394 = vld [vmem:[%s224 + $0x390] sm:$0xff]
        %v395 = vld [vmem:[%s224 + $0x398] sm:$0xff]
        %v396 = vld [vmem:[%s224 + $0x3a0] sm:$0xff]
        %v397 = vld [vmem:[%s224 + $0x3a8] sm:$0xff]
        %v398 = vld [vmem:[%s224 + $0x3b0] sm:$0xff]
        %v399 = vld [vmem:[%s224 + $0x3b8] sm:$0xff]
        %v400 = vld [vmem:[%s224 + $0x3c0] sm:$0xff]
        %v401 = vld [vmem:[%s224 + $0x3c8] sm:$0xff]
        %v402 = vld [vmem:[%s224 + $0x3d0] sm:$0xff]
        %v403 = vld [vmem:[%s224 + $0x3d8] sm:$0xff]
        %v404 = vld [vmem:[%s224 + $0x3e0] sm:$0xff]
        %v405 = vld [vmem:[%s224 + $0x3e8] sm:$0xff]
        %v406 = vld [vmem:[%s224 + $0x3f0] sm:$0xff]
        %v407 = vld [vmem:[%s224 + $0x3f8] sm:$0xff]
        %v408 = vld [vmem:[%s233] sm:$0xff]
        %v409 = vld [vmem:[%s233 + $0x8] sm:$0xff]
        %v410 = vld [vmem:[%s233 + $0x10] sm:$0xff]
        %v411 = vld [vmem:[%s233 + $0x18] sm:$0xff]
        %v412 = vld [vmem:[%s233 + $0x20] sm:$0xff]
        %v413 = vld [vmem:[%s233 + $0x28] sm:$0xff]
        %v414 = vld [vmem:[%s233 + $0x30] sm:$0xff]
        %v415 = vld [vmem:[%s233 + $0x38] sm:$0xff]
        %v416 = vld [vmem:[%s233 + $0x40] sm:$0xff]
        %v417 = vld [vmem:[%s233 + $0x48] sm:$0xff]
        %v418 = vld [vmem:[%s233 + $0x50] sm:$0xff]
        %v419 = vld [vmem:[%s233 + $0x58] sm:$0xff]
        %v420 = vld [vmem:[%s233 + $0x60] sm:$0xff]
        %v421 = vld [vmem:[%s233 + $0x68] sm:$0xff]
        %v422 = vld [vmem:[%s233 + $0x70] sm:$0xff]
        %v423 = vld [vmem:[%s233 + $0x78] sm:$0xff]
        %v424 = vld [vmem:[%s233 + $0x80] sm:$0xff]
        %v425 = vld [vmem:[%s233 + $0x88] sm:$0xff]
        %v426 = vld [vmem:[%s233 + $0x90] sm:$0xff]
        %v427 = vld [vmem:[%s233 + $0x98] sm:$0xff]
        %v428 = vld [vmem:[%s233 + $0xa0] sm:$0xff]
        %v429 = vld [vmem:[%s233 + $0xa8] sm:$0xff]
        %v430 = vld [vmem:[%s233 + $0xb0] sm:$0xff]
        %v431 = vld [vmem:[%s233 + $0xb8] sm:$0xff]
        %v432 = vld [vmem:[%s233 + $0xc0] sm:$0xff]
        %v433 = vld [vmem:[%s233 + $0xc8] sm:$0xff]
        %v434 = vld [vmem:[%s233 + $0xd0] sm:$0xff]
        %v435 = vld [vmem:[%s233 + $0xd8] sm:$0xff]
        %v436 = vld [vmem:[%s233 + $0xe0] sm:$0xff]
        %v437 = vld [vmem:[%s233 + $0xe8] sm:$0xff]
        %v438 = vld [vmem:[%s233 + $0xf0] sm:$0xff]
        %v439 = vld [vmem:[%s233 + $0xf8] sm:$0xff]
        %v440 = vld [vmem:[%s233 + $0x100] sm:$0xff]
        %v441 = vld [vmem:[%s233 + $0x108] sm:$0xff]
        %v442 = vld [vmem:[%s233 + $0x110] sm:$0xff]
        %v443 = vld [vmem:[%s233 + $0x118] sm:$0xff]
        %v444 = vld [vmem:[%s233 + $0x120] sm:$0xff]
        %v445 = vld [vmem:[%s233 + $0x128] sm:$0xff]
        %v446 = vld [vmem:[%s233 + $0x130] sm:$0xff]
        %v447 = vld [vmem:[%s233 + $0x138] sm:$0xff]
        %v448 = vld [vmem:[%s233 + $0x140] sm:$0xff]
        %v449 = vld [vmem:[%s233 + $0x148] sm:$0xff]
        %v450 = vld [vmem:[%s233 + $0x150] sm:$0xff]
        %v451 = vld [vmem:[%s233 + $0x158] sm:$0xff]
        %v452 = vld [vmem:[%s233 + $0x160] sm:$0xff]
        %v453 = vld [vmem:[%s233 + $0x168] sm:$0xff]
        %v454 = vld [vmem:[%s233 + $0x170] sm:$0xff]
        %v455 = vld [vmem:[%s233 + $0x178] sm:$0xff]
        %v456 = vld [vmem:[%s233 + $0x180] sm:$0xff]
        %v457 = vld [vmem:[%s233 + $0x188] sm:$0xff]
        %v458 = vld [vmem:[%s233 + $0x190] sm:$0xff]
        %v459 = vld [vmem:[%s233 + $0x198] sm:$0xff]
        %v460 = vld [vmem:[%s233 + $0x1a0] sm:$0xff]
        %v461 = vld [vmem:[%s233 + $0x1a8] sm:$0xff]
        %v462 = vld [vmem:[%s233 + $0x1b0] sm:$0xff]
        %v463 = vld [vmem:[%s233 + $0x1b8] sm:$0xff]
        %v464 = vld [vmem:[%s233 + $0x1c0] sm:$0xff]
        %v465 = vld [vmem:[%s233 + $0x1c8] sm:$0xff]
        %v466 = vld [vmem:[%s233 + $0x1d0] sm:$0xff]
        %v467 = vld [vmem:[%s233 + $0x1d8] sm:$0xff]
        %v468 = vld [vmem:[%s233 + $0x1e0] sm:$0xff]
        %v469 = vld [vmem:[%s233 + $0x1e8] sm:$0xff]
        %v470 = vld [vmem:[%s233 + $0x1f0] sm:$0xff]
        %v471 = vld [vmem:[%s233 + $0x1f8] sm:$0xff]
        %v472 = vld [vmem:[%s233 + $0x200] sm:$0xff]
        %v473 = vld [vmem:[%s233 + $0x208] sm:$0xff]
        %v474 = vld [vmem:[%s233 + $0x210] sm:$0xff]
        %v475 = vld [vmem:[%s233 + $0x218] sm:$0xff]
        %v476 = vld [vmem:[%s233 + $0x220] sm:$0xff]
        %v477 = vld [vmem:[%s233 + $0x228] sm:$0xff]
        %v478 = vld [vmem:[%s233 + $0x230] sm:$0xff]
        %v479 = vld [vmem:[%s233 + $0x238] sm:$0xff]
        %v480 = vld [vmem:[%s233 + $0x240] sm:$0xff]
        %v481 = vld [vmem:[%s233 + $0x248] sm:$0xff]
        %v482 = vld [vmem:[%s233 + $0x250] sm:$0xff]
        %v483 = vld [vmem:[%s233 + $0x258] sm:$0xff]
        %v484 = vld [vmem:[%s233 + $0x260] sm:$0xff]
        %v485 = vld [vmem:[%s233 + $0x268] sm:$0xff]
        %v486 = vld [vmem:[%s233 + $0x270] sm:$0xff]
        %v487 = vld [vmem:[%s233 + $0x278] sm:$0xff]
        %v488 = vld [vmem:[%s233 + $0x280] sm:$0xff]
        %v489 = vld [vmem:[%s233 + $0x288] sm:$0xff]
        %v490 = vld [vmem:[%s233 + $0x290] sm:$0xff]
        %v491 = vld [vmem:[%s233 + $0x298] sm:$0xff]
        %v492 = vld [vmem:[%s233 + $0x2a0] sm:$0xff]
        %v493 = vld [vmem:[%s233 + $0x2a8] sm:$0xff]
        %v494 = vld [vmem:[%s233 + $0x2b0] sm:$0xff]
        %v495 = vld [vmem:[%s233 + $0x2b8] sm:$0xff]
        %v496 = vld [vmem:[%s233 + $0x2c0] sm:$0xff]
        %v497 = vld [vmem:[%s233 + $0x2c8] sm:$0xff]
        %v498 = vld [vmem:[%s233 + $0x2d0] sm:$0xff]
        %v499 = vld [vmem:[%s233 + $0x2d8] sm:$0xff]
        %v500 = vld [vmem:[%s233 + $0x2e0] sm:$0xff]
        %v501 = vld [vmem:[%s233 + $0x2e8] sm:$0xff]
        %v502 = vld [vmem:[%s233 + $0x2f0] sm:$0xff]
        %v503 = vld [vmem:[%s233 + $0x2f8] sm:$0xff]
        %v504 = vld [vmem:[%s233 + $0x300] sm:$0xff]
        %v505 = vld [vmem:[%s233 + $0x308] sm:$0xff]
        %v506 = vld [vmem:[%s233 + $0x310] sm:$0xff]
        %v507 = vld [vmem:[%s233 + $0x318] sm:$0xff]
        %v508 = vld [vmem:[%s233 + $0x320] sm:$0xff]
        %v509 = vld [vmem:[%s233 + $0x328] sm:$0xff]
        %v510 = vld [vmem:[%s233 + $0x330] sm:$0xff]
        %v511 = vld [vmem:[%s233 + $0x338] sm:$0xff]
        %v512 = vld [vmem:[%s233 + $0x340] sm:$0xff]
        %v513 = vld [vmem:[%s233 + $0x348] sm:$0xff]
        %v514 = vld [vmem:[%s233 + $0x350] sm:$0xff]
        %v515 = vld [vmem:[%s233 + $0x358] sm:$0xff]
        %v516 = vld [vmem:[%s233 + $0x360] sm:$0xff]
        %v517 = vld [vmem:[%s233 + $0x368] sm:$0xff]
        %v518 = vld [vmem:[%s233 + $0x370] sm:$0xff]
        %v519 = vld [vmem:[%s233 + $0x378] sm:$0xff]
        %v520 = vld [vmem:[%s233 + $0x380] sm:$0xff]
        %v521 = vld [vmem:[%s233 + $0x388] sm:$0xff]
        %v522 = vld [vmem:[%s233 + $0x390] sm:$0xff]
        %v523 = vld [vmem:[%s233 + $0x398] sm:$0xff]
        %v524 = vld [vmem:[%s233 + $0x3a0] sm:$0xff]
        %v525 = vld [vmem:[%s233 + $0x3a8] sm:$0xff]
        %v526 = vld [vmem:[%s233 + $0x3b0] sm:$0xff]
        %v527 = vld [vmem:[%s233 + $0x3b8] sm:$0xff]
        %v528 = vld [vmem:[%s233 + $0x3c0] sm:$0xff]
        %v529 = vld [vmem:[%s233 + $0x3c8] sm:$0xff]
        %v530 = vld [vmem:[%s233 + $0x3d0] sm:$0xff]
        %v531 = vld [vmem:[%s233 + $0x3d8] sm:$0xff]
        %v532 = vld [vmem:[%s233 + $0x3e0] sm:$0xff]
        %v533 = vld [vmem:[%s233 + $0x3e8] sm:$0xff]
        %v534 = vld [vmem:[%s233 + $0x3f0] sm:$0xff]
        %v535 = vld [vmem:[%s233 + $0x3f8] sm:$0xff]
        %v536 = vmul.f32 %v278, 10000.0
        %v537 = vmul.f32 %v279, 10000.0
        %vm538 = vcmask 261120
        %v540 = vsel %vm538, %v536, 0
        %v543 = vsel %vm538, %v537, 0
        %v546 = vsel %vm538, %v280, 0
        %v549 = vsel %vm538, %v281, 0
        %v552 = vsel %vm538, %v282, 0
        %v555 = vsel %vm538, %v283, 0
        %v558 = vsel %vm538, %v284, 0
        %v561 = vsel %vm538, %v285, 0
        %v564 = vsel %vm538, %v286, 0
        %v567 = vsel %vm538, %v287, 0
        %v570 = vsel %vm538, %v288, 0
        %v573 = vsel %vm538, %v289, 0
        %v576 = vsel %vm538, %v290, 0
        %v579 = vsel %vm538, %v291, 0
        %v582 = vsel %vm538, %v292, 0
        %v585 = vsel %vm538, %v293, 0
        %v588 = vsel %vm538, %v294, 0
        %v591 = vsel %vm538, %v295, 0
        %v594 = vsel %vm538, %v296, 0
        %v597 = vsel %vm538, %v297, 0
        %v600 = vsel %vm538, %v298, 0
        %v603 = vsel %vm538, %v299, 0
        %v606 = vsel %vm538, %v300, 0
        %v609 = vsel %vm538, %v301, 0
        %v612 = vsel %vm538, %v302, 0
        %v615 = vsel %vm538, %v303, 0
        %v618 = vsel %vm538, %v304, 0
        %v621 = vsel %vm538, %v305, 0
        %v624 = vsel %vm538, %v306, 0
        %v627 = vsel %vm538, %v307, 0
        %v630 = vsel %vm538, %v308, 0
        %v633 = vsel %vm538, %v309, 0
        %v636 = vsel %vm538, %v310, 0
        %v639 = vsel %vm538, %v311, 0
        %v642 = vsel %vm538, %v312, 0
        %v645 = vsel %vm538, %v313, 0
        %v648 = vsel %vm538, %v314, 0
        %v651 = vsel %vm538, %v315, 0
        %v654 = vsel %vm538, %v316, 0
        %v657 = vsel %vm538, %v317, 0
        %v660 = vsel %vm538, %v318, 0
        %v663 = vsel %vm538, %v319, 0
        %v666 = vsel %vm538, %v320, 0
        %v669 = vsel %vm538, %v321, 0
        %v672 = vsel %vm538, %v322, 0
        %v675 = vsel %vm538, %v323, 0
        %v678 = vsel %vm538, %v324, 0
        %v681 = vsel %vm538, %v325, 0
        %v684 = vsel %vm538, %v326, 0
        %v687 = vsel %vm538, %v327, 0
        %v690 = vsel %vm538, %v328, 0
        %v693 = vsel %vm538, %v329, 0
        %v696 = vsel %vm538, %v330, 0
        %v699 = vsel %vm538, %v331, 0
        %v702 = vsel %vm538, %v332, 0
        %v705 = vsel %vm538, %v333, 0
        %v708 = vsel %vm538, %v334, 0
        %v711 = vsel %vm538, %v335, 0
        %v714 = vsel %vm538, %v336, 0
        %v717 = vsel %vm538, %v337, 0
        %v720 = vsel %vm538, %v338, 0
        %v723 = vsel %vm538, %v339, 0
        %v726 = vsel %vm538, %v340, 0
        %v729 = vsel %vm538, %v341, 0
        %v732 = vsel %vm538, %v342, 0
        %v735 = vsel %vm538, %v343, 0
        %v738 = vsel %vm538, %v344, 0
        %v741 = vsel %vm538, %v345, 0
        %v744 = vsel %vm538, %v346, 0
        %v747 = vsel %vm538, %v347, 0
        %v750 = vsel %vm538, %v348, 0
        %v753 = vsel %vm538, %v349, 0
        %v756 = vsel %vm538, %v350, 0
        %v759 = vsel %vm538, %v351, 0
        %v762 = vsel %vm538, %v352, 0
        %v765 = vsel %vm538, %v353, 0
        %v768 = vsel %vm538, %v354, 0
        %v771 = vsel %vm538, %v355, 0
        %v774 = vsel %vm538, %v356, 0
        %v777 = vsel %vm538, %v357, 0
        %v780 = vsel %vm538, %v358, 0
        %v783 = vsel %vm538, %v359, 0
        %v786 = vsel %vm538, %v360, 0
        %v789 = vsel %vm538, %v361, 0
        %v792 = vsel %vm538, %v362, 0
        %v795 = vsel %vm538, %v363, 0
        %v798 = vsel %vm538, %v364, 0
        %v801 = vsel %vm538, %v365, 0
        %v804 = vsel %vm538, %v366, 0
        %v807 = vsel %vm538, %v367, 0
        %v810 = vsel %vm538, %v368, 0
        %v813 = vsel %vm538, %v369, 0
        %v816 = vsel %vm538, %v370, 0
        %v819 = vsel %vm538, %v371, 0
        %v822 = vsel %vm538, %v372, 0
        %v825 = vsel %vm538, %v373, 0
        %v828 = vsel %vm538, %v374, 0
        %v831 = vsel %vm538, %v375, 0
        %v834 = vsel %vm538, %v376, 0
        %v837 = vsel %vm538, %v377, 0
        %v840 = vsel %vm538, %v378, 0
        %v843 = vsel %vm538, %v379, 0
        %v846 = vsel %vm538, %v380, 0
        %v849 = vsel %vm538, %v381, 0
        %v852 = vsel %vm538, %v382, 0
        %v855 = vsel %vm538, %v383, 0
        %v858 = vsel %vm538, %v384, 0
        %v861 = vsel %vm538, %v385, 0
        %v864 = vsel %vm538, %v386, 0
        %v867 = vsel %vm538, %v387, 0
        %v870 = vsel %vm538, %v388, 0
        %v873 = vsel %vm538, %v389, 0
        %v876 = vsel %vm538, %v390, 0
        %v879 = vsel %vm538, %v391, 0
        %v882 = vsel %vm538, %v392, 0
        %v885 = vsel %vm538, %v393, 0
        %v888 = vsel %vm538, %v394, 0
        %v891 = vsel %vm538, %v395, 0
        %v894 = vsel %vm538, %v396, 0
        %v897 = vsel %vm538, %v397, 0
        %v900 = vsel %vm538, %v398, 0
        %v903 = vsel %vm538, %v399, 0
        %v906 = vsel %vm538, %v400, 0
        %v909 = vsel %vm538, %v401, 0
        %v912 = vsel %vm538, %v402, 0
        %v915 = vsel %vm538, %v403, 0
        %v918 = vsel %vm538, %v404, 0
        %v921 = vsel %vm538, %v405, 0
        %v924 = vsel %vm538, %v406, 0
        %v927 = vsel %vm538, %v407, 0
        %929 = vmatprep.subr.mxu0 0.0
        %930 = vmatpush1.xpose.msra.mxu0 %v546
        %931 = vmatprep.subr.mxu0 0.0
        %932 = vmatpush1.xpose.msra.mxu0 %v549
        %933 = vmatprep.subr.mxu0 0.0
        %934 = vmatpush1.xpose.msra.mxu0 %v552
        %935 = vmatprep.subr.mxu0 0.0
        %936 = vmatpush1.xpose.msra.mxu0 %v555
        %937 = vmatprep.subr.mxu0 0.0
        %938 = vmatpush1.xpose.msra.mxu0 %v558
        %939 = vmatprep.subr.mxu0 0.0
        %940 = vmatpush1.xpose.msra.mxu0 %v561
        %941 = vmatprep.subr.mxu0 0.0
        %942 = vmatpush1.xpose.msra.mxu0 %v564
        %943 = vmatprep.subr.mxu0 0.0
        %944 = vmatpush1.xpose.msra.mxu0 %v567
        %945 = vmatprep.subr.mxu0 0.0
        %946 = vmatpush1.xpose.msra.mxu0 %v570
        %947 = vmatprep.subr.mxu0 0.0
        %948 = vmatpush1.xpose.msra.mxu0 %v573
        %949 = vmatprep.subr.mxu0 0.0
        %950 = vmatpush1.xpose.msra.mxu0 %v576
        %951 = vmatprep.subr.mxu0 0.0
        %952 = vmatpush1.xpose.msra.mxu0 %v579
        %953 = vmatprep.subr.mxu0 0.0
        %954 = vmatpush1.xpose.msra.mxu0 %v582
        %955 = vmatprep.subr.mxu0 0.0
        %956 = vmatpush1.xpose.msra.mxu0 %v585
        %957 = vmatprep.subr.mxu0 0.0
        %958 = vmatpush1.xpose.msra.mxu0 %v588
        %959 = vmatprep.subr.mxu0 0.0
        %960 = vmatpush1.xpose.msra.mxu0 %v591
        %961 = vmatprep.subr.mxu0 0.0
        %962 = vmatpush1.xpose.msra.mxu0 %v594
        %963 = vmatprep.subr.mxu0 0.0
        %964 = vmatpush1.xpose.msra.mxu0 %v597
        %965 = vmatprep.subr.mxu0 0.0
        %966 = vmatpush1.xpose.msra.mxu0 %v600
        %967 = vmatprep.subr.mxu0 0.0
        %968 = vmatpush1.xpose.msra.mxu0 %v603
        %969 = vmatprep.subr.mxu0 0.0
        %970 = vmatpush1.xpose.msra.mxu0 %v606
        %971 = vmatprep.subr.mxu0 0.0
        %972 = vmatpush1.xpose.msra.mxu0 %v609
        %973 = vmatprep.subr.mxu0 0.0
        %974 = vmatpush1.xpose.msra.mxu0 %v612
        %975 = vmatprep.subr.mxu0 0.0
        %976 = vmatpush1.xpose.msra.mxu0 %v615
        %977 = vmatprep.subr.mxu0 0.0
        %978 = vmatpush1.xpose.msra.mxu0 %v618
        %979 = vmatprep.subr.mxu0 0.0
        %980 = vmatpush1.xpose.msra.mxu0 %v621
        %981 = vmatprep.subr.mxu0 0.0
        %982 = vmatpush1.xpose.msra.mxu0 %v624
        %983 = vmatprep.subr.mxu0 0.0
        %984 = vmatpush1.xpose.msra.mxu0 %v627
        %985 = vmatprep.subr.mxu0 0.0
        %986 = vmatpush1.xpose.msra.mxu0 %v630
        %987 = vmatprep.subr.mxu0 0.0
        %988 = vmatpush1.xpose.msra.mxu0 %v633
        %989 = vmatprep.subr.mxu0 0.0
        %990 = vmatpush1.xpose.msra.mxu0 %v636
        %991 = vmatprep.subr.mxu0 0.0
        %992 = vmatpush1.xpose.msra.mxu0 %v639
        %993 = vmatprep.mubr.f32.mxu0 0.0
        %994 = vmatmul.mubr.f32.gmra.mrb[0].mxu0 %v540
        %v995 = vpop.f32.mrb[0].mxu0
        %v996 = vadd.f32 0.0, %v995
        %v997 = vpop.f32.mrb[0].mxu0
        %v998 = vadd.f32 0.0, %v997
        %999 = vmatprep.mubr.f32.mxu0 0.0
        %1000 = vmatmul.mubr.f32.gmra.mrb[0].mxu0 %v543
        %v1001 = vpop.f32.mrb[0].mxu0
        %v1002 = vadd.f32 0.0, %v1001
        %v1003 = vpop.f32.mrb[0].mxu0
        %v1004 = vadd.f32 0.0, %v1003
        %1005 = vdwg.mxu0
        %1006 = vmatprep.subr.mxu0 0.0
        %1007 = vmatpush1.xpose.msra.mxu0 %v642
        %1008 = vmatprep.subr.mxu0 0.0
        %1009 = vmatpush1.xpose.msra.mxu0 %v645
        %1010 = vmatprep.subr.mxu0 0.0
        %1011 = vmatpush1.xpose.msra.mxu0 %v648
        %1012 = vmatprep.subr.mxu0 0.0
        %1013 = vmatpush1.xpose.msra.mxu0 %v651
        %1014 = vmatprep.subr.mxu0 0.0
        %1015 = vmatpush1.xpose.msra.mxu0 %v654
        %1016 = vmatprep.subr.mxu0 0.0
        %1017 = vmatpush1.xpose.msra.mxu0 %v657
        %1018 = vmatprep.subr.mxu0 0.0
        %1019 = vmatpush1.xpose.msra.mxu0 %v660
        %1020 = vmatprep.subr.mxu0 0.0
        %1021 = vmatpush1.xpose.msra.mxu0 %v663
        %1022 = vmatprep.subr.mxu0 0.0
        %1023 = vmatpush1.xpose.msra.mxu0 %v666
        %1024 = vmatprep.subr.mxu0 0.0
        %1025 = vmatpush1.xpose.msra.mxu0 %v669
        %1026 = vmatprep.subr.mxu0 0.0
        %1027 = vmatpush1.xpose.msra.mxu0 %v672
        %1028 = vmatprep.subr.mxu0 0.0
        %1029 = vmatpush1.xpose.msra.mxu0 %v675
        %1030 = vmatprep.subr.mxu0 0.0
        %1031 = vmatpush1.xpose.msra.mxu0 %v678
        %1032 = vmatprep.subr.mxu0 0.0
        %1033 = vmatpush1.xpose.msra.mxu0 %v681
        %1034 = vmatprep.subr.mxu0 0.0
        %1035 = vmatpush1.xpose.msra.mxu0 %v684
        %1036 = vmatprep.subr.mxu0 0.0
        %1037 = vmatpush1.xpose.msra.mxu0 %v687
        %1038 = vmatprep.subr.mxu0 0.0
        %1039 = vmatpush1.xpose.msra.mxu0 %v690
        %1040 = vmatprep.subr.mxu0 0.0
        %1041 = vmatpush1.xpose.msra.mxu0 %v693
        %1042 = vmatprep.subr.mxu0 0.0
        %1043 = vmatpush1.xpose.msra.mxu0 %v696
        %1044 = vmatprep.subr.mxu0 0.0
        %1045 = vmatpush1.xpose.msra.mxu0 %v699
        %1046 = vmatprep.subr.mxu0 0.0
        %1047 = vmatpush1.xpose.msra.mxu0 %v702
        %1048 = vmatprep.subr.mxu0 0.0
        %1049 = vmatpush1.xpose.msra.mxu0 %v705
        %1050 = vmatprep.subr.mxu0 0.0
        %1051 = vmatpush1.xpose.msra.mxu0 %v708
        %1052 = vmatprep.subr.mxu0 0.0
        %1053 = vmatpush1.xpose.msra.mxu0 %v711
        %1054 = vmatprep.subr.mxu0 0.0
        %1055 = vmatpush1.xpose.msra.mxu0 %v714
        %1056 = vmatprep.subr.mxu0 0.0
        %1057 = vmatpush1.xpose.msra.mxu0 %v717
        %1058 = vmatprep.subr.mxu0 0.0
        %1059 = vmatpush1.xpose.msra.mxu0 %v720
        %1060 = vmatprep.subr.mxu0 0.0
        %1061 = vmatpush1.xpose.msra.mxu0 %v723
        %1062 = vmatprep.subr.mxu0 0.0
        %1063 = vmatpush1.xpose.msra.mxu0 %v726
        %1064 = vmatprep.subr.mxu0 0.0
        %1065 = vmatpush1.xpose.msra.mxu0 %v729
        %1066 = vmatprep.subr.mxu0 0.0
        %1067 = vmatpush1.xpose.msra.mxu0 %v732
        %1068 = vmatprep.subr.mxu0 0.0
        %1069 = vmatpush1.xpose.msra.mxu0 %v735
        %1070 = vmatprep.mubr.f32.mxu0 0.0
        %1071 = vmatmul.mubr.f32.gmra.mrb[0].mxu0 %v540
        %v1072 = vpop.f32.mrb[0].mxu0
        %v1073 = vadd.f32 0.0, %v1072
        %v1074 = vpop.f32.mrb[0].mxu0
        %v1075 = vadd.f32 0.0, %v1074
        %1076 = vmatprep.mubr.f32.mxu0 0.0
        %1077 = vmatmul.mubr.f32.gmra.mrb[0].mxu0 %v543
        %v1078 = vpop.f32.mrb[0].mxu0
        %v1079 = vadd.f32 0.0, %v1078
        %v1080 = vpop.f32.mrb[0].mxu0
        %v1081 = vadd.f32 0.0, %v1080
        %1082 = vdwg.mxu0
        %1083 = vmatprep.subr.mxu0 0.0
        %1084 = vmatpush1.xpose.msra.mxu0 %v738
        %1085 = vmatprep.subr.mxu0 0.0
        %1086 = vmatpush1.xpose.msra.mxu0 %v741
        %1087 = vmatprep.subr.mxu0 0.0
        %1088 = vmatpush1.xpose.msra.mxu0 %v744
        %1089 = vmatprep.subr.mxu0 0.0
        %1090 = vmatpush1.xpose.msra.mxu0 %v747
        %1091 = vmatprep.subr.mxu0 0.0
        %1092 = vmatpush1.xpose.msra.mxu0 %v750
        %1093 = vmatprep.subr.mxu0 0.0
        %1094 = vmatpush1.xpose.msra.mxu0 %v753
        %1095 = vmatprep.subr.mxu0 0.0
        %1096 = vmatpush1.xpose.msra.mxu0 %v756
        %1097 = vmatprep.subr.mxu0 0.0
        %1098 = vmatpush1.xpose.msra.mxu0 %v759
        %1099 = vmatprep.subr.mxu0 0.0
        %1100 = vmatpush1.xpose.msra.mxu0 %v762
        %1101 = vmatprep.subr.mxu0 0.0
        %1102 = vmatpush1.xpose.msra.mxu0 %v765
        %1103 = vmatprep.subr.mxu0 0.0
        %1104 = vmatpush1.xpose.msra.mxu0 %v768
        %1105 = vmatprep.subr.mxu0 0.0
        %1106 = vmatpush1.xpose.msra.mxu0 %v771
        %1107 = vmatprep.subr.mxu0 0.0
        %1108 = vmatpush1.xpose.msra.mxu0 %v774
        %1109 = vmatprep.subr.mxu0 0.0
        %1110 = vmatpush1.xpose.msra.mxu0 %v777
        %1111 = vmatprep.subr.mxu0 0.0
        %1112 = vmatpush1.xpose.msra.mxu0 %v780
        %1113 = vmatprep.subr.mxu0 0.0
        %1114 = vmatpush1.xpose.msra.mxu0 %v783
        %1115 = vmatprep.subr.mxu0 0.0
        %1116 = vmatpush1.xpose.msra.mxu0 %v786
        %1117 = vmatprep.subr.mxu0 0.0
        %1118 = vmatpush1.xpose.msra.mxu0 %v789
        %1119 = vmatprep.subr.mxu0 0.0
        %1120 = vmatpush1.xpose.msra.mxu0 %v792
        %1121 = vmatprep.subr.mxu0 0.0
        %1122 = vmatpush1.xpose.msra.mxu0 %v795
        %1123 = vmatprep.subr.mxu0 0.0
        %1124 = vmatpush1.xpose.msra.mxu0 %v798
        %1125 = vmatprep.subr.mxu0 0.0
        %1126 = vmatpush1.xpose.msra.mxu0 %v801
        %1127 = vmatprep.subr.mxu0 0.0
        %1128 = vmatpush1.xpose.msra.mxu0 %v804
        %1129 = vmatprep.subr.mxu0 0.0
        %1130 = vmatpush1.xpose.msra.mxu0 %v807
        %1131 = vmatprep.subr.mxu0 0.0
        %1132 = vmatpush1.xpose.msra.mxu0 %v810
        %1133 = vmatprep.subr.mxu0 0.0
        %1134 = vmatpush1.xpose.msra.mxu0 %v813
        %1135 = vmatprep.subr.mxu0 0.0
        %1136 = vmatpush1.xpose.msra.mxu0 %v816
        %1137 = vmatprep.subr.mxu0 0.0
        %1138 = vmatpush1.xpose.msra.mxu0 %v819
        %1139 = vmatprep.subr.mxu0 0.0
        %1140 = vmatpush1.xpose.msra.mxu0 %v822
        %1141 = vmatprep.subr.mxu0 0.0
        %1142 = vmatpush1.xpose.msra.mxu0 %v825
        %1143 = vmatprep.subr.mxu0 0.0
        %1144 = vmatpush1.xpose.msra.mxu0 %v828
        %1145 = vmatprep.subr.mxu0 0.0
        %1146 = vmatpush1.xpose.msra.mxu0 %v831
        %1147 = vmatprep.mubr.f32.mxu0 0.0
        %1148 = vmatmul.mubr.f32.gmra.mrb[0].mxu0 %v540
        %v1149 = vpop.f32.mrb[0].mxu0
        %v1150 = vadd.f32 0.0, %v1149
        %v1151 = vpop.f32.mrb[0].mxu0
        %v1152 = vadd.f32 0.0, %v1151
        %1153 = vmatprep.mubr.f32.mxu0 0.0
        %1154 = vmatmul.mubr.f32.gmra.mrb[0].mxu0 %v543
        %v1155 = vpop.f32.mrb[0].mxu0
        %v1156 = vadd.f32 0.0, %v1155
        %v1157 = vpop.f32.mrb[0].mxu0
        %v1158 = vadd.f32 0.0, %v1157
        %1159 = vdwg.mxu0
        %1160 = vmatprep.subr.mxu0 0.0
        %1161 = vmatpush1.xpose.msra.mxu0 %v834
        %1162 = vmatprep.subr.mxu0 0.0
        %1163 = vmatpush1.xpose.msra.mxu0 %v837
        %1164 = vmatprep.subr.mxu0 0.0
        %1165 = vmatpush1.xpose.msra.mxu0 %v840
        %1166 = vmatprep.subr.mxu0 0.0
        %1167 = vmatpush1.xpose.msra.mxu0 %v843
        %1168 = vmatprep.subr.mxu0 0.0
        %1169 = vmatpush1.xpose.msra.mxu0 %v846
        %1170 = vmatprep.subr.mxu0 0.0
        %1171 = vmatpush1.xpose.msra.mxu0 %v849
        %1172 = vmatprep.subr.mxu0 0.0
        %1173 = vmatpush1.xpose.msra.mxu0 %v852
        %1174 = vmatprep.subr.mxu0 0.0
        %1175 = vmatpush1.xpose.msra.mxu0 %v855
        %1176 = vmatprep.subr.mxu0 0.0
        %1177 = vmatpush1.xpose.msra.mxu0 %v858
        %1178 = vmatprep.subr.mxu0 0.0
        %1179 = vmatpush1.xpose.msra.mxu0 %v861
        %1180 = vmatprep.subr.mxu0 0.0
        %1181 = vmatpush1.xpose.msra.mxu0 %v864
        %1182 = vmatprep.subr.mxu0 0.0
        %1183 = vmatpush1.xpose.msra.mxu0 %v867
        %1184 = vmatprep.subr.mxu0 0.0
        %1185 = vmatpush1.xpose.msra.mxu0 %v870
        %1186 = vmatprep.subr.mxu0 0.0
        %1187 = vmatpush1.xpose.msra.mxu0 %v873
        %1188 = vmatprep.subr.mxu0 0.0
        %1189 = vmatpush1.xpose.msra.mxu0 %v876
        %1190 = vmatprep.subr.mxu0 0.0
        %1191 = vmatpush1.xpose.msra.mxu0 %v879
        %1192 = vmatprep.subr.mxu0 0.0
        %1193 = vmatpush1.xpose.msra.mxu0 %v882
        %1194 = vmatprep.subr.mxu0 0.0
        %1195 = vmatpush1.xpose.msra.mxu0 %v885
        %1196 = vmatprep.subr.mxu0 0.0
        %1197 = vmatpush1.xpose.msra.mxu0 %v888
        %1198 = vmatprep.subr.mxu0 0.0
        %1199 = vmatpush1.xpose.msra.mxu0 %v891
        %1200 = vmatprep.subr.mxu0 0.0
        %1201 = vmatpush1.xpose.msra.mxu0 %v894
        %1202 = vmatprep.subr.mxu0 0.0
        %1203 = vmatpush1.xpose.msra.mxu0 %v897
        %1204 = vmatprep.subr.mxu0 0.0
        %1205 = vmatpush1.xpose.msra.mxu0 %v900
        %1206 = vmatprep.subr.mxu0 0.0
        %1207 = vmatpush1.xpose.msra.mxu0 %v903
        %1208 = vmatprep.subr.mxu0 0.0
        %1209 = vmatpush1.xpose.msra.mxu0 %v906
        %1210 = vmatprep.subr.mxu0 0.0
        %1211 = vmatpush1.xpose.msra.mxu0 %v909
        %1212 = vmatprep.subr.mxu0 0.0
        %1213 = vmatpush1.xpose.msra.mxu0 %v912
        %1214 = vmatprep.subr.mxu0 0.0
        %1215 = vmatpush1.xpose.msra.mxu0 %v915
        %1216 = vmatprep.subr.mxu0 0.0
        %1217 = vmatpush1.xpose.msra.mxu0 %v918
        %1218 = vmatprep.subr.mxu0 0.0
        %1219 = vmatpush1.xpose.msra.mxu0 %v921
        %1220 = vmatprep.subr.mxu0 0.0
        %1221 = vmatpush1.xpose.msra.mxu0 %v924
        %1222 = vmatprep.subr.mxu0 0.0
        %1223 = vmatpush1.xpose.msra.mxu0 %v927
        %1224 = vmatprep.mubr.f32.mxu0 0.0
        %1225 = vmatmul.mubr.f32.gmra.mrb[0].mxu0 %v540
        %v1226 = vpop.f32.mrb[0].mxu0
        %v1227 = vadd.f32 0.0, %v1226
        %v1228 = vpop.f32.mrb[0].mxu0
        %v1229 = vadd.f32 0.0, %v1228
        %1230 = vmatprep.mubr.f32.mxu0 0.0
        %1231 = vmatmul.mubr.f32.gmra.mrb[0].mxu0 %v543
        %v1232 = vpop.f32.mrb[0].mxu0
        %v1233 = vadd.f32 0.0, %v1232
        %v1234 = vpop.f32.mrb[0].mxu0
        %v1235 = vadd.f32 0.0, %v1234
        %1236 = vdwg.mxu0
        %1239 = vrot.lane.b32.xlu0 %v996, 96
        %v1240 = vpop.permute.xlu0 %1239
        %1241 = vrot.lane.b32.xlu0 %v1002, 96
        %v1242 = vpop.permute.xlu0 %1241
        %1245 = vrot.lane.b32.xlu0 %v996, 64
        %v1246 = vpop.permute.xlu0 %1245
        %1247 = vrot.lane.b32.xlu0 %v1002, 64
        %v1248 = vpop.permute.xlu0 %1247
        %1251 = vrot.lane.b32.xlu0 %v996, 32
        %v1252 = vpop.permute.xlu0 %1251
        %1253 = vrot.lane.b32.xlu0 %v1002, 32
        %v1254 = vpop.permute.xlu0 %1253
        %1259 = vrot.lane.b32.xlu0 %v998, 96
        %v1260 = vpop.permute.xlu0 %1259
        %1261 = vrot.lane.b32.xlu0 %v1004, 96
        %v1262 = vpop.permute.xlu0 %1261
        %1265 = vrot.lane.b32.xlu0 %v998, 64
        %v1266 = vpop.permute.xlu0 %1265
        %1267 = vrot.lane.b32.xlu0 %v1004, 64
        %v1268 = vpop.permute.xlu0 %1267
        %1271 = vrot.lane.b32.xlu0 %v998, 32
        %v1272 = vpop.permute.xlu0 %1271
        %1273 = vrot.lane.b32.xlu0 %v1004, 32
        %v1274 = vpop.permute.xlu0 %1273
        %1279 = vrot.lane.b32.xlu0 %v1073, 96
        %v1280 = vpop.permute.xlu0 %1279
        %1281 = vrot.lane.b32.xlu0 %v1079, 96
        %v1282 = vpop.permute.xlu0 %1281
        %1285 = vrot.lane.b32.xlu0 %v1073, 64
        %v1286 = vpop.permute.xlu0 %1285
        %1287 = vrot.lane.b32.xlu0 %v1079, 64
        %v1288 = vpop.permute.xlu0 %1287
        %1291 = vrot.lane.b32.xlu0 %v1073, 32
        %v1292 = vpop.permute.xlu0 %1291
        %1293 = vrot.lane.b32.xlu0 %v1079, 32
        %v1294 = vpop.permute.xlu0 %1293
        %1299 = vrot.lane.b32.xlu0 %v1075, 96
        %v1300 = vpop.permute.xlu0 %1299
        %1301 = vrot.lane.b32.xlu0 %v1081, 96
        %v1302 = vpop.permute.xlu0 %1301
        %1305 = vrot.lane.b32.xlu0 %v1075, 64
        %v1306 = vpop.permute.xlu0 %1305
        %1307 = vrot.lane.b32.xlu0 %v1081, 64
        %v1308 = vpop.permute.xlu0 %1307
        %1311 = vrot.lane.b32.xlu0 %v1075, 32
        %v1312 = vpop.permute.xlu0 %1311
        %1313 = vrot.lane.b32.xlu0 %v1081, 32
        %v1314 = vpop.permute.xlu0 %1313
        %1319 = vrot.lane.b32.xlu0 %v1150, 96
        %v1320 = vpop.permute.xlu0 %1319
        %1321 = vrot.lane.b32.xlu0 %v1156, 96
        %v1322 = vpop.permute.xlu0 %1321
        %1325 = vrot.lane.b32.xlu0 %v1150, 64
        %v1326 = vpop.permute.xlu0 %1325
        %1327 = vrot.lane.b32.xlu0 %v1156, 64
        %v1328 = vpop.permute.xlu0 %1327
        %1331 = vrot.lane.b32.xlu0 %v1150, 32
        %v1332 = vpop.permute.xlu0 %1331
        %1333 = vrot.lane.b32.xlu0 %v1156, 32
        %v1334 = vpop.permute.xlu0 %1333
        %1339 = vrot.lane.b32.xlu0 %v1152, 96
        %v1340 = vpop.permute.xlu0 %1339
        %1341 = vrot.lane.b32.xlu0 %v1158, 96
        %v1342 = vpop.permute.xlu0 %1341
        %1345 = vrot.lane.b32.xlu0 %v1152, 64
        %v1346 = vpop.permute.xlu0 %1345
        %1347 = vrot.lane.b32.xlu0 %v1158, 64
        %v1348 = vpop.permute.xlu0 %1347
        %1351 = vrot.lane.b32.xlu0 %v1152, 32
        %v1352 = vpop.permute.xlu0 %1351
        %1353 = vrot.lane.b32.xlu0 %v1158, 32
        %v1354 = vpop.permute.xlu0 %1353
        %1359 = vrot.lane.b32.xlu0 %v1227, 96
        %v1360 = vpop.permute.xlu0 %1359
        %1361 = vrot.lane.b32.xlu0 %v1233, 96
        %v1362 = vpop.permute.xlu0 %1361
        %1365 = vrot.lane.b32.xlu0 %v1227, 64
        %v1366 = vpop.permute.xlu0 %1365
        %1367 = vrot.lane.b32.xlu0 %v1233, 64
        %v1368 = vpop.permute.xlu0 %1367
        %1371 = vrot.lane.b32.xlu0 %v1227, 32
        %v1372 = vpop.permute.xlu0 %1371
        %1373 = vrot.lane.b32.xlu0 %v1233, 32
        %v1374 = vpop.permute.xlu0 %1373
        %1379 = vrot.lane.b32.xlu0 %v1229, 96
        %v1380 = vpop.permute.xlu0 %1379
        %1381 = vrot.lane.b32.xlu0 %v1235, 96
        %v1382 = vpop.permute.xlu0 %1381
        %1385 = vrot.lane.b32.xlu0 %v1229, 64
        %v1386 = vpop.permute.xlu0 %1385
        %1387 = vrot.lane.b32.xlu0 %v1235, 64
        %v1388 = vpop.permute.xlu0 %1387
        %1391 = vrot.lane.b32.xlu0 %v1229, 32
        %v1392 = vpop.permute.xlu0 %1391
        %1393 = vrot.lane.b32.xlu0 %v1235, 32
        %v1394 = vpop.permute.xlu0 %1393
        %v1397 = vcombine.low %v996, %v1246
        %v1398 = vcombine.high %v996, %v1246
        %v1400 = vunpack.c.l.s4 1983009808
        %v1401 = vunpack.c.0.s8 %v1400
        %v1402 = vlaneseq
        %v1403 = vshrl.u32 %v1402, 7
        %v1404 = vsub.s32 %v1401, %v1403
        %v1405 = vrot.slane %v1397, %v1404
        %v1407 = vunpack.c.l.s4 1983009808
        %v1408 = vunpack.c.0.s8 %v1407
        %v1409 = vlaneseq
        %v1410 = vshrl.u32 %v1409, 7
        %v1411 = vsub.s32 %v1408, %v1410
        %v1412 = vrot.slane %v1398, %v1411
        %v1413 = vcombine.low %v1240, %v1252
        %v1414 = vcombine.high %v1240, %v1252
        %v1416 = vunpack.c.l.s4 1983009808
        %v1417 = vunpack.c.0.s8 %v1416
        %v1418 = vlaneseq
        %v1419 = vshrl.u32 %v1418, 7
        %v1420 = vsub.s32 %v1417, %v1419
        %v1421 = vrot.slane %v1413, %v1420
        %v1423 = vunpack.c.l.s4 1983009808
        %v1424 = vunpack.c.0.s8 %v1423
        %v1425 = vlaneseq
        %v1426 = vshrl.u32 %v1425, 7
        %v1427 = vsub.s32 %v1424, %v1426
        %v1428 = vrot.slane %v1414, %v1427
        %v1429 = vcombine.low %v998, %v1266
        %v1430 = vcombine.high %v998, %v1266
        %v1432 = vunpack.c.l.s4 1983009808
        %v1433 = vunpack.c.0.s8 %v1432
        %v1434 = vlaneseq
        %v1435 = vshrl.u32 %v1434, 7
        %v1436 = vsub.s32 %v1433, %v1435
        %v1437 = vrot.slane %v1429, %v1436
        %v1439 = vunpack.c.l.s4 1983009808
        %v1440 = vunpack.c.0.s8 %v1439
        %v1441 = vlaneseq
        %v1442 = vshrl.u32 %v1441, 7
        %v1443 = vsub.s32 %v1440, %v1442
        %v1444 = vrot.slane %v1430, %v1443
        %v1445 = vcombine.low %v1260, %v1272
        %v1446 = vcombine.high %v1260, %v1272
        %v1448 = vunpack.c.l.s4 1983009808
        %v1449 = vunpack.c.0.s8 %v1448
        %v1450 = vlaneseq
        %v1451 = vshrl.u32 %v1450, 7
        %v1452 = vsub.s32 %v1449, %v1451
        %v1453 = vrot.slane %v1445, %v1452
        %v1455 = vunpack.c.l.s4 1983009808
        %v1456 = vunpack.c.0.s8 %v1455
        %v1457 = vlaneseq
        %v1458 = vshrl.u32 %v1457, 7
        %v1459 = vsub.s32 %v1456, %v1458
        %v1460 = vrot.slane %v1446, %v1459
        %v1461 = vcombine.low %v1405, %v1421
        %v1462 = vcombine.high %v1405, %v1421
        %v1464 = vunpack.c.l.s4 1934713408
        %v1465 = vunpack.c.0.s8 %v1464
        %v1466 = vlaneseq
        %v1467 = vshrl.u32 %v1466, 7
        %v1468 = vsub.s32 %v1465, %v1467
        %v1469 = vrot.slane %v1461, %v1468
        %v1471 = vunpack.c.l.s4 1934713408
        %v1472 = vunpack.c.0.s8 %v1471
        %v1473 = vlaneseq
        %v1474 = vshrl.u32 %v1473, 7
        %v1475 = vsub.s32 %v1472, %v1474
        %v1476 = vrot.slane %v1462, %v1475
        %v1477 = vcombine.low %v1412, %v1428
        %v1478 = vcombine.high %v1412, %v1428
        %v1480 = vunpack.c.l.s4 1934713408
        %v1481 = vunpack.c.0.s8 %v1480
        %v1482 = vlaneseq
        %v1483 = vshrl.u32 %v1482, 7
        %v1484 = vsub.s32 %v1481, %v1483
        %v1485 = vrot.slane %v1477, %v1484
        %v1487 = vunpack.c.l.s4 1934713408
        %v1488 = vunpack.c.0.s8 %v1487
        %v1489 = vlaneseq
        %v1490 = vshrl.u32 %v1489, 7
        %v1491 = vsub.s32 %v1488, %v1490
        %v1492 = vrot.slane %v1478, %v1491
        %v1493 = vcombine.low %v1437, %v1453
        %v1494 = vcombine.high %v1437, %v1453
        %v1496 = vunpack.c.l.s4 1934713408
        %v1497 = vunpack.c.0.s8 %v1496
        %v1498 = vlaneseq
        %v1499 = vshrl.u32 %v1498, 7
        %v1500 = vsub.s32 %v1497, %v1499
        %v1501 = vrot.slane %v1493, %v1500
        %v1503 = vunpack.c.l.s4 1934713408
        %v1504 = vunpack.c.0.s8 %v1503
        %v1505 = vlaneseq
        %v1506 = vshrl.u32 %v1505, 7
        %v1507 = vsub.s32 %v1504, %v1506
        %v1508 = vrot.slane %v1494, %v1507
        %v1509 = vcombine.low %v1444, %v1460
        %v1510 = vcombine.high %v1444, %v1460
        %v1512 = vunpack.c.l.s4 1934713408
        %v1513 = vunpack.c.0.s8 %v1512
        %v1514 = vlaneseq
        %v1515 = vshrl.u32 %v1514, 7
        %v1516 = vsub.s32 %v1513, %v1515
        %v1517 = vrot.slane %v1509, %v1516
        %v1519 = vunpack.c.l.s4 1934713408
        %v1520 = vunpack.c.0.s8 %v1519
        %v1521 = vlaneseq
        %v1522 = vshrl.u32 %v1521, 7
        %v1523 = vsub.s32 %v1520, %v1522
        %v1524 = vrot.slane %v1510, %v1523
        %v1525 = vcombine.low %v1469, %v1501
        %v1526 = vcombine.high %v1469, %v1501
        %v1527 = vcombine.low %v1476, %v1508
        %v1528 = vcombine.high %v1476, %v1508
        %v1529 = vcombine.low %v1485, %v1517
        %v1530 = vcombine.high %v1485, %v1517
        %v1531 = vcombine.low %v1492, %v1524
        %v1532 = vcombine.high %v1492, %v1524
        %v1533 = vcombine.low %v1073, %v1286
        %v1534 = vcombine.high %v1073, %v1286
        %v1536 = vunpack.c.l.s4 1983009808
        %v1537 = vunpack.c.0.s8 %v1536
        %v1538 = vlaneseq
        %v1539 = vshrl.u32 %v1538, 7
        %v1540 = vsub.s32 %v1537, %v1539
        %v1541 = vrot.slane %v1533, %v1540
        %v1543 = vunpack.c.l.s4 1983009808
        %v1544 = vunpack.c.0.s8 %v1543
        %v1545 = vlaneseq
        %v1546 = vshrl.u32 %v1545, 7
        %v1547 = vsub.s32 %v1544, %v1546
        %v1548 = vrot.slane %v1534, %v1547
        %v1549 = vcombine.low %v1280, %v1292
        %v1550 = vcombine.high %v1280, %v1292
        %v1552 = vunpack.c.l.s4 1983009808
        %v1553 = vunpack.c.0.s8 %v1552
        %v1554 = vlaneseq
        %v1555 = vshrl.u32 %v1554, 7
        %v1556 = vsub.s32 %v1553, %v1555
        %v1557 = vrot.slane %v1549, %v1556
        %v1559 = vunpack.c.l.s4 1983009808
        %v1560 = vunpack.c.0.s8 %v1559
        %v1561 = vlaneseq
        %v1562 = vshrl.u32 %v1561, 7
        %v1563 = vsub.s32 %v1560, %v1562
        %v1564 = vrot.slane %v1550, %v1563
        %v1565 = vcombine.low %v1075, %v1306
        %v1566 = vcombine.high %v1075, %v1306
        %v1568 = vunpack.c.l.s4 1983009808
        %v1569 = vunpack.c.0.s8 %v1568
        %v1570 = vlaneseq
        %v1571 = vshrl.u32 %v1570, 7
        %v1572 = vsub.s32 %v1569, %v1571
        %v1573 = vrot.slane %v1565, %v1572
        %v1575 = vunpack.c.l.s4 1983009808
        %v1576 = vunpack.c.0.s8 %v1575
        %v1577 = vlaneseq
        %v1578 = vshrl.u32 %v1577, 7
        %v1579 = vsub.s32 %v1576, %v1578
        %v1580 = vrot.slane %v1566, %v1579
        %v1581 = vcombine.low %v1300, %v1312
        %v1582 = vcombine.high %v1300, %v1312
        %v1584 = vunpack.c.l.s4 1983009808
        %v1585 = vunpack.c.0.s8 %v1584
        %v1586 = vlaneseq
        %v1587 = vshrl.u32 %v1586, 7
        %v1588 = vsub.s32 %v1585, %v1587
        %v1589 = vrot.slane %v1581, %v1588
        %v1591 = vunpack.c.l.s4 1983009808
        %v1592 = vunpack.c.0.s8 %v1591
        %v1593 = vlaneseq
        %v1594 = vshrl.u32 %v1593, 7
        %v1595 = vsub.s32 %v1592, %v1594
        %v1596 = vrot.slane %v1582, %v1595
        %v1597 = vcombine.low %v1541, %v1557
        %v1598 = vcombine.high %v1541, %v1557
        %v1600 = vunpack.c.l.s4 1934713408
        %v1601 = vunpack.c.0.s8 %v1600
        %v1602 = vlaneseq
        %v1603 = vshrl.u32 %v1602, 7
        %v1604 = vsub.s32 %v1601, %v1603
        %v1605 = vrot.slane %v1597, %v1604
        %v1607 = vunpack.c.l.s4 1934713408
        %v1608 = vunpack.c.0.s8 %v1607
        %v1609 = vlaneseq
        %v1610 = vshrl.u32 %v1609, 7
        %v1611 = vsub.s32 %v1608, %v1610
        %v1612 = vrot.slane %v1598, %v1611
        %v1613 = vcombine.low %v1548, %v1564
        %v1614 = vcombine.high %v1548, %v1564
        %v1616 = vunpack.c.l.s4 1934713408
        %v1617 = vunpack.c.0.s8 %v1616
        %v1618 = vlaneseq
        %v1619 = vshrl.u32 %v1618, 7
        %v1620 = vsub.s32 %v1617, %v1619
        %v1621 = vrot.slane %v1613, %v1620
        %v1623 = vunpack.c.l.s4 1934713408
        %v1624 = vunpack.c.0.s8 %v1623
        %v1625 = vlaneseq
        %v1626 = vshrl.u32 %v1625, 7
        %v1627 = vsub.s32 %v1624, %v1626
        %v1628 = vrot.slane %v1614, %v1627
        %v1629 = vcombine.low %v1573, %v1589
        %v1630 = vcombine.high %v1573, %v1589
        %v1632 = vunpack.c.l.s4 1934713408
        %v1633 = vunpack.c.0.s8 %v1632
        %v1634 = vlaneseq
        %v1635 = vshrl.u32 %v1634, 7
        %v1636 = vsub.s32 %v1633, %v1635
        %v1637 = vrot.slane %v1629, %v1636
        %v1639 = vunpack.c.l.s4 1934713408
        %v1640 = vunpack.c.0.s8 %v1639
        %v1641 = vlaneseq
        %v1642 = vshrl.u32 %v1641, 7
        %v1643 = vsub.s32 %v1640, %v1642
        %v1644 = vrot.slane %v1630, %v1643
        %v1645 = vcombine.low %v1580, %v1596
        %v1646 = vcombine.high %v1580, %v1596
        %v1648 = vunpack.c.l.s4 1934713408
        %v1649 = vunpack.c.0.s8 %v1648
        %v1650 = vlaneseq
        %v1651 = vshrl.u32 %v1650, 7
        %v1652 = vsub.s32 %v1649, %v1651
        %v1653 = vrot.slane %v1645, %v1652
        %v1655 = vunpack.c.l.s4 1934713408
        %v1656 = vunpack.c.0.s8 %v1655
        %v1657 = vlaneseq
        %v1658 = vshrl.u32 %v1657, 7
        %v1659 = vsub.s32 %v1656, %v1658
        %v1660 = vrot.slane %v1646, %v1659
        %v1661 = vcombine.low %v1605, %v1637
        %v1662 = vcombine.high %v1605, %v1637
        %v1663 = vcombine.low %v1612, %v1644
        %v1664 = vcombine.high %v1612, %v1644
        %v1665 = vcombine.low %v1621, %v1653
        %v1666 = vcombine.high %v1621, %v1653
        %v1667 = vcombine.low %v1628, %v1660
        %v1668 = vcombine.high %v1628, %v1660
        %v1669 = vcombine.low %v1150, %v1326
        %v1670 = vcombine.high %v1150, %v1326
        %v1672 = vunpack.c.l.s4 1983009808
        %v1673 = vunpack.c.0.s8 %v1672
        %v1674 = vlaneseq
        %v1675 = vshrl.u32 %v1674, 7
        %v1676 = vsub.s32 %v1673, %v1675
        %v1677 = vrot.slane %v1669, %v1676
        %v1679 = vunpack.c.l.s4 1983009808
        %v1680 = vunpack.c.0.s8 %v1679
        %v1681 = vlaneseq
        %v1682 = vshrl.u32 %v1681, 7
        %v1683 = vsub.s32 %v1680, %v1682
        %v1684 = vrot.slane %v1670, %v1683
        %v1685 = vcombine.low %v1320, %v1332
        %v1686 = vcombine.high %v1320, %v1332
        %v1688 = vunpack.c.l.s4 1983009808
        %v1689 = vunpack.c.0.s8 %v1688
        %v1690 = vlaneseq
        %v1691 = vshrl.u32 %v1690, 7
        %v1692 = vsub.s32 %v1689, %v1691
        %v1693 = vrot.slane %v1685, %v1692
        %v1695 = vunpack.c.l.s4 1983009808
        %v1696 = vunpack.c.0.s8 %v1695
        %v1697 = vlaneseq
        %v1698 = vshrl.u32 %v1697, 7
        %v1699 = vsub.s32 %v1696, %v1698
        %v1700 = vrot.slane %v1686, %v1699
        %v1701 = vcombine.low %v1152, %v1346
        %v1702 = vcombine.high %v1152, %v1346
        %v1704 = vunpack.c.l.s4 1983009808
        %v1705 = vunpack.c.0.s8 %v1704
        %v1706 = vlaneseq
        %v1707 = vshrl.u32 %v1706, 7
        %v1708 = vsub.s32 %v1705, %v1707
        %v1709 = vrot.slane %v1701, %v1708
        %v1711 = vunpack.c.l.s4 1983009808
        %v1712 = vunpack.c.0.s8 %v1711
        %v1713 = vlaneseq
        %v1714 = vshrl.u32 %v1713, 7
        %v1715 = vsub.s32 %v1712, %v1714
        %v1716 = vrot.slane %v1702, %v1715
        %v1717 = vcombine.low %v1340, %v1352
        %v1718 = vcombine.high %v1340, %v1352
        %v1720 = vunpack.c.l.s4 1983009808
        %v1721 = vunpack.c.0.s8 %v1720
        %v1722 = vlaneseq
        %v1723 = vshrl.u32 %v1722, 7
        %v1724 = vsub.s32 %v1721, %v1723
        %v1725 = vrot.slane %v1717, %v1724
        %v1727 = vunpack.c.l.s4 1983009808
        %v1728 = vunpack.c.0.s8 %v1727
        %v1729 = vlaneseq
        %v1730 = vshrl.u32 %v1729, 7
        %v1731 = vsub.s32 %v1728, %v1730
        %v1732 = vrot.slane %v1718, %v1731
        %v1733 = vcombine.low %v1677, %v1693
        %v1734 = vcombine.high %v1677, %v1693
        %v1736 = vunpack.c.l.s4 1934713408
        %v1737 = vunpack.c.0.s8 %v1736
        %v1738 = vlaneseq
        %v1739 = vshrl.u32 %v1738, 7
        %v1740 = vsub.s32 %v1737, %v1739
        %v1741 = vrot.slane %v1733, %v1740
        %v1743 = vunpack.c.l.s4 1934713408
        %v1744 = vunpack.c.0.s8 %v1743
        %v1745 = vlaneseq
        %v1746 = vshrl.u32 %v1745, 7
        %v1747 = vsub.s32 %v1744, %v1746
        %v1748 = vrot.slane %v1734, %v1747
        %v1749 = vcombine.low %v1684, %v1700
        %v1750 = vcombine.high %v1684, %v1700
        %v1752 = vunpack.c.l.s4 1934713408
        %v1753 = vunpack.c.0.s8 %v1752
        %v1754 = vlaneseq
        %v1755 = vshrl.u32 %v1754, 7
        %v1756 = vsub.s32 %v1753, %v1755
        %v1757 = vrot.slane %v1749, %v1756
        %v1759 = vunpack.c.l.s4 1934713408
        %v1760 = vunpack.c.0.s8 %v1759
        %v1761 = vlaneseq
        %v1762 = vshrl.u32 %v1761, 7
        %v1763 = vsub.s32 %v1760, %v1762
        %v1764 = vrot.slane %v1750, %v1763
        %v1765 = vcombine.low %v1709, %v1725
        %v1766 = vcombine.high %v1709, %v1725
        %v1768 = vunpack.c.l.s4 1934713408
        %v1769 = vunpack.c.0.s8 %v1768
        %v1770 = vlaneseq
        %v1771 = vshrl.u32 %v1770, 7
        %v1772 = vsub.s32 %v1769, %v1771
        %v1773 = vrot.slane %v1765, %v1772
        %v1775 = vunpack.c.l.s4 1934713408
        %v1776 = vunpack.c.0.s8 %v1775
        %v1777 = vlaneseq
        %v1778 = vshrl.u32 %v1777, 7
        %v1779 = vsub.s32 %v1776, %v1778
        %v1780 = vrot.slane %v1766, %v1779
        %v1781 = vcombine.low %v1716, %v1732
        %v1782 = vcombine.high %v1716, %v1732
        %v1784 = vunpack.c.l.s4 1934713408
        %v1785 = vunpack.c.0.s8 %v1784
        %v1786 = vlaneseq
        %v1787 = vshrl.u32 %v1786, 7
        %v1788 = vsub.s32 %v1785, %v1787
        %v1789 = vrot.slane %v1781, %v1788
        %v1791 = vunpack.c.l.s4 1934713408
        %v1792 = vunpack.c.0.s8 %v1791
        %v1793 = vlaneseq
        %v1794 = vshrl.u32 %v1793, 7
        %v1795 = vsub.s32 %v1792, %v1794
        %v1796 = vrot.slane %v1782, %v1795
        %v1797 = vcombine.low %v1741, %v1773
        %v1798 = vcombine.high %v1741, %v1773
        %v1799 = vcombine.low %v1748, %v1780
        %v1800 = vcombine.high %v1748, %v1780
        %v1801 = vcombine.low %v1757, %v1789
        %v1802 = vcombine.high %v1757, %v1789
        %v1803 = vcombine.low %v1764, %v1796
        %v1804 = vcombine.high %v1764, %v1796
        %v1805 = vcombine.low %v1227, %v1366
        %v1806 = vcombine.high %v1227, %v1366
        %v1808 = vunpack.c.l.s4 1983009808
        %v1809 = vunpack.c.0.s8 %v1808
        %v1810 = vlaneseq
        %v1811 = vshrl.u32 %v1810, 7
        %v1812 = vsub.s32 %v1809, %v1811
        %v1813 = vrot.slane %v1805, %v1812
        %v1815 = vunpack.c.l.s4 1983009808
        %v1816 = vunpack.c.0.s8 %v1815
        %v1817 = vlaneseq
        %v1818 = vshrl.u32 %v1817, 7
        %v1819 = vsub.s32 %v1816, %v1818
        %v1820 = vrot.slane %v1806, %v1819
        %v1821 = vcombine.low %v1360, %v1372
        %v1822 = vcombine.high %v1360, %v1372
        %v1824 = vunpack.c.l.s4 1983009808
        %v1825 = vunpack.c.0.s8 %v1824
        %v1826 = vlaneseq
        %v1827 = vshrl.u32 %v1826, 7
        %v1828 = vsub.s32 %v1825, %v1827
        %v1829 = vrot.slane %v1821, %v1828
        %v1831 = vunpack.c.l.s4 1983009808
        %v1832 = vunpack.c.0.s8 %v1831
        %v1833 = vlaneseq
        %v1834 = vshrl.u32 %v1833, 7
        %v1835 = vsub.s32 %v1832, %v1834
        %v1836 = vrot.slane %v1822, %v1835
        %v1837 = vcombine.low %v1229, %v1386
        %v1838 = vcombine.high %v1229, %v1386
        %v1840 = vunpack.c.l.s4 1983009808
        %v1841 = vunpack.c.0.s8 %v1840
        %v1842 = vlaneseq
        %v1843 = vshrl.u32 %v1842, 7
        %v1844 = vsub.s32 %v1841, %v1843
        %v1845 = vrot.slane %v1837, %v1844
        %v1847 = vunpack.c.l.s4 1983009808
        %v1848 = vunpack.c.0.s8 %v1847
        %v1849 = vlaneseq
        %v1850 = vshrl.u32 %v1849, 7
        %v1851 = vsub.s32 %v1848, %v1850
        %v1852 = vrot.slane %v1838, %v1851
        %v1853 = vcombine.low %v1380, %v1392
        %v1854 = vcombine.high %v1380, %v1392
        %v1856 = vunpack.c.l.s4 1983009808
        %v1857 = vunpack.c.0.s8 %v1856
        %v1858 = vlaneseq
        %v1859 = vshrl.u32 %v1858, 7
        %v1860 = vsub.s32 %v1857, %v1859
        %v1861 = vrot.slane %v1853, %v1860
        %v1863 = vunpack.c.l.s4 1983009808
        %v1864 = vunpack.c.0.s8 %v1863
        %v1865 = vlaneseq
        %v1866 = vshrl.u32 %v1865, 7
        %v1867 = vsub.s32 %v1864, %v1866
        %v1868 = vrot.slane %v1854, %v1867
        %v1869 = vcombine.low %v1813, %v1829
        %v1870 = vcombine.high %v1813, %v1829
        %v1872 = vunpack.c.l.s4 1934713408
        %v1873 = vunpack.c.0.s8 %v1872
        %v1874 = vlaneseq
        %v1875 = vshrl.u32 %v1874, 7
        %v1876 = vsub.s32 %v1873, %v1875
        %v1877 = vrot.slane %v1869, %v1876
        %v1879 = vunpack.c.l.s4 1934713408
        %v1880 = vunpack.c.0.s8 %v1879
        %v1881 = vlaneseq
        %v1882 = vshrl.u32 %v1881, 7
        %v1883 = vsub.s32 %v1880, %v1882
        %v1884 = vrot.slane %v1870, %v1883
        %v1885 = vcombine.low %v1820, %v1836
        %v1886 = vcombine.high %v1820, %v1836
        %v1888 = vunpack.c.l.s4 1934713408
        %v1889 = vunpack.c.0.s8 %v1888
        %v1890 = vlaneseq
        %v1891 = vshrl.u32 %v1890, 7
        %v1892 = vsub.s32 %v1889, %v1891
        %v1893 = vrot.slane %v1885, %v1892
        %v1895 = vunpack.c.l.s4 1934713408
        %v1896 = vunpack.c.0.s8 %v1895
        %v1897 = vlaneseq
        %v1898 = vshrl.u32 %v1897, 7
        %v1899 = vsub.s32 %v1896, %v1898
        %v1900 = vrot.slane %v1886, %v1899
        %v1901 = vcombine.low %v1845, %v1861
        %v1902 = vcombine.high %v1845, %v1861
        %v1904 = vunpack.c.l.s4 1934713408
        %v1905 = vunpack.c.0.s8 %v1904
        %v1906 = vlaneseq
        %v1907 = vshrl.u32 %v1906, 7
        %v1908 = vsub.s32 %v1905, %v1907
        %v1909 = vrot.slane %v1901, %v1908
        %v1911 = vunpack.c.l.s4 1934713408
        %v1912 = vunpack.c.0.s8 %v1911
        %v1913 = vlaneseq
        %v1914 = vshrl.u32 %v1913, 7
        %v1915 = vsub.s32 %v1912, %v1914
        %v1916 = vrot.slane %v1902, %v1915
        %v1917 = vcombine.low %v1852, %v1868
        %v1918 = vcombine.high %v1852, %v1868
        %v1920 = vunpack.c.l.s4 1934713408
        %v1921 = vunpack.c.0.s8 %v1920
        %v1922 = vlaneseq
        %v1923 = vshrl.u32 %v1922, 7
        %v1924 = vsub.s32 %v1921, %v1923
        %v1925 = vrot.slane %v1917, %v1924
        %v1927 = vunpack.c.l.s4 1934713408
        %v1928 = vunpack.c.0.s8 %v1927
        %v1929 = vlaneseq
        %v1930 = vshrl.u32 %v1929, 7
        %v1931 = vsub.s32 %v1928, %v1930
        %v1932 = vrot.slane %v1918, %v1931
        %v1933 = vcombine.low %v1877, %v1909
        %v1934 = vcombine.high %v1877, %v1909
        %v1935 = vcombine.low %v1884, %v1916
        %v1936 = vcombine.high %v1884, %v1916
        %v1937 = vcombine.low %v1893, %v1925
        %v1938 = vcombine.high %v1893, %v1925
        %v1939 = vcombine.low %v1900, %v1932
        %v1940 = vcombine.high %v1900, %v1932
        %v1941 = vcombine.low %v1002, %v1248
        %v1943 = vunpack.c.l.s4 1983009808
        %v1944 = vunpack.c.0.s8 %v1943
        %v1945 = vlaneseq
        %v1946 = vshrl.u32 %v1945, 7
        %v1947 = vsub.s32 %v1944, %v1946
        %v1948 = vrot.slane %v1941, %v1947
        %v1949 = vcombine.low %v1242, %v1254
        %v1951 = vunpack.c.l.s4 1983009808
        %v1952 = vunpack.c.0.s8 %v1951
        %v1953 = vlaneseq
        %v1954 = vshrl.u32 %v1953, 7
        %v1955 = vsub.s32 %v1952, %v1954
        %v1956 = vrot.slane %v1949, %v1955
        %v1957 = vcombine.low %v1004, %v1268
        %v1959 = vunpack.c.l.s4 1983009808
        %v1960 = vunpack.c.0.s8 %v1959
        %v1961 = vlaneseq
        %v1962 = vshrl.u32 %v1961, 7
        %v1963 = vsub.s32 %v1960, %v1962
        %v1964 = vrot.slane %v1957, %v1963
        %v1965 = vcombine.low %v1262, %v1274
        %v1967 = vunpack.c.l.s4 1983009808
        %v1968 = vunpack.c.0.s8 %v1967
        %v1969 = vlaneseq
        %v1970 = vshrl.u32 %v1969, 7
        %v1971 = vsub.s32 %v1968, %v1970
        %v1972 = vrot.slane %v1965, %v1971
        %v1973 = vcombine.low %v1948, %v1956
        %v1975 = vunpack.c.l.s4 1934713408
        %v1976 = vunpack.c.0.s8 %v1975
        %v1977 = vlaneseq
        %v1978 = vshrl.u32 %v1977, 7
        %v1979 = vsub.s32 %v1976, %v1978
        %v1980 = vrot.slane %v1973, %v1979
        %v1981 = vcombine.low %v1964, %v1972
        %v1983 = vunpack.c.l.s4 1934713408
        %v1984 = vunpack.c.0.s8 %v1983
        %v1985 = vlaneseq
        %v1986 = vshrl.u32 %v1985, 7
        %v1987 = vsub.s32 %v1984, %v1986
        %v1988 = vrot.slane %v1981, %v1987
        %v1989 = vcombine.low %v1980, %v1988
        %v1990 = vcombine.high %v1980, %v1988
        %v1991 = vcombine.low %v1079, %v1288
        %v1993 = vunpack.c.l.s4 1983009808
        %v1994 = vunpack.c.0.s8 %v1993
        %v1995 = vlaneseq
        %v1996 = vshrl.u32 %v1995, 7
        %v1997 = vsub.s32 %v1994, %v1996
        %v1998 = vrot.slane %v1991, %v1997
        %v1999 = vcombine.low %v1282, %v1294
        %v2001 = vunpack.c.l.s4 1983009808
        %v2002 = vunpack.c.0.s8 %v2001
        %v2003 = vlaneseq
        %v2004 = vshrl.u32 %v2003, 7
        %v2005 = vsub.s32 %v2002, %v2004
        %v2006 = vrot.slane %v1999, %v2005
        %v2007 = vcombine.low %v1081, %v1308
        %v2009 = vunpack.c.l.s4 1983009808
        %v2010 = vunpack.c.0.s8 %v2009
        %v2011 = vlaneseq
        %v2012 = vshrl.u32 %v2011, 7
        %v2013 = vsub.s32 %v2010, %v2012
        %v2014 = vrot.slane %v2007, %v2013
        %v2015 = vcombine.low %v1302, %v1314
        %v2017 = vunpack.c.l.s4 1983009808
        %v2018 = vunpack.c.0.s8 %v2017
        %v2019 = vlaneseq
        %v2020 = vshrl.u32 %v2019, 7
        %v2021 = vsub.s32 %v2018, %v2020
        %v2022 = vrot.slane %v2015, %v2021
        %v2023 = vcombine.low %v1998, %v2006
        %v2025 = vunpack.c.l.s4 1934713408
        %v2026 = vunpack.c.0.s8 %v2025
        %v2027 = vlaneseq
        %v2028 = vshrl.u32 %v2027, 7
        %v2029 = vsub.s32 %v2026, %v2028
        %v2030 = vrot.slane %v2023, %v2029
        %v2031 = vcombine.low %v2014, %v2022
        %v2033 = vunpack.c.l.s4 1934713408
        %v2034 = vunpack.c.0.s8 %v2033
        %v2035 = vlaneseq
        %v2036 = vshrl.u32 %v2035, 7
        %v2037 = vsub.s32 %v2034, %v2036
        %v2038 = vrot.slane %v2031, %v2037
        %v2039 = vcombine.low %v2030, %v2038
        %v2040 = vcombine.high %v2030, %v2038
        %v2041 = vcombine.low %v1156, %v1328
        %v2043 = vunpack.c.l.s4 1983009808
        %v2044 = vunpack.c.0.s8 %v2043
        %v2045 = vlaneseq
        %v2046 = vshrl.u32 %v2045, 7
        %v2047 = vsub.s32 %v2044, %v2046
        %v2048 = vrot.slane %v2041, %v2047
        %v2049 = vcombine.low %v1322, %v1334
        %v2051 = vunpack.c.l.s4 1983009808
        %v2052 = vunpack.c.0.s8 %v2051
        %v2053 = vlaneseq
        %v2054 = vshrl.u32 %v2053, 7
        %v2055 = vsub.s32 %v2052, %v2054
        %v2056 = vrot.slane %v2049, %v2055
        %v2057 = vcombine.low %v1158, %v1348
        %v2059 = vunpack.c.l.s4 1983009808
        %v2060 = vunpack.c.0.s8 %v2059
        %v2061 = vlaneseq
        %v2062 = vshrl.u32 %v2061, 7
        %v2063 = vsub.s32 %v2060, %v2062
        %v2064 = vrot.slane %v2057, %v2063
        %v2065 = vcombine.low %v1342, %v1354
        %v2067 = vunpack.c.l.s4 1983009808
        %v2068 = vunpack.c.0.s8 %v2067
        %v2069 = vlaneseq
        %v2070 = vshrl.u32 %v2069, 7
        %v2071 = vsub.s32 %v2068, %v2070
        %v2072 = vrot.slane %v2065, %v2071
        %v2073 = vcombine.low %v2048, %v2056
        %v2075 = vunpack.c.l.s4 1934713408
        %v2076 = vunpack.c.0.s8 %v2075
        %v2077 = vlaneseq
        %v2078 = vshrl.u32 %v2077, 7
        %v2079 = vsub.s32 %v2076, %v2078
        %v2080 = vrot.slane %v2073, %v2079
        %v2081 = vcombine.low %v2064, %v2072
        %v2083 = vunpack.c.l.s4 1934713408
        %v2084 = vunpack.c.0.s8 %v2083
        %v2085 = vlaneseq
        %v2086 = vshrl.u32 %v2085, 7
        %v2087 = vsub.s32 %v2084, %v2086
        %v2088 = vrot.slane %v2081, %v2087
        %v2089 = vcombine.low %v2080, %v2088
        %v2090 = vcombine.high %v2080, %v2088
        %v2091 = vcombine.low %v1233, %v1368
        %v2093 = vunpack.c.l.s4 1983009808
        %v2094 = vunpack.c.0.s8 %v2093
        %v2095 = vlaneseq
        %v2096 = vshrl.u32 %v2095, 7
        %v2097 = vsub.s32 %v2094, %v2096
        %v2098 = vrot.slane %v2091, %v2097
        %v2099 = vcombine.low %v1362, %v1374
        %v2101 = vunpack.c.l.s4 1983009808
        %v2102 = vunpack.c.0.s8 %v2101
        %v2103 = vlaneseq
        %v2104 = vshrl.u32 %v2103, 7
        %v2105 = vsub.s32 %v2102, %v2104
        %v2106 = vrot.slane %v2099, %v2105
        %v2107 = vcombine.low %v1235, %v1388
        %v2109 = vunpack.c.l.s4 1983009808
        %v2110 = vunpack.c.0.s8 %v2109
        %v2111 = vlaneseq
        %v2112 = vshrl.u32 %v2111, 7
        %v2113 = vsub.s32 %v2110, %v2112
        %v2114 = vrot.slane %v2107, %v2113
        %v2115 = vcombine.low %v1382, %v1394
        %v2117 = vunpack.c.l.s4 1983009808
        %v2118 = vunpack.c.0.s8 %v2117
        %v2119 = vlaneseq
        %v2120 = vshrl.u32 %v2119, 7
        %v2121 = vsub.s32 %v2118, %v2120
        %v2122 = vrot.slane %v2115, %v2121
        %v2123 = vcombine.low %v2098, %v2106
        %v2125 = vunpack.c.l.s4 1934713408
        %v2126 = vunpack.c.0.s8 %v2125
        %v2127 = vlaneseq
        %v2128 = vshrl.u32 %v2127, 7
        %v2129 = vsub.s32 %v2126, %v2128
        %v2130 = vrot.slane %v2123, %v2129
        %v2131 = vcombine.low %v2114, %v2122
        %v2133 = vunpack.c.l.s4 1934713408
        %v2134 = vunpack.c.0.s8 %v2133
        %v2135 = vlaneseq
        %v2136 = vshrl.u32 %v2135, 7
        %v2137 = vsub.s32 %v2134, %v2136
        %v2138 = vrot.slane %v2131, %v2137
        %v2139 = vcombine.low %v2130, %v2138
        %v2140 = vcombine.high %v2130, %v2138
        %v2141 = vsel %vm538, %v1525, -inf
        %2142 = vmax.xlane.f32.xlu0 %v2141
        %v2143 = vpop.xlane.xlu0 %2142
        %v2144 = vsel %vm538, %v1661, -inf
        %2145 = vmax.xlane.f32.xlu0 %v2144
        %v2146 = vpop.xlane.xlu0 %2145
        %v2147 = vsel %vm538, %v1797, -inf
        %2148 = vmax.xlane.f32.xlu0 %v2147
        %v2149 = vpop.xlane.xlu0 %2148
        %v2150 = vsel %vm538, %v1933, -inf
        %2151 = vmax.xlane.f32.xlu0 %v2150
        %v2152 = vpop.xlane.xlu0 %2151
        %v2153 = vsel %vm538, %v1526, -inf
        %2154 = vmax.xlane.f32.xlu0 %v2153
        %v2155 = vpop.xlane.xlu0 %2154
        %v2156 = vsel %vm538, %v1662, -inf
        %2157 = vmax.xlane.f32.xlu0 %v2156
        %v2158 = vpop.xlane.xlu0 %2157
        %v2159 = vsel %vm538, %v1798, -inf
        %2160 = vmax.xlane.f32.xlu0 %v2159
        %v2161 = vpop.xlane.xlu0 %2160
        %v2162 = vsel %vm538, %v1934, -inf
        %2163 = vmax.xlane.f32.xlu0 %v2162
        %v2164 = vpop.xlane.xlu0 %2163
        %v2165 = vsel %vm538, %v1527, -inf
        %2166 = vmax.xlane.f32.xlu0 %v2165
        %v2167 = vpop.xlane.xlu0 %2166
        %v2168 = vsel %vm538, %v1663, -inf
        %2169 = vmax.xlane.f32.xlu0 %v2168
        %v2170 = vpop.xlane.xlu0 %2169
        %v2171 = vsel %vm538, %v1799, -inf
        %2172 = vmax.xlane.f32.xlu0 %v2171
        %v2173 = vpop.xlane.xlu0 %2172
        %v2174 = vsel %vm538, %v1935, -inf
        %2175 = vmax.xlane.f32.xlu0 %v2174
        %v2176 = vpop.xlane.xlu0 %2175
        %v2177 = vsel %vm538, %v1528, -inf
        %2178 = vmax.xlane.f32.xlu0 %v2177
        %v2179 = vpop.xlane.xlu0 %2178
        %v2180 = vsel %vm538, %v1664, -inf
        %2181 = vmax.xlane.f32.xlu0 %v2180
        %v2182 = vpop.xlane.xlu0 %2181
        %v2183 = vsel %vm538, %v1800, -inf
        %2184 = vmax.xlane.f32.xlu0 %v2183
        %v2185 = vpop.xlane.xlu0 %2184
        %v2186 = vsel %vm538, %v1936, -inf
        %2187 = vmax.xlane.f32.xlu0 %v2186
        %v2188 = vpop.xlane.xlu0 %2187
        %v2189 = vsel %vm538, %v1529, -inf
        %2190 = vmax.xlane.f32.xlu0 %v2189
        %v2191 = vpop.xlane.xlu0 %2190
        %v2192 = vsel %vm538, %v1665, -inf
        %2193 = vmax.xlane.f32.xlu0 %v2192
        %v2194 = vpop.xlane.xlu0 %2193
        %v2195 = vsel %vm538, %v1801, -inf
        %2196 = vmax.xlane.f32.xlu0 %v2195
        %v2197 = vpop.xlane.xlu0 %2196
        %v2198 = vsel %vm538, %v1937, -inf
        %2199 = vmax.xlane.f32.xlu0 %v2198
        %v2200 = vpop.xlane.xlu0 %2199
        %v2201 = vsel %vm538, %v1530, -inf
        %2202 = vmax.xlane.f32.xlu0 %v2201
        %v2203 = vpop.xlane.xlu0 %2202
        %v2204 = vsel %vm538, %v1666, -inf
        %2205 = vmax.xlane.f32.xlu0 %v2204
        %v2206 = vpop.xlane.xlu0 %2205
        %v2207 = vsel %vm538, %v1802, -inf
        %2208 = vmax.xlane.f32.xlu0 %v2207
        %v2209 = vpop.xlane.xlu0 %2208
        %v2210 = vsel %vm538, %v1938, -inf
        %2211 = vmax.xlane.f32.xlu0 %v2210
        %v2212 = vpop.xlane.xlu0 %2211
        %v2213 = vsel %vm538, %v1531, -inf
        %2214 = vmax.xlane.f32.xlu0 %v2213
        %v2215 = vpop.xlane.xlu0 %2214
        %v2216 = vsel %vm538, %v1667, -inf
        %2217 = vmax.xlane.f32.xlu0 %v2216
        %v2218 = vpop.xlane.xlu0 %2217
        %v2219 = vsel %vm538, %v1803, -inf
        %2220 = vmax.xlane.f32.xlu0 %v2219
        %v2221 = vpop.xlane.xlu0 %2220
        %v2222 = vsel %vm538, %v1939, -inf
        %2223 = vmax.xlane.f32.xlu0 %v2222
        %v2224 = vpop.xlane.xlu0 %2223
        %v2225 = vsel %vm538, %v1532, -inf
        %2226 = vmax.xlane.f32.xlu0 %v2225
        %v2227 = vpop.xlane.xlu0 %2226
        %v2228 = vsel %vm538, %v1668, -inf
        %2229 = vmax.xlane.f32.xlu0 %v2228
        %v2230 = vpop.xlane.xlu0 %2229
        %v2231 = vsel %vm538, %v1804, -inf
        %2232 = vmax.xlane.f32.xlu0 %v2231
        %v2233 = vpop.xlane.xlu0 %2232
        %v2234 = vsel %vm538, %v1940, -inf
        %2235 = vmax.xlane.f32.xlu0 %v2234
        %v2236 = vpop.xlane.xlu0 %2235
        %v2237 = vsel %vm538, %v1989, -inf
        %2238 = vmax.xlane.f32.xlu0 %v2237
        %v2239 = vpop.xlane.xlu0 %2238
        %v2240 = vsel %vm538, %v2039, -inf
        %2241 = vmax.xlane.f32.xlu0 %v2240
        %v2242 = vpop.xlane.xlu0 %2241
        %v2243 = vsel %vm538, %v2089, -inf
        %2244 = vmax.xlane.f32.xlu0 %v2243
        %v2245 = vpop.xlane.xlu0 %2244
        %v2246 = vsel %vm538, %v2139, -inf
        %2247 = vmax.xlane.f32.xlu0 %v2246
        %v2248 = vpop.xlane.xlu0 %2247
        %v2249 = vsel %vm538, %v1990, -inf
        %2250 = vmax.xlane.f32.xlu0 %v2249
        %v2251 = vpop.xlane.xlu0 %2250
        %v2252 = vsel %vm538, %v2040, -inf
        %2253 = vmax.xlane.f32.xlu0 %v2252
        %v2254 = vpop.xlane.xlu0 %2253
        %v2255 = vsel %vm538, %v2090, -inf
        %2256 = vmax.xlane.f32.xlu0 %v2255
        %v2257 = vpop.xlane.xlu0 %2256
        %v2258 = vsel %vm538, %v2140, -inf
        %2259 = vmax.xlane.f32.xlu0 %v2258
        %v2260 = vpop.xlane.xlu0 %2259
        %v2261 = vsub.f32 %v1525, %v2143
        %v2262 = vsub.f32 %v1661, %v2146
        %v2263 = vsub.f32 %v1797, %v2149
        %v2264 = vsub.f32 %v1933, %v2152
        %v2265 = vsub.f32 %v1526, %v2155
        %v2266 = vsub.f32 %v1662, %v2158
        %v2267 = vsub.f32 %v1798, %v2161
        %v2268 = vsub.f32 %v1934, %v2164
        %v2269 = vsub.f32 %v1527, %v2167
        %v2270 = vsub.f32 %v1663, %v2170
        %v2271 = vsub.f32 %v1799, %v2173
        %v2272 = vsub.f32 %v1935, %v2176
        %v2273 = vsub.f32 %v1528, %v2179
        %v2274 = vsub.f32 %v1664, %v2182
        %v2275 = vsub.f32 %v1800, %v2185
        %v2276 = vsub.f32 %v1936, %v2188
        %v2277 = vsub.f32 %v1529, %v2191
        %v2278 = vsub.f32 %v1665, %v2194
        %v2279 = vsub.f32 %v1801, %v2197
        %v2280 = vsub.f32 %v1937, %v2200
        %v2281 = vsub.f32 %v1530, %v2203
        %v2282 = vsub.f32 %v1666, %v2206
        %v2283 = vsub.f32 %v1802, %v2209
        %v2284 = vsub.f32 %v1938, %v2212
        %v2285 = vsub.f32 %v1531, %v2215
        %v2286 = vsub.f32 %v1667, %v2218
        %v2287 = vsub.f32 %v1803, %v2221
        %v2288 = vsub.f32 %v1939, %v2224
        %v2289 = vsub.f32 %v1532, %v2227
        %v2290 = vsub.f32 %v1668, %v2230
        %v2291 = vsub.f32 %v1804, %v2233
        %v2292 = vsub.f32 %v1940, %v2236
        %v2293 = vsub.f32 %v1989, %v2239
        %v2294 = vsub.f32 %v2039, %v2242
        %v2295 = vsub.f32 %v2089, %v2245
        %v2296 = vsub.f32 %v2139, %v2248
        %v2297 = vsub.f32 %v1990, %v2251
        %v2298 = vsub.f32 %v2040, %v2254
        %v2299 = vsub.f32 %v2090, %v2257
        %v2300 = vsub.f32 %v2140, %v2260
        %v2301 = vmul.f32 %v2261, 1.442695
        %v2302 = vpow.pop %v2301
        %v2303 = vmul.f32 %v2262, 1.442695
        %v2304 = vpow.pop %v2303
        %v2305 = vmul.f32 %v2263, 1.442695
        %v2306 = vpow.pop %v2305
        %v2307 = vmul.f32 %v2264, 1.442695
        %v2308 = vpow.pop %v2307
        %v2309 = vmul.f32 %v2265, 1.442695
        %v2310 = vpow.pop %v2309
        %v2311 = vmul.f32 %v2266, 1.442695
        %v2312 = vpow.pop %v2311
        %v2313 = vmul.f32 %v2267, 1.442695
        %v2314 = vpow.pop %v2313
        %v2315 = vmul.f32 %v2268, 1.442695
        %v2316 = vpow.pop %v2315
        %v2317 = vmul.f32 %v2269, 1.442695
        %v2318 = vpow.pop %v2317
        %v2319 = vmul.f32 %v2270, 1.442695
        %v2320 = vpow.pop %v2319
        %v2321 = vmul.f32 %v2271, 1.442695
        %v2322 = vpow.pop %v2321
        %v2323 = vmul.f32 %v2272, 1.442695
        %v2324 = vpow.pop %v2323
        %v2325 = vmul.f32 %v2273, 1.442695
        %v2326 = vpow.pop %v2325
        %v2327 = vmul.f32 %v2274, 1.442695
        %v2328 = vpow.pop %v2327
        %v2329 = vmul.f32 %v2275, 1.442695
        %v2330 = vpow.pop %v2329
        %v2331 = vmul.f32 %v2276, 1.442695
        %v2332 = vpow.pop %v2331
        %v2333 = vmul.f32 %v2277, 1.442695
        %v2334 = vpow.pop %v2333
        %v2335 = vmul.f32 %v2278, 1.442695
        %v2336 = vpow.pop %v2335
        %v2337 = vmul.f32 %v2279, 1.442695
        %v2338 = vpow.pop %v2337
        %v2339 = vmul.f32 %v2280, 1.442695
        %v2340 = vpow.pop %v2339
        %v2341 = vmul.f32 %v2281, 1.442695
        %v2342 = vpow.pop %v2341
        %v2343 = vmul.f32 %v2282, 1.442695
        %v2344 = vpow.pop %v2343
        %v2345 = vmul.f32 %v2283, 1.442695
        %v2346 = vpow.pop %v2345
        %v2347 = vmul.f32 %v2284, 1.442695
        %v2348 = vpow.pop %v2347
        %v2349 = vmul.f32 %v2285, 1.442695
        %v2350 = vpow.pop %v2349
        %v2351 = vmul.f32 %v2286, 1.442695
        %v2352 = vpow.pop %v2351
        %v2353 = vmul.f32 %v2287, 1.442695
        %v2354 = vpow.pop %v2353
        %v2355 = vmul.f32 %v2288, 1.442695
        %v2356 = vpow.pop %v2355
        %v2357 = vmul.f32 %v2289, 1.442695
        %v2358 = vpow.pop %v2357
        %v2359 = vmul.f32 %v2290, 1.442695
        %v2360 = vpow.pop %v2359
        %v2361 = vmul.f32 %v2291, 1.442695
        %v2362 = vpow.pop %v2361
        %v2363 = vmul.f32 %v2292, 1.442695
        %v2364 = vpow.pop %v2363
        %v2365 = vmul.f32 %v2293, 1.442695
        %v2366 = vpow.pop %v2365
        %v2367 = vmul.f32 %v2294, 1.442695
        %v2368 = vpow.pop %v2367
        %v2369 = vmul.f32 %v2295, 1.442695
        %v2370 = vpow.pop %v2369
        %v2371 = vmul.f32 %v2296, 1.442695
        %v2372 = vpow.pop %v2371
        %v2373 = vmul.f32 %v2297, 1.442695
        %v2374 = vpow.pop %v2373
        %v2375 = vmul.f32 %v2298, 1.442695
        %v2376 = vpow.pop %v2375
        %v2377 = vmul.f32 %v2299, 1.442695
        %v2378 = vpow.pop %v2377
        %v2379 = vmul.f32 %v2300, 1.442695
        %v2380 = vpow.pop %v2379
        %v2381 = vsel %vm538, %v2302, 0.0
        %2382 = vadd.xlane.f32.xlu0 %v2381
        %v2383 = vpop.xlane.xlu0 %2382
        %v2384 = vsel %vm538, %v2304, 0.0
        %2385 = vadd.xlane.f32.xlu0 %v2384
        %v2386 = vpop.xlane.xlu0 %2385
        %v2387 = vsel %vm538, %v2306, 0.0
        %2388 = vadd.xlane.f32.xlu0 %v2387
        %v2389 = vpop.xlane.xlu0 %2388
        %v2390 = vsel %vm538, %v2308, 0.0
        %2391 = vadd.xlane.f32.xlu0 %v2390
        %v2392 = vpop.xlane.xlu0 %2391
        %v2393 = vsel %vm538, %v2310, 0.0
        %2394 = vadd.xlane.f32.xlu0 %v2393
        %v2395 = vpop.xlane.xlu0 %2394
        %v2396 = vsel %vm538, %v2312, 0.0
        %2397 = vadd.xlane.f32.xlu0 %v2396
        %v2398 = vpop.xlane.xlu0 %2397
        %v2399 = vsel %vm538, %v2314, 0.0
        %2400 = vadd.xlane.f32.xlu0 %v2399
        %v2401 = vpop.xlane.xlu0 %2400
        %v2402 = vsel %vm538, %v2316, 0.0
        %2403 = vadd.xlane.f32.xlu0 %v2402
        %v2404 = vpop.xlane.xlu0 %2403
        %v2405 = vsel %vm538, %v2318, 0.0
        %2406 = vadd.xlane.f32.xlu0 %v2405
        %v2407 = vpop.xlane.xlu0 %2406
        %v2408 = vsel %vm538, %v2320, 0.0
        %2409 = vadd.xlane.f32.xlu0 %v2408
        %v2410 = vpop.xlane.xlu0 %2409
        %v2411 = vsel %vm538, %v2322, 0.0
        %2412 = vadd.xlane.f32.xlu0 %v2411
        %v2413 = vpop.xlane.xlu0 %2412
        %v2414 = vsel %vm538, %v2324, 0.0
        %2415 = vadd.xlane.f32.xlu0 %v2414
        %v2416 = vpop.xlane.xlu0 %2415
        %v2417 = vsel %vm538, %v2326, 0.0
        %2418 = vadd.xlane.f32.xlu0 %v2417
        %v2419 = vpop.xlane.xlu0 %2418
        %v2420 = vsel %vm538, %v2328, 0.0
        %2421 = vadd.xlane.f32.xlu0 %v2420
        %v2422 = vpop.xlane.xlu0 %2421
        %v2423 = vsel %vm538, %v2330, 0.0
        %2424 = vadd.xlane.f32.xlu0 %v2423
        %v2425 = vpop.xlane.xlu0 %2424
        %v2426 = vsel %vm538, %v2332, 0.0
        %2427 = vadd.xlane.f32.xlu0 %v2426
        %v2428 = vpop.xlane.xlu0 %2427
        %v2429 = vsel %vm538, %v2334, 0.0
        %2430 = vadd.xlane.f32.xlu0 %v2429
        %v2431 = vpop.xlane.xlu0 %2430
        %v2432 = vsel %vm538, %v2336, 0.0
        %2433 = vadd.xlane.f32.xlu0 %v2432
        %v2434 = vpop.xlane.xlu0 %2433
        %v2435 = vsel %vm538, %v2338, 0.0
        %2436 = vadd.xlane.f32.xlu0 %v2435
        %v2437 = vpop.xlane.xlu0 %2436
        %v2438 = vsel %vm538, %v2340, 0.0
        %2439 = vadd.xlane.f32.xlu0 %v2438
        %v2440 = vpop.xlane.xlu0 %2439
        %v2441 = vsel %vm538, %v2342, 0.0
        %2442 = vadd.xlane.f32.xlu0 %v2441
        %v2443 = vpop.xlane.xlu0 %2442
        %v2444 = vsel %vm538, %v2344, 0.0
        %2445 = vadd.xlane.f32.xlu0 %v2444
        %v2446 = vpop.xlane.xlu0 %2445
        %v2447 = vsel %vm538, %v2346, 0.0
        %2448 = vadd.xlane.f32.xlu0 %v2447
        %v2449 = vpop.xlane.xlu0 %2448
        %v2450 = vsel %vm538, %v2348, 0.0
        %2451 = vadd.xlane.f32.xlu0 %v2450
        %v2452 = vpop.xlane.xlu0 %2451
        %v2453 = vsel %vm538, %v2350, 0.0
        %2454 = vadd.xlane.f32.xlu0 %v2453
        %v2455 = vpop.xlane.xlu0 %2454
        %v2456 = vsel %vm538, %v2352, 0.0
        %2457 = vadd.xlane.f32.xlu0 %v2456
        %v2458 = vpop.xlane.xlu0 %2457
        %v2459 = vsel %vm538, %v2354, 0.0
        %2460 = vadd.xlane.f32.xlu0 %v2459
        %v2461 = vpop.xlane.xlu0 %2460
        %v2462 = vsel %vm538, %v2356, 0.0
        %2463 = vadd.xlane.f32.xlu0 %v2462
        %v2464 = vpop.xlane.xlu0 %2463
        %v2465 = vsel %vm538, %v2358, 0.0
        %2466 = vadd.xlane.f32.xlu0 %v2465
        %v2467 = vpop.xlane.xlu0 %2466
        %v2468 = vsel %vm538, %v2360, 0.0
        %2469 = vadd.xlane.f32.xlu0 %v2468
        %v2470 = vpop.xlane.xlu0 %2469
        %v2471 = vsel %vm538, %v2362, 0.0
        %2472 = vadd.xlane.f32.xlu0 %v2471
        %v2473 = vpop.xlane.xlu0 %2472
        %v2474 = vsel %vm538, %v2364, 0.0
        %2475 = vadd.xlane.f32.xlu0 %v2474
        %v2476 = vpop.xlane.xlu0 %2475
        %v2477 = vsel %vm538, %v2366, 0.0
        %2478 = vadd.xlane.f32.xlu0 %v2477
        %v2479 = vpop.xlane.xlu0 %2478
        %v2480 = vsel %vm538, %v2368, 0.0
        %2481 = vadd.xlane.f32.xlu0 %v2480
        %v2482 = vpop.xlane.xlu0 %2481
        %v2483 = vsel %vm538, %v2370, 0.0
        %2484 = vadd.xlane.f32.xlu0 %v2483
        %v2485 = vpop.xlane.xlu0 %2484
        %v2486 = vsel %vm538, %v2372, 0.0
        %2487 = vadd.xlane.f32.xlu0 %v2486
        %v2488 = vpop.xlane.xlu0 %2487
        %v2489 = vsel %vm538, %v2374, 0.0
        %2490 = vadd.xlane.f32.xlu0 %v2489
        %v2491 = vpop.xlane.xlu0 %2490
        %v2492 = vsel %vm538, %v2376, 0.0
        %2493 = vadd.xlane.f32.xlu0 %v2492
        %v2494 = vpop.xlane.xlu0 %2493
        %v2495 = vsel %vm538, %v2378, 0.0
        %2496 = vadd.xlane.f32.xlu0 %v2495
        %v2497 = vpop.xlane.xlu0 %2496
        %v2498 = vsel %vm538, %v2380, 0.0
        %2499 = vadd.xlane.f32.xlu0 %v2498
        %v2500 = vpop.xlane.xlu0 %2499
        %v2501 = vrcp.pop %v2383
        %v2502 = vmul.f32 %v2302, %v2501
        %v2503 = vrcp.pop %v2386
        %v2504 = vmul.f32 %v2304, %v2503
        %v2505 = vrcp.pop %v2389
        %v2506 = vmul.f32 %v2306, %v2505
        %v2507 = vrcp.pop %v2392
        %v2508 = vmul.f32 %v2308, %v2507
        %v2509 = vrcp.pop %v2395
        %v2510 = vmul.f32 %v2310, %v2509
        %v2511 = vrcp.pop %v2398
        %v2512 = vmul.f32 %v2312, %v2511
        %v2513 = vrcp.pop %v2401
        %v2514 = vmul.f32 %v2314, %v2513
        %v2515 = vrcp.pop %v2404
        %v2516 = vmul.f32 %v2316, %v2515
        %v2517 = vrcp.pop %v2407
        %v2518 = vmul.f32 %v2318, %v2517
        %v2519 = vrcp.pop %v2410
        %v2520 = vmul.f32 %v2320, %v2519
        %v2521 = vrcp.pop %v2413
        %v2522 = vmul.f32 %v2322, %v2521
        %v2523 = vrcp.pop %v2416
        %v2524 = vmul.f32 %v2324, %v2523
        %v2525 = vrcp.pop %v2419
        %v2526 = vmul.f32 %v2326, %v2525
        %v2527 = vrcp.pop %v2422
        %v2528 = vmul.f32 %v2328, %v2527
        %v2529 = vrcp.pop %v2425
        %v2530 = vmul.f32 %v2330, %v2529
        %v2531 = vrcp.pop %v2428
        %v2532 = vmul.f32 %v2332, %v2531
        %v2533 = vrcp.pop %v2431
        %v2534 = vmul.f32 %v2334, %v2533
        %v2535 = vrcp.pop %v2434
        %v2536 = vmul.f32 %v2336, %v2535
        %v2537 = vrcp.pop %v2437
        %v2538 = vmul.f32 %v2338, %v2537
        %v2539 = vrcp.pop %v2440
        %v2540 = vmul.f32 %v2340, %v2539
        %v2541 = vrcp.pop %v2443
        %v2542 = vmul.f32 %v2342, %v2541
        %v2543 = vrcp.pop %v2446
        %v2544 = vmul.f32 %v2344, %v2543
        %v2545 = vrcp.pop %v2449
        %v2546 = vmul.f32 %v2346, %v2545
        %v2547 = vrcp.pop %v2452
        %v2548 = vmul.f32 %v2348, %v2547
        %v2549 = vrcp.pop %v2455
        %v2550 = vmul.f32 %v2350, %v2549
        %v2551 = vrcp.pop %v2458
        %v2552 = vmul.f32 %v2352, %v2551
        %v2553 = vrcp.pop %v2461
        %v2554 = vmul.f32 %v2354, %v2553
        %v2555 = vrcp.pop %v2464
        %v2556 = vmul.f32 %v2356, %v2555
        %v2557 = vrcp.pop %v2467
        %v2558 = vmul.f32 %v2358, %v2557
        %v2559 = vrcp.pop %v2470
        %v2560 = vmul.f32 %v2360, %v2559
        %v2561 = vrcp.pop %v2473
        %v2562 = vmul.f32 %v2362, %v2561
        %v2563 = vrcp.pop %v2476
        %v2564 = vmul.f32 %v2364, %v2563
        %v2565 = vrcp.pop %v2479
        %v2566 = vmul.f32 %v2366, %v2565
        %v2567 = vrcp.pop %v2482
        %v2568 = vmul.f32 %v2368, %v2567
        %v2569 = vrcp.pop %v2485
        %v2570 = vmul.f32 %v2370, %v2569
        %v2571 = vrcp.pop %v2488
        %v2572 = vmul.f32 %v2372, %v2571
        %v2573 = vrcp.pop %v2491
        %v2574 = vmul.f32 %v2374, %v2573
        %v2575 = vrcp.pop %v2494
        %v2576 = vmul.f32 %v2376, %v2575
        %v2577 = vrcp.pop %v2497
        %v2578 = vmul.f32 %v2378, %v2577
        %v2579 = vrcp.pop %v2500
        %v2580 = vmul.f32 %v2380, %v2579
        %v2581 = vld [vmem:[%s272] sm:$0xff]
        %v2582 = vld [vmem:[%s272 + $0x8] sm:$0xff]
        %v2583 = vld [vmem:[%s272 + $0x10] sm:$0xff]
        %v2584 = vld [vmem:[%s272 + $0x18] sm:$0xff]
        %v2585 = vld [vmem:[%s272 + $0x20] sm:$0xff]
        %v2586 = vld [vmem:[%s272 + $0x28] sm:$0xff]
        %v2587 = vld [vmem:[%s272 + $0x30] sm:$0xff]
        %v2588 = vld [vmem:[%s272 + $0x38] sm:$0xff]
        %v2589 = vld [vmem:[%s272 + $0x40] sm:$0x3]
        %v2590 = vld [vmem:[%s272 + $0x48] sm:$0x3]
        %v2591 = vld [vmem:[%s272 + $0x50] sm:$0x3]
        %v2592 = vld [vmem:[%s272 + $0x58] sm:$0x3]
        %v2593 = vld [vmem:[%s272 + $0x60] sm:$0x3]
        %v2594 = vld [vmem:[%s272 + $0x68] sm:$0x3]
        %v2595 = vld [vmem:[%s272 + $0x70] sm:$0x3]
        %v2596 = vld [vmem:[%s272 + $0x78] sm:$0x3]
        %2597 = vrot.lane.b32.xlu0 %v2581, 96
        %v2598 = vpop.permute.xlu0 %2597
        %2599 = vrot.lane.b32.xlu0 %v2589, 96
        %v2600 = vpop.permute.xlu0 %2599
        %2601 = vrot.lane.b32.xlu0 %v2581, 64
        %v2602 = vpop.permute.xlu0 %2601
        %2603 = vrot.lane.b32.xlu0 %v2589, 64
        %v2604 = vpop.permute.xlu0 %2603
        %2605 = vrot.lane.b32.xlu0 %v2581, 32
        %v2606 = vpop.permute.xlu0 %2605
        %2607 = vrot.lane.b32.xlu0 %v2589, 32
        %v2608 = vpop.permute.xlu0 %2607
        %2609 = vrot.lane.b32.xlu0 %v2582, 96
        %v2610 = vpop.permute.xlu0 %2609
        %2611 = vrot.lane.b32.xlu0 %v2590, 96
        %v2612 = vpop.permute.xlu0 %2611
        %2613 = vrot.lane.b32.xlu0 %v2582, 64
        %v2614 = vpop.permute.xlu0 %2613
        %2615 = vrot.lane.b32.xlu0 %v2590, 64
        %v2616 = vpop.permute.xlu0 %2615
        %2617 = vrot.lane.b32.xlu0 %v2582, 32
        %v2618 = vpop.permute.xlu0 %2617
        %2619 = vrot.lane.b32.xlu0 %v2590, 32
        %v2620 = vpop.permute.xlu0 %2619
        %2621 = vrot.lane.b32.xlu0 %v2583, 96
        %v2622 = vpop.permute.xlu0 %2621
        %2623 = vrot.lane.b32.xlu0 %v2591, 96
        %v2624 = vpop.permute.xlu0 %2623
        %2625 = vrot.lane.b32.xlu0 %v2583, 64
        %v2626 = vpop.permute.xlu0 %2625
        %2627 = vrot.lane.b32.xlu0 %v2591, 64
        %v2628 = vpop.permute.xlu0 %2627
        %2629 = vrot.lane.b32.xlu0 %v2583, 32
        %v2630 = vpop.permute.xlu0 %2629
        %2631 = vrot.lane.b32.xlu0 %v2591, 32
        %v2632 = vpop.permute.xlu0 %2631
        %2633 = vrot.lane.b32.xlu0 %v2584, 96
        %v2634 = vpop.permute.xlu0 %2633
        %2635 = vrot.lane.b32.xlu0 %v2592, 96
        %v2636 = vpop.permute.xlu0 %2635
        %2637 = vrot.lane.b32.xlu0 %v2584, 64
        %v2638 = vpop.permute.xlu0 %2637
        %2639 = vrot.lane.b32.xlu0 %v2592, 64
        %v2640 = vpop.permute.xlu0 %2639
        %2641 = vrot.lane.b32.xlu0 %v2584, 32
        %v2642 = vpop.permute.xlu0 %2641
        %2643 = vrot.lane.b32.xlu0 %v2592, 32
        %v2644 = vpop.permute.xlu0 %2643
        %2645 = vrot.lane.b32.xlu0 %v2585, 96
        %v2646 = vpop.permute.xlu0 %2645
        %2647 = vrot.lane.b32.xlu0 %v2593, 96
        %v2648 = vpop.permute.xlu0 %2647
        %2649 = vrot.lane.b32.xlu0 %v2585, 64
        %v2650 = vpop.permute.xlu0 %2649
        %2651 = vrot.lane.b32.xlu0 %v2593, 64
        %v2652 = vpop.permute.xlu0 %2651
        %2653 = vrot.lane.b32.xlu0 %v2585, 32
        %v2654 = vpop.permute.xlu0 %2653
        %2655 = vrot.lane.b32.xlu0 %v2593, 32
        %v2656 = vpop.permute.xlu0 %2655
        %2657 = vrot.lane.b32.xlu0 %v2586, 96
        %v2658 = vpop.permute.xlu0 %2657
        %2659 = vrot.lane.b32.xlu0 %v2594, 96
        %v2660 = vpop.permute.xlu0 %2659
        %2661 = vrot.lane.b32.xlu0 %v2586, 64
        %v2662 = vpop.permute.xlu0 %2661
        %2663 = vrot.lane.b32.xlu0 %v2594, 64
        %v2664 = vpop.permute.xlu0 %2663
        %2665 = vrot.lane.b32.xlu0 %v2586, 32
        %v2666 = vpop.permute.xlu0 %2665
        %2667 = vrot.lane.b32.xlu0 %v2594, 32
        %v2668 = vpop.permute.xlu0 %2667
        %2669 = vrot.lane.b32.xlu0 %v2587, 96
        %v2670 = vpop.permute.xlu0 %2669
        %2671 = vrot.lane.b32.xlu0 %v2595, 96
        %v2672 = vpop.permute.xlu0 %2671
        %2673 = vrot.lane.b32.xlu0 %v2587, 64
        %v2674 = vpop.permute.xlu0 %2673
        %2675 = vrot.lane.b32.xlu0 %v2595, 64
        %v2676 = vpop.permute.xlu0 %2675
        %2677 = vrot.lane.b32.xlu0 %v2587, 32
        %v2678 = vpop.permute.xlu0 %2677
        %2679 = vrot.lane.b32.xlu0 %v2595, 32
        %v2680 = vpop.permute.xlu0 %2679
        %2681 = vrot.lane.b32.xlu0 %v2588, 96
        %v2682 = vpop.permute.xlu0 %2681
        %2683 = vrot.lane.b32.xlu0 %v2596, 96
        %v2684 = vpop.permute.xlu0 %2683
        %2685 = vrot.lane.b32.xlu0 %v2588, 64
        %v2686 = vpop.permute.xlu0 %2685
        %2687 = vrot.lane.b32.xlu0 %v2596, 64
        %v2688 = vpop.permute.xlu0 %2687
        %2689 = vrot.lane.b32.xlu0 %v2588, 32
        %v2690 = vpop.permute.xlu0 %2689
        %2691 = vrot.lane.b32.xlu0 %v2596, 32
        %v2692 = vpop.permute.xlu0 %2691
        %v2693 = vcombine.low %v2581, %v2602
        %v2694 = vcombine.high %v2581, %v2602
        %v2696 = vunpack.c.l.s4 1983009808
        %v2697 = vunpack.c.0.s8 %v2696
        %v2698 = vlaneseq
        %v2699 = vshrl.u32 %v2698, 7
        %v2700 = vsub.s32 %v2697, %v2699
        %v2701 = vrot.slane %v2693, %v2700
        %v2703 = vunpack.c.l.s4 1983009808
        %v2704 = vunpack.c.0.s8 %v2703
        %v2705 = vlaneseq
        %v2706 = vshrl.u32 %v2705, 7
        %v2707 = vsub.s32 %v2704, %v2706
        %v2708 = vrot.slane %v2694, %v2707
        %v2709 = vcombine.low %v2598, %v2606
        %v2710 = vcombine.high %v2598, %v2606
        %v2712 = vunpack.c.l.s4 1983009808
        %v2713 = vunpack.c.0.s8 %v2712
        %v2714 = vlaneseq
        %v2715 = vshrl.u32 %v2714, 7
        %v2716 = vsub.s32 %v2713, %v2715
        %v2717 = vrot.slane %v2709, %v2716
        %v2719 = vunpack.c.l.s4 1983009808
        %v2720 = vunpack.c.0.s8 %v2719
        %v2721 = vlaneseq
        %v2722 = vshrl.u32 %v2721, 7
        %v2723 = vsub.s32 %v2720, %v2722
        %v2724 = vrot.slane %v2710, %v2723
        %v2725 = vcombine.low %v2582, %v2614
        %v2726 = vcombine.high %v2582, %v2614
        %v2728 = vunpack.c.l.s4 1983009808
        %v2729 = vunpack.c.0.s8 %v2728
        %v2730 = vlaneseq
        %v2731 = vshrl.u32 %v2730, 7
        %v2732 = vsub.s32 %v2729, %v2731
        %v2733 = vrot.slane %v2725, %v2732
        %v2735 = vunpack.c.l.s4 1983009808
        %v2736 = vunpack.c.0.s8 %v2735
        %v2737 = vlaneseq
        %v2738 = vshrl.u32 %v2737, 7
        %v2739 = vsub.s32 %v2736, %v2738
        %v2740 = vrot.slane %v2726, %v2739
        %v2741 = vcombine.low %v2610, %v2618
        %v2742 = vcombine.high %v2610, %v2618
        %v2744 = vunpack.c.l.s4 1983009808
        %v2745 = vunpack.c.0.s8 %v2744
        %v2746 = vlaneseq
        %v2747 = vshrl.u32 %v2746, 7
        %v2748 = vsub.s32 %v2745, %v2747
        %v2749 = vrot.slane %v2741, %v2748
        %v2751 = vunpack.c.l.s4 1983009808
        %v2752 = vunpack.c.0.s8 %v2751
        %v2753 = vlaneseq
        %v2754 = vshrl.u32 %v2753, 7
        %v2755 = vsub.s32 %v2752, %v2754
        %v2756 = vrot.slane %v2742, %v2755
        %v2757 = vcombine.low %v2701, %v2717
        %v2758 = vcombine.high %v2701, %v2717
        %v2760 = vunpack.c.l.s4 1934713408
        %v2761 = vunpack.c.0.s8 %v2760
        %v2762 = vlaneseq
        %v2763 = vshrl.u32 %v2762, 7
        %v2764 = vsub.s32 %v2761, %v2763
        %v2765 = vrot.slane %v2757, %v2764
        %v2767 = vunpack.c.l.s4 1934713408
        %v2768 = vunpack.c.0.s8 %v2767
        %v2769 = vlaneseq
        %v2770 = vshrl.u32 %v2769, 7
        %v2771 = vsub.s32 %v2768, %v2770
        %v2772 = vrot.slane %v2758, %v2771
        %v2773 = vcombine.low %v2708, %v2724
        %v2774 = vcombine.high %v2708, %v2724
        %v2776 = vunpack.c.l.s4 1934713408
        %v2777 = vunpack.c.0.s8 %v2776
        %v2778 = vlaneseq
        %v2779 = vshrl.u32 %v2778, 7
        %v2780 = vsub.s32 %v2777, %v2779
        %v2781 = vrot.slane %v2773, %v2780
        %v2783 = vunpack.c.l.s4 1934713408
        %v2784 = vunpack.c.0.s8 %v2783
        %v2785 = vlaneseq
        %v2786 = vshrl.u32 %v2785, 7
        %v2787 = vsub.s32 %v2784, %v2786
        %v2788 = vrot.slane %v2774, %v2787
        %v2789 = vcombine.low %v2733, %v2749
        %v2790 = vcombine.high %v2733, %v2749
        %v2792 = vunpack.c.l.s4 1934713408
        %v2793 = vunpack.c.0.s8 %v2792
        %v2794 = vlaneseq
        %v2795 = vshrl.u32 %v2794, 7
        %v2796 = vsub.s32 %v2793, %v2795
        %v2797 = vrot.slane %v2789, %v2796
        %v2799 = vunpack.c.l.s4 1934713408
        %v2800 = vunpack.c.0.s8 %v2799
        %v2801 = vlaneseq
        %v2802 = vshrl.u32 %v2801, 7
        %v2803 = vsub.s32 %v2800, %v2802
        %v2804 = vrot.slane %v2790, %v2803
        %v2805 = vcombine.low %v2740, %v2756
        %v2806 = vcombine.high %v2740, %v2756
        %v2808 = vunpack.c.l.s4 1934713408
        %v2809 = vunpack.c.0.s8 %v2808
        %v2810 = vlaneseq
        %v2811 = vshrl.u32 %v2810, 7
        %v2812 = vsub.s32 %v2809, %v2811
        %v2813 = vrot.slane %v2805, %v2812
        %v2815 = vunpack.c.l.s4 1934713408
        %v2816 = vunpack.c.0.s8 %v2815
        %v2817 = vlaneseq
        %v2818 = vshrl.u32 %v2817, 7
        %v2819 = vsub.s32 %v2816, %v2818
        %v2820 = vrot.slane %v2806, %v2819
        %v2821 = vcombine.low %v2765, %v2797
        %v2822 = vcombine.high %v2765, %v2797
        %v2823 = vcombine.low %v2772, %v2804
        %v2824 = vcombine.high %v2772, %v2804
        %v2825 = vcombine.low %v2781, %v2813
        %v2826 = vcombine.high %v2781, %v2813
        %v2827 = vcombine.low %v2788, %v2820
        %v2828 = vcombine.high %v2788, %v2820
        %v2829 = vcombine.low %v2583, %v2626
        %v2830 = vcombine.high %v2583, %v2626
        %v2832 = vunpack.c.l.s4 1983009808
        %v2833 = vunpack.c.0.s8 %v2832
        %v2834 = vlaneseq
        %v2835 = vshrl.u32 %v2834, 7
        %v2836 = vsub.s32 %v2833, %v2835
        %v2837 = vrot.slane %v2829, %v2836
        %v2839 = vunpack.c.l.s4 1983009808
        %v2840 = vunpack.c.0.s8 %v2839
        %v2841 = vlaneseq
        %v2842 = vshrl.u32 %v2841, 7
        %v2843 = vsub.s32 %v2840, %v2842
        %v2844 = vrot.slane %v2830, %v2843
        %v2845 = vcombine.low %v2622, %v2630
        %v2846 = vcombine.high %v2622, %v2630
        %v2848 = vunpack.c.l.s4 1983009808
        %v2849 = vunpack.c.0.s8 %v2848
        %v2850 = vlaneseq
        %v2851 = vshrl.u32 %v2850, 7
        %v2852 = vsub.s32 %v2849, %v2851
        %v2853 = vrot.slane %v2845, %v2852
        %v2855 = vunpack.c.l.s4 1983009808
        %v2856 = vunpack.c.0.s8 %v2855
        %v2857 = vlaneseq
        %v2858 = vshrl.u32 %v2857, 7
        %v2859 = vsub.s32 %v2856, %v2858
        %v2860 = vrot.slane %v2846, %v2859
        %v2861 = vcombine.low %v2584, %v2638
        %v2862 = vcombine.high %v2584, %v2638
        %v2864 = vunpack.c.l.s4 1983009808
        %v2865 = vunpack.c.0.s8 %v2864
        %v2866 = vlaneseq
        %v2867 = vshrl.u32 %v2866, 7
        %v2868 = vsub.s32 %v2865, %v2867
        %v2869 = vrot.slane %v2861, %v2868
        %v2871 = vunpack.c.l.s4 1983009808
        %v2872 = vunpack.c.0.s8 %v2871
        %v2873 = vlaneseq
        %v2874 = vshrl.u32 %v2873, 7
        %v2875 = vsub.s32 %v2872, %v2874
        %v2876 = vrot.slane %v2862, %v2875
        %v2877 = vcombine.low %v2634, %v2642
        %v2878 = vcombine.high %v2634, %v2642
        %v2880 = vunpack.c.l.s4 1983009808
        %v2881 = vunpack.c.0.s8 %v2880
        %v2882 = vlaneseq
        %v2883 = vshrl.u32 %v2882, 7
        %v2884 = vsub.s32 %v2881, %v2883
        %v2885 = vrot.slane %v2877, %v2884
        %v2887 = vunpack.c.l.s4 1983009808
        %v2888 = vunpack.c.0.s8 %v2887
        %v2889 = vlaneseq
        %v2890 = vshrl.u32 %v2889, 7
        %v2891 = vsub.s32 %v2888, %v2890
        %v2892 = vrot.slane %v2878, %v2891
        %v2893 = vcombine.low %v2837, %v2853
        %v2894 = vcombine.high %v2837, %v2853
        %v2896 = vunpack.c.l.s4 1934713408
        %v2897 = vunpack.c.0.s8 %v2896
        %v2898 = vlaneseq
        %v2899 = vshrl.u32 %v2898, 7
        %v2900 = vsub.s32 %v2897, %v2899
        %v2901 = vrot.slane %v2893, %v2900
        %v2903 = vunpack.c.l.s4 1934713408
        %v2904 = vunpack.c.0.s8 %v2903
        %v2905 = vlaneseq
        %v2906 = vshrl.u32 %v2905, 7
        %v2907 = vsub.s32 %v2904, %v2906
        %v2908 = vrot.slane %v2894, %v2907
        %v2909 = vcombine.low %v2844, %v2860
        %v2910 = vcombine.high %v2844, %v2860
        %v2912 = vunpack.c.l.s4 1934713408
        %v2913 = vunpack.c.0.s8 %v2912
        %v2914 = vlaneseq
        %v2915 = vshrl.u32 %v2914, 7
        %v2916 = vsub.s32 %v2913, %v2915
        %v2917 = vrot.slane %v2909, %v2916
        %v2919 = vunpack.c.l.s4 1934713408
        %v2920 = vunpack.c.0.s8 %v2919
        %v2921 = vlaneseq
        %v2922 = vshrl.u32 %v2921, 7
        %v2923 = vsub.s32 %v2920, %v2922
        %v2924 = vrot.slane %v2910, %v2923
        %v2925 = vcombine.low %v2869, %v2885
        %v2926 = vcombine.high %v2869, %v2885
        %v2928 = vunpack.c.l.s4 1934713408
        %v2929 = vunpack.c.0.s8 %v2928
        %v2930 = vlaneseq
        %v2931 = vshrl.u32 %v2930, 7
        %v2932 = vsub.s32 %v2929, %v2931
        %v2933 = vrot.slane %v2925, %v2932
        %v2935 = vunpack.c.l.s4 1934713408
        %v2936 = vunpack.c.0.s8 %v2935
        %v2937 = vlaneseq
        %v2938 = vshrl.u32 %v2937, 7
        %v2939 = vsub.s32 %v2936, %v2938
        %v2940 = vrot.slane %v2926, %v2939
        %v2941 = vcombine.low %v2876, %v2892
        %v2942 = vcombine.high %v2876, %v2892
        %v2944 = vunpack.c.l.s4 1934713408
        %v2945 = vunpack.c.0.s8 %v2944
        %v2946 = vlaneseq
        %v2947 = vshrl.u32 %v2946, 7
        %v2948 = vsub.s32 %v2945, %v2947
        %v2949 = vrot.slane %v2941, %v2948
        %v2951 = vunpack.c.l.s4 1934713408
        %v2952 = vunpack.c.0.s8 %v2951
        %v2953 = vlaneseq
        %v2954 = vshrl.u32 %v2953, 7
        %v2955 = vsub.s32 %v2952, %v2954
        %v2956 = vrot.slane %v2942, %v2955
        %v2957 = vcombine.low %v2901, %v2933
        %v2958 = vcombine.high %v2901, %v2933
        %v2959 = vcombine.low %v2908, %v2940
        %v2960 = vcombine.high %v2908, %v2940
        %v2961 = vcombine.low %v2917, %v2949
        %v2962 = vcombine.high %v2917, %v2949
        %v2963 = vcombine.low %v2924, %v2956
        %v2964 = vcombine.high %v2924, %v2956
        %v2965 = vcombine.low %v2585, %v2650
        %v2966 = vcombine.high %v2585, %v2650
        %v2968 = vunpack.c.l.s4 1983009808
        %v2969 = vunpack.c.0.s8 %v2968
        %v2970 = vlaneseq
        %v2971 = vshrl.u32 %v2970, 7
        %v2972 = vsub.s32 %v2969, %v2971
        %v2973 = vrot.slane %v2965, %v2972
        %v2975 = vunpack.c.l.s4 1983009808
        %v2976 = vunpack.c.0.s8 %v2975
        %v2977 = vlaneseq
        %v2978 = vshrl.u32 %v2977, 7
        %v2979 = vsub.s32 %v2976, %v2978
        %v2980 = vrot.slane %v2966, %v2979
        %v2981 = vcombine.low %v2646, %v2654
        %v2982 = vcombine.high %v2646, %v2654
        %v2984 = vunpack.c.l.s4 1983009808
        %v2985 = vunpack.c.0.s8 %v2984
        %v2986 = vlaneseq
        %v2987 = vshrl.u32 %v2986, 7
        %v2988 = vsub.s32 %v2985, %v2987
        %v2989 = vrot.slane %v2981, %v2988
        %v2991 = vunpack.c.l.s4 1983009808
        %v2992 = vunpack.c.0.s8 %v2991
        %v2993 = vlaneseq
        %v2994 = vshrl.u32 %v2993, 7
        %v2995 = vsub.s32 %v2992, %v2994
        %v2996 = vrot.slane %v2982, %v2995
        %v2997 = vcombine.low %v2586, %v2662
        %v2998 = vcombine.high %v2586, %v2662
        %v3000 = vunpack.c.l.s4 1983009808
        %v3001 = vunpack.c.0.s8 %v3000
        %v3002 = vlaneseq
        %v3003 = vshrl.u32 %v3002, 7
        %v3004 = vsub.s32 %v3001, %v3003
        %v3005 = vrot.slane %v2997, %v3004
        %v3007 = vunpack.c.l.s4 1983009808
        %v3008 = vunpack.c.0.s8 %v3007
        %v3009 = vlaneseq
        %v3010 = vshrl.u32 %v3009, 7
        %v3011 = vsub.s32 %v3008, %v3010
        %v3012 = vrot.slane %v2998, %v3011
        %v3013 = vcombine.low %v2658, %v2666
        %v3014 = vcombine.high %v2658, %v2666
        %v3016 = vunpack.c.l.s4 1983009808
        %v3017 = vunpack.c.0.s8 %v3016
        %v3018 = vlaneseq
        %v3019 = vshrl.u32 %v3018, 7
        %v3020 = vsub.s32 %v3017, %v3019
        %v3021 = vrot.slane %v3013, %v3020
        %v3023 = vunpack.c.l.s4 1983009808
        %v3024 = vunpack.c.0.s8 %v3023
        %v3025 = vlaneseq
        %v3026 = vshrl.u32 %v3025, 7
        %v3027 = vsub.s32 %v3024, %v3026
        %v3028 = vrot.slane %v3014, %v3027
        %v3029 = vcombine.low %v2973, %v2989
        %v3030 = vcombine.high %v2973, %v2989
        %v3032 = vunpack.c.l.s4 1934713408
        %v3033 = vunpack.c.0.s8 %v3032
        %v3034 = vlaneseq
        %v3035 = vshrl.u32 %v3034, 7
        %v3036 = vsub.s32 %v3033, %v3035
        %v3037 = vrot.slane %v3029, %v3036
        %v3039 = vunpack.c.l.s4 1934713408
        %v3040 = vunpack.c.0.s8 %v3039
        %v3041 = vlaneseq
        %v3042 = vshrl.u32 %v3041, 7
        %v3043 = vsub.s32 %v3040, %v3042
        %v3044 = vrot.slane %v3030, %v3043
        %v3045 = vcombine.low %v2980, %v2996
        %v3046 = vcombine.high %v2980, %v2996
        %v3048 = vunpack.c.l.s4 1934713408
        %v3049 = vunpack.c.0.s8 %v3048
        %v3050 = vlaneseq
        %v3051 = vshrl.u32 %v3050, 7
        %v3052 = vsub.s32 %v3049, %v3051
        %v3053 = vrot.slane %v3045, %v3052
        %v3055 = vunpack.c.l.s4 1934713408
        %v3056 = vunpack.c.0.s8 %v3055
        %v3057 = vlaneseq
        %v3058 = vshrl.u32 %v3057, 7
        %v3059 = vsub.s32 %v3056, %v3058
        %v3060 = vrot.slane %v3046, %v3059
        %v3061 = vcombine.low %v3005, %v3021
        %v3062 = vcombine.high %v3005, %v3021
        %v3064 = vunpack.c.l.s4 1934713408
        %v3065 = vunpack.c.0.s8 %v3064
        %v3066 = vlaneseq
        %v3067 = vshrl.u32 %v3066, 7
        %v3068 = vsub.s32 %v3065, %v3067
        %v3069 = vrot.slane %v3061, %v3068
        %v3071 = vunpack.c.l.s4 1934713408
        %v3072 = vunpack.c.0.s8 %v3071
        %v3073 = vlaneseq
        %v3074 = vshrl.u32 %v3073, 7
        %v3075 = vsub.s32 %v3072, %v3074
        %v3076 = vrot.slane %v3062, %v3075
        %v3077 = vcombine.low %v3012, %v3028
        %v3078 = vcombine.high %v3012, %v3028
        %v3080 = vunpack.c.l.s4 1934713408
        %v3081 = vunpack.c.0.s8 %v3080
        %v3082 = vlaneseq
        %v3083 = vshrl.u32 %v3082, 7
        %v3084 = vsub.s32 %v3081, %v3083
        %v3085 = vrot.slane %v3077, %v3084
        %v3087 = vunpack.c.l.s4 1934713408
        %v3088 = vunpack.c.0.s8 %v3087
        %v3089 = vlaneseq
        %v3090 = vshrl.u32 %v3089, 7
        %v3091 = vsub.s32 %v3088, %v3090
        %v3092 = vrot.slane %v3078, %v3091
        %v3093 = vcombine.low %v3037, %v3069
        %v3094 = vcombine.high %v3037, %v3069
        %v3095 = vcombine.low %v3044, %v3076
        %v3096 = vcombine.high %v3044, %v3076
        %v3097 = vcombine.low %v3053, %v3085
        %v3098 = vcombine.high %v3053, %v3085
        %v3099 = vcombine.low %v3060, %v3092
        %v3100 = vcombine.high %v3060, %v3092
        %v3101 = vcombine.low %v2587, %v2674
        %v3102 = vcombine.high %v2587, %v2674
        %v3104 = vunpack.c.l.s4 1983009808
        %v3105 = vunpack.c.0.s8 %v3104
        %v3106 = vlaneseq
        %v3107 = vshrl.u32 %v3106, 7
        %v3108 = vsub.s32 %v3105, %v3107
        %v3109 = vrot.slane %v3101, %v3108
        %v3111 = vunpack.c.l.s4 1983009808
        %v3112 = vunpack.c.0.s8 %v3111
        %v3113 = vlaneseq
        %v3114 = vshrl.u32 %v3113, 7
        %v3115 = vsub.s32 %v3112, %v3114
        %v3116 = vrot.slane %v3102, %v3115
        %v3117 = vcombine.low %v2670, %v2678
        %v3118 = vcombine.high %v2670, %v2678
        %v3120 = vunpack.c.l.s4 1983009808
        %v3121 = vunpack.c.0.s8 %v3120
        %v3122 = vlaneseq
        %v3123 = vshrl.u32 %v3122, 7
        %v3124 = vsub.s32 %v3121, %v3123
        %v3125 = vrot.slane %v3117, %v3124
        %v3127 = vunpack.c.l.s4 1983009808
        %v3128 = vunpack.c.0.s8 %v3127
        %v3129 = vlaneseq
        %v3130 = vshrl.u32 %v3129, 7
        %v3131 = vsub.s32 %v3128, %v3130
        %v3132 = vrot.slane %v3118, %v3131
        %v3133 = vcombine.low %v2588, %v2686
        %v3134 = vcombine.high %v2588, %v2686
        %v3136 = vunpack.c.l.s4 1983009808
        %v3137 = vunpack.c.0.s8 %v3136
        %v3138 = vlaneseq
        %v3139 = vshrl.u32 %v3138, 7
        %v3140 = vsub.s32 %v3137, %v3139
        %v3141 = vrot.slane %v3133, %v3140
        %v3143 = vunpack.c.l.s4 1983009808
        %v3144 = vunpack.c.0.s8 %v3143
        %v3145 = vlaneseq
        %v3146 = vshrl.u32 %v3145, 7
        %v3147 = vsub.s32 %v3144, %v3146
        %v3148 = vrot.slane %v3134, %v3147
        %v3149 = vcombine.low %v2682, %v2690
        %v3150 = vcombine.high %v2682, %v2690
        %v3152 = vunpack.c.l.s4 1983009808
        %v3153 = vunpack.c.0.s8 %v3152
        %v3154 = vlaneseq
        %v3155 = vshrl.u32 %v3154, 7
        %v3156 = vsub.s32 %v3153, %v3155
        %v3157 = vrot.slane %v3149, %v3156
        %v3159 = vunpack.c.l.s4 1983009808
        %v3160 = vunpack.c.0.s8 %v3159
        %v3161 = vlaneseq
        %v3162 = vshrl.u32 %v3161, 7
        %v3163 = vsub.s32 %v3160, %v3162
        %v3164 = vrot.slane %v3150, %v3163
        %v3165 = vcombine.low %v3109, %v3125
        %v3166 = vcombine.high %v3109, %v3125
        %v3168 = vunpack.c.l.s4 1934713408
        %v3169 = vunpack.c.0.s8 %v3168
        %v3170 = vlaneseq
        %v3171 = vshrl.u32 %v3170, 7
        %v3172 = vsub.s32 %v3169, %v3171
        %v3173 = vrot.slane %v3165, %v3172
        %v3175 = vunpack.c.l.s4 1934713408
        %v3176 = vunpack.c.0.s8 %v3175
        %v3177 = vlaneseq
        %v3178 = vshrl.u32 %v3177, 7
        %v3179 = vsub.s32 %v3176, %v3178
        %v3180 = vrot.slane %v3166, %v3179
        %v3181 = vcombine.low %v3116, %v3132
        %v3182 = vcombine.high %v3116, %v3132
        %v3184 = vunpack.c.l.s4 1934713408
        %v3185 = vunpack.c.0.s8 %v3184
        %v3186 = vlaneseq
        %v3187 = vshrl.u32 %v3186, 7
        %v3188 = vsub.s32 %v3185, %v3187
        %v3189 = vrot.slane %v3181, %v3188
        %v3191 = vunpack.c.l.s4 1934713408
        %v3192 = vunpack.c.0.s8 %v3191
        %v3193 = vlaneseq
        %v3194 = vshrl.u32 %v3193, 7
        %v3195 = vsub.s32 %v3192, %v3194
        %v3196 = vrot.slane %v3182, %v3195
        %v3197 = vcombine.low %v3141, %v3157
        %v3198 = vcombine.high %v3141, %v3157
        %v3200 = vunpack.c.l.s4 1934713408
        %v3201 = vunpack.c.0.s8 %v3200
        %v3202 = vlaneseq
        %v3203 = vshrl.u32 %v3202, 7
        %v3204 = vsub.s32 %v3201, %v3203
        %v3205 = vrot.slane %v3197, %v3204
        %v3207 = vunpack.c.l.s4 1934713408
        %v3208 = vunpack.c.0.s8 %v3207
        %v3209 = vlaneseq
        %v3210 = vshrl.u32 %v3209, 7
        %v3211 = vsub.s32 %v3208, %v3210
        %v3212 = vrot.slane %v3198, %v3211
        %v3213 = vcombine.low %v3148, %v3164
        %v3214 = vcombine.high %v3148, %v3164
        %v3216 = vunpack.c.l.s4 1934713408
        %v3217 = vunpack.c.0.s8 %v3216
        %v3218 = vlaneseq
        %v3219 = vshrl.u32 %v3218, 7
        %v3220 = vsub.s32 %v3217, %v3219
        %v3221 = vrot.slane %v3213, %v3220
        %v3223 = vunpack.c.l.s4 1934713408
        %v3224 = vunpack.c.0.s8 %v3223
        %v3225 = vlaneseq
        %v3226 = vshrl.u32 %v3225, 7
        %v3227 = vsub.s32 %v3224, %v3226
        %v3228 = vrot.slane %v3214, %v3227
        %v3229 = vcombine.low %v3173, %v3205
        %v3230 = vcombine.high %v3173, %v3205
        %v3231 = vcombine.low %v3180, %v3212
        %v3232 = vcombine.high %v3180, %v3212
        %v3233 = vcombine.low %v3189, %v3221
        %v3234 = vcombine.high %v3189, %v3221
        %v3235 = vcombine.low %v3196, %v3228
        %v3236 = vcombine.high %v3196, %v3228
        %v3237 = vcombine.low %v2589, %v2604
        %v3239 = vunpack.c.l.s4 1983009808
        %v3240 = vunpack.c.0.s8 %v3239
        %v3241 = vlaneseq
        %v3242 = vshrl.u32 %v3241, 7
        %v3243 = vsub.s32 %v3240, %v3242
        %v3244 = vrot.slane %v3237, %v3243
        %v3245 = vcombine.low %v2600, %v2608
        %v3247 = vunpack.c.l.s4 1983009808
        %v3248 = vunpack.c.0.s8 %v3247
        %v3249 = vlaneseq
        %v3250 = vshrl.u32 %v3249, 7
        %v3251 = vsub.s32 %v3248, %v3250
        %v3252 = vrot.slane %v3245, %v3251
        %v3253 = vcombine.low %v2590, %v2616
        %v3255 = vunpack.c.l.s4 1983009808
        %v3256 = vunpack.c.0.s8 %v3255
        %v3257 = vlaneseq
        %v3258 = vshrl.u32 %v3257, 7
        %v3259 = vsub.s32 %v3256, %v3258
        %v3260 = vrot.slane %v3253, %v3259
        %v3261 = vcombine.low %v2612, %v2620
        %v3263 = vunpack.c.l.s4 1983009808
        %v3264 = vunpack.c.0.s8 %v3263
        %v3265 = vlaneseq
        %v3266 = vshrl.u32 %v3265, 7
        %v3267 = vsub.s32 %v3264, %v3266
        %v3268 = vrot.slane %v3261, %v3267
        %v3269 = vcombine.low %v3244, %v3252
        %v3271 = vunpack.c.l.s4 1934713408
        %v3272 = vunpack.c.0.s8 %v3271
        %v3273 = vlaneseq
        %v3274 = vshrl.u32 %v3273, 7
        %v3275 = vsub.s32 %v3272, %v3274
        %v3276 = vrot.slane %v3269, %v3275
        %v3277 = vcombine.low %v3260, %v3268
        %v3279 = vunpack.c.l.s4 1934713408
        %v3280 = vunpack.c.0.s8 %v3279
        %v3281 = vlaneseq
        %v3282 = vshrl.u32 %v3281, 7
        %v3283 = vsub.s32 %v3280, %v3282
        %v3284 = vrot.slane %v3277, %v3283
        %v3285 = vcombine.low %v3276, %v3284
        %v3286 = vcombine.high %v3276, %v3284
        %v3287 = vcombine.low %v2591, %v2628
        %v3289 = vunpack.c.l.s4 1983009808
        %v3290 = vunpack.c.0.s8 %v3289
        %v3291 = vlaneseq
        %v3292 = vshrl.u32 %v3291, 7
        %v3293 = vsub.s32 %v3290, %v3292
        %v3294 = vrot.slane %v3287, %v3293
        %v3295 = vcombine.low %v2624, %v2632
        %v3297 = vunpack.c.l.s4 1983009808
        %v3298 = vunpack.c.0.s8 %v3297
        %v3299 = vlaneseq
        %v3300 = vshrl.u32 %v3299, 7
        %v3301 = vsub.s32 %v3298, %v3300
        %v3302 = vrot.slane %v3295, %v3301
        %v3303 = vcombine.low %v2592, %v2640
        %v3305 = vunpack.c.l.s4 1983009808
        %v3306 = vunpack.c.0.s8 %v3305
        %v3307 = vlaneseq
        %v3308 = vshrl.u32 %v3307, 7
        %v3309 = vsub.s32 %v3306, %v3308
        %v3310 = vrot.slane %v3303, %v3309
        %v3311 = vcombine.low %v2636, %v2644
        %v3313 = vunpack.c.l.s4 1983009808
        %v3314 = vunpack.c.0.s8 %v3313
        %v3315 = vlaneseq
        %v3316 = vshrl.u32 %v3315, 7
        %v3317 = vsub.s32 %v3314, %v3316
        %v3318 = vrot.slane %v3311, %v3317
        %v3319 = vcombine.low %v3294, %v3302
        %v3321 = vunpack.c.l.s4 1934713408
        %v3322 = vunpack.c.0.s8 %v3321
        %v3323 = vlaneseq
        %v3324 = vshrl.u32 %v3323, 7
        %v3325 = vsub.s32 %v3322, %v3324
        %v3326 = vrot.slane %v3319, %v3325
        %v3327 = vcombine.low %v3310, %v3318
        %v3329 = vunpack.c.l.s4 1934713408
        %v3330 = vunpack.c.0.s8 %v3329
        %v3331 = vlaneseq
        %v3332 = vshrl.u32 %v3331, 7
        %v3333 = vsub.s32 %v3330, %v3332
        %v3334 = vrot.slane %v3327, %v3333
        %v3335 = vcombine.low %v3326, %v3334
        %v3336 = vcombine.high %v3326, %v3334
        %v3337 = vcombine.low %v2593, %v2652
        %v3339 = vunpack.c.l.s4 1983009808
        %v3340 = vunpack.c.0.s8 %v3339
        %v3341 = vlaneseq
        %v3342 = vshrl.u32 %v3341, 7
        %v3343 = vsub.s32 %v3340, %v3342
        %v3344 = vrot.slane %v3337, %v3343
        %v3345 = vcombine.low %v2648, %v2656
        %v3347 = vunpack.c.l.s4 1983009808
        %v3348 = vunpack.c.0.s8 %v3347
        %v3349 = vlaneseq
        %v3350 = vshrl.u32 %v3349, 7
        %v3351 = vsub.s32 %v3348, %v3350
        %v3352 = vrot.slane %v3345, %v3351
        %v3353 = vcombine.low %v2594, %v2664
        %v3355 = vunpack.c.l.s4 1983009808
        %v3356 = vunpack.c.0.s8 %v3355
        %v3357 = vlaneseq
        %v3358 = vshrl.u32 %v3357, 7
        %v3359 = vsub.s32 %v3356, %v3358
        %v3360 = vrot.slane %v3353, %v3359
        %v3361 = vcombine.low %v2660, %v2668
        %v3363 = vunpack.c.l.s4 1983009808
        %v3364 = vunpack.c.0.s8 %v3363
        %v3365 = vlaneseq
        %v3366 = vshrl.u32 %v3365, 7
        %v3367 = vsub.s32 %v3364, %v3366
        %v3368 = vrot.slane %v3361, %v3367
        %v3369 = vcombine.low %v3344, %v3352
        %v3371 = vunpack.c.l.s4 1934713408
        %v3372 = vunpack.c.0.s8 %v3371
        %v3373 = vlaneseq
        %v3374 = vshrl.u32 %v3373, 7
        %v3375 = vsub.s32 %v3372, %v3374
        %v3376 = vrot.slane %v3369, %v3375
        %v3377 = vcombine.low %v3360, %v3368
        %v3379 = vunpack.c.l.s4 1934713408
        %v3380 = vunpack.c.0.s8 %v3379
        %v3381 = vlaneseq
        %v3382 = vshrl.u32 %v3381, 7
        %v3383 = vsub.s32 %v3380, %v3382
        %v3384 = vrot.slane %v3377, %v3383
        %v3385 = vcombine.low %v3376, %v3384
        %v3386 = vcombine.high %v3376, %v3384
        %v3387 = vcombine.low %v2595, %v2676
        %v3389 = vunpack.c.l.s4 1983009808
        %v3390 = vunpack.c.0.s8 %v3389
        %v3391 = vlaneseq
        %v3392 = vshrl.u32 %v3391, 7
        %v3393 = vsub.s32 %v3390, %v3392
        %v3394 = vrot.slane %v3387, %v3393
        %v3395 = vcombine.low %v2672, %v2680
        %v3397 = vunpack.c.l.s4 1983009808
        %v3398 = vunpack.c.0.s8 %v3397
        %v3399 = vlaneseq
        %v3400 = vshrl.u32 %v3399, 7
        %v3401 = vsub.s32 %v3398, %v3400
        %v3402 = vrot.slane %v3395, %v3401
        %v3403 = vcombine.low %v2596, %v2688
        %v3405 = vunpack.c.l.s4 1983009808
        %v3406 = vunpack.c.0.s8 %v3405
        %v3407 = vlaneseq
        %v3408 = vshrl.u32 %v3407, 7
        %v3409 = vsub.s32 %v3406, %v3408
        %v3410 = vrot.slane %v3403, %v3409
        %v3411 = vcombine.low %v2684, %v2692
        %v3413 = vunpack.c.l.s4 1983009808
        %v3414 = vunpack.c.0.s8 %v3413
        %v3415 = vlaneseq
        %v3416 = vshrl.u32 %v3415, 7
        %v3417 = vsub.s32 %v3414, %v3416
        %v3418 = vrot.slane %v3411, %v3417
        %v3419 = vcombine.low %v3394, %v3402
        %v3421 = vunpack.c.l.s4 1934713408
        %v3422 = vunpack.c.0.s8 %v3421
        %v3423 = vlaneseq
        %v3424 = vshrl.u32 %v3423, 7
        %v3425 = vsub.s32 %v3422, %v3424
        %v3426 = vrot.slane %v3419, %v3425
        %v3427 = vcombine.low %v3410, %v3418
        %v3429 = vunpack.c.l.s4 1934713408
        %v3430 = vunpack.c.0.s8 %v3429
        %v3431 = vlaneseq
        %v3432 = vshrl.u32 %v3431, 7
        %v3433 = vsub.s32 %v3430, %v3432
        %v3434 = vrot.slane %v3427, %v3433
        %v3435 = vcombine.low %v3426, %v3434
        %v3436 = vcombine.high %v3426, %v3434
        %vm3437 = vcmp.ge.u32.totalorder %v2821, 429496729
        %vm3438 = vcmp.ge.u32.totalorder %v2957, 429496729
        %vm3439 = vcmp.ge.u32.totalorder %v3093, 429496729
        %vm3440 = vcmp.ge.u32.totalorder %v3229, 429496729
        %vm3441 = vcmp.ge.u32.totalorder %v2822, 429496729
        %vm3442 = vcmp.ge.u32.totalorder %v2958, 429496729
        %vm3443 = vcmp.ge.u32.totalorder %v3094, 429496729
        %vm3444 = vcmp.ge.u32.totalorder %v3230, 429496729
        %vm3445 = vcmp.ge.u32.totalorder %v2823, 429496729
        %vm3446 = vcmp.ge.u32.totalorder %v2959, 429496729
        %vm3447 = vcmp.ge.u32.totalorder %v3095, 429496729
        %vm3448 = vcmp.ge.u32.totalorder %v3231, 429496729
        %vm3449 = vcmp.ge.u32.totalorder %v2824, 429496729
        %vm3450 = vcmp.ge.u32.totalorder %v2960, 429496729
        %vm3451 = vcmp.ge.u32.totalorder %v3096, 429496729
        %vm3452 = vcmp.ge.u32.totalorder %v3232, 429496729
        %vm3453 = vcmp.ge.u32.totalorder %v2825, 429496729
        %vm3454 = vcmp.ge.u32.totalorder %v2961, 429496729
        %vm3455 = vcmp.ge.u32.totalorder %v3097, 429496729
        %vm3456 = vcmp.ge.u32.totalorder %v3233, 429496729
        %vm3457 = vcmp.ge.u32.totalorder %v2826, 429496729
        %vm3458 = vcmp.ge.u32.totalorder %v2962, 429496729
        %vm3459 = vcmp.ge.u32.totalorder %v3098, 429496729
        %vm3460 = vcmp.ge.u32.totalorder %v3234, 429496729
        %vm3461 = vcmp.ge.u32.totalorder %v2827, 429496729
        %vm3462 = vcmp.ge.u32.totalorder %v2963, 429496729
        %vm3463 = vcmp.ge.u32.totalorder %v3099, 429496729
        %vm3464 = vcmp.ge.u32.totalorder %v3235, 429496729
        %vm3465 = vcmp.ge.u32.totalorder %v2828, 429496729
        %vm3466 = vcmp.ge.u32.totalorder %v2964, 429496729
        %vm3467 = vcmp.ge.u32.totalorder %v3100, 429496729
        %vm3468 = vcmp.ge.u32.totalorder %v3236, 429496729
        %vm3469 = vcmp.ge.u32.totalorder %v3285, 429496729
        %vm3470 = vcmp.ge.u32.totalorder %v3335, 429496729
        %vm3471 = vcmp.ge.u32.totalorder %v3385, 429496729
        %vm3472 = vcmp.ge.u32.totalorder %v3435, 429496729
        %vm3473 = vcmp.ge.u32.totalorder %v3286, 429496729
        %vm3474 = vcmp.ge.u32.totalorder %v3336, 429496729
        %vm3475 = vcmp.ge.u32.totalorder %v3386, 429496729
        %vm3476 = vcmp.ge.u32.totalorder %v3436, 429496729
        %v3477 = vmul.f32 %v2502, 1.1111112
        %v3478 = vmul.f32 %v2504, 1.1111112
        %v3479 = vmul.f32 %v2506, 1.1111112
        %v3480 = vmul.f32 %v2508, 1.1111112
        %v3481 = vmul.f32 %v2510, 1.1111112
        %v3482 = vmul.f32 %v2512, 1.1111112
        %v3483 = vmul.f32 %v2514, 1.1111112
        %v3484 = vmul.f32 %v2516, 1.1111112
        %v3485 = vmul.f32 %v2518, 1.1111112
        %v3486 = vmul.f32 %v2520, 1.1111112
        %v3487 = vmul.f32 %v2522, 1.1111112
        %v3488 = vmul.f32 %v2524, 1.1111112
        %v3489 = vmul.f32 %v2526, 1.1111112
        %v3490 = vmul.f32 %v2528, 1.1111112
        %v3491 = vmul.f32 %v2530, 1.1111112
        %v3492 = vmul.f32 %v2532, 1.1111112
        %v3493 = vmul.f32 %v2534, 1.1111112
        %v3494 = vmul.f32 %v2536, 1.1111112
        %v3495 = vmul.f32 %v2538, 1.1111112
        %v3496 = vmul.f32 %v2540, 1.1111112
        %v3497 = vmul.f32 %v2542, 1.1111112
        %v3498 = vmul.f32 %v2544, 1.1111112
        %v3499 = vmul.f32 %v2546, 1.1111112
        %v3500 = vmul.f32 %v2548, 1.1111112
        %v3501 = vmul.f32 %v2550, 1.1111112
        %v3502 = vmul.f32 %v2552, 1.1111112
        %v3503 = vmul.f32 %v2554, 1.1111112
        %v3504 = vmul.f32 %v2556, 1.1111112
        %v3505 = vmul.f32 %v2558, 1.1111112
        %v3506 = vmul.f32 %v2560, 1.1111112
        %v3507 = vmul.f32 %v2562, 1.1111112
        %v3508 = vmul.f32 %v2564, 1.1111112
        %v3509 = vmul.f32 %v2566, 1.1111112
        %v3510 = vmul.f32 %v2568, 1.1111112
        %v3511 = vmul.f32 %v2570, 1.1111112
        %v3512 = vmul.f32 %v2572, 1.1111112
        %v3513 = vmul.f32 %v2574, 1.1111112
        %v3514 = vmul.f32 %v2576, 1.1111112
        %v3515 = vmul.f32 %v2578, 1.1111112
        %v3516 = vmul.f32 %v2580, 1.1111112
        %v3517 = vsel %vm3437, %v3477, 0.0
        %v3518 = vsel %vm3438, %v3478, 0.0
        %v3519 = vsel %vm3439, %v3479, 0.0
        %v3520 = vsel %vm3440, %v3480, 0.0
        %v3521 = vsel %vm3441, %v3481, 0.0
        %v3522 = vsel %vm3442, %v3482, 0.0
        %v3523 = vsel %vm3443, %v3483, 0.0
        %v3524 = vsel %vm3444, %v3484, 0.0
        %v3525 = vsel %vm3445, %v3485, 0.0
        %v3526 = vsel %vm3446, %v3486, 0.0
        %v3527 = vsel %vm3447, %v3487, 0.0
        %v3528 = vsel %vm3448, %v3488, 0.0
        %v3529 = vsel %vm3449, %v3489, 0.0
        %v3530 = vsel %vm3450, %v3490, 0.0
        %v3531 = vsel %vm3451, %v3491, 0.0
        %v3532 = vsel %vm3452, %v3492, 0.0
        %v3533 = vsel %vm3453, %v3493, 0.0
        %v3534 = vsel %vm3454, %v3494, 0.0
        %v3535 = vsel %vm3455, %v3495, 0.0
        %v3536 = vsel %vm3456, %v3496, 0.0
        %v3537 = vsel %vm3457, %v3497, 0.0
        %v3538 = vsel %vm3458, %v3498, 0.0
        %v3539 = vsel %vm3459, %v3499, 0.0
        %v3540 = vsel %vm3460, %v3500, 0.0
        %v3541 = vsel %vm3461, %v3501, 0.0
        %v3542 = vsel %vm3462, %v3502, 0.0
        %v3543 = vsel %vm3463, %v3503, 0.0
        %v3544 = vsel %vm3464, %v3504, 0.0
        %v3545 = vsel %vm3465, %v3505, 0.0
        %v3546 = vsel %vm3466, %v3506, 0.0
        %v3547 = vsel %vm3467, %v3507, 0.0
        %v3548 = vsel %vm3468, %v3508, 0.0
        %v3549 = vsel %vm3469, %v3509, 0.0
        %v3550 = vsel %vm3470, %v3510, 0.0
        %v3551 = vsel %vm3471, %v3511, 0.0
        %v3552 = vsel %vm3472, %v3512, 0.0
        %v3553 = vsel %vm3473, %v3513, 0.0
        %v3554 = vsel %vm3474, %v3514, 0.0
        %v3555 = vsel %vm3475, %v3515, 0.0
        %v3556 = vsel %vm3476, %v3516, 0.0
        %v3557 = vcombine.low %v3517, %v3525
        %v3558 = vcombine.high %v3517, %v3525
        %v3560 = vunpack.c.l.s4 1983009808
        %v3561 = vunpack.c.0.s8 %v3560
        %v3562 = vlaneseq
        %v3563 = vshrl.u32 %v3562, 7
        %v3564 = vsub.s32 %v3561, %v3563
        %v3565 = vrot.slane %v3557, %v3564
        %v3567 = vunpack.c.l.s4 1983009808
        %v3568 = vunpack.c.0.s8 %v3567
        %v3569 = vlaneseq
        %v3570 = vshrl.u32 %v3569, 7
        %v3571 = vsub.s32 %v3568, %v3570
        %v3572 = vrot.slane %v3558, %v3571
        %v3573 = vcombine.low %v3521, %v3529
        %v3574 = vcombine.high %v3521, %v3529
        %v3576 = vunpack.c.l.s4 1983009808
        %v3577 = vunpack.c.0.s8 %v3576
        %v3578 = vlaneseq
        %v3579 = vshrl.u32 %v3578, 7
        %v3580 = vsub.s32 %v3577, %v3579
        %v3581 = vrot.slane %v3573, %v3580
        %v3583 = vunpack.c.l.s4 1983009808
        %v3584 = vunpack.c.0.s8 %v3583
        %v3585 = vlaneseq
        %v3586 = vshrl.u32 %v3585, 7
        %v3587 = vsub.s32 %v3584, %v3586
        %v3588 = vrot.slane %v3574, %v3587
        %v3589 = vcombine.low %v3533, %v3541
        %v3590 = vcombine.high %v3533, %v3541
        %v3592 = vunpack.c.l.s4 1983009808
        %v3593 = vunpack.c.0.s8 %v3592
        %v3594 = vlaneseq
        %v3595 = vshrl.u32 %v3594, 7
        %v3596 = vsub.s32 %v3593, %v3595
        %v3597 = vrot.slane %v3589, %v3596
        %v3599 = vunpack.c.l.s4 1983009808
        %v3600 = vunpack.c.0.s8 %v3599
        %v3601 = vlaneseq
        %v3602 = vshrl.u32 %v3601, 7
        %v3603 = vsub.s32 %v3600, %v3602
        %v3604 = vrot.slane %v3590, %v3603
        %v3605 = vcombine.low %v3537, %v3545
        %v3606 = vcombine.high %v3537, %v3545
        %v3608 = vunpack.c.l.s4 1983009808
        %v3609 = vunpack.c.0.s8 %v3608
        %v3610 = vlaneseq
        %v3611 = vshrl.u32 %v3610, 7
        %v3612 = vsub.s32 %v3609, %v3611
        %v3613 = vrot.slane %v3605, %v3612
        %v3615 = vunpack.c.l.s4 1983009808
        %v3616 = vunpack.c.0.s8 %v3615
        %v3617 = vlaneseq
        %v3618 = vshrl.u32 %v3617, 7
        %v3619 = vsub.s32 %v3616, %v3618
        %v3620 = vrot.slane %v3606, %v3619
        %v3621 = vcombine.low %v3565, %v3581
        %v3622 = vcombine.high %v3565, %v3581
        %v3624 = vunpack.c.l.s4 1934713408
        %v3625 = vunpack.c.0.s8 %v3624
        %v3626 = vlaneseq
        %v3627 = vshrl.u32 %v3626, 7
        %v3628 = vsub.s32 %v3625, %v3627
        %v3629 = vrot.slane %v3621, %v3628
        %v3631 = vunpack.c.l.s4 1934713408
        %v3632 = vunpack.c.0.s8 %v3631
        %v3633 = vlaneseq
        %v3634 = vshrl.u32 %v3633, 7
        %v3635 = vsub.s32 %v3632, %v3634
        %v3636 = vrot.slane %v3622, %v3635
        %v3637 = vcombine.low %v3572, %v3588
        %v3638 = vcombine.high %v3572, %v3588
        %v3640 = vunpack.c.l.s4 1934713408
        %v3641 = vunpack.c.0.s8 %v3640
        %v3642 = vlaneseq
        %v3643 = vshrl.u32 %v3642, 7
        %v3644 = vsub.s32 %v3641, %v3643
        %v3645 = vrot.slane %v3637, %v3644
        %v3647 = vunpack.c.l.s4 1934713408
        %v3648 = vunpack.c.0.s8 %v3647
        %v3649 = vlaneseq
        %v3650 = vshrl.u32 %v3649, 7
        %v3651 = vsub.s32 %v3648, %v3650
        %v3652 = vrot.slane %v3638, %v3651
        %v3653 = vcombine.low %v3597, %v3613
        %v3654 = vcombine.high %v3597, %v3613
        %v3656 = vunpack.c.l.s4 1934713408
        %v3657 = vunpack.c.0.s8 %v3656
        %v3658 = vlaneseq
        %v3659 = vshrl.u32 %v3658, 7
        %v3660 = vsub.s32 %v3657, %v3659
        %v3661 = vrot.slane %v3653, %v3660
        %v3663 = vunpack.c.l.s4 1934713408
        %v3664 = vunpack.c.0.s8 %v3663
        %v3665 = vlaneseq
        %v3666 = vshrl.u32 %v3665, 7
        %v3667 = vsub.s32 %v3664, %v3666
        %v3668 = vrot.slane %v3654, %v3667
        %v3669 = vcombine.low %v3604, %v3620
        %v3670 = vcombine.high %v3604, %v3620
        %v3672 = vunpack.c.l.s4 1934713408
        %v3673 = vunpack.c.0.s8 %v3672
        %v3674 = vlaneseq
        %v3675 = vshrl.u32 %v3674, 7
        %v3676 = vsub.s32 %v3673, %v3675
        %v3677 = vrot.slane %v3669, %v3676
        %v3679 = vunpack.c.l.s4 1934713408
        %v3680 = vunpack.c.0.s8 %v3679
        %v3681 = vlaneseq
        %v3682 = vshrl.u32 %v3681, 7
        %v3683 = vsub.s32 %v3680, %v3682
        %v3684 = vrot.slane %v3670, %v3683
        %v3685 = vcombine.low %v3629, %v3661
        %v3686 = vcombine.high %v3629, %v3661
        %v3687 = vcombine.low %v3636, %v3668
        %v3688 = vcombine.high %v3636, %v3668
        %v3689 = vcombine.low %v3645, %v3677
        %v3690 = vcombine.high %v3645, %v3677
        %v3691 = vcombine.low %v3652, %v3684
        %v3692 = vcombine.high %v3652, %v3684
        %v3693 = vcombine.high %v3549, 0.0
        %v3695 = vunpack.c.l.s4 1983009808
        %v3696 = vunpack.c.0.s8 %v3695
        %v3697 = vlaneseq
        %v3698 = vshrl.u32 %v3697, 7
        %v3699 = vsub.s32 %v3696, %v3698
        %v3700 = vrot.slane %v3549, %v3699
        %v3702 = vunpack.c.l.s4 1983009808
        %v3703 = vunpack.c.0.s8 %v3702
        %v3704 = vlaneseq
        %v3705 = vshrl.u32 %v3704, 7
        %v3706 = vsub.s32 %v3703, %v3705
        %v3707 = vrot.slane %v3693, %v3706
        %v3708 = vcombine.high %v3553, 0.0
        %v3710 = vunpack.c.l.s4 1983009808
        %v3711 = vunpack.c.0.s8 %v3710
        %v3712 = vlaneseq
        %v3713 = vshrl.u32 %v3712, 7
        %v3714 = vsub.s32 %v3711, %v3713
        %v3715 = vrot.slane %v3553, %v3714
        %v3717 = vunpack.c.l.s4 1983009808
        %v3718 = vunpack.c.0.s8 %v3717
        %v3719 = vlaneseq
        %v3720 = vshrl.u32 %v3719, 7
        %v3721 = vsub.s32 %v3718, %v3720
        %v3722 = vrot.slane %v3708, %v3721
        %v3723 = vcombine.low %v3700, %v3715
        %v3724 = vcombine.high %v3700, %v3715
        %v3726 = vunpack.c.l.s4 1934713408
        %v3727 = vunpack.c.0.s8 %v3726
        %v3728 = vlaneseq
        %v3729 = vshrl.u32 %v3728, 7
        %v3730 = vsub.s32 %v3727, %v3729
        %v3731 = vrot.slane %v3723, %v3730
        %v3733 = vunpack.c.l.s4 1934713408
        %v3734 = vunpack.c.0.s8 %v3733
        %v3735 = vlaneseq
        %v3736 = vshrl.u32 %v3735, 7
        %v3737 = vsub.s32 %v3734, %v3736
        %v3738 = vrot.slane %v3724, %v3737
        %v3739 = vcombine.low %v3707, %v3722
        %v3740 = vcombine.high %v3707, %v3722
        %v3742 = vunpack.c.l.s4 1934713408
        %v3743 = vunpack.c.0.s8 %v3742
        %v3744 = vlaneseq
        %v3745 = vshrl.u32 %v3744, 7
        %v3746 = vsub.s32 %v3743, %v3745
        %v3747 = vrot.slane %v3739, %v3746
        %v3749 = vunpack.c.l.s4 1934713408
        %v3750 = vunpack.c.0.s8 %v3749
        %v3751 = vlaneseq
        %v3752 = vshrl.u32 %v3751, 7
        %v3753 = vsub.s32 %v3750, %v3752
        %v3754 = vrot.slane %v3740, %v3753
        %v3755 = vcombine.high %v3731, 0.0
        %v3756 = vcombine.high %v3738, 0.0
        %v3757 = vcombine.high %v3747, 0.0
        %v3758 = vcombine.high %v3754, 0.0
        %v3759 = vcombine.low %v3518, %v3526
        %v3760 = vcombine.high %v3518, %v3526
        %v3762 = vunpack.c.l.s4 1983009808
        %v3763 = vunpack.c.0.s8 %v3762
        %v3764 = vlaneseq
        %v3765 = vshrl.u32 %v3764, 7
        %v3766 = vsub.s32 %v3763, %v3765
        %v3767 = vrot.slane %v3759, %v3766
        %v3769 = vunpack.c.l.s4 1983009808
        %v3770 = vunpack.c.0.s8 %v3769
        %v3771 = vlaneseq
        %v3772 = vshrl.u32 %v3771, 7
        %v3773 = vsub.s32 %v3770, %v3772
        %v3774 = vrot.slane %v3760, %v3773
        %v3775 = vcombine.low %v3522, %v3530
        %v3776 = vcombine.high %v3522, %v3530
        %v3778 = vunpack.c.l.s4 1983009808
        %v3779 = vunpack.c.0.s8 %v3778
        %v3780 = vlaneseq
        %v3781 = vshrl.u32 %v3780, 7
        %v3782 = vsub.s32 %v3779, %v3781
        %v3783 = vrot.slane %v3775, %v3782
        %v3785 = vunpack.c.l.s4 1983009808
        %v3786 = vunpack.c.0.s8 %v3785
        %v3787 = vlaneseq
        %v3788 = vshrl.u32 %v3787, 7
        %v3789 = vsub.s32 %v3786, %v3788
        %v3790 = vrot.slane %v3776, %v3789
        %v3791 = vcombine.low %v3534, %v3542
        %v3792 = vcombine.high %v3534, %v3542
        %v3794 = vunpack.c.l.s4 1983009808
        %v3795 = vunpack.c.0.s8 %v3794
        %v3796 = vlaneseq
        %v3797 = vshrl.u32 %v3796, 7
        %v3798 = vsub.s32 %v3795, %v3797
        %v3799 = vrot.slane %v3791, %v3798
        %v3801 = vunpack.c.l.s4 1983009808
        %v3802 = vunpack.c.0.s8 %v3801
        %v3803 = vlaneseq
        %v3804 = vshrl.u32 %v3803, 7
        %v3805 = vsub.s32 %v3802, %v3804
        %v3806 = vrot.slane %v3792, %v3805
        %v3807 = vcombine.low %v3538, %v3546
        %v3808 = vcombine.high %v3538, %v3546
        %v3810 = vunpack.c.l.s4 1983009808
        %v3811 = vunpack.c.0.s8 %v3810
        %v3812 = vlaneseq
        %v3813 = vshrl.u32 %v3812, 7
        %v3814 = vsub.s32 %v3811, %v3813
        %v3815 = vrot.slane %v3807, %v3814
        %v3817 = vunpack.c.l.s4 1983009808
        %v3818 = vunpack.c.0.s8 %v3817
        %v3819 = vlaneseq
        %v3820 = vshrl.u32 %v3819, 7
        %v3821 = vsub.s32 %v3818, %v3820
        %v3822 = vrot.slane %v3808, %v3821
        %v3823 = vcombine.low %v3767, %v3783
        %v3824 = vcombine.high %v3767, %v3783
        %v3826 = vunpack.c.l.s4 1934713408
        %v3827 = vunpack.c.0.s8 %v3826
        %v3828 = vlaneseq
        %v3829 = vshrl.u32 %v3828, 7
        %v3830 = vsub.s32 %v3827, %v3829
        %v3831 = vrot.slane %v3823, %v3830
        %v3833 = vunpack.c.l.s4 1934713408
        %v3834 = vunpack.c.0.s8 %v3833
        %v3835 = vlaneseq
        %v3836 = vshrl.u32 %v3835, 7
        %v3837 = vsub.s32 %v3834, %v3836
        %v3838 = vrot.slane %v3824, %v3837
        %v3839 = vcombine.low %v3774, %v3790
        %v3840 = vcombine.high %v3774, %v3790
        %v3842 = vunpack.c.l.s4 1934713408
        %v3843 = vunpack.c.0.s8 %v3842
        %v3844 = vlaneseq
        %v3845 = vshrl.u32 %v3844, 7
        %v3846 = vsub.s32 %v3843, %v3845
        %v3847 = vrot.slane %v3839, %v3846
        %v3849 = vunpack.c.l.s4 1934713408
        %v3850 = vunpack.c.0.s8 %v3849
        %v3851 = vlaneseq
        %v3852 = vshrl.u32 %v3851, 7
        %v3853 = vsub.s32 %v3850, %v3852
        %v3854 = vrot.slane %v3840, %v3853
        %v3855 = vcombine.low %v3799, %v3815
        %v3856 = vcombine.high %v3799, %v3815
        %v3858 = vunpack.c.l.s4 1934713408
        %v3859 = vunpack.c.0.s8 %v3858
        %v3860 = vlaneseq
        %v3861 = vshrl.u32 %v3860, 7
        %v3862 = vsub.s32 %v3859, %v3861
        %v3863 = vrot.slane %v3855, %v3862
        %v3865 = vunpack.c.l.s4 1934713408
        %v3866 = vunpack.c.0.s8 %v3865
        %v3867 = vlaneseq
        %v3868 = vshrl.u32 %v3867, 7
        %v3869 = vsub.s32 %v3866, %v3868
        %v3870 = vrot.slane %v3856, %v3869
        %v3871 = vcombine.low %v3806, %v3822
        %v3872 = vcombine.high %v3806, %v3822
        %v3874 = vunpack.c.l.s4 1934713408
        %v3875 = vunpack.c.0.s8 %v3874
        %v3876 = vlaneseq
        %v3877 = vshrl.u32 %v3876, 7
        %v3878 = vsub.s32 %v3875, %v3877
        %v3879 = vrot.slane %v3871, %v3878
        %v3881 = vunpack.c.l.s4 1934713408
        %v3882 = vunpack.c.0.s8 %v3881
        %v3883 = vlaneseq
        %v3884 = vshrl.u32 %v3883, 7
        %v3885 = vsub.s32 %v3882, %v3884
        %v3886 = vrot.slane %v3872, %v3885
        %v3887 = vcombine.low %v3831, %v3863
        %v3888 = vcombine.high %v3831, %v3863
        %v3889 = vcombine.low %v3838, %v3870
        %v3890 = vcombine.high %v3838, %v3870
        %v3891 = vcombine.low %v3847, %v3879
        %v3892 = vcombine.high %v3847, %v3879
        %v3893 = vcombine.low %v3854, %v3886
        %v3894 = vcombine.high %v3854, %v3886
        %v3895 = vcombine.high %v3550, 0.0
        %v3897 = vunpack.c.l.s4 1983009808
        %v3898 = vunpack.c.0.s8 %v3897
        %v3899 = vlaneseq
        %v3900 = vshrl.u32 %v3899, 7
        %v3901 = vsub.s32 %v3898, %v3900
        %v3902 = vrot.slane %v3550, %v3901
        %v3904 = vunpack.c.l.s4 1983009808
        %v3905 = vunpack.c.0.s8 %v3904
        %v3906 = vlaneseq
        %v3907 = vshrl.u32 %v3906, 7
        %v3908 = vsub.s32 %v3905, %v3907
        %v3909 = vrot.slane %v3895, %v3908
        %v3910 = vcombine.high %v3554, 0.0
        %v3912 = vunpack.c.l.s4 1983009808
        %v3913 = vunpack.c.0.s8 %v3912
        %v3914 = vlaneseq
        %v3915 = vshrl.u32 %v3914, 7
        %v3916 = vsub.s32 %v3913, %v3915
        %v3917 = vrot.slane %v3554, %v3916
        %v3919 = vunpack.c.l.s4 1983009808
        %v3920 = vunpack.c.0.s8 %v3919
        %v3921 = vlaneseq
        %v3922 = vshrl.u32 %v3921, 7
        %v3923 = vsub.s32 %v3920, %v3922
        %v3924 = vrot.slane %v3910, %v3923
        %v3925 = vcombine.low %v3902, %v3917
        %v3926 = vcombine.high %v3902, %v3917
        %v3928 = vunpack.c.l.s4 1934713408
        %v3929 = vunpack.c.0.s8 %v3928
        %v3930 = vlaneseq
        %v3931 = vshrl.u32 %v3930, 7
        %v3932 = vsub.s32 %v3929, %v3931
        %v3933 = vrot.slane %v3925, %v3932
        %v3935 = vunpack.c.l.s4 1934713408
        %v3936 = vunpack.c.0.s8 %v3935
        %v3937 = vlaneseq
        %v3938 = vshrl.u32 %v3937, 7
        %v3939 = vsub.s32 %v3936, %v3938
        %v3940 = vrot.slane %v3926, %v3939
        %v3941 = vcombine.low %v3909, %v3924
        %v3942 = vcombine.high %v3909, %v3924
        %v3944 = vunpack.c.l.s4 1934713408
        %v3945 = vunpack.c.0.s8 %v3944
        %v3946 = vlaneseq
        %v3947 = vshrl.u32 %v3946, 7
        %v3948 = vsub.s32 %v3945, %v3947
        %v3949 = vrot.slane %v3941, %v3948
        %v3951 = vunpack.c.l.s4 1934713408
        %v3952 = vunpack.c.0.s8 %v3951
        %v3953 = vlaneseq
        %v3954 = vshrl.u32 %v3953, 7
        %v3955 = vsub.s32 %v3952, %v3954
        %v3956 = vrot.slane %v3942, %v3955
        %v3957 = vcombine.high %v3933, 0.0
        %v3958 = vcombine.high %v3940, 0.0
        %v3959 = vcombine.high %v3949, 0.0
        %v3960 = vcombine.high %v3956, 0.0
        %v3961 = vcombine.low %v3519, %v3527
        %v3962 = vcombine.high %v3519, %v3527
        %v3964 = vunpack.c.l.s4 1983009808
        %v3965 = vunpack.c.0.s8 %v3964
        %v3966 = vlaneseq
        %v3967 = vshrl.u32 %v3966, 7
        %v3968 = vsub.s32 %v3965, %v3967
        %v3969 = vrot.slane %v3961, %v3968
        %v3971 = vunpack.c.l.s4 1983009808
        %v3972 = vunpack.c.0.s8 %v3971
        %v3973 = vlaneseq
        %v3974 = vshrl.u32 %v3973, 7
        %v3975 = vsub.s32 %v3972, %v3974
        %v3976 = vrot.slane %v3962, %v3975
        %v3977 = vcombine.low %v3523, %v3531
        %v3978 = vcombine.high %v3523, %v3531
        %v3980 = vunpack.c.l.s4 1983009808
        %v3981 = vunpack.c.0.s8 %v3980
        %v3982 = vlaneseq
        %v3983 = vshrl.u32 %v3982, 7
        %v3984 = vsub.s32 %v3981, %v3983
        %v3985 = vrot.slane %v3977, %v3984
        %v3987 = vunpack.c.l.s4 1983009808
        %v3988 = vunpack.c.0.s8 %v3987
        %v3989 = vlaneseq
        %v3990 = vshrl.u32 %v3989, 7
        %v3991 = vsub.s32 %v3988, %v3990
        %v3992 = vrot.slane %v3978, %v3991
        %v3993 = vcombine.low %v3535, %v3543
        %v3994 = vcombine.high %v3535, %v3543
        %v3996 = vunpack.c.l.s4 1983009808
        %v3997 = vunpack.c.0.s8 %v3996
        %v3998 = vlaneseq
        %v3999 = vshrl.u32 %v3998, 7
        %v4000 = vsub.s32 %v3997, %v3999
        %v4001 = vrot.slane %v3993, %v4000
        %v4003 = vunpack.c.l.s4 1983009808
        %v4004 = vunpack.c.0.s8 %v4003
        %v4005 = vlaneseq
        %v4006 = vshrl.u32 %v4005, 7
        %v4007 = vsub.s32 %v4004, %v4006
        %v4008 = vrot.slane %v3994, %v4007
        %v4009 = vcombine.low %v3539, %v3547
        %v4010 = vcombine.high %v3539, %v3547
        %v4012 = vunpack.c.l.s4 1983009808
        %v4013 = vunpack.c.0.s8 %v4012
        %v4014 = vlaneseq
        %v4015 = vshrl.u32 %v4014, 7
        %v4016 = vsub.s32 %v4013, %v4015
        %v4017 = vrot.slane %v4009, %v4016
        %v4019 = vunpack.c.l.s4 1983009808
        %v4020 = vunpack.c.0.s8 %v4019
        %v4021 = vlaneseq
        %v4022 = vshrl.u32 %v4021, 7
        %v4023 = vsub.s32 %v4020, %v4022
        %v4024 = vrot.slane %v4010, %v4023
        %v4025 = vcombine.low %v3969, %v3985
        %v4026 = vcombine.high %v3969, %v3985
        %v4028 = vunpack.c.l.s4 1934713408
        %v4029 = vunpack.c.0.s8 %v4028
        %v4030 = vlaneseq
        %v4031 = vshrl.u32 %v4030, 7
        %v4032 = vsub.s32 %v4029, %v4031
        %v4033 = vrot.slane %v4025, %v4032
        %v4035 = vunpack.c.l.s4 1934713408
        %v4036 = vunpack.c.0.s8 %v4035
        %v4037 = vlaneseq
        %v4038 = vshrl.u32 %v4037, 7
        %v4039 = vsub.s32 %v4036, %v4038
        %v4040 = vrot.slane %v4026, %v4039
        %v4041 = vcombine.low %v3976, %v3992
        %v4042 = vcombine.high %v3976, %v3992
        %v4044 = vunpack.c.l.s4 1934713408
        %v4045 = vunpack.c.0.s8 %v4044
        %v4046 = vlaneseq
        %v4047 = vshrl.u32 %v4046, 7
        %v4048 = vsub.s32 %v4045, %v4047
        %v4049 = vrot.slane %v4041, %v4048
        %v4051 = vunpack.c.l.s4 1934713408
        %v4052 = vunpack.c.0.s8 %v4051
        %v4053 = vlaneseq
        %v4054 = vshrl.u32 %v4053, 7
        %v4055 = vsub.s32 %v4052, %v4054
        %v4056 = vrot.slane %v4042, %v4055
        %v4057 = vcombine.low %v4001, %v4017
        %v4058 = vcombine.high %v4001, %v4017
        %v4060 = vunpack.c.l.s4 1934713408
        %v4061 = vunpack.c.0.s8 %v4060
        %v4062 = vlaneseq
        %v4063 = vshrl.u32 %v4062, 7
        %v4064 = vsub.s32 %v4061, %v4063
        %v4065 = vrot.slane %v4057, %v4064
        %v4067 = vunpack.c.l.s4 1934713408
        %v4068 = vunpack.c.0.s8 %v4067
        %v4069 = vlaneseq
        %v4070 = vshrl.u32 %v4069, 7
        %v4071 = vsub.s32 %v4068, %v4070
        %v4072 = vrot.slane %v4058, %v4071
        %v4073 = vcombine.low %v4008, %v4024
        %v4074 = vcombine.high %v4008, %v4024
        %v4076 = vunpack.c.l.s4 1934713408
        %v4077 = vunpack.c.0.s8 %v4076
        %v4078 = vlaneseq
        %v4079 = vshrl.u32 %v4078, 7
        %v4080 = vsub.s32 %v4077, %v4079
        %v4081 = vrot.slane %v4073, %v4080
        %v4083 = vunpack.c.l.s4 1934713408
        %v4084 = vunpack.c.0.s8 %v4083
        %v4085 = vlaneseq
        %v4086 = vshrl.u32 %v4085, 7
        %v4087 = vsub.s32 %v4084, %v4086
        %v4088 = vrot.slane %v4074, %v4087
        %v4089 = vcombine.low %v4033, %v4065
        %v4090 = vcombine.high %v4033, %v4065
        %v4091 = vcombine.low %v4040, %v4072
        %v4092 = vcombine.high %v4040, %v4072
        %v4093 = vcombine.low %v4049, %v4081
        %v4094 = vcombine.high %v4049, %v4081
        %v4095 = vcombine.low %v4056, %v4088
        %v4096 = vcombine.high %v4056, %v4088
        %v4097 = vcombine.high %v3551, 0.0
        %v4099 = vunpack.c.l.s4 1983009808
        %v4100 = vunpack.c.0.s8 %v4099
        %v4101 = vlaneseq
        %v4102 = vshrl.u32 %v4101, 7
        %v4103 = vsub.s32 %v4100, %v4102
        %v4104 = vrot.slane %v3551, %v4103
        %v4106 = vunpack.c.l.s4 1983009808
        %v4107 = vunpack.c.0.s8 %v4106
        %v4108 = vlaneseq
        %v4109 = vshrl.u32 %v4108, 7
        %v4110 = vsub.s32 %v4107, %v4109
        %v4111 = vrot.slane %v4097, %v4110
        %v4112 = vcombine.high %v3555, 0.0
        %v4114 = vunpack.c.l.s4 1983009808
        %v4115 = vunpack.c.0.s8 %v4114
        %v4116 = vlaneseq
        %v4117 = vshrl.u32 %v4116, 7
        %v4118 = vsub.s32 %v4115, %v4117
        %v4119 = vrot.slane %v3555, %v4118
        %v4121 = vunpack.c.l.s4 1983009808
        %v4122 = vunpack.c.0.s8 %v4121
        %v4123 = vlaneseq
        %v4124 = vshrl.u32 %v4123, 7
        %v4125 = vsub.s32 %v4122, %v4124
        %v4126 = vrot.slane %v4112, %v4125
        %v4127 = vcombine.low %v4104, %v4119
        %v4128 = vcombine.high %v4104, %v4119
        %v4130 = vunpack.c.l.s4 1934713408
        %v4131 = vunpack.c.0.s8 %v4130
        %v4132 = vlaneseq
        %v4133 = vshrl.u32 %v4132, 7
        %v4134 = vsub.s32 %v4131, %v4133
        %v4135 = vrot.slane %v4127, %v4134
        %v4137 = vunpack.c.l.s4 1934713408
        %v4138 = vunpack.c.0.s8 %v4137
        %v4139 = vlaneseq
        %v4140 = vshrl.u32 %v4139, 7
        %v4141 = vsub.s32 %v4138, %v4140
        %v4142 = vrot.slane %v4128, %v4141
        %v4143 = vcombine.low %v4111, %v4126
        %v4144 = vcombine.high %v4111, %v4126
        %v4146 = vunpack.c.l.s4 1934713408
        %v4147 = vunpack.c.0.s8 %v4146
        %v4148 = vlaneseq
        %v4149 = vshrl.u32 %v4148, 7
        %v4150 = vsub.s32 %v4147, %v4149
        %v4151 = vrot.slane %v4143, %v4150
        %v4153 = vunpack.c.l.s4 1934713408
        %v4154 = vunpack.c.0.s8 %v4153
        %v4155 = vlaneseq
        %v4156 = vshrl.u32 %v4155, 7
        %v4157 = vsub.s32 %v4154, %v4156
        %v4158 = vrot.slane %v4144, %v4157
        %v4159 = vcombine.high %v4135, 0.0
        %v4160 = vcombine.high %v4142, 0.0
        %v4161 = vcombine.high %v4151, 0.0
        %v4162 = vcombine.high %v4158, 0.0
        %v4163 = vcombine.low %v3520, %v3528
        %v4164 = vcombine.high %v3520, %v3528
        %v4166 = vunpack.c.l.s4 1983009808
        %v4167 = vunpack.c.0.s8 %v4166
        %v4168 = vlaneseq
        %v4169 = vshrl.u32 %v4168, 7
        %v4170 = vsub.s32 %v4167, %v4169
        %v4171 = vrot.slane %v4163, %v4170
        %v4173 = vunpack.c.l.s4 1983009808
        %v4174 = vunpack.c.0.s8 %v4173
        %v4175 = vlaneseq
        %v4176 = vshrl.u32 %v4175, 7
        %v4177 = vsub.s32 %v4174, %v4176
        %v4178 = vrot.slane %v4164, %v4177
        %v4179 = vcombine.low %v3524, %v3532
        %v4180 = vcombine.high %v3524, %v3532
        %v4182 = vunpack.c.l.s4 1983009808
        %v4183 = vunpack.c.0.s8 %v4182
        %v4184 = vlaneseq
        %v4185 = vshrl.u32 %v4184, 7
        %v4186 = vsub.s32 %v4183, %v4185
        %v4187 = vrot.slane %v4179, %v4186
        %v4189 = vunpack.c.l.s4 1983009808
        %v4190 = vunpack.c.0.s8 %v4189
        %v4191 = vlaneseq
        %v4192 = vshrl.u32 %v4191, 7
        %v4193 = vsub.s32 %v4190, %v4192
        %v4194 = vrot.slane %v4180, %v4193
        %v4195 = vcombine.low %v3536, %v3544
        %v4196 = vcombine.high %v3536, %v3544
        %v4198 = vunpack.c.l.s4 1983009808
        %v4199 = vunpack.c.0.s8 %v4198
        %v4200 = vlaneseq
        %v4201 = vshrl.u32 %v4200, 7
        %v4202 = vsub.s32 %v4199, %v4201
        %v4203 = vrot.slane %v4195, %v4202
        %v4205 = vunpack.c.l.s4 1983009808
        %v4206 = vunpack.c.0.s8 %v4205
        %v4207 = vlaneseq
        %v4208 = vshrl.u32 %v4207, 7
        %v4209 = vsub.s32 %v4206, %v4208
        %v4210 = vrot.slane %v4196, %v4209
        %v4211 = vcombine.low %v3540, %v3548
        %v4212 = vcombine.high %v3540, %v3548
        %v4214 = vunpack.c.l.s4 1983009808
        %v4215 = vunpack.c.0.s8 %v4214
        %v4216 = vlaneseq
        %v4217 = vshrl.u32 %v4216, 7
        %v4218 = vsub.s32 %v4215, %v4217
        %v4219 = vrot.slane %v4211, %v4218
        %v4221 = vunpack.c.l.s4 1983009808
        %v4222 = vunpack.c.0.s8 %v4221
        %v4223 = vlaneseq
        %v4224 = vshrl.u32 %v4223, 7
        %v4225 = vsub.s32 %v4222, %v4224
        %v4226 = vrot.slane %v4212, %v4225
        %v4227 = vcombine.low %v4171, %v4187
        %v4228 = vcombine.high %v4171, %v4187
        %v4230 = vunpack.c.l.s4 1934713408
        %v4231 = vunpack.c.0.s8 %v4230
        %v4232 = vlaneseq
        %v4233 = vshrl.u32 %v4232, 7
        %v4234 = vsub.s32 %v4231, %v4233
        %v4235 = vrot.slane %v4227, %v4234
        %v4237 = vunpack.c.l.s4 1934713408
        %v4238 = vunpack.c.0.s8 %v4237
        %v4239 = vlaneseq
        %v4240 = vshrl.u32 %v4239, 7
        %v4241 = vsub.s32 %v4238, %v4240
        %v4242 = vrot.slane %v4228, %v4241
        %v4243 = vcombine.low %v4178, %v4194
        %v4244 = vcombine.high %v4178, %v4194
        %v4246 = vunpack.c.l.s4 1934713408
        %v4247 = vunpack.c.0.s8 %v4246
        %v4248 = vlaneseq
        %v4249 = vshrl.u32 %v4248, 7
        %v4250 = vsub.s32 %v4247, %v4249
        %v4251 = vrot.slane %v4243, %v4250
        %v4253 = vunpack.c.l.s4 1934713408
        %v4254 = vunpack.c.0.s8 %v4253
        %v4255 = vlaneseq
        %v4256 = vshrl.u32 %v4255, 7
        %v4257 = vsub.s32 %v4254, %v4256
        %v4258 = vrot.slane %v4244, %v4257
        %v4259 = vcombine.low %v4203, %v4219
        %v4260 = vcombine.high %v4203, %v4219
        %v4262 = vunpack.c.l.s4 1934713408
        %v4263 = vunpack.c.0.s8 %v4262
        %v4264 = vlaneseq
        %v4265 = vshrl.u32 %v4264, 7
        %v4266 = vsub.s32 %v4263, %v4265
        %v4267 = vrot.slane %v4259, %v4266
        %v4269 = vunpack.c.l.s4 1934713408
        %v4270 = vunpack.c.0.s8 %v4269
        %v4271 = vlaneseq
        %v4272 = vshrl.u32 %v4271, 7
        %v4273 = vsub.s32 %v4270, %v4272
        %v4274 = vrot.slane %v4260, %v4273
        %v4275 = vcombine.low %v4210, %v4226
        %v4276 = vcombine.high %v4210, %v4226
        %v4278 = vunpack.c.l.s4 1934713408
        %v4279 = vunpack.c.0.s8 %v4278
        %v4280 = vlaneseq
        %v4281 = vshrl.u32 %v4280, 7
        %v4282 = vsub.s32 %v4279, %v4281
        %v4283 = vrot.slane %v4275, %v4282
        %v4285 = vunpack.c.l.s4 1934713408
        %v4286 = vunpack.c.0.s8 %v4285
        %v4287 = vlaneseq
        %v4288 = vshrl.u32 %v4287, 7
        %v4289 = vsub.s32 %v4286, %v4288
        %v4290 = vrot.slane %v4276, %v4289
        %v4291 = vcombine.low %v4235, %v4267
        %v4292 = vcombine.high %v4235, %v4267
        %v4293 = vcombine.low %v4242, %v4274
        %v4294 = vcombine.high %v4242, %v4274
        %v4295 = vcombine.low %v4251, %v4283
        %v4296 = vcombine.high %v4251, %v4283
        %v4297 = vcombine.low %v4258, %v4290
        %v4298 = vcombine.high %v4258, %v4290
        %v4299 = vcombine.high %v3552, 0.0
        %v4301 = vunpack.c.l.s4 1983009808
        %v4302 = vunpack.c.0.s8 %v4301
        %v4303 = vlaneseq
        %v4304 = vshrl.u32 %v4303, 7
        %v4305 = vsub.s32 %v4302, %v4304
        %v4306 = vrot.slane %v3552, %v4305
        %v4308 = vunpack.c.l.s4 1983009808
        %v4309 = vunpack.c.0.s8 %v4308
        %v4310 = vlaneseq
        %v4311 = vshrl.u32 %v4310, 7
        %v4312 = vsub.s32 %v4309, %v4311
        %v4313 = vrot.slane %v4299, %v4312
        %v4314 = vcombine.high %v3556, 0.0
        %v4316 = vunpack.c.l.s4 1983009808
        %v4317 = vunpack.c.0.s8 %v4316
        %v4318 = vlaneseq
        %v4319 = vshrl.u32 %v4318, 7
        %v4320 = vsub.s32 %v4317, %v4319
        %v4321 = vrot.slane %v3556, %v4320
        %v4323 = vunpack.c.l.s4 1983009808
        %v4324 = vunpack.c.0.s8 %v4323
        %v4325 = vlaneseq
        %v4326 = vshrl.u32 %v4325, 7
        %v4327 = vsub.s32 %v4324, %v4326
        %v4328 = vrot.slane %v4314, %v4327
        %v4329 = vcombine.low %v4306, %v4321
        %v4330 = vcombine.high %v4306, %v4321
        %v4332 = vunpack.c.l.s4 1934713408
        %v4333 = vunpack.c.0.s8 %v4332
        %v4334 = vlaneseq
        %v4335 = vshrl.u32 %v4334, 7
        %v4336 = vsub.s32 %v4333, %v4335
        %v4337 = vrot.slane %v4329, %v4336
        %v4339 = vunpack.c.l.s4 1934713408
        %v4340 = vunpack.c.0.s8 %v4339
        %v4341 = vlaneseq
        %v4342 = vshrl.u32 %v4341, 7
        %v4343 = vsub.s32 %v4340, %v4342
        %v4344 = vrot.slane %v4330, %v4343
        %v4345 = vcombine.low %v4313, %v4328
        %v4346 = vcombine.high %v4313, %v4328
        %v4348 = vunpack.c.l.s4 1934713408
        %v4349 = vunpack.c.0.s8 %v4348
        %v4350 = vlaneseq
        %v4351 = vshrl.u32 %v4350, 7
        %v4352 = vsub.s32 %v4349, %v4351
        %v4353 = vrot.slane %v4345, %v4352
        %v4355 = vunpack.c.l.s4 1934713408
        %v4356 = vunpack.c.0.s8 %v4355
        %v4357 = vlaneseq
        %v4358 = vshrl.u32 %v4357, 7
        %v4359 = vsub.s32 %v4356, %v4358
        %v4360 = vrot.slane %v4346, %v4359
        %v4361 = vcombine.high %v4337, 0.0
        %v4362 = vcombine.high %v4344, 0.0
        %v4363 = vcombine.high %v4353, 0.0
        %v4364 = vcombine.high %v4360, 0.0
        %v4366 = vsel %vm538, %v3685, 0
        %v4369 = vsel %vm538, %v3731, 0
        %4371 = vmatprep.subr.mxu0 0.0
        %4372 = vmatpush1.msra.mxu0 %v408
        %4373 = vmatprep.subr.mxu0 0.0
        %4374 = vmatpush1.msra.mxu0 %v409
        %4375 = vmatprep.subr.mxu0 0.0
        %4376 = vmatpush1.msra.mxu0 %v410
        %4377 = vmatprep.subr.mxu0 0.0
        %4378 = vmatpush1.msra.mxu0 %v411
        %4379 = vmatprep.subr.mxu0 0.0
        %4380 = vmatpush1.msra.mxu0 0.0
        %4381 = vmatprep.subr.mxu0 0.0
        %4382 = vmatpush1.msra.mxu0 0.0
        %4383 = vmatprep.subr.mxu0 0.0
        %4384 = vmatpush1.msra.mxu0 0.0
        %4385 = vmatprep.subr.mxu0 0.0
        %4386 = vmatpush1.msra.mxu0 0.0
        %4387 = vmatprep.subr.mxu0 0.0
        %4388 = vmatpush1.msra.mxu0 0.0
        %4389 = vmatprep.subr.mxu0 0.0
        %4390 = vmatpush1.msra.mxu0 0.0
        %4391 = vmatprep.subr.mxu0 0.0
        %4392 = vmatpush1.msra.mxu0 0.0
        %4393 = vmatprep.subr.mxu0 0.0
        %4394 = vmatpush1.msra.mxu0 0.0
        %4395 = vmatprep.subr.mxu0 0.0
        %4396 = vmatpush1.msra.mxu0 0.0
        %4397 = vmatprep.subr.mxu0 0.0
        %4398 = vmatpush1.msra.mxu0 0.0
        %4399 = vmatprep.subr.mxu0 0.0
        %4400 = vmatpush1.msra.mxu0 0.0
        %4401 = vmatprep.subr.mxu0 0.0
        %4402 = vmatpush1.msra.mxu0 0.0
        %4403 = vmatprep.subr.mxu0 0.0
        %4404 = vmatpush1.msra.mxu0 0.0
        %4405 = vmatprep.subr.mxu0 0.0
        %4406 = vmatpush1.msra.mxu0 0.0
        %4407 = vmatprep.subr.mxu0 0.0
        %4408 = vmatpush1.msra.mxu0 0.0
        %4409 = vmatprep.subr.mxu0 0.0
        %4410 = vmatpush1.msra.mxu0 0.0
        %4411 = vmatprep.subr.mxu0 0.0
        %4412 = vmatpush1.msra.mxu0 0.0
        %4413 = vmatprep.subr.mxu0 0.0
        %4414 = vmatpush1.msra.mxu0 0.0
        %4415 = vmatprep.subr.mxu0 0.0
        %4416 = vmatpush1.msra.mxu0 0.0
        %4417 = vmatprep.subr.mxu0 0.0
        %4418 = vmatpush1.msra.mxu0 0.0
        %4419 = vmatprep.subr.mxu0 0.0
        %4420 = vmatpush1.msra.mxu0 0.0
        %4421 = vmatprep.subr.mxu0 0.0
        %4422 = vmatpush1.msra.mxu0 0.0
        %4423 = vmatprep.subr.mxu0 0.0
        %4424 = vmatpush1.msra.mxu0 0.0
        %4425 = vmatprep.subr.mxu0 0.0
        %4426 = vmatpush1.msra.mxu0 0.0
        %4427 = vmatprep.subr.mxu0 0.0
        %4428 = vmatpush1.msra.mxu0 0.0
        %4429 = vmatprep.subr.mxu0 0.0
        %4430 = vmatpush1.msra.mxu0 0.0
        %4431 = vmatprep.subr.mxu0 0.0
        %4432 = vmatpush1.msra.mxu0 0.0
        %4433 = vmatprep.subr.mxu0 0.0
        %4434 = vmatpush1.msra.mxu0 0.0
        %4435 = vmatprep.mubr.f32.mxu0 0.0
        %4436 = vmatmul.mubr.f32.gmra.mrb[0].mxu0 %v4366
        %v4437 = vpop.f32.mrb[0].mxu0
        %v4438 = vadd.f32 0.0, %v4437
        %v4439 = vpop.f32.mrb[0].mxu0
        %4440 = vmatprep.mubr.f32.mxu0 0.0
        %4441 = vmatmul.mubr.f32.gmra.mrb[0].mxu0 %v4369
        %v4442 = vpop.f32.mrb[0].mxu0
        %v4443 = vadd.f32 0.0, %v4442
        %v4444 = vpop.f32.mrb[0].mxu0
        %4445 = vdwg.mxu0
        %v4447 = vsel %vm538, %v3686, 0
        %v4450 = vsel %vm538, %v3755, 0
        %4452 = vmatprep.subr.mxu0 0.0
        %4453 = vmatpush1.msra.mxu0 %v412
        %4454 = vmatprep.subr.mxu0 0.0
        %4455 = vmatpush1.msra.mxu0 %v413
        %4456 = vmatprep.subr.mxu0 0.0
        %4457 = vmatpush1.msra.mxu0 %v414
        %4458 = vmatprep.subr.mxu0 0.0
        %4459 = vmatpush1.msra.mxu0 %v415
        %4460 = vmatprep.subr.mxu0 0.0
        %4461 = vmatpush1.msra.mxu0 0.0
        %4462 = vmatprep.subr.mxu0 0.0
        %4463 = vmatpush1.msra.mxu0 0.0
        %4464 = vmatprep.subr.mxu0 0.0
        %4465 = vmatpush1.msra.mxu0 0.0
        %4466 = vmatprep.subr.mxu0 0.0
        %4467 = vmatpush1.msra.mxu0 0.0
        %4468 = vmatprep.subr.mxu0 0.0
        %4469 = vmatpush1.msra.mxu0 0.0
        %4470 = vmatprep.subr.mxu0 0.0
        %4471 = vmatpush1.msra.mxu0 0.0
        %4472 = vmatprep.subr.mxu0 0.0
        %4473 = vmatpush1.msra.mxu0 0.0
        %4474 = vmatprep.subr.mxu0 0.0
        %4475 = vmatpush1.msra.mxu0 0.0
        %4476 = vmatprep.subr.mxu0 0.0
        %4477 = vmatpush1.msra.mxu0 0.0
        %4478 = vmatprep.subr.mxu0 0.0
        %4479 = vmatpush1.msra.mxu0 0.0
        %4480 = vmatprep.subr.mxu0 0.0
        %4481 = vmatpush1.msra.mxu0 0.0
        %4482 = vmatprep.subr.mxu0 0.0
        %4483 = vmatpush1.msra.mxu0 0.0
        %4484 = vmatprep.subr.mxu0 0.0
        %4485 = vmatpush1.msra.mxu0 0.0
        %4486 = vmatprep.subr.mxu0 0.0
        %4487 = vmatpush1.msra.mxu0 0.0
        %4488 = vmatprep.subr.mxu0 0.0
        %4489 = vmatpush1.msra.mxu0 0.0
        %4490 = vmatprep.subr.mxu0 0.0
        %4491 = vmatpush1.msra.mxu0 0.0
        %4492 = vmatprep.subr.mxu0 0.0
        %4493 = vmatpush1.msra.mxu0 0.0
        %4494 = vmatprep.subr.mxu0 0.0
        %4495 = vmatpush1.msra.mxu0 0.0
        %4496 = vmatprep.subr.mxu0 0.0
        %4497 = vmatpush1.msra.mxu0 0.0
        %4498 = vmatprep.subr.mxu0 0.0
        %4499 = vmatpush1.msra.mxu0 0.0
        %4500 = vmatprep.subr.mxu0 0.0
        %4501 = vmatpush1.msra.mxu0 0.0
        %4502 = vmatprep.subr.mxu0 0.0
        %4503 = vmatpush1.msra.mxu0 0.0
        %4504 = vmatprep.subr.mxu0 0.0
        %4505 = vmatpush1.msra.mxu0 0.0
        %4506 = vmatprep.subr.mxu0 0.0
        %4507 = vmatpush1.msra.mxu0 0.0
        %4508 = vmatprep.subr.mxu0 0.0
        %4509 = vmatpush1.msra.mxu0 0.0
        %4510 = vmatprep.subr.mxu0 0.0
        %4511 = vmatpush1.msra.mxu0 0.0
        %4512 = vmatprep.subr.mxu0 0.0
        %4513 = vmatpush1.msra.mxu0 0.0
        %4514 = vmatprep.subr.mxu0 0.0
        %4515 = vmatpush1.msra.mxu0 0.0
        %4516 = vmatprep.mubr.f32.mxu0 0.0
        %4517 = vmatmul.mubr.f32.gmra.mrb[0].mxu0 %v4447
        %v4518 = vpop.f32.mrb[0].mxu0
        %v4519 = vadd.f32 0.0, %v4518
        %v4520 = vpop.f32.mrb[0].mxu0
        %4521 = vmatprep.mubr.f32.mxu0 0.0
        %4522 = vmatmul.mubr.f32.gmra.mrb[0].mxu0 %v4450
        %v4523 = vpop.f32.mrb[0].mxu0
        %v4524 = vadd.f32 0.0, %v4523
        %v4525 = vpop.f32.mrb[0].mxu0
        %4526 = vdwg.mxu0
        %v4528 = vsel %vm538, %v3687, 0
        %v4531 = vsel %vm538, %v3738, 0
        %4533 = vmatprep.subr.mxu0 0.0
        %4534 = vmatpush1.msra.mxu0 %v416
        %4535 = vmatprep.subr.mxu0 0.0
        %4536 = vmatpush1.msra.mxu0 %v417
        %4537 = vmatprep.subr.mxu0 0.0
        %4538 = vmatpush1.msra.mxu0 %v418
        %4539 = vmatprep.subr.mxu0 0.0
        %4540 = vmatpush1.msra.mxu0 %v419
        %4541 = vmatprep.subr.mxu0 0.0
        %4542 = vmatpush1.msra.mxu0 0.0
        %4543 = vmatprep.subr.mxu0 0.0
        %4544 = vmatpush1.msra.mxu0 0.0
        %4545 = vmatprep.subr.mxu0 0.0
        %4546 = vmatpush1.msra.mxu0 0.0
        %4547 = vmatprep.subr.mxu0 0.0
        %4548 = vmatpush1.msra.mxu0 0.0
        %4549 = vmatprep.subr.mxu0 0.0
        %4550 = vmatpush1.msra.mxu0 0.0
        %4551 = vmatprep.subr.mxu0 0.0
        %4552 = vmatpush1.msra.mxu0 0.0
        %4553 = vmatprep.subr.mxu0 0.0
        %4554 = vmatpush1.msra.mxu0 0.0
        %4555 = vmatprep.subr.mxu0 0.0
        %4556 = vmatpush1.msra.mxu0 0.0
        %4557 = vmatprep.subr.mxu0 0.0
        %4558 = vmatpush1.msra.mxu0 0.0
        %4559 = vmatprep.subr.mxu0 0.0
        %4560 = vmatpush1.msra.mxu0 0.0
        %4561 = vmatprep.subr.mxu0 0.0
        %4562 = vmatpush1.msra.mxu0 0.0
        %4563 = vmatprep.subr.mxu0 0.0
        %4564 = vmatpush1.msra.mxu0 0.0
        %4565 = vmatprep.subr.mxu0 0.0
        %4566 = vmatpush1.msra.mxu0 0.0
        %4567 = vmatprep.subr.mxu0 0.0
        %4568 = vmatpush1.msra.mxu0 0.0
        %4569 = vmatprep.subr.mxu0 0.0
        %4570 = vmatpush1.msra.mxu0 0.0
        %4571 = vmatprep.subr.mxu0 0.0
        %4572 = vmatpush1.msra.mxu0 0.0
        %4573 = vmatprep.subr.mxu0 0.0
        %4574 = vmatpush1.msra.mxu0 0.0
        %4575 = vmatprep.subr.mxu0 0.0
        %4576 = vmatpush1.msra.mxu0 0.0
        %4577 = vmatprep.subr.mxu0 0.0
        %4578 = vmatpush1.msra.mxu0 0.0
        %4579 = vmatprep.subr.mxu0 0.0
        %4580 = vmatpush1.msra.mxu0 0.0
        %4581 = vmatprep.subr.mxu0 0.0
        %4582 = vmatpush1.msra.mxu0 0.0
        %4583 = vmatprep.subr.mxu0 0.0
        %4584 = vmatpush1.msra.mxu0 0.0
        %4585 = vmatprep.subr.mxu0 0.0
        %4586 = vmatpush1.msra.mxu0 0.0
        %4587 = vmatprep.subr.mxu0 0.0
        %4588 = vmatpush1.msra.mxu0 0.0
        %4589 = vmatprep.subr.mxu0 0.0
        %4590 = vmatpush1.msra.mxu0 0.0
        %4591 = vmatprep.subr.mxu0 0.0
        %4592 = vmatpush1.msra.mxu0 0.0
        %4593 = vmatprep.subr.mxu0 0.0
        %4594 = vmatpush1.msra.mxu0 0.0
        %4595 = vmatprep.subr.mxu0 0.0
        %4596 = vmatpush1.msra.mxu0 0.0
        %4597 = vmatprep.mubr.f32.mxu0 0.0
        %4598 = vmatmul.mubr.f32.gmra.mrb[0].mxu0 %v4528
        %v4599 = vpop.f32.mrb[0].mxu0
        %v4600 = vadd.f32 0.0, %v4599
        %v4601 = vpop.f32.mrb[0].mxu0
        %4602 = vmatprep.mubr.f32.mxu0 0.0
        %4603 = vmatmul.mubr.f32.gmra.mrb[0].mxu0 %v4531
        %v4604 = vpop.f32.mrb[0].mxu0
        %v4605 = vadd.f32 0.0, %v4604
        %v4606 = vpop.f32.mrb[0].mxu0
        %4607 = vdwg.mxu0
        %v4609 = vsel %vm538, %v3688, 0
        %v4612 = vsel %vm538, %v3756, 0
        %4614 = vmatprep.subr.mxu0 0.0
        %4615 = vmatpush1.msra.mxu0 %v420
        %4616 = vmatprep.subr.mxu0 0.0
        %4617 = vmatpush1.msra.mxu0 %v421
        %4618 = vmatprep.subr.mxu0 0.0
        %4619 = vmatpush1.msra.mxu0 %v422
        %4620 = vmatprep.subr.mxu0 0.0
        %4621 = vmatpush1.msra.mxu0 %v423
        %4622 = vmatprep.subr.mxu0 0.0
        %4623 = vmatpush1.msra.mxu0 0.0
        %4624 = vmatprep.subr.mxu0 0.0
        %4625 = vmatpush1.msra.mxu0 0.0
        %4626 = vmatprep.subr.mxu0 0.0
        %4627 = vmatpush1.msra.mxu0 0.0
        %4628 = vmatprep.subr.mxu0 0.0
        %4629 = vmatpush1.msra.mxu0 0.0
        %4630 = vmatprep.subr.mxu0 0.0
        %4631 = vmatpush1.msra.mxu0 0.0
        %4632 = vmatprep.subr.mxu0 0.0
        %4633 = vmatpush1.msra.mxu0 0.0
        %4634 = vmatprep.subr.mxu0 0.0
        %4635 = vmatpush1.msra.mxu0 0.0
        %4636 = vmatprep.subr.mxu0 0.0
        %4637 = vmatpush1.msra.mxu0 0.0
        %4638 = vmatprep.subr.mxu0 0.0
        %4639 = vmatpush1.msra.mxu0 0.0
        %4640 = vmatprep.subr.mxu0 0.0
        %4641 = vmatpush1.msra.mxu0 0.0
        %4642 = vmatprep.subr.mxu0 0.0
        %4643 = vmatpush1.msra.mxu0 0.0
        %4644 = vmatprep.subr.mxu0 0.0
        %4645 = vmatpush1.msra.mxu0 0.0
        %4646 = vmatprep.subr.mxu0 0.0
        %4647 = vmatpush1.msra.mxu0 0.0
        %4648 = vmatprep.subr.mxu0 0.0
        %4649 = vmatpush1.msra.mxu0 0.0
        %4650 = vmatprep.subr.mxu0 0.0
        %4651 = vmatpush1.msra.mxu0 0.0
        %4652 = vmatprep.subr.mxu0 0.0
        %4653 = vmatpush1.msra.mxu0 0.0
        %4654 = vmatprep.subr.mxu0 0.0
        %4655 = vmatpush1.msra.mxu0 0.0
        %4656 = vmatprep.subr.mxu0 0.0
        %4657 = vmatpush1.msra.mxu0 0.0
        %4658 = vmatprep.subr.mxu0 0.0
        %4659 = vmatpush1.msra.mxu0 0.0
        %4660 = vmatprep.subr.mxu0 0.0
        %4661 = vmatpush1.msra.mxu0 0.0
        %4662 = vmatprep.subr.mxu0 0.0
        %4663 = vmatpush1.msra.mxu0 0.0
        %4664 = vmatprep.subr.mxu0 0.0
        %4665 = vmatpush1.msra.mxu0 0.0
        %4666 = vmatprep.subr.mxu0 0.0
        %4667 = vmatpush1.msra.mxu0 0.0
        %4668 = vmatprep.subr.mxu0 0.0
        %4669 = vmatpush1.msra.mxu0 0.0
        %4670 = vmatprep.subr.mxu0 0.0
        %4671 = vmatpush1.msra.mxu0 0.0
        %4672 = vmatprep.subr.mxu0 0.0
        %4673 = vmatpush1.msra.mxu0 0.0
        %4674 = vmatprep.subr.mxu0 0.0
        %4675 = vmatpush1.msra.mxu0 0.0
        %4676 = vmatprep.subr.mxu0 0.0
        %4677 = vmatpush1.msra.mxu0 0.0
        %4678 = vmatprep.mubr.f32.mxu0 0.0
        %4679 = vmatmul.mubr.f32.gmra.mrb[0].mxu0 %v4609
        %v4680 = vpop.f32.mrb[0].mxu0
        %v4681 = vadd.f32 0.0, %v4680
        %v4682 = vpop.f32.mrb[0].mxu0
        %4683 = vmatprep.mubr.f32.mxu0 0.0
        %4684 = vmatmul.mubr.f32.gmra.mrb[0].mxu0 %v4612
        %v4685 = vpop.f32.mrb[0].mxu0
        %v4686 = vadd.f32 0.0, %v4685
        %v4687 = vpop.f32.mrb[0].mxu0
        %4688 = vdwg.mxu0
        %v4690 = vsel %vm538, %v3689, 0
        %v4693 = vsel %vm538, %v3747, 0
        %4695 = vmatprep.subr.mxu0 0.0
        %4696 = vmatpush1.msra.mxu0 %v424
        %4697 = vmatprep.subr.mxu0 0.0
        %4698 = vmatpush1.msra.mxu0 %v425
        %4699 = vmatprep.subr.mxu0 0.0
        %4700 = vmatpush1.msra.mxu0 %v426
        %4701 = vmatprep.subr.mxu0 0.0
        %4702 = vmatpush1.msra.mxu0 %v427
        %4703 = vmatprep.subr.mxu0 0.0
        %4704 = vmatpush1.msra.mxu0 0.0
        %4705 = vmatprep.subr.mxu0 0.0
        %4706 = vmatpush1.msra.mxu0 0.0
        %4707 = vmatprep.subr.mxu0 0.0
        %4708 = vmatpush1.msra.mxu0 0.0
        %4709 = vmatprep.subr.mxu0 0.0
        %4710 = vmatpush1.msra.mxu0 0.0
        %4711 = vmatprep.subr.mxu0 0.0
        %4712 = vmatpush1.msra.mxu0 0.0
        %4713 = vmatprep.subr.mxu0 0.0
        %4714 = vmatpush1.msra.mxu0 0.0
        %4715 = vmatprep.subr.mxu0 0.0
        %4716 = vmatpush1.msra.mxu0 0.0
        %4717 = vmatprep.subr.mxu0 0.0
        %4718 = vmatpush1.msra.mxu0 0.0
        %4719 = vmatprep.subr.mxu0 0.0
        %4720 = vmatpush1.msra.mxu0 0.0
        %4721 = vmatprep.subr.mxu0 0.0
        %4722 = vmatpush1.msra.mxu0 0.0
        %4723 = vmatprep.subr.mxu0 0.0
        %4724 = vmatpush1.msra.mxu0 0.0
        %4725 = vmatprep.subr.mxu0 0.0
        %4726 = vmatpush1.msra.mxu0 0.0
        %4727 = vmatprep.subr.mxu0 0.0
        %4728 = vmatpush1.msra.mxu0 0.0
        %4729 = vmatprep.subr.mxu0 0.0
        %4730 = vmatpush1.msra.mxu0 0.0
        %4731 = vmatprep.subr.mxu0 0.0
        %4732 = vmatpush1.msra.mxu0 0.0
        %4733 = vmatprep.subr.mxu0 0.0
        %4734 = vmatpush1.msra.mxu0 0.0
        %4735 = vmatprep.subr.mxu0 0.0
        %4736 = vmatpush1.msra.mxu0 0.0
        %4737 = vmatprep.subr.mxu0 0.0
        %4738 = vmatpush1.msra.mxu0 0.0
        %4739 = vmatprep.subr.mxu0 0.0
        %4740 = vmatpush1.msra.mxu0 0.0
        %4741 = vmatprep.subr.mxu0 0.0
        %4742 = vmatpush1.msra.mxu0 0.0
        %4743 = vmatprep.subr.mxu0 0.0
        %4744 = vmatpush1.msra.mxu0 0.0
        %4745 = vmatprep.subr.mxu0 0.0
        %4746 = vmatpush1.msra.mxu0 0.0
        %4747 = vmatprep.subr.mxu0 0.0
        %4748 = vmatpush1.msra.mxu0 0.0
        %4749 = vmatprep.subr.mxu0 0.0
        %4750 = vmatpush1.msra.mxu0 0.0
        %4751 = vmatprep.subr.mxu0 0.0
        %4752 = vmatpush1.msra.mxu0 0.0
        %4753 = vmatprep.subr.mxu0 0.0
        %4754 = vmatpush1.msra.mxu0 0.0
        %4755 = vmatprep.subr.mxu0 0.0
        %4756 = vmatpush1.msra.mxu0 0.0
        %4757 = vmatprep.subr.mxu0 0.0
        %4758 = vmatpush1.msra.mxu0 0.0
        %4759 = vmatprep.mubr.f32.mxu0 0.0
        %4760 = vmatmul.mubr.f32.gmra.mrb[0].mxu0 %v4690
        %v4761 = vpop.f32.mrb[0].mxu0
        %v4762 = vadd.f32 0.0, %v4761
        %v4763 = vpop.f32.mrb[0].mxu0
        %4764 = vmatprep.mubr.f32.mxu0 0.0
        %4765 = vmatmul.mubr.f32.gmra.mrb[0].mxu0 %v4693
        %v4766 = vpop.f32.mrb[0].mxu0
        %v4767 = vadd.f32 0.0, %v4766
        %v4768 = vpop.f32.mrb[0].mxu0
        %4769 = vdwg.mxu0
        %v4771 = vsel %vm538, %v3690, 0
        %v4774 = vsel %vm538, %v3757, 0
        %4776 = vmatprep.subr.mxu0 0.0
        %4777 = vmatpush1.msra.mxu0 %v428
        %4778 = vmatprep.subr.mxu0 0.0
        %4779 = vmatpush1.msra.mxu0 %v429
        %4780 = vmatprep.subr.mxu0 0.0
        %4781 = vmatpush1.msra.mxu0 %v430
        %4782 = vmatprep.subr.mxu0 0.0
        %4783 = vmatpush1.msra.mxu0 %v431
        %4784 = vmatprep.subr.mxu0 0.0
        %4785 = vmatpush1.msra.mxu0 0.0
        %4786 = vmatprep.subr.mxu0 0.0
        %4787 = vmatpush1.msra.mxu0 0.0
        %4788 = vmatprep.subr.mxu0 0.0
        %4789 = vmatpush1.msra.mxu0 0.0
        %4790 = vmatprep.subr.mxu0 0.0
        %4791 = vmatpush1.msra.mxu0 0.0
        %4792 = vmatprep.subr.mxu0 0.0
        %4793 = vmatpush1.msra.mxu0 0.0
        %4794 = vmatprep.subr.mxu0 0.0
        %4795 = vmatpush1.msra.mxu0 0.0
        %4796 = vmatprep.subr.mxu0 0.0
        %4797 = vmatpush1.msra.mxu0 0.0
        %4798 = vmatprep.subr.mxu0 0.0
        %4799 = vmatpush1.msra.mxu0 0.0
        %4800 = vmatprep.subr.mxu0 0.0
        %4801 = vmatpush1.msra.mxu0 0.0
        %4802 = vmatprep.subr.mxu0 0.0
        %4803 = vmatpush1.msra.mxu0 0.0
        %4804 = vmatprep.subr.mxu0 0.0
        %4805 = vmatpush1.msra.mxu0 0.0
        %4806 = vmatprep.subr.mxu0 0.0
        %4807 = vmatpush1.msra.mxu0 0.0
        %4808 = vmatprep.subr.mxu0 0.0
        %4809 = vmatpush1.msra.mxu0 0.0
        %4810 = vmatprep.subr.mxu0 0.0
        %4811 = vmatpush1.msra.mxu0 0.0
        %4812 = vmatprep.subr.mxu0 0.0
        %4813 = vmatpush1.msra.mxu0 0.0
        %4814 = vmatprep.subr.mxu0 0.0
        %4815 = vmatpush1.msra.mxu0 0.0
        %4816 = vmatprep.subr.mxu0 0.0
        %4817 = vmatpush1.msra.mxu0 0.0
        %4818 = vmatprep.subr.mxu0 0.0
        %4819 = vmatpush1.msra.mxu0 0.0
        %4820 = vmatprep.subr.mxu0 0.0
        %4821 = vmatpush1.msra.mxu0 0.0
        %4822 = vmatprep.subr.mxu0 0.0
        %4823 = vmatpush1.msra.mxu0 0.0
        %4824 = vmatprep.subr.mxu0 0.0
        %4825 = vmatpush1.msra.mxu0 0.0
        %4826 = vmatprep.subr.mxu0 0.0
        %4827 = vmatpush1.msra.mxu0 0.0
        %4828 = vmatprep.subr.mxu0 0.0
        %4829 = vmatpush1.msra.mxu0 0.0
        %4830 = vmatprep.subr.mxu0 0.0
        %4831 = vmatpush1.msra.mxu0 0.0
        %4832 = vmatprep.subr.mxu0 0.0
        %4833 = vmatpush1.msra.mxu0 0.0
        %4834 = vmatprep.subr.mxu0 0.0
        %4835 = vmatpush1.msra.mxu0 0.0
        %4836 = vmatprep.subr.mxu0 0.0
        %4837 = vmatpush1.msra.mxu0 0.0
        %4838 = vmatprep.subr.mxu0 0.0
        %4839 = vmatpush1.msra.mxu0 0.0
        %4840 = vmatprep.mubr.f32.mxu0 0.0
        %4841 = vmatmul.mubr.f32.gmra.mrb[0].mxu0 %v4771
        %v4842 = vpop.f32.mrb[0].mxu0
        %v4843 = vadd.f32 0.0, %v4842
        %v4844 = vpop.f32.mrb[0].mxu0
        %4845 = vmatprep.mubr.f32.mxu0 0.0
        %4846 = vmatmul.mubr.f32.gmra.mrb[0].mxu0 %v4774
        %v4847 = vpop.f32.mrb[0].mxu0
        %v4848 = vadd.f32 0.0, %v4847
        %v4849 = vpop.f32.mrb[0].mxu0
        %4850 = vdwg.mxu0
        %v4852 = vsel %vm538, %v3691, 0
        %v4855 = vsel %vm538, %v3754, 0
        %4857 = vmatprep.subr.mxu0 0.0
        %4858 = vmatpush1.msra.mxu0 %v432
        %4859 = vmatprep.subr.mxu0 0.0
        %4860 = vmatpush1.msra.mxu0 %v433
        %4861 = vmatprep.subr.mxu0 0.0
        %4862 = vmatpush1.msra.mxu0 %v434
        %4863 = vmatprep.subr.mxu0 0.0
        %4864 = vmatpush1.msra.mxu0 %v435
        %4865 = vmatprep.subr.mxu0 0.0
        %4866 = vmatpush1.msra.mxu0 0.0
        %4867 = vmatprep.subr.mxu0 0.0
        %4868 = vmatpush1.msra.mxu0 0.0
        %4869 = vmatprep.subr.mxu0 0.0
        %4870 = vmatpush1.msra.mxu0 0.0
        %4871 = vmatprep.subr.mxu0 0.0
        %4872 = vmatpush1.msra.mxu0 0.0
        %4873 = vmatprep.subr.mxu0 0.0
        %4874 = vmatpush1.msra.mxu0 0.0
        %4875 = vmatprep.subr.mxu0 0.0
        %4876 = vmatpush1.msra.mxu0 0.0
        %4877 = vmatprep.subr.mxu0 0.0
        %4878 = vmatpush1.msra.mxu0 0.0
        %4879 = vmatprep.subr.mxu0 0.0
        %4880 = vmatpush1.msra.mxu0 0.0
        %4881 = vmatprep.subr.mxu0 0.0
        %4882 = vmatpush1.msra.mxu0 0.0
        %4883 = vmatprep.subr.mxu0 0.0
        %4884 = vmatpush1.msra.mxu0 0.0
        %4885 = vmatprep.subr.mxu0 0.0
        %4886 = vmatpush1.msra.mxu0 0.0
        %4887 = vmatprep.subr.mxu0 0.0
        %4888 = vmatpush1.msra.mxu0 0.0
        %4889 = vmatprep.subr.mxu0 0.0
        %4890 = vmatpush1.msra.mxu0 0.0
        %4891 = vmatprep.subr.mxu0 0.0
        %4892 = vmatpush1.msra.mxu0 0.0
        %4893 = vmatprep.subr.mxu0 0.0
        %4894 = vmatpush1.msra.mxu0 0.0
        %4895 = vmatprep.subr.mxu0 0.0
        %4896 = vmatpush1.msra.mxu0 0.0
        %4897 = vmatprep.subr.mxu0 0.0
        %4898 = vmatpush1.msra.mxu0 0.0
        %4899 = vmatprep.subr.mxu0 0.0
        %4900 = vmatpush1.msra.mxu0 0.0
        %4901 = vmatprep.subr.mxu0 0.0
        %4902 = vmatpush1.msra.mxu0 0.0
        %4903 = vmatprep.subr.mxu0 0.0
        %4904 = vmatpush1.msra.mxu0 0.0
        %4905 = vmatprep.subr.mxu0 0.0
        %4906 = vmatpush1.msra.mxu0 0.0
        %4907 = vmatprep.subr.mxu0 0.0
        %4908 = vmatpush1.msra.mxu0 0.0
        %4909 = vmatprep.subr.mxu0 0.0
        %4910 = vmatpush1.msra.mxu0 0.0
        %4911 = vmatprep.subr.mxu0 0.0
        %4912 = vmatpush1.msra.mxu0 0.0
        %4913 = vmatprep.subr.mxu0 0.0
        %4914 = vmatpush1.msra.mxu0 0.0
        %4915 = vmatprep.subr.mxu0 0.0
        %4916 = vmatpush1.msra.mxu0 0.0
        %4917 = vmatprep.subr.mxu0 0.0
        %4918 = vmatpush1.msra.mxu0 0.0
        %4919 = vmatprep.subr.mxu0 0.0
        %4920 = vmatpush1.msra.mxu0 0.0
        %4921 = vmatprep.mubr.f32.mxu0 0.0
        %4922 = vmatmul.mubr.f32.gmra.mrb[0].mxu0 %v4852
        %v4923 = vpop.f32.mrb[0].mxu0
        %v4924 = vadd.f32 0.0, %v4923
        %v4925 = vpop.f32.mrb[0].mxu0
        %4926 = vmatprep.mubr.f32.mxu0 0.0
        %4927 = vmatmul.mubr.f32.gmra.mrb[0].mxu0 %v4855
        %v4928 = vpop.f32.mrb[0].mxu0
        %v4929 = vadd.f32 0.0, %v4928
        %v4930 = vpop.f32.mrb[0].mxu0
        %4931 = vdwg.mxu0
        %v4933 = vsel %vm538, %v3692, 0
        %v4936 = vsel %vm538, %v3758, 0
        %4938 = vmatprep.subr.mxu0 0.0
        %4939 = vmatpush1.msra.mxu0 %v436
        %4940 = vmatprep.subr.mxu0 0.0
        %4941 = vmatpush1.msra.mxu0 %v437
        %4942 = vmatprep.subr.mxu0 0.0
        %4943 = vmatpush1.msra.mxu0 %v438
        %4944 = vmatprep.subr.mxu0 0.0
        %4945 = vmatpush1.msra.mxu0 %v439
        %4946 = vmatprep.subr.mxu0 0.0
        %4947 = vmatpush1.msra.mxu0 0.0
        %4948 = vmatprep.subr.mxu0 0.0
        %4949 = vmatpush1.msra.mxu0 0.0
        %4950 = vmatprep.subr.mxu0 0.0
        %4951 = vmatpush1.msra.mxu0 0.0
        %4952 = vmatprep.subr.mxu0 0.0
        %4953 = vmatpush1.msra.mxu0 0.0
        %4954 = vmatprep.subr.mxu0 0.0
        %4955 = vmatpush1.msra.mxu0 0.0
        %4956 = vmatprep.subr.mxu0 0.0
        %4957 = vmatpush1.msra.mxu0 0.0
        %4958 = vmatprep.subr.mxu0 0.0
        %4959 = vmatpush1.msra.mxu0 0.0
        %4960 = vmatprep.subr.mxu0 0.0
        %4961 = vmatpush1.msra.mxu0 0.0
        %4962 = vmatprep.subr.mxu0 0.0
        %4963 = vmatpush1.msra.mxu0 0.0
        %4964 = vmatprep.subr.mxu0 0.0
        %4965 = vmatpush1.msra.mxu0 0.0
        %4966 = vmatprep.subr.mxu0 0.0
        %4967 = vmatpush1.msra.mxu0 0.0
        %4968 = vmatprep.subr.mxu0 0.0
        %4969 = vmatpush1.msra.mxu0 0.0
        %4970 = vmatprep.subr.mxu0 0.0
        %4971 = vmatpush1.msra.mxu0 0.0
        %4972 = vmatprep.subr.mxu0 0.0
        %4973 = vmatpush1.msra.mxu0 0.0
        %4974 = vmatprep.subr.mxu0 0.0
        %4975 = vmatpush1.msra.mxu0 0.0
        %4976 = vmatprep.subr.mxu0 0.0
        %4977 = vmatpush1.msra.mxu0 0.0
        %4978 = vmatprep.subr.mxu0 0.0
        %4979 = vmatpush1.msra.mxu0 0.0
        %4980 = vmatprep.subr.mxu0 0.0
        %4981 = vmatpush1.msra.mxu0 0.0
        %4982 = vmatprep.subr.mxu0 0.0
        %4983 = vmatpush1.msra.mxu0 0.0
        %4984 = vmatprep.subr.mxu0 0.0
        %4985 = vmatpush1.msra.mxu0 0.0
        %4986 = vmatprep.subr.mxu0 0.0
        %4987 = vmatpush1.msra.mxu0 0.0
        %4988 = vmatprep.subr.mxu0 0.0
        %4989 = vmatpush1.msra.mxu0 0.0
        %4990 = vmatprep.subr.mxu0 0.0
        %4991 = vmatpush1.msra.mxu0 0.0
        %4992 = vmatprep.subr.mxu0 0.0
        %4993 = vmatpush1.msra.mxu0 0.0
        %4994 = vmatprep.subr.mxu0 0.0
        %4995 = vmatpush1.msra.mxu0 0.0
        %4996 = vmatprep.subr.mxu0 0.0
        %4997 = vmatpush1.msra.mxu0 0.0
        %4998 = vmatprep.subr.mxu0 0.0
        %4999 = vmatpush1.msra.mxu0 0.0
        %5000 = vmatprep.subr.mxu0 0.0
        %5001 = vmatpush1.msra.mxu0 0.0
        %5002 = vmatprep.mubr.f32.mxu0 0.0
        %5003 = vmatmul.mubr.f32.gmra.mrb[0].mxu0 %v4933
        %v5004 = vpop.f32.mrb[0].mxu0
        %v5005 = vadd.f32 0.0, %v5004
        %v5006 = vpop.f32.mrb[0].mxu0
        %5007 = vmatprep.mubr.f32.mxu0 0.0
        %5008 = vmatmul.mubr.f32.gmra.mrb[0].mxu0 %v4936
        %v5009 = vpop.f32.mrb[0].mxu0
        %v5010 = vadd.f32 0.0, %v5009
        %v5011 = vpop.f32.mrb[0].mxu0
        %5012 = vdwg.mxu0
        %v5014 = vsel %vm538, %v3887, 0
        %v5017 = vsel %vm538, %v3933, 0
        %5019 = vmatprep.subr.mxu0 0.0
        %5020 = vmatpush1.msra.mxu0 %v440
        %5021 = vmatprep.subr.mxu0 0.0
        %5022 = vmatpush1.msra.mxu0 %v441
        %5023 = vmatprep.subr.mxu0 0.0
        %5024 = vmatpush1.msra.mxu0 %v442
        %5025 = vmatprep.subr.mxu0 0.0
        %5026 = vmatpush1.msra.mxu0 %v443
        %5027 = vmatprep.subr.mxu0 0.0
        %5028 = vmatpush1.msra.mxu0 0.0
        %5029 = vmatprep.subr.mxu0 0.0
        %5030 = vmatpush1.msra.mxu0 0.0
        %5031 = vmatprep.subr.mxu0 0.0
        %5032 = vmatpush1.msra.mxu0 0.0
        %5033 = vmatprep.subr.mxu0 0.0
        %5034 = vmatpush1.msra.mxu0 0.0
        %5035 = vmatprep.subr.mxu0 0.0
        %5036 = vmatpush1.msra.mxu0 0.0
        %5037 = vmatprep.subr.mxu0 0.0
        %5038 = vmatpush1.msra.mxu0 0.0
        %5039 = vmatprep.subr.mxu0 0.0
        %5040 = vmatpush1.msra.mxu0 0.0
        %5041 = vmatprep.subr.mxu0 0.0
        %5042 = vmatpush1.msra.mxu0 0.0
        %5043 = vmatprep.subr.mxu0 0.0
        %5044 = vmatpush1.msra.mxu0 0.0
        %5045 = vmatprep.subr.mxu0 0.0
        %5046 = vmatpush1.msra.mxu0 0.0
        %5047 = vmatprep.subr.mxu0 0.0
        %5048 = vmatpush1.msra.mxu0 0.0
        %5049 = vmatprep.subr.mxu0 0.0
        %5050 = vmatpush1.msra.mxu0 0.0
        %5051 = vmatprep.subr.mxu0 0.0
        %5052 = vmatpush1.msra.mxu0 0.0
        %5053 = vmatprep.subr.mxu0 0.0
        %5054 = vmatpush1.msra.mxu0 0.0
        %5055 = vmatprep.subr.mxu0 0.0
        %5056 = vmatpush1.msra.mxu0 0.0
        %5057 = vmatprep.subr.mxu0 0.0
        %5058 = vmatpush1.msra.mxu0 0.0
        %5059 = vmatprep.subr.mxu0 0.0
        %5060 = vmatpush1.msra.mxu0 0.0
        %5061 = vmatprep.subr.mxu0 0.0
        %5062 = vmatpush1.msra.mxu0 0.0
        %5063 = vmatprep.subr.mxu0 0.0
        %5064 = vmatpush1.msra.mxu0 0.0
        %5065 = vmatprep.subr.mxu0 0.0
        %5066 = vmatpush1.msra.mxu0 0.0
        %5067 = vmatprep.subr.mxu0 0.0
        %5068 = vmatpush1.msra.mxu0 0.0
        %5069 = vmatprep.subr.mxu0 0.0
        %5070 = vmatpush1.msra.mxu0 0.0
        %5071 = vmatprep.subr.mxu0 0.0
        %5072 = vmatpush1.msra.mxu0 0.0
        %5073 = vmatprep.subr.mxu0 0.0
        %5074 = vmatpush1.msra.mxu0 0.0
        %5075 = vmatprep.subr.mxu0 0.0
        %5076 = vmatpush1.msra.mxu0 0.0
        %5077 = vmatprep.subr.mxu0 0.0
        %5078 = vmatpush1.msra.mxu0 0.0
        %5079 = vmatprep.subr.mxu0 0.0
        %5080 = vmatpush1.msra.mxu0 0.0
        %5081 = vmatprep.subr.mxu0 0.0
        %5082 = vmatpush1.msra.mxu0 0.0
        %5083 = vmatprep.mubr.f32.mxu0 0.0
        %5084 = vmatmul.mubr.f32.gmra.mrb[0].mxu0 %v5014
        %v5085 = vpop.f32.mrb[0].mxu0
        %v5086 = vadd.f32 0.0, %v5085
        %v5087 = vpop.f32.mrb[0].mxu0
        %5088 = vmatprep.mubr.f32.mxu0 0.0
        %5089 = vmatmul.mubr.f32.gmra.mrb[0].mxu0 %v5017
        %v5090 = vpop.f32.mrb[0].mxu0
        %v5091 = vadd.f32 0.0, %v5090
        %v5092 = vpop.f32.mrb[0].mxu0
        %5093 = vdwg.mxu0
        %v5095 = vsel %vm538, %v3888, 0
        %v5098 = vsel %vm538, %v3957, 0
        %5100 = vmatprep.subr.mxu0 0.0
        %5101 = vmatpush1.msra.mxu0 %v444
        %5102 = vmatprep.subr.mxu0 0.0
        %5103 = vmatpush1.msra.mxu0 %v445
        %5104 = vmatprep.subr.mxu0 0.0
        %5105 = vmatpush1.msra.mxu0 %v446
        %5106 = vmatprep.subr.mxu0 0.0
        %5107 = vmatpush1.msra.mxu0 %v447
        %5108 = vmatprep.subr.mxu0 0.0
        %5109 = vmatpush1.msra.mxu0 0.0
        %5110 = vmatprep.subr.mxu0 0.0
        %5111 = vmatpush1.msra.mxu0 0.0
        %5112 = vmatprep.subr.mxu0 0.0
        %5113 = vmatpush1.msra.mxu0 0.0
        %5114 = vmatprep.subr.mxu0 0.0
        %5115 = vmatpush1.msra.mxu0 0.0
        %5116 = vmatprep.subr.mxu0 0.0
        %5117 = vmatpush1.msra.mxu0 0.0
        %5118 = vmatprep.subr.mxu0 0.0
        %5119 = vmatpush1.msra.mxu0 0.0
        %5120 = vmatprep.subr.mxu0 0.0
        %5121 = vmatpush1.msra.mxu0 0.0
        %5122 = vmatprep.subr.mxu0 0.0
        %5123 = vmatpush1.msra.mxu0 0.0
        %5124 = vmatprep.subr.mxu0 0.0
        %5125 = vmatpush1.msra.mxu0 0.0
        %5126 = vmatprep.subr.mxu0 0.0
        %5127 = vmatpush1.msra.mxu0 0.0
        %5128 = vmatprep.subr.mxu0 0.0
        %5129 = vmatpush1.msra.mxu0 0.0
        %5130 = vmatprep.subr.mxu0 0.0
        %5131 = vmatpush1.msra.mxu0 0.0
        %5132 = vmatprep.subr.mxu0 0.0
        %5133 = vmatpush1.msra.mxu0 0.0
        %5134 = vmatprep.subr.mxu0 0.0
        %5135 = vmatpush1.msra.mxu0 0.0
        %5136 = vmatprep.subr.mxu0 0.0
        %5137 = vmatpush1.msra.mxu0 0.0
        %5138 = vmatprep.subr.mxu0 0.0
        %5139 = vmatpush1.msra.mxu0 0.0
        %5140 = vmatprep.subr.mxu0 0.0
        %5141 = vmatpush1.msra.mxu0 0.0
        %5142 = vmatprep.subr.mxu0 0.0
        %5143 = vmatpush1.msra.mxu0 0.0
        %5144 = vmatprep.subr.mxu0 0.0
        %5145 = vmatpush1.msra.mxu0 0.0
        %5146 = vmatprep.subr.mxu0 0.0
        %5147 = vmatpush1.msra.mxu0 0.0
        %5148 = vmatprep.subr.mxu0 0.0
        %5149 = vmatpush1.msra.mxu0 0.0
        %5150 = vmatprep.subr.mxu0 0.0
        %5151 = vmatpush1.msra.mxu0 0.0
        %5152 = vmatprep.subr.mxu0 0.0
        %5153 = vmatpush1.msra.mxu0 0.0
        %5154 = vmatprep.subr.mxu0 0.0
        %5155 = vmatpush1.msra.mxu0 0.0
        %5156 = vmatprep.subr.mxu0 0.0
        %5157 = vmatpush1.msra.mxu0 0.0
        %5158 = vmatprep.subr.mxu0 0.0
        %5159 = vmatpush1.msra.mxu0 0.0
        %5160 = vmatprep.subr.mxu0 0.0
        %5161 = vmatpush1.msra.mxu0 0.0
        %5162 = vmatprep.subr.mxu0 0.0
        %5163 = vmatpush1.msra.mxu0 0.0
        %5164 = vmatprep.mubr.f32.mxu0 0.0
        %5165 = vmatmul.mubr.f32.gmra.mrb[0].mxu0 %v5095
        %v5166 = vpop.f32.mrb[0].mxu0
        %v5167 = vadd.f32 0.0, %v5166
        %v5168 = vpop.f32.mrb[0].mxu0
        %5169 = vmatprep.mubr.f32.mxu0 0.0
        %5170 = vmatmul.mubr.f32.gmra.mrb[0].mxu0 %v5098
        %v5171 = vpop.f32.mrb[0].mxu0
        %v5172 = vadd.f32 0.0, %v5171
        %v5173 = vpop.f32.mrb[0].mxu0
        %5174 = vdwg.mxu0
        %v5176 = vsel %vm538, %v3889, 0
        %v5179 = vsel %vm538, %v3940, 0
        %5181 = vmatprep.subr.mxu0 0.0
        %5182 = vmatpush1.msra.mxu0 %v448
        %5183 = vmatprep.subr.mxu0 0.0
        %5184 = vmatpush1.msra.mxu0 %v449
        %5185 = vmatprep.subr.mxu0 0.0
        %5186 = vmatpush1.msra.mxu0 %v450
        %5187 = vmatprep.subr.mxu0 0.0
        %5188 = vmatpush1.msra.mxu0 %v451
        %5189 = vmatprep.subr.mxu0 0.0
        %5190 = vmatpush1.msra.mxu0 0.0
        %5191 = vmatprep.subr.mxu0 0.0
        %5192 = vmatpush1.msra.mxu0 0.0
        %5193 = vmatprep.subr.mxu0 0.0
        %5194 = vmatpush1.msra.mxu0 0.0
        %5195 = vmatprep.subr.mxu0 0.0
        %5196 = vmatpush1.msra.mxu0 0.0
        %5197 = vmatprep.subr.mxu0 0.0
        %5198 = vmatpush1.msra.mxu0 0.0
        %5199 = vmatprep.subr.mxu0 0.0
        %5200 = vmatpush1.msra.mxu0 0.0
        %5201 = vmatprep.subr.mxu0 0.0
        %5202 = vmatpush1.msra.mxu0 0.0
        %5203 = vmatprep.subr.mxu0 0.0
        %5204 = vmatpush1.msra.mxu0 0.0
        %5205 = vmatprep.subr.mxu0 0.0
        %5206 = vmatpush1.msra.mxu0 0.0
        %5207 = vmatprep.subr.mxu0 0.0
        %5208 = vmatpush1.msra.mxu0 0.0
        %5209 = vmatprep.subr.mxu0 0.0
        %5210 = vmatpush1.msra.mxu0 0.0
        %5211 = vmatprep.subr.mxu0 0.0
        %5212 = vmatpush1.msra.mxu0 0.0
        %5213 = vmatprep.subr.mxu0 0.0
        %5214 = vmatpush1.msra.mxu0 0.0
        %5215 = vmatprep.subr.mxu0 0.0
        %5216 = vmatpush1.msra.mxu0 0.0
        %5217 = vmatprep.subr.mxu0 0.0
        %5218 = vmatpush1.msra.mxu0 0.0
        %5219 = vmatprep.subr.mxu0 0.0
        %5220 = vmatpush1.msra.mxu0 0.0
        %5221 = vmatprep.subr.mxu0 0.0
        %5222 = vmatpush1.msra.mxu0 0.0
        %5223 = vmatprep.subr.mxu0 0.0
        %5224 = vmatpush1.msra.mxu0 0.0
        %5225 = vmatprep.subr.mxu0 0.0
        %5226 = vmatpush1.msra.mxu0 0.0
        %5227 = vmatprep.subr.mxu0 0.0
        %5228 = vmatpush1.msra.mxu0 0.0
        %5229 = vmatprep.subr.mxu0 0.0
        %5230 = vmatpush1.msra.mxu0 0.0
        %5231 = vmatprep.subr.mxu0 0.0
        %5232 = vmatpush1.msra.mxu0 0.0
        %5233 = vmatprep.subr.mxu0 0.0
        %5234 = vmatpush1.msra.mxu0 0.0
        %5235 = vmatprep.subr.mxu0 0.0
        %5236 = vmatpush1.msra.mxu0 0.0
        %5237 = vmatprep.subr.mxu0 0.0
        %5238 = vmatpush1.msra.mxu0 0.0
        %5239 = vmatprep.subr.mxu0 0.0
        %5240 = vmatpush1.msra.mxu0 0.0
        %5241 = vmatprep.subr.mxu0 0.0
        %5242 = vmatpush1.msra.mxu0 0.0
        %5243 = vmatprep.subr.mxu0 0.0
        %5244 = vmatpush1.msra.mxu0 0.0
        %5245 = vmatprep.mubr.f32.mxu0 0.0
        %5246 = vmatmul.mubr.f32.gmra.mrb[0].mxu0 %v5176
        %v5247 = vpop.f32.mrb[0].mxu0
        %v5248 = vadd.f32 0.0, %v5247
        %v5249 = vpop.f32.mrb[0].mxu0
        %5250 = vmatprep.mubr.f32.mxu0 0.0
        %5251 = vmatmul.mubr.f32.gmra.mrb[0].mxu0 %v5179
        %v5252 = vpop.f32.mrb[0].mxu0
        %v5253 = vadd.f32 0.0, %v5252
        %v5254 = vpop.f32.mrb[0].mxu0
        %5255 = vdwg.mxu0
        %v5257 = vsel %vm538, %v3890, 0
        %v5260 = vsel %vm538, %v3958, 0
        %5262 = vmatprep.subr.mxu0 0.0
        %5263 = vmatpush1.msra.mxu0 %v452
        %5264 = vmatprep.subr.mxu0 0.0
        %5265 = vmatpush1.msra.mxu0 %v453
        %5266 = vmatprep.subr.mxu0 0.0
        %5267 = vmatpush1.msra.mxu0 %v454
        %5268 = vmatprep.subr.mxu0 0.0
        %5269 = vmatpush1.msra.mxu0 %v455
        %5270 = vmatprep.subr.mxu0 0.0
        %5271 = vmatpush1.msra.mxu0 0.0
        %5272 = vmatprep.subr.mxu0 0.0
        %5273 = vmatpush1.msra.mxu0 0.0
        %5274 = vmatprep.subr.mxu0 0.0
        %5275 = vmatpush1.msra.mxu0 0.0
        %5276 = vmatprep.subr.mxu0 0.0
        %5277 = vmatpush1.msra.mxu0 0.0
        %5278 = vmatprep.subr.mxu0 0.0
        %5279 = vmatpush1.msra.mxu0 0.0
        %5280 = vmatprep.subr.mxu0 0.0
        %5281 = vmatpush1.msra.mxu0 0.0
        %5282 = vmatprep.subr.mxu0 0.0
        %5283 = vmatpush1.msra.mxu0 0.0
        %5284 = vmatprep.subr.mxu0 0.0
        %5285 = vmatpush1.msra.mxu0 0.0
        %5286 = vmatprep.subr.mxu0 0.0
        %5287 = vmatpush1.msra.mxu0 0.0
        %5288 = vmatprep.subr.mxu0 0.0
        %5289 = vmatpush1.msra.mxu0 0.0
        %5290 = vmatprep.subr.mxu0 0.0
        %5291 = vmatpush1.msra.mxu0 0.0
        %5292 = vmatprep.subr.mxu0 0.0
        %5293 = vmatpush1.msra.mxu0 0.0
        %5294 = vmatprep.subr.mxu0 0.0
        %5295 = vmatpush1.msra.mxu0 0.0
        %5296 = vmatprep.subr.mxu0 0.0
        %5297 = vmatpush1.msra.mxu0 0.0
        %5298 = vmatprep.subr.mxu0 0.0
        %5299 = vmatpush1.msra.mxu0 0.0
        %5300 = vmatprep.subr.mxu0 0.0
        %5301 = vmatpush1.msra.mxu0 0.0
        %5302 = vmatprep.subr.mxu0 0.0
        %5303 = vmatpush1.msra.mxu0 0.0
        %5304 = vmatprep.subr.mxu0 0.0
        %5305 = vmatpush1.msra.mxu0 0.0
        %5306 = vmatprep.subr.mxu0 0.0
        %5307 = vmatpush1.msra.mxu0 0.0
        %5308 = vmatprep.subr.mxu0 0.0
        %5309 = vmatpush1.msra.mxu0 0.0
        %5310 = vmatprep.subr.mxu0 0.0
        %5311 = vmatpush1.msra.mxu0 0.0
        %5312 = vmatprep.subr.mxu0 0.0
        %5313 = vmatpush1.msra.mxu0 0.0
        %5314 = vmatprep.subr.mxu0 0.0
        %5315 = vmatpush1.msra.mxu0 0.0
        %5316 = vmatprep.subr.mxu0 0.0
        %5317 = vmatpush1.msra.mxu0 0.0
        %5318 = vmatprep.subr.mxu0 0.0
        %5319 = vmatpush1.msra.mxu0 0.0
        %5320 = vmatprep.subr.mxu0 0.0
        %5321 = vmatpush1.msra.mxu0 0.0
        %5322 = vmatprep.subr.mxu0 0.0
        %5323 = vmatpush1.msra.mxu0 0.0
        %5324 = vmatprep.subr.mxu0 0.0
        %5325 = vmatpush1.msra.mxu0 0.0
        %5326 = vmatprep.mubr.f32.mxu0 0.0
        %5327 = vmatmul.mubr.f32.gmra.mrb[0].mxu0 %v5257
        %v5328 = vpop.f32.mrb[0].mxu0
        %v5329 = vadd.f32 0.0, %v5328
        %v5330 = vpop.f32.mrb[0].mxu0
        %5331 = vmatprep.mubr.f32.mxu0 0.0
        %5332 = vmatmul.mubr.f32.gmra.mrb[0].mxu0 %v5260
        %v5333 = vpop.f32.mrb[0].mxu0
        %v5334 = vadd.f32 0.0, %v5333
        %v5335 = vpop.f32.mrb[0].mxu0
        %5336 = vdwg.mxu0
        %v5338 = vsel %vm538, %v3891, 0
        %v5341 = vsel %vm538, %v3949, 0
        %5343 = vmatprep.subr.mxu0 0.0
        %5344 = vmatpush1.msra.mxu0 %v456
        %5345 = vmatprep.subr.mxu0 0.0
        %5346 = vmatpush1.msra.mxu0 %v457
        %5347 = vmatprep.subr.mxu0 0.0
        %5348 = vmatpush1.msra.mxu0 %v458
        %5349 = vmatprep.subr.mxu0 0.0
        %5350 = vmatpush1.msra.mxu0 %v459
        %5351 = vmatprep.subr.mxu0 0.0
        %5352 = vmatpush1.msra.mxu0 0.0
        %5353 = vmatprep.subr.mxu0 0.0
        %5354 = vmatpush1.msra.mxu0 0.0
        %5355 = vmatprep.subr.mxu0 0.0
        %5356 = vmatpush1.msra.mxu0 0.0
        %5357 = vmatprep.subr.mxu0 0.0
        %5358 = vmatpush1.msra.mxu0 0.0
        %5359 = vmatprep.subr.mxu0 0.0
        %5360 = vmatpush1.msra.mxu0 0.0
        %5361 = vmatprep.subr.mxu0 0.0
        %5362 = vmatpush1.msra.mxu0 0.0
        %5363 = vmatprep.subr.mxu0 0.0
        %5364 = vmatpush1.msra.mxu0 0.0
        %5365 = vmatprep.subr.mxu0 0.0
        %5366 = vmatpush1.msra.mxu0 0.0
        %5367 = vmatprep.subr.mxu0 0.0
        %5368 = vmatpush1.msra.mxu0 0.0
        %5369 = vmatprep.subr.mxu0 0.0
        %5370 = vmatpush1.msra.mxu0 0.0
        %5371 = vmatprep.subr.mxu0 0.0
        %5372 = vmatpush1.msra.mxu0 0.0
        %5373 = vmatprep.subr.mxu0 0.0
        %5374 = vmatpush1.msra.mxu0 0.0
        %5375 = vmatprep.subr.mxu0 0.0
        %5376 = vmatpush1.msra.mxu0 0.0
        %5377 = vmatprep.subr.mxu0 0.0
        %5378 = vmatpush1.msra.mxu0 0.0
        %5379 = vmatprep.subr.mxu0 0.0
        %5380 = vmatpush1.msra.mxu0 0.0
        %5381 = vmatprep.subr.mxu0 0.0
        %5382 = vmatpush1.msra.mxu0 0.0
        %5383 = vmatprep.subr.mxu0 0.0
        %5384 = vmatpush1.msra.mxu0 0.0
        %5385 = vmatprep.subr.mxu0 0.0
        %5386 = vmatpush1.msra.mxu0 0.0
        %5387 = vmatprep.subr.mxu0 0.0
        %5388 = vmatpush1.msra.mxu0 0.0
        %5389 = vmatprep.subr.mxu0 0.0
        %5390 = vmatpush1.msra.mxu0 0.0
        %5391 = vmatprep.subr.mxu0 0.0
        %5392 = vmatpush1.msra.mxu0 0.0
        %5393 = vmatprep.subr.mxu0 0.0
        %5394 = vmatpush1.msra.mxu0 0.0
        %5395 = vmatprep.subr.mxu0 0.0
        %5396 = vmatpush1.msra.mxu0 0.0
        %5397 = vmatprep.subr.mxu0 0.0
        %5398 = vmatpush1.msra.mxu0 0.0
        %5399 = vmatprep.subr.mxu0 0.0
        %5400 = vmatpush1.msra.mxu0 0.0
        %5401 = vmatprep.subr.mxu0 0.0
        %5402 = vmatpush1.msra.mxu0 0.0
        %5403 = vmatprep.subr.mxu0 0.0
        %5404 = vmatpush1.msra.mxu0 0.0
        %5405 = vmatprep.subr.mxu0 0.0
        %5406 = vmatpush1.msra.mxu0 0.0
        %5407 = vmatprep.mubr.f32.mxu0 0.0
        %5408 = vmatmul.mubr.f32.gmra.mrb[0].mxu0 %v5338
        %v5409 = vpop.f32.mrb[0].mxu0
        %v5410 = vadd.f32 0.0, %v5409
        %v5411 = vpop.f32.mrb[0].mxu0
        %5412 = vmatprep.mubr.f32.mxu0 0.0
        %5413 = vmatmul.mubr.f32.gmra.mrb[0].mxu0 %v5341
        %v5414 = vpop.f32.mrb[0].mxu0
        %v5415 = vadd.f32 0.0, %v5414
        %v5416 = vpop.f32.mrb[0].mxu0
        %5417 = vdwg.mxu0
        %v5419 = vsel %vm538, %v3892, 0
        %v5422 = vsel %vm538, %v3959, 0
        %5424 = vmatprep.subr.mxu0 0.0
        %5425 = vmatpush1.msra.mxu0 %v460
        %5426 = vmatprep.subr.mxu0 0.0
        %5427 = vmatpush1.msra.mxu0 %v461
        %5428 = vmatprep.subr.mxu0 0.0
        %5429 = vmatpush1.msra.mxu0 %v462
        %5430 = vmatprep.subr.mxu0 0.0
        %5431 = vmatpush1.msra.mxu0 %v463
        %5432 = vmatprep.subr.mxu0 0.0
        %5433 = vmatpush1.msra.mxu0 0.0
        %5434 = vmatprep.subr.mxu0 0.0
        %5435 = vmatpush1.msra.mxu0 0.0
        %5436 = vmatprep.subr.mxu0 0.0
        %5437 = vmatpush1.msra.mxu0 0.0
        %5438 = vmatprep.subr.mxu0 0.0
        %5439 = vmatpush1.msra.mxu0 0.0
        %5440 = vmatprep.subr.mxu0 0.0
        %5441 = vmatpush1.msra.mxu0 0.0
        %5442 = vmatprep.subr.mxu0 0.0
        %5443 = vmatpush1.msra.mxu0 0.0
        %5444 = vmatprep.subr.mxu0 0.0
        %5445 = vmatpush1.msra.mxu0 0.0
        %5446 = vmatprep.subr.mxu0 0.0
        %5447 = vmatpush1.msra.mxu0 0.0
        %5448 = vmatprep.subr.mxu0 0.0
        %5449 = vmatpush1.msra.mxu0 0.0
        %5450 = vmatprep.subr.mxu0 0.0
        %5451 = vmatpush1.msra.mxu0 0.0
        %5452 = vmatprep.subr.mxu0 0.0
        %5453 = vmatpush1.msra.mxu0 0.0
        %5454 = vmatprep.subr.mxu0 0.0
        %5455 = vmatpush1.msra.mxu0 0.0
        %5456 = vmatprep.subr.mxu0 0.0
        %5457 = vmatpush1.msra.mxu0 0.0
        %5458 = vmatprep.subr.mxu0 0.0
        %5459 = vmatpush1.msra.mxu0 0.0
        %5460 = vmatprep.subr.mxu0 0.0
        %5461 = vmatpush1.msra.mxu0 0.0
        %5462 = vmatprep.subr.mxu0 0.0
        %5463 = vmatpush1.msra.mxu0 0.0
        %5464 = vmatprep.subr.mxu0 0.0
        %5465 = vmatpush1.msra.mxu0 0.0
        %5466 = vmatprep.subr.mxu0 0.0
        %5467 = vmatpush1.msra.mxu0 0.0
        %5468 = vmatprep.subr.mxu0 0.0
        %5469 = vmatpush1.msra.mxu0 0.0
        %5470 = vmatprep.subr.mxu0 0.0
        %5471 = vmatpush1.msra.mxu0 0.0
        %5472 = vmatprep.subr.mxu0 0.0
        %5473 = vmatpush1.msra.mxu0 0.0
        %5474 = vmatprep.subr.mxu0 0.0
        %5475 = vmatpush1.msra.mxu0 0.0
        %5476 = vmatprep.subr.mxu0 0.0
        %5477 = vmatpush1.msra.mxu0 0.0
        %5478 = vmatprep.subr.mxu0 0.0
        %5479 = vmatpush1.msra.mxu0 0.0
        %5480 = vmatprep.subr.mxu0 0.0
        %5481 = vmatpush1.msra.mxu0 0.0
        %5482 = vmatprep.subr.mxu0 0.0
        %5483 = vmatpush1.msra.mxu0 0.0
        %5484 = vmatprep.subr.mxu0 0.0
        %5485 = vmatpush1.msra.mxu0 0.0
        %5486 = vmatprep.subr.mxu0 0.0
        %5487 = vmatpush1.msra.mxu0 0.0
        %5488 = vmatprep.mubr.f32.mxu0 0.0
        %5489 = vmatmul.mubr.f32.gmra.mrb[0].mxu0 %v5419
        %v5490 = vpop.f32.mrb[0].mxu0
        %v5491 = vadd.f32 0.0, %v5490
        %v5492 = vpop.f32.mrb[0].mxu0
        %5493 = vmatprep.mubr.f32.mxu0 0.0
        %5494 = vmatmul.mubr.f32.gmra.mrb[0].mxu0 %v5422
        %v5495 = vpop.f32.mrb[0].mxu0
        %v5496 = vadd.f32 0.0, %v5495
        %v5497 = vpop.f32.mrb[0].mxu0
        %5498 = vdwg.mxu0
        %v5500 = vsel %vm538, %v3893, 0
        %v5503 = vsel %vm538, %v3956, 0
        %5505 = vmatprep.subr.mxu0 0.0
        %5506 = vmatpush1.msra.mxu0 %v464
        %5507 = vmatprep.subr.mxu0 0.0
        %5508 = vmatpush1.msra.mxu0 %v465
        %5509 = vmatprep.subr.mxu0 0.0
        %5510 = vmatpush1.msra.mxu0 %v466
        %5511 = vmatprep.subr.mxu0 0.0
        %5512 = vmatpush1.msra.mxu0 %v467
        %5513 = vmatprep.subr.mxu0 0.0
        %5514 = vmatpush1.msra.mxu0 0.0
        %5515 = vmatprep.subr.mxu0 0.0
        %5516 = vmatpush1.msra.mxu0 0.0
        %5517 = vmatprep.subr.mxu0 0.0
        %5518 = vmatpush1.msra.mxu0 0.0
        %5519 = vmatprep.subr.mxu0 0.0
        %5520 = vmatpush1.msra.mxu0 0.0
        %5521 = vmatprep.subr.mxu0 0.0
        %5522 = vmatpush1.msra.mxu0 0.0
        %5523 = vmatprep.subr.mxu0 0.0
        %5524 = vmatpush1.msra.mxu0 0.0
        %5525 = vmatprep.subr.mxu0 0.0
        %5526 = vmatpush1.msra.mxu0 0.0
        %5527 = vmatprep.subr.mxu0 0.0
        %5528 = vmatpush1.msra.mxu0 0.0
        %5529 = vmatprep.subr.mxu0 0.0
        %5530 = vmatpush1.msra.mxu0 0.0
        %5531 = vmatprep.subr.mxu0 0.0
        %5532 = vmatpush1.msra.mxu0 0.0
        %5533 = vmatprep.subr.mxu0 0.0
        %5534 = vmatpush1.msra.mxu0 0.0
        %5535 = vmatprep.subr.mxu0 0.0
        %5536 = vmatpush1.msra.mxu0 0.0
        %5537 = vmatprep.subr.mxu0 0.0
        %5538 = vmatpush1.msra.mxu0 0.0
        %5539 = vmatprep.subr.mxu0 0.0
        %5540 = vmatpush1.msra.mxu0 0.0
        %5541 = vmatprep.subr.mxu0 0.0
        %5542 = vmatpush1.msra.mxu0 0.0
        %5543 = vmatprep.subr.mxu0 0.0
        %5544 = vmatpush1.msra.mxu0 0.0
        %5545 = vmatprep.subr.mxu0 0.0
        %5546 = vmatpush1.msra.mxu0 0.0
        %5547 = vmatprep.subr.mxu0 0.0
        %5548 = vmatpush1.msra.mxu0 0.0
        %5549 = vmatprep.subr.mxu0 0.0
        %5550 = vmatpush1.msra.mxu0 0.0
        %5551 = vmatprep.subr.mxu0 0.0
        %5552 = vmatpush1.msra.mxu0 0.0
        %5553 = vmatprep.subr.mxu0 0.0
        %5554 = vmatpush1.msra.mxu0 0.0
        %5555 = vmatprep.subr.mxu0 0.0
        %5556 = vmatpush1.msra.mxu0 0.0
        %5557 = vmatprep.subr.mxu0 0.0
        %5558 = vmatpush1.msra.mxu0 0.0
        %5559 = vmatprep.subr.mxu0 0.0
        %5560 = vmatpush1.msra.mxu0 0.0
        %5561 = vmatprep.subr.mxu0 0.0
        %5562 = vmatpush1.msra.mxu0 0.0
        %5563 = vmatprep.subr.mxu0 0.0
        %5564 = vmatpush1.msra.mxu0 0.0
        %5565 = vmatprep.subr.mxu0 0.0
        %5566 = vmatpush1.msra.mxu0 0.0
        %5567 = vmatprep.subr.mxu0 0.0
        %5568 = vmatpush1.msra.mxu0 0.0
        %5569 = vmatprep.mubr.f32.mxu0 0.0
        %5570 = vmatmul.mubr.f32.gmra.mrb[0].mxu0 %v5500
        %v5571 = vpop.f32.mrb[0].mxu0
        %v5572 = vadd.f32 0.0, %v5571
        %v5573 = vpop.f32.mrb[0].mxu0
        %5574 = vmatprep.mubr.f32.mxu0 0.0
        %5575 = vmatmul.mubr.f32.gmra.mrb[0].mxu0 %v5503
        %v5576 = vpop.f32.mrb[0].mxu0
        %v5577 = vadd.f32 0.0, %v5576
        %v5578 = vpop.f32.mrb[0].mxu0
        %5579 = vdwg.mxu0
        %v5581 = vsel %vm538, %v3894, 0
        %v5584 = vsel %vm538, %v3960, 0
        %5586 = vmatprep.subr.mxu0 0.0
        %5587 = vmatpush1.msra.mxu0 %v468
        %5588 = vmatprep.subr.mxu0 0.0
        %5589 = vmatpush1.msra.mxu0 %v469
        %5590 = vmatprep.subr.mxu0 0.0
        %5591 = vmatpush1.msra.mxu0 %v470
        %5592 = vmatprep.subr.mxu0 0.0
        %5593 = vmatpush1.msra.mxu0 %v471
        %5594 = vmatprep.subr.mxu0 0.0
        %5595 = vmatpush1.msra.mxu0 0.0
        %5596 = vmatprep.subr.mxu0 0.0
        %5597 = vmatpush1.msra.mxu0 0.0
        %5598 = vmatprep.subr.mxu0 0.0
        %5599 = vmatpush1.msra.mxu0 0.0
        %5600 = vmatprep.subr.mxu0 0.0
        %5601 = vmatpush1.msra.mxu0 0.0
        %5602 = vmatprep.subr.mxu0 0.0
        %5603 = vmatpush1.msra.mxu0 0.0
        %5604 = vmatprep.subr.mxu0 0.0
        %5605 = vmatpush1.msra.mxu0 0.0
        %5606 = vmatprep.subr.mxu0 0.0
        %5607 = vmatpush1.msra.mxu0 0.0
        %5608 = vmatprep.subr.mxu0 0.0
        %5609 = vmatpush1.msra.mxu0 0.0
        %5610 = vmatprep.subr.mxu0 0.0
        %5611 = vmatpush1.msra.mxu0 0.0
        %5612 = vmatprep.subr.mxu0 0.0
        %5613 = vmatpush1.msra.mxu0 0.0
        %5614 = vmatprep.subr.mxu0 0.0
        %5615 = vmatpush1.msra.mxu0 0.0
        %5616 = vmatprep.subr.mxu0 0.0
        %5617 = vmatpush1.msra.mxu0 0.0
        %5618 = vmatprep.subr.mxu0 0.0
        %5619 = vmatpush1.msra.mxu0 0.0
        %5620 = vmatprep.subr.mxu0 0.0
        %5621 = vmatpush1.msra.mxu0 0.0
        %5622 = vmatprep.subr.mxu0 0.0
        %5623 = vmatpush1.msra.mxu0 0.0
        %5624 = vmatprep.subr.mxu0 0.0
        %5625 = vmatpush1.msra.mxu0 0.0
        %5626 = vmatprep.subr.mxu0 0.0
        %5627 = vmatpush1.msra.mxu0 0.0
        %5628 = vmatprep.subr.mxu0 0.0
        %5629 = vmatpush1.msra.mxu0 0.0
        %5630 = vmatprep.subr.mxu0 0.0
        %5631 = vmatpush1.msra.mxu0 0.0
        %5632 = vmatprep.subr.mxu0 0.0
        %5633 = vmatpush1.msra.mxu0 0.0
        %5634 = vmatprep.subr.mxu0 0.0
        %5635 = vmatpush1.msra.mxu0 0.0
        %5636 = vmatprep.subr.mxu0 0.0
        %5637 = vmatpush1.msra.mxu0 0.0
        %5638 = vmatprep.subr.mxu0 0.0
        %5639 = vmatpush1.msra.mxu0 0.0
        %5640 = vmatprep.subr.mxu0 0.0
        %5641 = vmatpush1.msra.mxu0 0.0
        %5642 = vmatprep.subr.mxu0 0.0
        %5643 = vmatpush1.msra.mxu0 0.0
        %5644 = vmatprep.subr.mxu0 0.0
        %5645 = vmatpush1.msra.mxu0 0.0
        %5646 = vmatprep.subr.mxu0 0.0
        %5647 = vmatpush1.msra.mxu0 0.0
        %5648 = vmatprep.subr.mxu0 0.0
        %5649 = vmatpush1.msra.mxu0 0.0
        %5650 = vmatprep.mubr.f32.mxu0 0.0
        %5651 = vmatmul.mubr.f32.gmra.mrb[0].mxu0 %v5581
        %v5652 = vpop.f32.mrb[0].mxu0
        %v5653 = vadd.f32 0.0, %v5652
        %v5654 = vpop.f32.mrb[0].mxu0
        %5655 = vmatprep.mubr.f32.mxu0 0.0
        %5656 = vmatmul.mubr.f32.gmra.mrb[0].mxu0 %v5584
        %v5657 = vpop.f32.mrb[0].mxu0
        %v5658 = vadd.f32 0.0, %v5657
        %v5659 = vpop.f32.mrb[0].mxu0
        %5660 = vdwg.mxu0
        %v5662 = vsel %vm538, %v4089, 0
        %v5665 = vsel %vm538, %v4135, 0
        %5667 = vmatprep.subr.mxu0 0.0
        %5668 = vmatpush1.msra.mxu0 %v472
        %5669 = vmatprep.subr.mxu0 0.0
        %5670 = vmatpush1.msra.mxu0 %v473
        %5671 = vmatprep.subr.mxu0 0.0
        %5672 = vmatpush1.msra.mxu0 %v474
        %5673 = vmatprep.subr.mxu0 0.0
        %5674 = vmatpush1.msra.mxu0 %v475
        %5675 = vmatprep.subr.mxu0 0.0
        %5676 = vmatpush1.msra.mxu0 0.0
        %5677 = vmatprep.subr.mxu0 0.0
        %5678 = vmatpush1.msra.mxu0 0.0
        %5679 = vmatprep.subr.mxu0 0.0
        %5680 = vmatpush1.msra.mxu0 0.0
        %5681 = vmatprep.subr.mxu0 0.0
        %5682 = vmatpush1.msra.mxu0 0.0
        %5683 = vmatprep.subr.mxu0 0.0
        %5684 = vmatpush1.msra.mxu0 0.0
        %5685 = vmatprep.subr.mxu0 0.0
        %5686 = vmatpush1.msra.mxu0 0.0
        %5687 = vmatprep.subr.mxu0 0.0
        %5688 = vmatpush1.msra.mxu0 0.0
        %5689 = vmatprep.subr.mxu0 0.0
        %5690 = vmatpush1.msra.mxu0 0.0
        %5691 = vmatprep.subr.mxu0 0.0
        %5692 = vmatpush1.msra.mxu0 0.0
        %5693 = vmatprep.subr.mxu0 0.0
        %5694 = vmatpush1.msra.mxu0 0.0
        %5695 = vmatprep.subr.mxu0 0.0
        %5696 = vmatpush1.msra.mxu0 0.0
        %5697 = vmatprep.subr.mxu0 0.0
        %5698 = vmatpush1.msra.mxu0 0.0
        %5699 = vmatprep.subr.mxu0 0.0
        %5700 = vmatpush1.msra.mxu0 0.0
        %5701 = vmatprep.subr.mxu0 0.0
        %5702 = vmatpush1.msra.mxu0 0.0
        %5703 = vmatprep.subr.mxu0 0.0
        %5704 = vmatpush1.msra.mxu0 0.0
        %5705 = vmatprep.subr.mxu0 0.0
        %5706 = vmatpush1.msra.mxu0 0.0
        %5707 = vmatprep.subr.mxu0 0.0
        %5708 = vmatpush1.msra.mxu0 0.0
        %5709 = vmatprep.subr.mxu0 0.0
        %5710 = vmatpush1.msra.mxu0 0.0
        %5711 = vmatprep.subr.mxu0 0.0
        %5712 = vmatpush1.msra.mxu0 0.0
        %5713 = vmatprep.subr.mxu0 0.0
        %5714 = vmatpush1.msra.mxu0 0.0
        %5715 = vmatprep.subr.mxu0 0.0
        %5716 = vmatpush1.msra.mxu0 0.0
        %5717 = vmatprep.subr.mxu0 0.0
        %5718 = vmatpush1.msra.mxu0 0.0
        %5719 = vmatprep.subr.mxu0 0.0
        %5720 = vmatpush1.msra.mxu0 0.0
        %5721 = vmatprep.subr.mxu0 0.0
        %5722 = vmatpush1.msra.mxu0 0.0
        %5723 = vmatprep.subr.mxu0 0.0
        %5724 = vmatpush1.msra.mxu0 0.0
        %5725 = vmatprep.subr.mxu0 0.0
        %5726 = vmatpush1.msra.mxu0 0.0
        %5727 = vmatprep.subr.mxu0 0.0
        %5728 = vmatpush1.msra.mxu0 0.0
        %5729 = vmatprep.subr.mxu0 0.0
        %5730 = vmatpush1.msra.mxu0 0.0
        %5731 = vmatprep.mubr.f32.mxu0 0.0
        %5732 = vmatmul.mubr.f32.gmra.mrb[0].mxu0 %v5662
        %v5733 = vpop.f32.mrb[0].mxu0
        %v5734 = vadd.f32 0.0, %v5733
        %v5735 = vpop.f32.mrb[0].mxu0
        %5736 = vmatprep.mubr.f32.mxu0 0.0
        %5737 = vmatmul.mubr.f32.gmra.mrb[0].mxu0 %v5665
        %v5738 = vpop.f32.mrb[0].mxu0
        %v5739 = vadd.f32 0.0, %v5738
        %v5740 = vpop.f32.mrb[0].mxu0
        %5741 = vdwg.mxu0
        %v5743 = vsel %vm538, %v4090, 0
        %v5746 = vsel %vm538, %v4159, 0
        %5748 = vmatprep.subr.mxu0 0.0
        %5749 = vmatpush1.msra.mxu0 %v476
        %5750 = vmatprep.subr.mxu0 0.0
        %5751 = vmatpush1.msra.mxu0 %v477
        %5752 = vmatprep.subr.mxu0 0.0
        %5753 = vmatpush1.msra.mxu0 %v478
        %5754 = vmatprep.subr.mxu0 0.0
        %5755 = vmatpush1.msra.mxu0 %v479
        %5756 = vmatprep.subr.mxu0 0.0
        %5757 = vmatpush1.msra.mxu0 0.0
        %5758 = vmatprep.subr.mxu0 0.0
        %5759 = vmatpush1.msra.mxu0 0.0
        %5760 = vmatprep.subr.mxu0 0.0
        %5761 = vmatpush1.msra.mxu0 0.0
        %5762 = vmatprep.subr.mxu0 0.0
        %5763 = vmatpush1.msra.mxu0 0.0
        %5764 = vmatprep.subr.mxu0 0.0
        %5765 = vmatpush1.msra.mxu0 0.0
        %5766 = vmatprep.subr.mxu0 0.0
        %5767 = vmatpush1.msra.mxu0 0.0
        %5768 = vmatprep.subr.mxu0 0.0
        %5769 = vmatpush1.msra.mxu0 0.0
        %5770 = vmatprep.subr.mxu0 0.0
        %5771 = vmatpush1.msra.mxu0 0.0
        %5772 = vmatprep.subr.mxu0 0.0
        %5773 = vmatpush1.msra.mxu0 0.0
        %5774 = vmatprep.subr.mxu0 0.0
        %5775 = vmatpush1.msra.mxu0 0.0
        %5776 = vmatprep.subr.mxu0 0.0
        %5777 = vmatpush1.msra.mxu0 0.0
        %5778 = vmatprep.subr.mxu0 0.0
        %5779 = vmatpush1.msra.mxu0 0.0
        %5780 = vmatprep.subr.mxu0 0.0
        %5781 = vmatpush1.msra.mxu0 0.0
        %5782 = vmatprep.subr.mxu0 0.0
        %5783 = vmatpush1.msra.mxu0 0.0
        %5784 = vmatprep.subr.mxu0 0.0
        %5785 = vmatpush1.msra.mxu0 0.0
        %5786 = vmatprep.subr.mxu0 0.0
        %5787 = vmatpush1.msra.mxu0 0.0
        %5788 = vmatprep.subr.mxu0 0.0
        %5789 = vmatpush1.msra.mxu0 0.0
        %5790 = vmatprep.subr.mxu0 0.0
        %5791 = vmatpush1.msra.mxu0 0.0
        %5792 = vmatprep.subr.mxu0 0.0
        %5793 = vmatpush1.msra.mxu0 0.0
        %5794 = vmatprep.subr.mxu0 0.0
        %5795 = vmatpush1.msra.mxu0 0.0
        %5796 = vmatprep.subr.mxu0 0.0
        %5797 = vmatpush1.msra.mxu0 0.0
        %5798 = vmatprep.subr.mxu0 0.0
        %5799 = vmatpush1.msra.mxu0 0.0
        %5800 = vmatprep.subr.mxu0 0.0
        %5801 = vmatpush1.msra.mxu0 0.0
        %5802 = vmatprep.subr.mxu0 0.0
        %5803 = vmatpush1.msra.mxu0 0.0
        %5804 = vmatprep.subr.mxu0 0.0
        %5805 = vmatpush1.msra.mxu0 0.0
        %5806 = vmatprep.subr.mxu0 0.0
        %5807 = vmatpush1.msra.mxu0 0.0
        %5808 = vmatprep.subr.mxu0 0.0
        %5809 = vmatpush1.msra.mxu0 0.0
        %5810 = vmatprep.subr.mxu0 0.0
        %5811 = vmatpush1.msra.mxu0 0.0
        %5812 = vmatprep.mubr.f32.mxu0 0.0
        %5813 = vmatmul.mubr.f32.gmra.mrb[0].mxu0 %v5743
        %v5814 = vpop.f32.mrb[0].mxu0
        %v5815 = vadd.f32 0.0, %v5814
        %v5816 = vpop.f32.mrb[0].mxu0
        %5817 = vmatprep.mubr.f32.mxu0 0.0
        %5818 = vmatmul.mubr.f32.gmra.mrb[0].mxu0 %v5746
        %v5819 = vpop.f32.mrb[0].mxu0
        %v5820 = vadd.f32 0.0, %v5819
        %v5821 = vpop.f32.mrb[0].mxu0
        %5822 = vdwg.mxu0
        %v5824 = vsel %vm538, %v4091, 0
        %v5827 = vsel %vm538, %v4142, 0
        %5829 = vmatprep.subr.mxu0 0.0
        %5830 = vmatpush1.msra.mxu0 %v480
        %5831 = vmatprep.subr.mxu0 0.0
        %5832 = vmatpush1.msra.mxu0 %v481
        %5833 = vmatprep.subr.mxu0 0.0
        %5834 = vmatpush1.msra.mxu0 %v482
        %5835 = vmatprep.subr.mxu0 0.0
        %5836 = vmatpush1.msra.mxu0 %v483
        %5837 = vmatprep.subr.mxu0 0.0
        %5838 = vmatpush1.msra.mxu0 0.0
        %5839 = vmatprep.subr.mxu0 0.0
        %5840 = vmatpush1.msra.mxu0 0.0
        %5841 = vmatprep.subr.mxu0 0.0
        %5842 = vmatpush1.msra.mxu0 0.0
        %5843 = vmatprep.subr.mxu0 0.0
        %5844 = vmatpush1.msra.mxu0 0.0
        %5845 = vmatprep.subr.mxu0 0.0
        %5846 = vmatpush1.msra.mxu0 0.0
        %5847 = vmatprep.subr.mxu0 0.0
        %5848 = vmatpush1.msra.mxu0 0.0
        %5849 = vmatprep.subr.mxu0 0.0
        %5850 = vmatpush1.msra.mxu0 0.0
        %5851 = vmatprep.subr.mxu0 0.0
        %5852 = vmatpush1.msra.mxu0 0.0
        %5853 = vmatprep.subr.mxu0 0.0
        %5854 = vmatpush1.msra.mxu0 0.0
        %5855 = vmatprep.subr.mxu0 0.0
        %5856 = vmatpush1.msra.mxu0 0.0
        %5857 = vmatprep.subr.mxu0 0.0
        %5858 = vmatpush1.msra.mxu0 0.0
        %5859 = vmatprep.subr.mxu0 0.0
        %5860 = vmatpush1.msra.mxu0 0.0
        %5861 = vmatprep.subr.mxu0 0.0
        %5862 = vmatpush1.msra.mxu0 0.0
        %5863 = vmatprep.subr.mxu0 0.0
        %5864 = vmatpush1.msra.mxu0 0.0
        %5865 = vmatprep.subr.mxu0 0.0
        %5866 = vmatpush1.msra.mxu0 0.0
        %5867 = vmatprep.subr.mxu0 0.0
        %5868 = vmatpush1.msra.mxu0 0.0
        %5869 = vmatprep.subr.mxu0 0.0
        %5870 = vmatpush1.msra.mxu0 0.0
        %5871 = vmatprep.subr.mxu0 0.0
        %5872 = vmatpush1.msra.mxu0 0.0
        %5873 = vmatprep.subr.mxu0 0.0
        %5874 = vmatpush1.msra.mxu0 0.0
        %5875 = vmatprep.subr.mxu0 0.0
        %5876 = vmatpush1.msra.mxu0 0.0
        %5877 = vmatprep.subr.mxu0 0.0
        %5878 = vmatpush1.msra.mxu0 0.0
        %5879 = vmatprep.subr.mxu0 0.0
        %5880 = vmatpush1.msra.mxu0 0.0
        %5881 = vmatprep.subr.mxu0 0.0
        %5882 = vmatpush1.msra.mxu0 0.0
        %5883 = vmatprep.subr.mxu0 0.0
        %5884 = vmatpush1.msra.mxu0 0.0
        %5885 = vmatprep.subr.mxu0 0.0
        %5886 = vmatpush1.msra.mxu0 0.0
        %5887 = vmatprep.subr.mxu0 0.0
        %5888 = vmatpush1.msra.mxu0 0.0
        %5889 = vmatprep.subr.mxu0 0.0
        %5890 = vmatpush1.msra.mxu0 0.0
        %5891 = vmatprep.subr.mxu0 0.0
        %5892 = vmatpush1.msra.mxu0 0.0
        %5893 = vmatprep.mubr.f32.mxu0 0.0
        %5894 = vmatmul.mubr.f32.gmra.mrb[0].mxu0 %v5824
        %v5895 = vpop.f32.mrb[0].mxu0
        %v5896 = vadd.f32 0.0, %v5895
        %v5897 = vpop.f32.mrb[0].mxu0
        %5898 = vmatprep.mubr.f32.mxu0 0.0
        %5899 = vmatmul.mubr.f32.gmra.mrb[0].mxu0 %v5827
        %v5900 = vpop.f32.mrb[0].mxu0
        %v5901 = vadd.f32 0.0, %v5900
        %v5902 = vpop.f32.mrb[0].mxu0
        %5903 = vdwg.mxu0
        %v5905 = vsel %vm538, %v4092, 0
        %v5908 = vsel %vm538, %v4160, 0
        %5910 = vmatprep.subr.mxu0 0.0
        %5911 = vmatpush1.msra.mxu0 %v484
        %5912 = vmatprep.subr.mxu0 0.0
        %5913 = vmatpush1.msra.mxu0 %v485
        %5914 = vmatprep.subr.mxu0 0.0
        %5915 = vmatpush1.msra.mxu0 %v486
        %5916 = vmatprep.subr.mxu0 0.0
        %5917 = vmatpush1.msra.mxu0 %v487
        %5918 = vmatprep.subr.mxu0 0.0
        %5919 = vmatpush1.msra.mxu0 0.0
        %5920 = vmatprep.subr.mxu0 0.0
        %5921 = vmatpush1.msra.mxu0 0.0
        %5922 = vmatprep.subr.mxu0 0.0
        %5923 = vmatpush1.msra.mxu0 0.0
        %5924 = vmatprep.subr.mxu0 0.0
        %5925 = vmatpush1.msra.mxu0 0.0
        %5926 = vmatprep.subr.mxu0 0.0
        %5927 = vmatpush1.msra.mxu0 0.0
        %5928 = vmatprep.subr.mxu0 0.0
        %5929 = vmatpush1.msra.mxu0 0.0
        %5930 = vmatprep.subr.mxu0 0.0
        %5931 = vmatpush1.msra.mxu0 0.0
        %5932 = vmatprep.subr.mxu0 0.0
        %5933 = vmatpush1.msra.mxu0 0.0
        %5934 = vmatprep.subr.mxu0 0.0
        %5935 = vmatpush1.msra.mxu0 0.0
        %5936 = vmatprep.subr.mxu0 0.0
        %5937 = vmatpush1.msra.mxu0 0.0
        %5938 = vmatprep.subr.mxu0 0.0
        %5939 = vmatpush1.msra.mxu0 0.0
        %5940 = vmatprep.subr.mxu0 0.0
        %5941 = vmatpush1.msra.mxu0 0.0
        %5942 = vmatprep.subr.mxu0 0.0
        %5943 = vmatpush1.msra.mxu0 0.0
        %5944 = vmatprep.subr.mxu0 0.0
        %5945 = vmatpush1.msra.mxu0 0.0
        %5946 = vmatprep.subr.mxu0 0.0
        %5947 = vmatpush1.msra.mxu0 0.0
        %5948 = vmatprep.subr.mxu0 0.0
        %5949 = vmatpush1.msra.mxu0 0.0
        %5950 = vmatprep.subr.mxu0 0.0
        %5951 = vmatpush1.msra.mxu0 0.0
        %5952 = vmatprep.subr.mxu0 0.0
        %5953 = vmatpush1.msra.mxu0 0.0
        %5954 = vmatprep.subr.mxu0 0.0
        %5955 = vmatpush1.msra.mxu0 0.0
        %5956 = vmatprep.subr.mxu0 0.0
        %5957 = vmatpush1.msra.mxu0 0.0
        %5958 = vmatprep.subr.mxu0 0.0
        %5959 = vmatpush1.msra.mxu0 0.0
        %5960 = vmatprep.subr.mxu0 0.0
        %5961 = vmatpush1.msra.mxu0 0.0
        %5962 = vmatprep.subr.mxu0 0.0
        %5963 = vmatpush1.msra.mxu0 0.0
        %5964 = vmatprep.subr.mxu0 0.0
        %5965 = vmatpush1.msra.mxu0 0.0
        %5966 = vmatprep.subr.mxu0 0.0
        %5967 = vmatpush1.msra.mxu0 0.0
        %5968 = vmatprep.subr.mxu0 0.0
        %5969 = vmatpush1.msra.mxu0 0.0
        %5970 = vmatprep.subr.mxu0 0.0
        %5971 = vmatpush1.msra.mxu0 0.0
        %5972 = vmatprep.subr.mxu0 0.0
        %5973 = vmatpush1.msra.mxu0 0.0
        %5974 = vmatprep.mubr.f32.mxu0 0.0
        %5975 = vmatmul.mubr.f32.gmra.mrb[0].mxu0 %v5905
        %v5976 = vpop.f32.mrb[0].mxu0
        %v5977 = vadd.f32 0.0, %v5976
        %v5978 = vpop.f32.mrb[0].mxu0
        %5979 = vmatprep.mubr.f32.mxu0 0.0
        %5980 = vmatmul.mubr.f32.gmra.mrb[0].mxu0 %v5908
        %v5981 = vpop.f32.mrb[0].mxu0
        %v5982 = vadd.f32 0.0, %v5981
        %v5983 = vpop.f32.mrb[0].mxu0
        %5984 = vdwg.mxu0
        %v5986 = vsel %vm538, %v4093, 0
        %v5989 = vsel %vm538, %v4151, 0
        %5991 = vmatprep.subr.mxu0 0.0
        %5992 = vmatpush1.msra.mxu0 %v488
        %5993 = vmatprep.subr.mxu0 0.0
        %5994 = vmatpush1.msra.mxu0 %v489
        %5995 = vmatprep.subr.mxu0 0.0
        %5996 = vmatpush1.msra.mxu0 %v490
        %5997 = vmatprep.subr.mxu0 0.0
        %5998 = vmatpush1.msra.mxu0 %v491
        %5999 = vmatprep.subr.mxu0 0.0
        %6000 = vmatpush1.msra.mxu0 0.0
        %6001 = vmatprep.subr.mxu0 0.0
        %6002 = vmatpush1.msra.mxu0 0.0
        %6003 = vmatprep.subr.mxu0 0.0
        %6004 = vmatpush1.msra.mxu0 0.0
        %6005 = vmatprep.subr.mxu0 0.0
        %6006 = vmatpush1.msra.mxu0 0.0
        %6007 = vmatprep.subr.mxu0 0.0
        %6008 = vmatpush1.msra.mxu0 0.0
        %6009 = vmatprep.subr.mxu0 0.0
        %6010 = vmatpush1.msra.mxu0 0.0
        %6011 = vmatprep.subr.mxu0 0.0
        %6012 = vmatpush1.msra.mxu0 0.0
        %6013 = vmatprep.subr.mxu0 0.0
        %6014 = vmatpush1.msra.mxu0 0.0
        %6015 = vmatprep.subr.mxu0 0.0
        %6016 = vmatpush1.msra.mxu0 0.0
        %6017 = vmatprep.subr.mxu0 0.0
        %6018 = vmatpush1.msra.mxu0 0.0
        %6019 = vmatprep.subr.mxu0 0.0
        %6020 = vmatpush1.msra.mxu0 0.0
        %6021 = vmatprep.subr.mxu0 0.0
        %6022 = vmatpush1.msra.mxu0 0.0
        %6023 = vmatprep.subr.mxu0 0.0
        %6024 = vmatpush1.msra.mxu0 0.0
        %6025 = vmatprep.subr.mxu0 0.0
        %6026 = vmatpush1.msra.mxu0 0.0
        %6027 = vmatprep.subr.mxu0 0.0
        %6028 = vmatpush1.msra.mxu0 0.0
        %6029 = vmatprep.subr.mxu0 0.0
        %6030 = vmatpush1.msra.mxu0 0.0
        %6031 = vmatprep.subr.mxu0 0.0
        %6032 = vmatpush1.msra.mxu0 0.0
        %6033 = vmatprep.subr.mxu0 0.0
        %6034 = vmatpush1.msra.mxu0 0.0
        %6035 = vmatprep.subr.mxu0 0.0
        %6036 = vmatpush1.msra.mxu0 0.0
        %6037 = vmatprep.subr.mxu0 0.0
        %6038 = vmatpush1.msra.mxu0 0.0
        %6039 = vmatprep.subr.mxu0 0.0
        %6040 = vmatpush1.msra.mxu0 0.0
        %6041 = vmatprep.subr.mxu0 0.0
        %6042 = vmatpush1.msra.mxu0 0.0
        %6043 = vmatprep.subr.mxu0 0.0
        %6044 = vmatpush1.msra.mxu0 0.0
        %6045 = vmatprep.subr.mxu0 0.0
        %6046 = vmatpush1.msra.mxu0 0.0
        %6047 = vmatprep.subr.mxu0 0.0
        %6048 = vmatpush1.msra.mxu0 0.0
        %6049 = vmatprep.subr.mxu0 0.0
        %6050 = vmatpush1.msra.mxu0 0.0
        %6051 = vmatprep.subr.mxu0 0.0
        %6052 = vmatpush1.msra.mxu0 0.0
        %6053 = vmatprep.subr.mxu0 0.0
        %6054 = vmatpush1.msra.mxu0 0.0
        %6055 = vmatprep.mubr.f32.mxu0 0.0
        %6056 = vmatmul.mubr.f32.gmra.mrb[0].mxu0 %v5986
        %v6057 = vpop.f32.mrb[0].mxu0
        %v6058 = vadd.f32 0.0, %v6057
        %v6059 = vpop.f32.mrb[0].mxu0
        %6060 = vmatprep.mubr.f32.mxu0 0.0
        %6061 = vmatmul.mubr.f32.gmra.mrb[0].mxu0 %v5989
        %v6062 = vpop.f32.mrb[0].mxu0
        %v6063 = vadd.f32 0.0, %v6062
        %v6064 = vpop.f32.mrb[0].mxu0
        %6065 = vdwg.mxu0
        %v6067 = vsel %vm538, %v4094, 0
        %v6070 = vsel %vm538, %v4161, 0
        %6072 = vmatprep.subr.mxu0 0.0
        %6073 = vmatpush1.msra.mxu0 %v492
        %6074 = vmatprep.subr.mxu0 0.0
        %6075 = vmatpush1.msra.mxu0 %v493
        %6076 = vmatprep.subr.mxu0 0.0
        %6077 = vmatpush1.msra.mxu0 %v494
        %6078 = vmatprep.subr.mxu0 0.0
        %6079 = vmatpush1.msra.mxu0 %v495
        %6080 = vmatprep.subr.mxu0 0.0
        %6081 = vmatpush1.msra.mxu0 0.0
        %6082 = vmatprep.subr.mxu0 0.0
        %6083 = vmatpush1.msra.mxu0 0.0
        %6084 = vmatprep.subr.mxu0 0.0
        %6085 = vmatpush1.msra.mxu0 0.0
        %6086 = vmatprep.subr.mxu0 0.0
        %6087 = vmatpush1.msra.mxu0 0.0
        %6088 = vmatprep.subr.mxu0 0.0
        %6089 = vmatpush1.msra.mxu0 0.0
        %6090 = vmatprep.subr.mxu0 0.0
        %6091 = vmatpush1.msra.mxu0 0.0
        %6092 = vmatprep.subr.mxu0 0.0
        %6093 = vmatpush1.msra.mxu0 0.0
        %6094 = vmatprep.subr.mxu0 0.0
        %6095 = vmatpush1.msra.mxu0 0.0
        %6096 = vmatprep.subr.mxu0 0.0
        %6097 = vmatpush1.msra.mxu0 0.0
        %6098 = vmatprep.subr.mxu0 0.0
        %6099 = vmatpush1.msra.mxu0 0.0
        %6100 = vmatprep.subr.mxu0 0.0
        %6101 = vmatpush1.msra.mxu0 0.0
        %6102 = vmatprep.subr.mxu0 0.0
        %6103 = vmatpush1.msra.mxu0 0.0
        %6104 = vmatprep.subr.mxu0 0.0
        %6105 = vmatpush1.msra.mxu0 0.0
        %6106 = vmatprep.subr.mxu0 0.0
        %6107 = vmatpush1.msra.mxu0 0.0
        %6108 = vmatprep.subr.mxu0 0.0
        %6109 = vmatpush1.msra.mxu0 0.0
        %6110 = vmatprep.subr.mxu0 0.0
        %6111 = vmatpush1.msra.mxu0 0.0
        %6112 = vmatprep.subr.mxu0 0.0
        %6113 = vmatpush1.msra.mxu0 0.0
        %6114 = vmatprep.subr.mxu0 0.0
        %6115 = vmatpush1.msra.mxu0 0.0
        %6116 = vmatprep.subr.mxu0 0.0
        %6117 = vmatpush1.msra.mxu0 0.0
        %6118 = vmatprep.subr.mxu0 0.0
        %6119 = vmatpush1.msra.mxu0 0.0
        %6120 = vmatprep.subr.mxu0 0.0
        %6121 = vmatpush1.msra.mxu0 0.0
        %6122 = vmatprep.subr.mxu0 0.0
        %6123 = vmatpush1.msra.mxu0 0.0
        %6124 = vmatprep.subr.mxu0 0.0
        %6125 = vmatpush1.msra.mxu0 0.0
        %6126 = vmatprep.subr.mxu0 0.0
        %6127 = vmatpush1.msra.mxu0 0.0
        %6128 = vmatprep.subr.mxu0 0.0
        %6129 = vmatpush1.msra.mxu0 0.0
        %6130 = vmatprep.subr.mxu0 0.0
        %6131 = vmatpush1.msra.mxu0 0.0
        %6132 = vmatprep.subr.mxu0 0.0
        %6133 = vmatpush1.msra.mxu0 0.0
        %6134 = vmatprep.subr.mxu0 0.0
        %6135 = vmatpush1.msra.mxu0 0.0
        %6136 = vmatprep.mubr.f32.mxu0 0.0
        %6137 = vmatmul.mubr.f32.gmra.mrb[0].mxu0 %v6067
        %v6138 = vpop.f32.mrb[0].mxu0
        %v6139 = vadd.f32 0.0, %v6138
        %v6140 = vpop.f32.mrb[0].mxu0
        %6141 = vmatprep.mubr.f32.mxu0 0.0
        %6142 = vmatmul.mubr.f32.gmra.mrb[0].mxu0 %v6070
        %v6143 = vpop.f32.mrb[0].mxu0
        %v6144 = vadd.f32 0.0, %v6143
        %v6145 = vpop.f32.mrb[0].mxu0
        %6146 = vdwg.mxu0
        %v6148 = vsel %vm538, %v4095, 0
        %v6151 = vsel %vm538, %v4158, 0
        %6153 = vmatprep.subr.mxu0 0.0
        %6154 = vmatpush1.msra.mxu0 %v496
        %6155 = vmatprep.subr.mxu0 0.0
        %6156 = vmatpush1.msra.mxu0 %v497
        %6157 = vmatprep.subr.mxu0 0.0
        %6158 = vmatpush1.msra.mxu0 %v498
        %6159 = vmatprep.subr.mxu0 0.0
        %6160 = vmatpush1.msra.mxu0 %v499
        %6161 = vmatprep.subr.mxu0 0.0
        %6162 = vmatpush1.msra.mxu0 0.0
        %6163 = vmatprep.subr.mxu0 0.0
        %6164 = vmatpush1.msra.mxu0 0.0
        %6165 = vmatprep.subr.mxu0 0.0
        %6166 = vmatpush1.msra.mxu0 0.0
        %6167 = vmatprep.subr.mxu0 0.0
        %6168 = vmatpush1.msra.mxu0 0.0
        %6169 = vmatprep.subr.mxu0 0.0
        %6170 = vmatpush1.msra.mxu0 0.0
        %6171 = vmatprep.subr.mxu0 0.0
        %6172 = vmatpush1.msra.mxu0 0.0
        %6173 = vmatprep.subr.mxu0 0.0
        %6174 = vmatpush1.msra.mxu0 0.0
        %6175 = vmatprep.subr.mxu0 0.0
        %6176 = vmatpush1.msra.mxu0 0.0
        %6177 = vmatprep.subr.mxu0 0.0
        %6178 = vmatpush1.msra.mxu0 0.0
        %6179 = vmatprep.subr.mxu0 0.0
        %6180 = vmatpush1.msra.mxu0 0.0
        %6181 = vmatprep.subr.mxu0 0.0
        %6182 = vmatpush1.msra.mxu0 0.0
        %6183 = vmatprep.subr.mxu0 0.0
        %6184 = vmatpush1.msra.mxu0 0.0
        %6185 = vmatprep.subr.mxu0 0.0
        %6186 = vmatpush1.msra.mxu0 0.0
        %6187 = vmatprep.subr.mxu0 0.0
        %6188 = vmatpush1.msra.mxu0 0.0
        %6189 = vmatprep.subr.mxu0 0.0
        %6190 = vmatpush1.msra.mxu0 0.0
        %6191 = vmatprep.subr.mxu0 0.0
        %6192 = vmatpush1.msra.mxu0 0.0
        %6193 = vmatprep.subr.mxu0 0.0
        %6194 = vmatpush1.msra.mxu0 0.0
        %6195 = vmatprep.subr.mxu0 0.0
        %6196 = vmatpush1.msra.mxu0 0.0
        %6197 = vmatprep.subr.mxu0 0.0
        %6198 = vmatpush1.msra.mxu0 0.0
        %6199 = vmatprep.subr.mxu0 0.0
        %6200 = vmatpush1.msra.mxu0 0.0
        %6201 = vmatprep.subr.mxu0 0.0
        %6202 = vmatpush1.msra.mxu0 0.0
        %6203 = vmatprep.subr.mxu0 0.0
        %6204 = vmatpush1.msra.mxu0 0.0
        %6205 = vmatprep.subr.mxu0 0.0
        %6206 = vmatpush1.msra.mxu0 0.0
        %6207 = vmatprep.subr.mxu0 0.0
        %6208 = vmatpush1.msra.mxu0 0.0
        %6209 = vmatprep.subr.mxu0 0.0
        %6210 = vmatpush1.msra.mxu0 0.0
        %6211 = vmatprep.subr.mxu0 0.0
        %6212 = vmatpush1.msra.mxu0 0.0
        %6213 = vmatprep.subr.mxu0 0.0
        %6214 = vmatpush1.msra.mxu0 0.0
        %6215 = vmatprep.subr.mxu0 0.0
        %6216 = vmatpush1.msra.mxu0 0.0
        %6217 = vmatprep.mubr.f32.mxu0 0.0
        %6218 = vmatmul.mubr.f32.gmra.mrb[0].mxu0 %v6148
        %v6219 = vpop.f32.mrb[0].mxu0
        %v6220 = vadd.f32 0.0, %v6219
        %v6221 = vpop.f32.mrb[0].mxu0
        %6222 = vmatprep.mubr.f32.mxu0 0.0
        %6223 = vmatmul.mubr.f32.gmra.mrb[0].mxu0 %v6151
        %v6224 = vpop.f32.mrb[0].mxu0
        %v6225 = vadd.f32 0.0, %v6224
        %v6226 = vpop.f32.mrb[0].mxu0
        %6227 = vdwg.mxu0
        %v6229 = vsel %vm538, %v4096, 0
        %v6232 = vsel %vm538, %v4162, 0
        %6234 = vmatprep.subr.mxu0 0.0
        %6235 = vmatpush1.msra.mxu0 %v500
        %6236 = vmatprep.subr.mxu0 0.0
        %6237 = vmatpush1.msra.mxu0 %v501
        %6238 = vmatprep.subr.mxu0 0.0
        %6239 = vmatpush1.msra.mxu0 %v502
        %6240 = vmatprep.subr.mxu0 0.0
        %6241 = vmatpush1.msra.mxu0 %v503
        %6242 = vmatprep.subr.mxu0 0.0
        %6243 = vmatpush1.msra.mxu0 0.0
        %6244 = vmatprep.subr.mxu0 0.0
        %6245 = vmatpush1.msra.mxu0 0.0
        %6246 = vmatprep.subr.mxu0 0.0
        %6247 = vmatpush1.msra.mxu0 0.0
        %6248 = vmatprep.subr.mxu0 0.0
        %6249 = vmatpush1.msra.mxu0 0.0
        %6250 = vmatprep.subr.mxu0 0.0
        %6251 = vmatpush1.msra.mxu0 0.0
        %6252 = vmatprep.subr.mxu0 0.0
        %6253 = vmatpush1.msra.mxu0 0.0
        %6254 = vmatprep.subr.mxu0 0.0
        %6255 = vmatpush1.msra.mxu0 0.0
        %6256 = vmatprep.subr.mxu0 0.0
        %6257 = vmatpush1.msra.mxu0 0.0
        %6258 = vmatprep.subr.mxu0 0.0
        %6259 = vmatpush1.msra.mxu0 0.0
        %6260 = vmatprep.subr.mxu0 0.0
        %6261 = vmatpush1.msra.mxu0 0.0
        %6262 = vmatprep.subr.mxu0 0.0
        %6263 = vmatpush1.msra.mxu0 0.0
        %6264 = vmatprep.subr.mxu0 0.0
        %6265 = vmatpush1.msra.mxu0 0.0
        %6266 = vmatprep.subr.mxu0 0.0
        %6267 = vmatpush1.msra.mxu0 0.0
        %6268 = vmatprep.subr.mxu0 0.0
        %6269 = vmatpush1.msra.mxu0 0.0
        %6270 = vmatprep.subr.mxu0 0.0
        %6271 = vmatpush1.msra.mxu0 0.0
        %6272 = vmatprep.subr.mxu0 0.0
        %6273 = vmatpush1.msra.mxu0 0.0
        %6274 = vmatprep.subr.mxu0 0.0
        %6275 = vmatpush1.msra.mxu0 0.0
        %6276 = vmatprep.subr.mxu0 0.0
        %6277 = vmatpush1.msra.mxu0 0.0
        %6278 = vmatprep.subr.mxu0 0.0
        %6279 = vmatpush1.msra.mxu0 0.0
        %6280 = vmatprep.subr.mxu0 0.0
        %6281 = vmatpush1.msra.mxu0 0.0
        %6282 = vmatprep.subr.mxu0 0.0
        %6283 = vmatpush1.msra.mxu0 0.0
        %6284 = vmatprep.subr.mxu0 0.0
        %6285 = vmatpush1.msra.mxu0 0.0
        %6286 = vmatprep.subr.mxu0 0.0
        %6287 = vmatpush1.msra.mxu0 0.0
        %6288 = vmatprep.subr.mxu0 0.0
        %6289 = vmatpush1.msra.mxu0 0.0
        %6290 = vmatprep.subr.mxu0 0.0
        %6291 = vmatpush1.msra.mxu0 0.0
        %6292 = vmatprep.subr.mxu0 0.0
        %6293 = vmatpush1.msra.mxu0 0.0
        %6294 = vmatprep.subr.mxu0 0.0
        %6295 = vmatpush1.msra.mxu0 0.0
        %6296 = vmatprep.subr.mxu0 0.0
        %6297 = vmatpush1.msra.mxu0 0.0
        %6298 = vmatprep.mubr.f32.mxu0 0.0
        %6299 = vmatmul.mubr.f32.gmra.mrb[0].mxu0 %v6229
        %v6300 = vpop.f32.mrb[0].mxu0
        %v6301 = vadd.f32 0.0, %v6300
        %v6302 = vpop.f32.mrb[0].mxu0
        %6303 = vmatprep.mubr.f32.mxu0 0.0
        %6304 = vmatmul.mubr.f32.gmra.mrb[0].mxu0 %v6232
        %v6305 = vpop.f32.mrb[0].mxu0
        %v6306 = vadd.f32 0.0, %v6305
        %v6307 = vpop.f32.mrb[0].mxu0
        %6308 = vdwg.mxu0
        %v6310 = vsel %vm538, %v4291, 0
        %v6313 = vsel %vm538, %v4337, 0
        %6315 = vmatprep.subr.mxu0 0.0
        %6316 = vmatpush1.msra.mxu0 %v504
        %6317 = vmatprep.subr.mxu0 0.0
        %6318 = vmatpush1.msra.mxu0 %v505
        %6319 = vmatprep.subr.mxu0 0.0
        %6320 = vmatpush1.msra.mxu0 %v506
        %6321 = vmatprep.subr.mxu0 0.0
        %6322 = vmatpush1.msra.mxu0 %v507
        %6323 = vmatprep.subr.mxu0 0.0
        %6324 = vmatpush1.msra.mxu0 0.0
        %6325 = vmatprep.subr.mxu0 0.0
        %6326 = vmatpush1.msra.mxu0 0.0
        %6327 = vmatprep.subr.mxu0 0.0
        %6328 = vmatpush1.msra.mxu0 0.0
        %6329 = vmatprep.subr.mxu0 0.0
        %6330 = vmatpush1.msra.mxu0 0.0
        %6331 = vmatprep.subr.mxu0 0.0
        %6332 = vmatpush1.msra.mxu0 0.0
        %6333 = vmatprep.subr.mxu0 0.0
        %6334 = vmatpush1.msra.mxu0 0.0
        %6335 = vmatprep.subr.mxu0 0.0
        %6336 = vmatpush1.msra.mxu0 0.0
        %6337 = vmatprep.subr.mxu0 0.0
        %6338 = vmatpush1.msra.mxu0 0.0
        %6339 = vmatprep.subr.mxu0 0.0
        %6340 = vmatpush1.msra.mxu0 0.0
        %6341 = vmatprep.subr.mxu0 0.0
        %6342 = vmatpush1.msra.mxu0 0.0
        %6343 = vmatprep.subr.mxu0 0.0
        %6344 = vmatpush1.msra.mxu0 0.0
        %6345 = vmatprep.subr.mxu0 0.0
        %6346 = vmatpush1.msra.mxu0 0.0
        %6347 = vmatprep.subr.mxu0 0.0
        %6348 = vmatpush1.msra.mxu0 0.0
        %6349 = vmatprep.subr.mxu0 0.0
        %6350 = vmatpush1.msra.mxu0 0.0
        %6351 = vmatprep.subr.mxu0 0.0
        %6352 = vmatpush1.msra.mxu0 0.0
        %6353 = vmatprep.subr.mxu0 0.0
        %6354 = vmatpush1.msra.mxu0 0.0
        %6355 = vmatprep.subr.mxu0 0.0
        %6356 = vmatpush1.msra.mxu0 0.0
        %6357 = vmatprep.subr.mxu0 0.0
        %6358 = vmatpush1.msra.mxu0 0.0
        %6359 = vmatprep.subr.mxu0 0.0
        %6360 = vmatpush1.msra.mxu0 0.0
        %6361 = vmatprep.subr.mxu0 0.0
        %6362 = vmatpush1.msra.mxu0 0.0
        %6363 = vmatprep.subr.mxu0 0.0
        %6364 = vmatpush1.msra.mxu0 0.0
        %6365 = vmatprep.subr.mxu0 0.0
        %6366 = vmatpush1.msra.mxu0 0.0
        %6367 = vmatprep.subr.mxu0 0.0
        %6368 = vmatpush1.msra.mxu0 0.0
        %6369 = vmatprep.subr.mxu0 0.0
        %6370 = vmatpush1.msra.mxu0 0.0
        %6371 = vmatprep.subr.mxu0 0.0
        %6372 = vmatpush1.msra.mxu0 0.0
        %6373 = vmatprep.subr.mxu0 0.0
        %6374 = vmatpush1.msra.mxu0 0.0
        %6375 = vmatprep.subr.mxu0 0.0
        %6376 = vmatpush1.msra.mxu0 0.0
        %6377 = vmatprep.subr.mxu0 0.0
        %6378 = vmatpush1.msra.mxu0 0.0
        %6379 = vmatprep.mubr.f32.mxu0 0.0
        %6380 = vmatmul.mubr.f32.gmra.mrb[0].mxu0 %v6310
        %v6381 = vpop.f32.mrb[0].mxu0
        %v6382 = vadd.f32 0.0, %v6381
        %v6383 = vpop.f32.mrb[0].mxu0
        %6384 = vmatprep.mubr.f32.mxu0 0.0
        %6385 = vmatmul.mubr.f32.gmra.mrb[0].mxu0 %v6313
        %v6386 = vpop.f32.mrb[0].mxu0
        %v6387 = vadd.f32 0.0, %v6386
        %v6388 = vpop.f32.mrb[0].mxu0
        %6389 = vdwg.mxu0
        %v6391 = vsel %vm538, %v4292, 0
        %v6394 = vsel %vm538, %v4361, 0
        %6396 = vmatprep.subr.mxu0 0.0
        %6397 = vmatpush1.msra.mxu0 %v508
        %6398 = vmatprep.subr.mxu0 0.0
        %6399 = vmatpush1.msra.mxu0 %v509
        %6400 = vmatprep.subr.mxu0 0.0
        %6401 = vmatpush1.msra.mxu0 %v510
        %6402 = vmatprep.subr.mxu0 0.0
        %6403 = vmatpush1.msra.mxu0 %v511
        %6404 = vmatprep.subr.mxu0 0.0
        %6405 = vmatpush1.msra.mxu0 0.0
        %6406 = vmatprep.subr.mxu0 0.0
        %6407 = vmatpush1.msra.mxu0 0.0
        %6408 = vmatprep.subr.mxu0 0.0
        %6409 = vmatpush1.msra.mxu0 0.0
        %6410 = vmatprep.subr.mxu0 0.0
        %6411 = vmatpush1.msra.mxu0 0.0
        %6412 = vmatprep.subr.mxu0 0.0
        %6413 = vmatpush1.msra.mxu0 0.0
        %6414 = vmatprep.subr.mxu0 0.0
        %6415 = vmatpush1.msra.mxu0 0.0
        %6416 = vmatprep.subr.mxu0 0.0
        %6417 = vmatpush1.msra.mxu0 0.0
        %6418 = vmatprep.subr.mxu0 0.0
        %6419 = vmatpush1.msra.mxu0 0.0
        %6420 = vmatprep.subr.mxu0 0.0
        %6421 = vmatpush1.msra.mxu0 0.0
        %6422 = vmatprep.subr.mxu0 0.0
        %6423 = vmatpush1.msra.mxu0 0.0
        %6424 = vmatprep.subr.mxu0 0.0
        %6425 = vmatpush1.msra.mxu0 0.0
        %6426 = vmatprep.subr.mxu0 0.0
        %6427 = vmatpush1.msra.mxu0 0.0
        %6428 = vmatprep.subr.mxu0 0.0
        %6429 = vmatpush1.msra.mxu0 0.0
        %6430 = vmatprep.subr.mxu0 0.0
        %6431 = vmatpush1.msra.mxu0 0.0
        %6432 = vmatprep.subr.mxu0 0.0
        %6433 = vmatpush1.msra.mxu0 0.0
        %6434 = vmatprep.subr.mxu0 0.0
        %6435 = vmatpush1.msra.mxu0 0.0
        %6436 = vmatprep.subr.mxu0 0.0
        %6437 = vmatpush1.msra.mxu0 0.0
        %6438 = vmatprep.subr.mxu0 0.0
        %6439 = vmatpush1.msra.mxu0 0.0
        %6440 = vmatprep.subr.mxu0 0.0
        %6441 = vmatpush1.msra.mxu0 0.0
        %6442 = vmatprep.subr.mxu0 0.0
        %6443 = vmatpush1.msra.mxu0 0.0
        %6444 = vmatprep.subr.mxu0 0.0
        %6445 = vmatpush1.msra.mxu0 0.0
        %6446 = vmatprep.subr.mxu0 0.0
        %6447 = vmatpush1.msra.mxu0 0.0
        %6448 = vmatprep.subr.mxu0 0.0
        %6449 = vmatpush1.msra.mxu0 0.0
        %6450 = vmatprep.subr.mxu0 0.0
        %6451 = vmatpush1.msra.mxu0 0.0
        %6452 = vmatprep.subr.mxu0 0.0
        %6453 = vmatpush1.msra.mxu0 0.0
        %6454 = vmatprep.subr.mxu0 0.0
        %6455 = vmatpush1.msra.mxu0 0.0
        %6456 = vmatprep.subr.mxu0 0.0
        %6457 = vmatpush1.msra.mxu0 0.0
        %6458 = vmatprep.subr.mxu0 0.0
        %6459 = vmatpush1.msra.mxu0 0.0
        %6460 = vmatprep.mubr.f32.mxu0 0.0
        %6461 = vmatmul.mubr.f32.gmra.mrb[0].mxu0 %v6391
        %v6462 = vpop.f32.mrb[0].mxu0
        %v6463 = vadd.f32 0.0, %v6462
        %v6464 = vpop.f32.mrb[0].mxu0
        %6465 = vmatprep.mubr.f32.mxu0 0.0
        %6466 = vmatmul.mubr.f32.gmra.mrb[0].mxu0 %v6394
        %v6467 = vpop.f32.mrb[0].mxu0
        %v6468 = vadd.f32 0.0, %v6467
        %v6469 = vpop.f32.mrb[0].mxu0
        %6470 = vdwg.mxu0
        %v6472 = vsel %vm538, %v4293, 0
        %v6475 = vsel %vm538, %v4344, 0
        %6477 = vmatprep.subr.mxu0 0.0
        %6478 = vmatpush1.msra.mxu0 %v512
        %6479 = vmatprep.subr.mxu0 0.0
        %6480 = vmatpush1.msra.mxu0 %v513
        %6481 = vmatprep.subr.mxu0 0.0
        %6482 = vmatpush1.msra.mxu0 %v514
        %6483 = vmatprep.subr.mxu0 0.0
        %6484 = vmatpush1.msra.mxu0 %v515
        %6485 = vmatprep.subr.mxu0 0.0
        %6486 = vmatpush1.msra.mxu0 0.0
        %6487 = vmatprep.subr.mxu0 0.0
        %6488 = vmatpush1.msra.mxu0 0.0
        %6489 = vmatprep.subr.mxu0 0.0
        %6490 = vmatpush1.msra.mxu0 0.0
        %6491 = vmatprep.subr.mxu0 0.0
        %6492 = vmatpush1.msra.mxu0 0.0
        %6493 = vmatprep.subr.mxu0 0.0
        %6494 = vmatpush1.msra.mxu0 0.0
        %6495 = vmatprep.subr.mxu0 0.0
        %6496 = vmatpush1.msra.mxu0 0.0
        %6497 = vmatprep.subr.mxu0 0.0
        %6498 = vmatpush1.msra.mxu0 0.0
        %6499 = vmatprep.subr.mxu0 0.0
        %6500 = vmatpush1.msra.mxu0 0.0
        %6501 = vmatprep.subr.mxu0 0.0
        %6502 = vmatpush1.msra.mxu0 0.0
        %6503 = vmatprep.subr.mxu0 0.0
        %6504 = vmatpush1.msra.mxu0 0.0
        %6505 = vmatprep.subr.mxu0 0.0
        %6506 = vmatpush1.msra.mxu0 0.0
        %6507 = vmatprep.subr.mxu0 0.0
        %6508 = vmatpush1.msra.mxu0 0.0
        %6509 = vmatprep.subr.mxu0 0.0
        %6510 = vmatpush1.msra.mxu0 0.0
        %6511 = vmatprep.subr.mxu0 0.0
        %6512 = vmatpush1.msra.mxu0 0.0
        %6513 = vmatprep.subr.mxu0 0.0
        %6514 = vmatpush1.msra.mxu0 0.0
        %6515 = vmatprep.subr.mxu0 0.0
        %6516 = vmatpush1.msra.mxu0 0.0
        %6517 = vmatprep.subr.mxu0 0.0
        %6518 = vmatpush1.msra.mxu0 0.0
        %6519 = vmatprep.subr.mxu0 0.0
        %6520 = vmatpush1.msra.mxu0 0.0
        %6521 = vmatprep.subr.mxu0 0.0
        %6522 = vmatpush1.msra.mxu0 0.0
        %6523 = vmatprep.subr.mxu0 0.0
        %6524 = vmatpush1.msra.mxu0 0.0
        %6525 = vmatprep.subr.mxu0 0.0
        %6526 = vmatpush1.msra.mxu0 0.0
        %6527 = vmatprep.subr.mxu0 0.0
        %6528 = vmatpush1.msra.mxu0 0.0
        %6529 = vmatprep.subr.mxu0 0.0
        %6530 = vmatpush1.msra.mxu0 0.0
        %6531 = vmatprep.subr.mxu0 0.0
        %6532 = vmatpush1.msra.mxu0 0.0
        %6533 = vmatprep.subr.mxu0 0.0
        %6534 = vmatpush1.msra.mxu0 0.0
        %6535 = vmatprep.subr.mxu0 0.0
        %6536 = vmatpush1.msra.mxu0 0.0
        %6537 = vmatprep.subr.mxu0 0.0
        %6538 = vmatpush1.msra.mxu0 0.0
        %6539 = vmatprep.subr.mxu0 0.0
        %6540 = vmatpush1.msra.mxu0 0.0
        %6541 = vmatprep.mubr.f32.mxu0 0.0
        %6542 = vmatmul.mubr.f32.gmra.mrb[0].mxu0 %v6472
        %v6543 = vpop.f32.mrb[0].mxu0
        %v6544 = vadd.f32 0.0, %v6543
        %v6545 = vpop.f32.mrb[0].mxu0
        %6546 = vmatprep.mubr.f32.mxu0 0.0
        %6547 = vmatmul.mubr.f32.gmra.mrb[0].mxu0 %v6475
        %v6548 = vpop.f32.mrb[0].mxu0
        %v6549 = vadd.f32 0.0, %v6548
        %v6550 = vpop.f32.mrb[0].mxu0
        %6551 = vdwg.mxu0
        %v6553 = vsel %vm538, %v4294, 0
        %v6556 = vsel %vm538, %v4362, 0
        %6558 = vmatprep.subr.mxu0 0.0
        %6559 = vmatpush1.msra.mxu0 %v516
        %6560 = vmatprep.subr.mxu0 0.0
        %6561 = vmatpush1.msra.mxu0 %v517
        %6562 = vmatprep.subr.mxu0 0.0
        %6563 = vmatpush1.msra.mxu0 %v518
        %6564 = vmatprep.subr.mxu0 0.0
        %6565 = vmatpush1.msra.mxu0 %v519
        %6566 = vmatprep.subr.mxu0 0.0
        %6567 = vmatpush1.msra.mxu0 0.0
        %6568 = vmatprep.subr.mxu0 0.0
        %6569 = vmatpush1.msra.mxu0 0.0
        %6570 = vmatprep.subr.mxu0 0.0
        %6571 = vmatpush1.msra.mxu0 0.0
        %6572 = vmatprep.subr.mxu0 0.0
        %6573 = vmatpush1.msra.mxu0 0.0
        %6574 = vmatprep.subr.mxu0 0.0
        %6575 = vmatpush1.msra.mxu0 0.0
        %6576 = vmatprep.subr.mxu0 0.0
        %6577 = vmatpush1.msra.mxu0 0.0
        %6578 = vmatprep.subr.mxu0 0.0
        %6579 = vmatpush1.msra.mxu0 0.0
        %6580 = vmatprep.subr.mxu0 0.0
        %6581 = vmatpush1.msra.mxu0 0.0
        %6582 = vmatprep.subr.mxu0 0.0
        %6583 = vmatpush1.msra.mxu0 0.0
        %6584 = vmatprep.subr.mxu0 0.0
        %6585 = vmatpush1.msra.mxu0 0.0
        %6586 = vmatprep.subr.mxu0 0.0
        %6587 = vmatpush1.msra.mxu0 0.0
        %6588 = vmatprep.subr.mxu0 0.0
        %6589 = vmatpush1.msra.mxu0 0.0
        %6590 = vmatprep.subr.mxu0 0.0
        %6591 = vmatpush1.msra.mxu0 0.0
        %6592 = vmatprep.subr.mxu0 0.0
        %6593 = vmatpush1.msra.mxu0 0.0
        %6594 = vmatprep.subr.mxu0 0.0
        %6595 = vmatpush1.msra.mxu0 0.0
        %6596 = vmatprep.subr.mxu0 0.0
        %6597 = vmatpush1.msra.mxu0 0.0
        %6598 = vmatprep.subr.mxu0 0.0
        %6599 = vmatpush1.msra.mxu0 0.0
        %6600 = vmatprep.subr.mxu0 0.0
        %6601 = vmatpush1.msra.mxu0 0.0
        %6602 = vmatprep.subr.mxu0 0.0
        %6603 = vmatpush1.msra.mxu0 0.0
        %6604 = vmatprep.subr.mxu0 0.0
        %6605 = vmatpush1.msra.mxu0 0.0
        %6606 = vmatprep.subr.mxu0 0.0
        %6607 = vmatpush1.msra.mxu0 0.0
        %6608 = vmatprep.subr.mxu0 0.0
        %6609 = vmatpush1.msra.mxu0 0.0
        %6610 = vmatprep.subr.mxu0 0.0
        %6611 = vmatpush1.msra.mxu0 0.0
        %6612 = vmatprep.subr.mxu0 0.0
        %6613 = vmatpush1.msra.mxu0 0.0
        %6614 = vmatprep.subr.mxu0 0.0
        %6615 = vmatpush1.msra.mxu0 0.0
        %6616 = vmatprep.subr.mxu0 0.0
        %6617 = vmatpush1.msra.mxu0 0.0
        %6618 = vmatprep.subr.mxu0 0.0
        %6619 = vmatpush1.msra.mxu0 0.0
        %6620 = vmatprep.subr.mxu0 0.0
        %6621 = vmatpush1.msra.mxu0 0.0
        %6622 = vmatprep.mubr.f32.mxu0 0.0
        %6623 = vmatmul.mubr.f32.gmra.mrb[0].mxu0 %v6553
        %v6624 = vpop.f32.mrb[0].mxu0
        %v6625 = vadd.f32 0.0, %v6624
        %v6626 = vpop.f32.mrb[0].mxu0
        %6627 = vmatprep.mubr.f32.mxu0 0.0
        %6628 = vmatmul.mubr.f32.gmra.mrb[0].mxu0 %v6556
        %v6629 = vpop.f32.mrb[0].mxu0
        %v6630 = vadd.f32 0.0, %v6629
        %v6631 = vpop.f32.mrb[0].mxu0
        %6632 = vdwg.mxu0
        %v6634 = vsel %vm538, %v4295, 0
        %v6637 = vsel %vm538, %v4353, 0
        %6639 = vmatprep.subr.mxu0 0.0
        %6640 = vmatpush1.msra.mxu0 %v520
        %6641 = vmatprep.subr.mxu0 0.0
        %6642 = vmatpush1.msra.mxu0 %v521
        %6643 = vmatprep.subr.mxu0 0.0
        %6644 = vmatpush1.msra.mxu0 %v522
        %6645 = vmatprep.subr.mxu0 0.0
        %6646 = vmatpush1.msra.mxu0 %v523
        %6647 = vmatprep.subr.mxu0 0.0
        %6648 = vmatpush1.msra.mxu0 0.0
        %6649 = vmatprep.subr.mxu0 0.0
        %6650 = vmatpush1.msra.mxu0 0.0
        %6651 = vmatprep.subr.mxu0 0.0
        %6652 = vmatpush1.msra.mxu0 0.0
        %6653 = vmatprep.subr.mxu0 0.0
        %6654 = vmatpush1.msra.mxu0 0.0
        %6655 = vmatprep.subr.mxu0 0.0
        %6656 = vmatpush1.msra.mxu0 0.0
        %6657 = vmatprep.subr.mxu0 0.0
        %6658 = vmatpush1.msra.mxu0 0.0
        %6659 = vmatprep.subr.mxu0 0.0
        %6660 = vmatpush1.msra.mxu0 0.0
        %6661 = vmatprep.subr.mxu0 0.0
        %6662 = vmatpush1.msra.mxu0 0.0
        %6663 = vmatprep.subr.mxu0 0.0
        %6664 = vmatpush1.msra.mxu0 0.0
        %6665 = vmatprep.subr.mxu0 0.0
        %6666 = vmatpush1.msra.mxu0 0.0
        %6667 = vmatprep.subr.mxu0 0.0
        %6668 = vmatpush1.msra.mxu0 0.0
        %6669 = vmatprep.subr.mxu0 0.0
        %6670 = vmatpush1.msra.mxu0 0.0
        %6671 = vmatprep.subr.mxu0 0.0
        %6672 = vmatpush1.msra.mxu0 0.0
        %6673 = vmatprep.subr.mxu0 0.0
        %6674 = vmatpush1.msra.mxu0 0.0
        %6675 = vmatprep.subr.mxu0 0.0
        %6676 = vmatpush1.msra.mxu0 0.0
        %6677 = vmatprep.subr.mxu0 0.0
        %6678 = vmatpush1.msra.mxu0 0.0
        %6679 = vmatprep.subr.mxu0 0.0
        %6680 = vmatpush1.msra.mxu0 0.0
        %6681 = vmatprep.subr.mxu0 0.0
        %6682 = vmatpush1.msra.mxu0 0.0
        %6683 = vmatprep.subr.mxu0 0.0
        %6684 = vmatpush1.msra.mxu0 0.0
        %6685 = vmatprep.subr.mxu0 0.0
        %6686 = vmatpush1.msra.mxu0 0.0
        %6687 = vmatprep.subr.mxu0 0.0
        %6688 = vmatpush1.msra.mxu0 0.0
        %6689 = vmatprep.subr.mxu0 0.0
        %6690 = vmatpush1.msra.mxu0 0.0
        %6691 = vmatprep.subr.mxu0 0.0
        %6692 = vmatpush1.msra.mxu0 0.0
        %6693 = vmatprep.subr.mxu0 0.0
        %6694 = vmatpush1.msra.mxu0 0.0
        %6695 = vmatprep.subr.mxu0 0.0
        %6696 = vmatpush1.msra.mxu0 0.0
        %6697 = vmatprep.subr.mxu0 0.0
        %6698 = vmatpush1.msra.mxu0 0.0
        %6699 = vmatprep.subr.mxu0 0.0
        %6700 = vmatpush1.msra.mxu0 0.0
        %6701 = vmatprep.subr.mxu0 0.0
        %6702 = vmatpush1.msra.mxu0 0.0
        %6703 = vmatprep.mubr.f32.mxu0 0.0
        %6704 = vmatmul.mubr.f32.gmra.mrb[0].mxu0 %v6634
        %v6705 = vpop.f32.mrb[0].mxu0
        %v6706 = vadd.f32 0.0, %v6705
        %v6707 = vpop.f32.mrb[0].mxu0
        %6708 = vmatprep.mubr.f32.mxu0 0.0
        %6709 = vmatmul.mubr.f32.gmra.mrb[0].mxu0 %v6637
        %v6710 = vpop.f32.mrb[0].mxu0
        %v6711 = vadd.f32 0.0, %v6710
        %v6712 = vpop.f32.mrb[0].mxu0
        %6713 = vdwg.mxu0
        %v6715 = vsel %vm538, %v4296, 0
        %v6718 = vsel %vm538, %v4363, 0
        %6720 = vmatprep.subr.mxu0 0.0
        %6721 = vmatpush1.msra.mxu0 %v524
        %6722 = vmatprep.subr.mxu0 0.0
        %6723 = vmatpush1.msra.mxu0 %v525
        %6724 = vmatprep.subr.mxu0 0.0
        %6725 = vmatpush1.msra.mxu0 %v526
        %6726 = vmatprep.subr.mxu0 0.0
        %6727 = vmatpush1.msra.mxu0 %v527
        %6728 = vmatprep.subr.mxu0 0.0
        %6729 = vmatpush1.msra.mxu0 0.0
        %6730 = vmatprep.subr.mxu0 0.0
        %6731 = vmatpush1.msra.mxu0 0.0
        %6732 = vmatprep.subr.mxu0 0.0
        %6733 = vmatpush1.msra.mxu0 0.0
        %6734 = vmatprep.subr.mxu0 0.0
        %6735 = vmatpush1.msra.mxu0 0.0
        %6736 = vmatprep.subr.mxu0 0.0
        %6737 = vmatpush1.msra.mxu0 0.0
        %6738 = vmatprep.subr.mxu0 0.0
        %6739 = vmatpush1.msra.mxu0 0.0
        %6740 = vmatprep.subr.mxu0 0.0
        %6741 = vmatpush1.msra.mxu0 0.0
        %6742 = vmatprep.subr.mxu0 0.0
        %6743 = vmatpush1.msra.mxu0 0.0
        %6744 = vmatprep.subr.mxu0 0.0
        %6745 = vmatpush1.msra.mxu0 0.0
        %6746 = vmatprep.subr.mxu0 0.0
        %6747 = vmatpush1.msra.mxu0 0.0
        %6748 = vmatprep.subr.mxu0 0.0
        %6749 = vmatpush1.msra.mxu0 0.0
        %6750 = vmatprep.subr.mxu0 0.0
        %6751 = vmatpush1.msra.mxu0 0.0
        %6752 = vmatprep.subr.mxu0 0.0
        %6753 = vmatpush1.msra.mxu0 0.0
        %6754 = vmatprep.subr.mxu0 0.0
        %6755 = vmatpush1.msra.mxu0 0.0
        %6756 = vmatprep.subr.mxu0 0.0
        %6757 = vmatpush1.msra.mxu0 0.0
        %6758 = vmatprep.subr.mxu0 0.0
        %6759 = vmatpush1.msra.mxu0 0.0
        %6760 = vmatprep.subr.mxu0 0.0
        %6761 = vmatpush1.msra.mxu0 0.0
        %6762 = vmatprep.subr.mxu0 0.0
        %6763 = vmatpush1.msra.mxu0 0.0
        %6764 = vmatprep.subr.mxu0 0.0
        %6765 = vmatpush1.msra.mxu0 0.0
        %6766 = vmatprep.subr.mxu0 0.0
        %6767 = vmatpush1.msra.mxu0 0.0
        %6768 = vmatprep.subr.mxu0 0.0
        %6769 = vmatpush1.msra.mxu0 0.0
        %6770 = vmatprep.subr.mxu0 0.0
        %6771 = vmatpush1.msra.mxu0 0.0
        %6772 = vmatprep.subr.mxu0 0.0
        %6773 = vmatpush1.msra.mxu0 0.0
        %6774 = vmatprep.subr.mxu0 0.0
        %6775 = vmatpush1.msra.mxu0 0.0
        %6776 = vmatprep.subr.mxu0 0.0
        %6777 = vmatpush1.msra.mxu0 0.0
        %6778 = vmatprep.subr.mxu0 0.0
        %6779 = vmatpush1.msra.mxu0 0.0
        %6780 = vmatprep.subr.mxu0 0.0
        %6781 = vmatpush1.msra.mxu0 0.0
        %6782 = vmatprep.subr.mxu0 0.0
        %6783 = vmatpush1.msra.mxu0 0.0
        %6784 = vmatprep.mubr.f32.mxu0 0.0
        %6785 = vmatmul.mubr.f32.gmra.mrb[0].mxu0 %v6715
        %v6786 = vpop.f32.mrb[0].mxu0
        %v6787 = vadd.f32 0.0, %v6786
        %v6788 = vpop.f32.mrb[0].mxu0
        %6789 = vmatprep.mubr.f32.mxu0 0.0
        %6790 = vmatmul.mubr.f32.gmra.mrb[0].mxu0 %v6718
        %v6791 = vpop.f32.mrb[0].mxu0
        %v6792 = vadd.f32 0.0, %v6791
        %v6793 = vpop.f32.mrb[0].mxu0
        %6794 = vdwg.mxu0
        %v6796 = vsel %vm538, %v4297, 0
        %v6799 = vsel %vm538, %v4360, 0
        %6801 = vmatprep.subr.mxu0 0.0
        %6802 = vmatpush1.msra.mxu0 %v528
        %6803 = vmatprep.subr.mxu0 0.0
        %6804 = vmatpush1.msra.mxu0 %v529
        %6805 = vmatprep.subr.mxu0 0.0
        %6806 = vmatpush1.msra.mxu0 %v530
        %6807 = vmatprep.subr.mxu0 0.0
        %6808 = vmatpush1.msra.mxu0 %v531
        %6809 = vmatprep.subr.mxu0 0.0
        %6810 = vmatpush1.msra.mxu0 0.0
        %6811 = vmatprep.subr.mxu0 0.0
        %6812 = vmatpush1.msra.mxu0 0.0
        %6813 = vmatprep.subr.mxu0 0.0
        %6814 = vmatpush1.msra.mxu0 0.0
        %6815 = vmatprep.subr.mxu0 0.0
        %6816 = vmatpush1.msra.mxu0 0.0
        %6817 = vmatprep.subr.mxu0 0.0
        %6818 = vmatpush1.msra.mxu0 0.0
        %6819 = vmatprep.subr.mxu0 0.0
        %6820 = vmatpush1.msra.mxu0 0.0
        %6821 = vmatprep.subr.mxu0 0.0
        %6822 = vmatpush1.msra.mxu0 0.0
        %6823 = vmatprep.subr.mxu0 0.0
        %6824 = vmatpush1.msra.mxu0 0.0
        %6825 = vmatprep.subr.mxu0 0.0
        %6826 = vmatpush1.msra.mxu0 0.0
        %6827 = vmatprep.subr.mxu0 0.0
        %6828 = vmatpush1.msra.mxu0 0.0
        %6829 = vmatprep.subr.mxu0 0.0
        %6830 = vmatpush1.msra.mxu0 0.0
        %6831 = vmatprep.subr.mxu0 0.0
        %6832 = vmatpush1.msra.mxu0 0.0
        %6833 = vmatprep.subr.mxu0 0.0
        %6834 = vmatpush1.msra.mxu0 0.0
        %6835 = vmatprep.subr.mxu0 0.0
        %6836 = vmatpush1.msra.mxu0 0.0
        %6837 = vmatprep.subr.mxu0 0.0
        %6838 = vmatpush1.msra.mxu0 0.0
        %6839 = vmatprep.subr.mxu0 0.0
        %6840 = vmatpush1.msra.mxu0 0.0
        %6841 = vmatprep.subr.mxu0 0.0
        %6842 = vmatpush1.msra.mxu0 0.0
        %6843 = vmatprep.subr.mxu0 0.0
        %6844 = vmatpush1.msra.mxu0 0.0
        %6845 = vmatprep.subr.mxu0 0.0
        %6846 = vmatpush1.msra.mxu0 0.0
        %6847 = vmatprep.subr.mxu0 0.0
        %6848 = vmatpush1.msra.mxu0 0.0
        %6849 = vmatprep.subr.mxu0 0.0
        %6850 = vmatpush1.msra.mxu0 0.0
        %6851 = vmatprep.subr.mxu0 0.0
        %6852 = vmatpush1.msra.mxu0 0.0
        %6853 = vmatprep.subr.mxu0 0.0
        %6854 = vmatpush1.msra.mxu0 0.0
        %6855 = vmatprep.subr.mxu0 0.0
        %6856 = vmatpush1.msra.mxu0 0.0
        %6857 = vmatprep.subr.mxu0 0.0
        %6858 = vmatpush1.msra.mxu0 0.0
        %6859 = vmatprep.subr.mxu0 0.0
        %6860 = vmatpush1.msra.mxu0 0.0
        %6861 = vmatprep.subr.mxu0 0.0
        %6862 = vmatpush1.msra.mxu0 0.0
        %6863 = vmatprep.subr.mxu0 0.0
        %6864 = vmatpush1.msra.mxu0 0.0
        %6865 = vmatprep.mubr.f32.mxu0 0.0
        %6866 = vmatmul.mubr.f32.gmra.mrb[0].mxu0 %v6796
        %v6867 = vpop.f32.mrb[0].mxu0
        %v6868 = vadd.f32 0.0, %v6867
        %v6869 = vpop.f32.mrb[0].mxu0
        %6870 = vmatprep.mubr.f32.mxu0 0.0
        %6871 = vmatmul.mubr.f32.gmra.mrb[0].mxu0 %v6799
        %v6872 = vpop.f32.mrb[0].mxu0
        %v6873 = vadd.f32 0.0, %v6872
        %v6874 = vpop.f32.mrb[0].mxu0
        %6875 = vdwg.mxu0
        %v6877 = vsel %vm538, %v4298, 0
        %v6880 = vsel %vm538, %v4364, 0
        %6882 = vmatprep.subr.mxu0 0.0
        %6883 = vmatpush1.msra.mxu0 %v532
        %6884 = vmatprep.subr.mxu0 0.0
        %6885 = vmatpush1.msra.mxu0 %v533
        %6886 = vmatprep.subr.mxu0 0.0
        %6887 = vmatpush1.msra.mxu0 %v534
        %6888 = vmatprep.subr.mxu0 0.0
        %6889 = vmatpush1.msra.mxu0 %v535
        %6890 = vmatprep.subr.mxu0 0.0
        %6891 = vmatpush1.msra.mxu0 0.0
        %6892 = vmatprep.subr.mxu0 0.0
        %6893 = vmatpush1.msra.mxu0 0.0
        %6894 = vmatprep.subr.mxu0 0.0
        %6895 = vmatpush1.msra.mxu0 0.0
        %6896 = vmatprep.subr.mxu0 0.0
        %6897 = vmatpush1.msra.mxu0 0.0
        %6898 = vmatprep.subr.mxu0 0.0
        %6899 = vmatpush1.msra.mxu0 0.0
        %6900 = vmatprep.subr.mxu0 0.0
        %6901 = vmatpush1.msra.mxu0 0.0
        %6902 = vmatprep.subr.mxu0 0.0
        %6903 = vmatpush1.msra.mxu0 0.0
        %6904 = vmatprep.subr.mxu0 0.0
        %6905 = vmatpush1.msra.mxu0 0.0
        %6906 = vmatprep.subr.mxu0 0.0
        %6907 = vmatpush1.msra.mxu0 0.0
        %6908 = vmatprep.subr.mxu0 0.0
        %6909 = vmatpush1.msra.mxu0 0.0
        %6910 = vmatprep.subr.mxu0 0.0
        %6911 = vmatpush1.msra.mxu0 0.0
        %6912 = vmatprep.subr.mxu0 0.0
        %6913 = vmatpush1.msra.mxu0 0.0
        %6914 = vmatprep.subr.mxu0 0.0
        %6915 = vmatpush1.msra.mxu0 0.0
        %6916 = vmatprep.subr.mxu0 0.0
        %6917 = vmatpush1.msra.mxu0 0.0
        %6918 = vmatprep.subr.mxu0 0.0
        %6919 = vmatpush1.msra.mxu0 0.0
        %6920 = vmatprep.subr.mxu0 0.0
        %6921 = vmatpush1.msra.mxu0 0.0
        %6922 = vmatprep.subr.mxu0 0.0
        %6923 = vmatpush1.msra.mxu0 0.0
        %6924 = vmatprep.subr.mxu0 0.0
        %6925 = vmatpush1.msra.mxu0 0.0
        %6926 = vmatprep.subr.mxu0 0.0
        %6927 = vmatpush1.msra.mxu0 0.0
        %6928 = vmatprep.subr.mxu0 0.0
        %6929 = vmatpush1.msra.mxu0 0.0
        %6930 = vmatprep.subr.mxu0 0.0
        %6931 = vmatpush1.msra.mxu0 0.0
        %6932 = vmatprep.subr.mxu0 0.0
        %6933 = vmatpush1.msra.mxu0 0.0
        %6934 = vmatprep.subr.mxu0 0.0
        %6935 = vmatpush1.msra.mxu0 0.0
        %6936 = vmatprep.subr.mxu0 0.0
        %6937 = vmatpush1.msra.mxu0 0.0
        %6938 = vmatprep.subr.mxu0 0.0
        %6939 = vmatpush1.msra.mxu0 0.0
        %6940 = vmatprep.subr.mxu0 0.0
        %6941 = vmatpush1.msra.mxu0 0.0
        %6942 = vmatprep.subr.mxu0 0.0
        %6943 = vmatpush1.msra.mxu0 0.0
        %6944 = vmatprep.subr.mxu0 0.0
        %6945 = vmatpush1.msra.mxu0 0.0
        %6946 = vmatprep.mubr.f32.mxu0 0.0
        %6947 = vmatmul.mubr.f32.gmra.mrb[0].mxu0 %v6877
        %v6948 = vpop.f32.mrb[0].mxu0
        %v6949 = vadd.f32 0.0, %v6948
        %v6950 = vpop.f32.mrb[0].mxu0
        %6951 = vmatprep.mubr.f32.mxu0 0.0
        %6952 = vmatmul.mubr.f32.gmra.mrb[0].mxu0 %v6880
        %v6953 = vpop.f32.mrb[0].mxu0
        %v6954 = vadd.f32 0.0, %v6953
        %v6955 = vpop.f32.mrb[0].mxu0
        %6956 = vdwg.mxu0
        %v6957 = vcombine.low %v4438, %v4600
        %v6958 = vcombine.high %v4438, %v4600
        %v6960 = vunpack.c.l.s4 1983009808
        %v6961 = vunpack.c.0.s8 %v6960
        %v6962 = vlaneseq
        %v6963 = vshrl.u32 %v6962, 7
        %v6964 = vsub.s32 %v6961, %v6963
        %v6965 = vrot.slane %v6957, %v6964
        %v6967 = vunpack.c.l.s4 1983009808
        %v6968 = vunpack.c.0.s8 %v6967
        %v6969 = vlaneseq
        %v6970 = vshrl.u32 %v6969, 7
        %v6971 = vsub.s32 %v6968, %v6970
        %v6972 = vrot.slane %v6958, %v6971
        %v6973 = vcombine.low %v4519, %v4681
        %v6974 = vcombine.high %v4519, %v4681
        %v6976 = vunpack.c.l.s4 1983009808
        %v6977 = vunpack.c.0.s8 %v6976
        %v6978 = vlaneseq
        %v6979 = vshrl.u32 %v6978, 7
        %v6980 = vsub.s32 %v6977, %v6979
        %v6981 = vrot.slane %v6973, %v6980
        %v6983 = vunpack.c.l.s4 1983009808
        %v6984 = vunpack.c.0.s8 %v6983
        %v6985 = vlaneseq
        %v6986 = vshrl.u32 %v6985, 7
        %v6987 = vsub.s32 %v6984, %v6986
        %v6988 = vrot.slane %v6974, %v6987
        %v6989 = vcombine.low %v4762, %v4924
        %v6990 = vcombine.high %v4762, %v4924
        %v6992 = vunpack.c.l.s4 1983009808
        %v6993 = vunpack.c.0.s8 %v6992
        %v6994 = vlaneseq
        %v6995 = vshrl.u32 %v6994, 7
        %v6996 = vsub.s32 %v6993, %v6995
        %v6997 = vrot.slane %v6989, %v6996
        %v6999 = vunpack.c.l.s4 1983009808
        %v7000 = vunpack.c.0.s8 %v6999
        %v7001 = vlaneseq
        %v7002 = vshrl.u32 %v7001, 7
        %v7003 = vsub.s32 %v7000, %v7002
        %v7004 = vrot.slane %v6990, %v7003
        %v7005 = vcombine.low %v4843, %v5005
        %v7006 = vcombine.high %v4843, %v5005
        %v7008 = vunpack.c.l.s4 1983009808
        %v7009 = vunpack.c.0.s8 %v7008
        %v7010 = vlaneseq
        %v7011 = vshrl.u32 %v7010, 7
        %v7012 = vsub.s32 %v7009, %v7011
        %v7013 = vrot.slane %v7005, %v7012
        %v7015 = vunpack.c.l.s4 1983009808
        %v7016 = vunpack.c.0.s8 %v7015
        %v7017 = vlaneseq
        %v7018 = vshrl.u32 %v7017, 7
        %v7019 = vsub.s32 %v7016, %v7018
        %v7020 = vrot.slane %v7006, %v7019
        %v7021 = vcombine.low %v6965, %v6981
        %v7022 = vcombine.high %v6965, %v6981
        %v7024 = vunpack.c.l.s4 1934713408
        %v7025 = vunpack.c.0.s8 %v7024
        %v7026 = vlaneseq
        %v7027 = vshrl.u32 %v7026, 7
        %v7028 = vsub.s32 %v7025, %v7027
        %v7029 = vrot.slane %v7021, %v7028
        %v7031 = vunpack.c.l.s4 1934713408
        %v7032 = vunpack.c.0.s8 %v7031
        %v7033 = vlaneseq
        %v7034 = vshrl.u32 %v7033, 7
        %v7035 = vsub.s32 %v7032, %v7034
        %v7036 = vrot.slane %v7022, %v7035
        %v7037 = vcombine.low %v6972, %v6988
        %v7038 = vcombine.high %v6972, %v6988
        %v7040 = vunpack.c.l.s4 1934713408
        %v7041 = vunpack.c.0.s8 %v7040
        %v7042 = vlaneseq
        %v7043 = vshrl.u32 %v7042, 7
        %v7044 = vsub.s32 %v7041, %v7043
        %v7045 = vrot.slane %v7037, %v7044
        %v7047 = vunpack.c.l.s4 1934713408
        %v7048 = vunpack.c.0.s8 %v7047
        %v7049 = vlaneseq
        %v7050 = vshrl.u32 %v7049, 7
        %v7051 = vsub.s32 %v7048, %v7050
        %v7052 = vrot.slane %v7038, %v7051
        %v7053 = vcombine.low %v6997, %v7013
        %v7054 = vcombine.high %v6997, %v7013
        %v7056 = vunpack.c.l.s4 1934713408
        %v7057 = vunpack.c.0.s8 %v7056
        %v7058 = vlaneseq
        %v7059 = vshrl.u32 %v7058, 7
        %v7060 = vsub.s32 %v7057, %v7059
        %v7061 = vrot.slane %v7053, %v7060
        %v7063 = vunpack.c.l.s4 1934713408
        %v7064 = vunpack.c.0.s8 %v7063
        %v7065 = vlaneseq
        %v7066 = vshrl.u32 %v7065, 7
        %v7067 = vsub.s32 %v7064, %v7066
        %v7068 = vrot.slane %v7054, %v7067
        %v7069 = vcombine.low %v7004, %v7020
        %v7070 = vcombine.high %v7004, %v7020
        %v7072 = vunpack.c.l.s4 1934713408
        %v7073 = vunpack.c.0.s8 %v7072
        %v7074 = vlaneseq
        %v7075 = vshrl.u32 %v7074, 7
        %v7076 = vsub.s32 %v7073, %v7075
        %v7077 = vrot.slane %v7069, %v7076
        %v7079 = vunpack.c.l.s4 1934713408
        %v7080 = vunpack.c.0.s8 %v7079
        %v7081 = vlaneseq
        %v7082 = vshrl.u32 %v7081, 7
        %v7083 = vsub.s32 %v7080, %v7082
        %v7084 = vrot.slane %v7070, %v7083
        %v7085 = vcombine.low %v7029, %v7061
        %v7086 = vcombine.high %v7029, %v7061
        %v7087 = vcombine.low %v7036, %v7068
        %v7088 = vcombine.high %v7036, %v7068
        %v7089 = vcombine.low %v7045, %v7077
        %v7090 = vcombine.high %v7045, %v7077
        %v7091 = vcombine.low %v7052, %v7084
        %v7092 = vcombine.high %v7052, %v7084
        %v7093 = vcombine.low %v5086, %v5248
        %v7094 = vcombine.high %v5086, %v5248
        %v7096 = vunpack.c.l.s4 1983009808
        %v7097 = vunpack.c.0.s8 %v7096
        %v7098 = vlaneseq
        %v7099 = vshrl.u32 %v7098, 7
        %v7100 = vsub.s32 %v7097, %v7099
        %v7101 = vrot.slane %v7093, %v7100
        %v7103 = vunpack.c.l.s4 1983009808
        %v7104 = vunpack.c.0.s8 %v7103
        %v7105 = vlaneseq
        %v7106 = vshrl.u32 %v7105, 7
        %v7107 = vsub.s32 %v7104, %v7106
        %v7108 = vrot.slane %v7094, %v7107
        %v7109 = vcombine.low %v5167, %v5329
        %v7110 = vcombine.high %v5167, %v5329
        %v7112 = vunpack.c.l.s4 1983009808
        %v7113 = vunpack.c.0.s8 %v7112
        %v7114 = vlaneseq
        %v7115 = vshrl.u32 %v7114, 7
        %v7116 = vsub.s32 %v7113, %v7115
        %v7117 = vrot.slane %v7109, %v7116
        %v7119 = vunpack.c.l.s4 1983009808
        %v7120 = vunpack.c.0.s8 %v7119
        %v7121 = vlaneseq
        %v7122 = vshrl.u32 %v7121, 7
        %v7123 = vsub.s32 %v7120, %v7122
        %v7124 = vrot.slane %v7110, %v7123
        %v7125 = vcombine.low %v5410, %v5572
        %v7126 = vcombine.high %v5410, %v5572
        %v7128 = vunpack.c.l.s4 1983009808
        %v7129 = vunpack.c.0.s8 %v7128
        %v7130 = vlaneseq
        %v7131 = vshrl.u32 %v7130, 7
        %v7132 = vsub.s32 %v7129, %v7131
        %v7133 = vrot.slane %v7125, %v7132
        %v7135 = vunpack.c.l.s4 1983009808
        %v7136 = vunpack.c.0.s8 %v7135
        %v7137 = vlaneseq
        %v7138 = vshrl.u32 %v7137, 7
        %v7139 = vsub.s32 %v7136, %v7138
        %v7140 = vrot.slane %v7126, %v7139
        %v7141 = vcombine.low %v5491, %v5653
        %v7142 = vcombine.high %v5491, %v5653
        %v7144 = vunpack.c.l.s4 1983009808
        %v7145 = vunpack.c.0.s8 %v7144
        %v7146 = vlaneseq
        %v7147 = vshrl.u32 %v7146, 7
        %v7148 = vsub.s32 %v7145, %v7147
        %v7149 = vrot.slane %v7141, %v7148
        %v7151 = vunpack.c.l.s4 1983009808
        %v7152 = vunpack.c.0.s8 %v7151
        %v7153 = vlaneseq
        %v7154 = vshrl.u32 %v7153, 7
        %v7155 = vsub.s32 %v7152, %v7154
        %v7156 = vrot.slane %v7142, %v7155
        %v7157 = vcombine.low %v7101, %v7117
        %v7158 = vcombine.high %v7101, %v7117
        %v7160 = vunpack.c.l.s4 1934713408
        %v7161 = vunpack.c.0.s8 %v7160
        %v7162 = vlaneseq
        %v7163 = vshrl.u32 %v7162, 7
        %v7164 = vsub.s32 %v7161, %v7163
        %v7165 = vrot.slane %v7157, %v7164
        %v7167 = vunpack.c.l.s4 1934713408
        %v7168 = vunpack.c.0.s8 %v7167
        %v7169 = vlaneseq
        %v7170 = vshrl.u32 %v7169, 7
        %v7171 = vsub.s32 %v7168, %v7170
        %v7172 = vrot.slane %v7158, %v7171
        %v7173 = vcombine.low %v7108, %v7124
        %v7174 = vcombine.high %v7108, %v7124
        %v7176 = vunpack.c.l.s4 1934713408
        %v7177 = vunpack.c.0.s8 %v7176
        %v7178 = vlaneseq
        %v7179 = vshrl.u32 %v7178, 7
        %v7180 = vsub.s32 %v7177, %v7179
        %v7181 = vrot.slane %v7173, %v7180
        %v7183 = vunpack.c.l.s4 1934713408
        %v7184 = vunpack.c.0.s8 %v7183
        %v7185 = vlaneseq
        %v7186 = vshrl.u32 %v7185, 7
        %v7187 = vsub.s32 %v7184, %v7186
        %v7188 = vrot.slane %v7174, %v7187
        %v7189 = vcombine.low %v7133, %v7149
        %v7190 = vcombine.high %v7133, %v7149
        %v7192 = vunpack.c.l.s4 1934713408
        %v7193 = vunpack.c.0.s8 %v7192
        %v7194 = vlaneseq
        %v7195 = vshrl.u32 %v7194, 7
        %v7196 = vsub.s32 %v7193, %v7195
        %v7197 = vrot.slane %v7189, %v7196
        %v7199 = vunpack.c.l.s4 1934713408
        %v7200 = vunpack.c.0.s8 %v7199
        %v7201 = vlaneseq
        %v7202 = vshrl.u32 %v7201, 7
        %v7203 = vsub.s32 %v7200, %v7202
        %v7204 = vrot.slane %v7190, %v7203
        %v7205 = vcombine.low %v7140, %v7156
        %v7206 = vcombine.high %v7140, %v7156
        %v7208 = vunpack.c.l.s4 1934713408
        %v7209 = vunpack.c.0.s8 %v7208
        %v7210 = vlaneseq
        %v7211 = vshrl.u32 %v7210, 7
        %v7212 = vsub.s32 %v7209, %v7211
        %v7213 = vrot.slane %v7205, %v7212
        %v7215 = vunpack.c.l.s4 1934713408
        %v7216 = vunpack.c.0.s8 %v7215
        %v7217 = vlaneseq
        %v7218 = vshrl.u32 %v7217, 7
        %v7219 = vsub.s32 %v7216, %v7218
        %v7220 = vrot.slane %v7206, %v7219
        %v7221 = vcombine.low %v7165, %v7197
        %v7222 = vcombine.high %v7165, %v7197
        %v7223 = vcombine.low %v7172, %v7204
        %v7224 = vcombine.high %v7172, %v7204
        %v7225 = vcombine.low %v7181, %v7213
        %v7226 = vcombine.high %v7181, %v7213
        %v7227 = vcombine.low %v7188, %v7220
        %v7228 = vcombine.high %v7188, %v7220
        %v7229 = vcombine.low %v5734, %v5896
        %v7230 = vcombine.high %v5734, %v5896
        %v7232 = vunpack.c.l.s4 1983009808
        %v7233 = vunpack.c.0.s8 %v7232
        %v7234 = vlaneseq
        %v7235 = vshrl.u32 %v7234, 7
        %v7236 = vsub.s32 %v7233, %v7235
        %v7237 = vrot.slane %v7229, %v7236
        %v7239 = vunpack.c.l.s4 1983009808
        %v7240 = vunpack.c.0.s8 %v7239
        %v7241 = vlaneseq
        %v7242 = vshrl.u32 %v7241, 7
        %v7243 = vsub.s32 %v7240, %v7242
        %v7244 = vrot.slane %v7230, %v7243
        %v7245 = vcombine.low %v5815, %v5977
        %v7246 = vcombine.high %v5815, %v5977
        %v7248 = vunpack.c.l.s4 1983009808
        %v7249 = vunpack.c.0.s8 %v7248
        %v7250 = vlaneseq
        %v7251 = vshrl.u32 %v7250, 7
        %v7252 = vsub.s32 %v7249, %v7251
        %v7253 = vrot.slane %v7245, %v7252
        %v7255 = vunpack.c.l.s4 1983009808
        %v7256 = vunpack.c.0.s8 %v7255
        %v7257 = vlaneseq
        %v7258 = vshrl.u32 %v7257, 7
        %v7259 = vsub.s32 %v7256, %v7258
        %v7260 = vrot.slane %v7246, %v7259
        %v7261 = vcombine.low %v6058, %v6220
        %v7262 = vcombine.high %v6058, %v6220
        %v7264 = vunpack.c.l.s4 1983009808
        %v7265 = vunpack.c.0.s8 %v7264
        %v7266 = vlaneseq
        %v7267 = vshrl.u32 %v7266, 7
        %v7268 = vsub.s32 %v7265, %v7267
        %v7269 = vrot.slane %v7261, %v7268
        %v7271 = vunpack.c.l.s4 1983009808
        %v7272 = vunpack.c.0.s8 %v7271
        %v7273 = vlaneseq
        %v7274 = vshrl.u32 %v7273, 7
        %v7275 = vsub.s32 %v7272, %v7274
        %v7276 = vrot.slane %v7262, %v7275
        %v7277 = vcombine.low %v6139, %v6301
        %v7278 = vcombine.high %v6139, %v6301
        %v7280 = vunpack.c.l.s4 1983009808
        %v7281 = vunpack.c.0.s8 %v7280
        %v7282 = vlaneseq
        %v7283 = vshrl.u32 %v7282, 7
        %v7284 = vsub.s32 %v7281, %v7283
        %v7285 = vrot.slane %v7277, %v7284
        %v7287 = vunpack.c.l.s4 1983009808
        %v7288 = vunpack.c.0.s8 %v7287
        %v7289 = vlaneseq
        %v7290 = vshrl.u32 %v7289, 7
        %v7291 = vsub.s32 %v7288, %v7290
        %v7292 = vrot.slane %v7278, %v7291
        %v7293 = vcombine.low %v7237, %v7253
        %v7294 = vcombine.high %v7237, %v7253
        %v7296 = vunpack.c.l.s4 1934713408
        %v7297 = vunpack.c.0.s8 %v7296
        %v7298 = vlaneseq
        %v7299 = vshrl.u32 %v7298, 7
        %v7300 = vsub.s32 %v7297, %v7299
        %v7301 = vrot.slane %v7293, %v7300
        %v7303 = vunpack.c.l.s4 1934713408
        %v7304 = vunpack.c.0.s8 %v7303
        %v7305 = vlaneseq
        %v7306 = vshrl.u32 %v7305, 7
        %v7307 = vsub.s32 %v7304, %v7306
        %v7308 = vrot.slane %v7294, %v7307
        %v7309 = vcombine.low %v7244, %v7260
        %v7310 = vcombine.high %v7244, %v7260
        %v7312 = vunpack.c.l.s4 1934713408
        %v7313 = vunpack.c.0.s8 %v7312
        %v7314 = vlaneseq
        %v7315 = vshrl.u32 %v7314, 7
        %v7316 = vsub.s32 %v7313, %v7315
        %v7317 = vrot.slane %v7309, %v7316
        %v7319 = vunpack.c.l.s4 1934713408
        %v7320 = vunpack.c.0.s8 %v7319
        %v7321 = vlaneseq
        %v7322 = vshrl.u32 %v7321, 7
        %v7323 = vsub.s32 %v7320, %v7322
        %v7324 = vrot.slane %v7310, %v7323
        %v7325 = vcombine.low %v7269, %v7285
        %v7326 = vcombine.high %v7269, %v7285
        %v7328 = vunpack.c.l.s4 1934713408
        %v7329 = vunpack.c.0.s8 %v7328
        %v7330 = vlaneseq
        %v7331 = vshrl.u32 %v7330, 7
        %v7332 = vsub.s32 %v7329, %v7331
        %v7333 = vrot.slane %v7325, %v7332
        %v7335 = vunpack.c.l.s4 1934713408
        %v7336 = vunpack.c.0.s8 %v7335
        %v7337 = vlaneseq
        %v7338 = vshrl.u32 %v7337, 7
        %v7339 = vsub.s32 %v7336, %v7338
        %v7340 = vrot.slane %v7326, %v7339
        %v7341 = vcombine.low %v7276, %v7292
        %v7342 = vcombine.high %v7276, %v7292
        %v7344 = vunpack.c.l.s4 1934713408
        %v7345 = vunpack.c.0.s8 %v7344
        %v7346 = vlaneseq
        %v7347 = vshrl.u32 %v7346, 7
        %v7348 = vsub.s32 %v7345, %v7347
        %v7349 = vrot.slane %v7341, %v7348
        %v7351 = vunpack.c.l.s4 1934713408
        %v7352 = vunpack.c.0.s8 %v7351
        %v7353 = vlaneseq
        %v7354 = vshrl.u32 %v7353, 7
        %v7355 = vsub.s32 %v7352, %v7354
        %v7356 = vrot.slane %v7342, %v7355
        %v7357 = vcombine.low %v7301, %v7333
        %v7358 = vcombine.high %v7301, %v7333
        %v7359 = vcombine.low %v7308, %v7340
        %v7360 = vcombine.high %v7308, %v7340
        %v7361 = vcombine.low %v7317, %v7349
        %v7362 = vcombine.high %v7317, %v7349
        %v7363 = vcombine.low %v7324, %v7356
        %v7364 = vcombine.high %v7324, %v7356
        %v7365 = vcombine.low %v6382, %v6544
        %v7366 = vcombine.high %v6382, %v6544
        %v7368 = vunpack.c.l.s4 1983009808
        %v7369 = vunpack.c.0.s8 %v7368
        %v7370 = vlaneseq
        %v7371 = vshrl.u32 %v7370, 7
        %v7372 = vsub.s32 %v7369, %v7371
        %v7373 = vrot.slane %v7365, %v7372
        %v7375 = vunpack.c.l.s4 1983009808
        %v7376 = vunpack.c.0.s8 %v7375
        %v7377 = vlaneseq
        %v7378 = vshrl.u32 %v7377, 7
        %v7379 = vsub.s32 %v7376, %v7378
        %v7380 = vrot.slane %v7366, %v7379
        %v7381 = vcombine.low %v6463, %v6625
        %v7382 = vcombine.high %v6463, %v6625
        %v7384 = vunpack.c.l.s4 1983009808
        %v7385 = vunpack.c.0.s8 %v7384
        %v7386 = vlaneseq
        %v7387 = vshrl.u32 %v7386, 7
        %v7388 = vsub.s32 %v7385, %v7387
        %v7389 = vrot.slane %v7381, %v7388
        %v7391 = vunpack.c.l.s4 1983009808
        %v7392 = vunpack.c.0.s8 %v7391
        %v7393 = vlaneseq
        %v7394 = vshrl.u32 %v7393, 7
        %v7395 = vsub.s32 %v7392, %v7394
        %v7396 = vrot.slane %v7382, %v7395
        %v7397 = vcombine.low %v6706, %v6868
        %v7398 = vcombine.high %v6706, %v6868
        %v7400 = vunpack.c.l.s4 1983009808
        %v7401 = vunpack.c.0.s8 %v7400
        %v7402 = vlaneseq
        %v7403 = vshrl.u32 %v7402, 7
        %v7404 = vsub.s32 %v7401, %v7403
        %v7405 = vrot.slane %v7397, %v7404
        %v7407 = vunpack.c.l.s4 1983009808
        %v7408 = vunpack.c.0.s8 %v7407
        %v7409 = vlaneseq
        %v7410 = vshrl.u32 %v7409, 7
        %v7411 = vsub.s32 %v7408, %v7410
        %v7412 = vrot.slane %v7398, %v7411
        %v7413 = vcombine.low %v6787, %v6949
        %v7414 = vcombine.high %v6787, %v6949
        %v7416 = vunpack.c.l.s4 1983009808
        %v7417 = vunpack.c.0.s8 %v7416
        %v7418 = vlaneseq
        %v7419 = vshrl.u32 %v7418, 7
        %v7420 = vsub.s32 %v7417, %v7419
        %v7421 = vrot.slane %v7413, %v7420
        %v7423 = vunpack.c.l.s4 1983009808
        %v7424 = vunpack.c.0.s8 %v7423
        %v7425 = vlaneseq
        %v7426 = vshrl.u32 %v7425, 7
        %v7427 = vsub.s32 %v7424, %v7426
        %v7428 = vrot.slane %v7414, %v7427
        %v7429 = vcombine.low %v7373, %v7389
        %v7430 = vcombine.high %v7373, %v7389
        %v7432 = vunpack.c.l.s4 1934713408
        %v7433 = vunpack.c.0.s8 %v7432
        %v7434 = vlaneseq
        %v7435 = vshrl.u32 %v7434, 7
        %v7436 = vsub.s32 %v7433, %v7435
        %v7437 = vrot.slane %v7429, %v7436
        %v7439 = vunpack.c.l.s4 1934713408
        %v7440 = vunpack.c.0.s8 %v7439
        %v7441 = vlaneseq
        %v7442 = vshrl.u32 %v7441, 7
        %v7443 = vsub.s32 %v7440, %v7442
        %v7444 = vrot.slane %v7430, %v7443
        %v7445 = vcombine.low %v7380, %v7396
        %v7446 = vcombine.high %v7380, %v7396
        %v7448 = vunpack.c.l.s4 1934713408
        %v7449 = vunpack.c.0.s8 %v7448
        %v7450 = vlaneseq
        %v7451 = vshrl.u32 %v7450, 7
        %v7452 = vsub.s32 %v7449, %v7451
        %v7453 = vrot.slane %v7445, %v7452
        %v7455 = vunpack.c.l.s4 1934713408
        %v7456 = vunpack.c.0.s8 %v7455
        %v7457 = vlaneseq
        %v7458 = vshrl.u32 %v7457, 7
        %v7459 = vsub.s32 %v7456, %v7458
        %v7460 = vrot.slane %v7446, %v7459
        %v7461 = vcombine.low %v7405, %v7421
        %v7462 = vcombine.high %v7405, %v7421
        %v7464 = vunpack.c.l.s4 1934713408
        %v7465 = vunpack.c.0.s8 %v7464
        %v7466 = vlaneseq
        %v7467 = vshrl.u32 %v7466, 7
        %v7468 = vsub.s32 %v7465, %v7467
        %v7469 = vrot.slane %v7461, %v7468
        %v7471 = vunpack.c.l.s4 1934713408
        %v7472 = vunpack.c.0.s8 %v7471
        %v7473 = vlaneseq
        %v7474 = vshrl.u32 %v7473, 7
        %v7475 = vsub.s32 %v7472, %v7474
        %v7476 = vrot.slane %v7462, %v7475
        %v7477 = vcombine.low %v7412, %v7428
        %v7478 = vcombine.high %v7412, %v7428
        %v7480 = vunpack.c.l.s4 1934713408
        %v7481 = vunpack.c.0.s8 %v7480
        %v7482 = vlaneseq
        %v7483 = vshrl.u32 %v7482, 7
        %v7484 = vsub.s32 %v7481, %v7483
        %v7485 = vrot.slane %v7477, %v7484
        %v7487 = vunpack.c.l.s4 1934713408
        %v7488 = vunpack.c.0.s8 %v7487
        %v7489 = vlaneseq
        %v7490 = vshrl.u32 %v7489, 7
        %v7491 = vsub.s32 %v7488, %v7490
        %v7492 = vrot.slane %v7478, %v7491
        %v7493 = vcombine.low %v7437, %v7469
        %v7494 = vcombine.high %v7437, %v7469
        %v7495 = vcombine.low %v7444, %v7476
        %v7496 = vcombine.high %v7444, %v7476
        %v7497 = vcombine.low %v7453, %v7485
        %v7498 = vcombine.high %v7453, %v7485
        %v7499 = vcombine.low %v7460, %v7492
        %v7500 = vcombine.high %v7460, %v7492
        %v7501 = vcombine.low %v4443, %v4605
        %v7503 = vunpack.c.l.s4 1983009808
        %v7504 = vunpack.c.0.s8 %v7503
        %v7505 = vlaneseq
        %v7506 = vshrl.u32 %v7505, 7
        %v7507 = vsub.s32 %v7504, %v7506
        %v7508 = vrot.slane %v7501, %v7507
        %v7509 = vcombine.low %v4524, %v4686
        %v7511 = vunpack.c.l.s4 1983009808
        %v7512 = vunpack.c.0.s8 %v7511
        %v7513 = vlaneseq
        %v7514 = vshrl.u32 %v7513, 7
        %v7515 = vsub.s32 %v7512, %v7514
        %v7516 = vrot.slane %v7509, %v7515
        %v7517 = vcombine.low %v4767, %v4929
        %v7519 = vunpack.c.l.s4 1983009808
        %v7520 = vunpack.c.0.s8 %v7519
        %v7521 = vlaneseq
        %v7522 = vshrl.u32 %v7521, 7
        %v7523 = vsub.s32 %v7520, %v7522
        %v7524 = vrot.slane %v7517, %v7523
        %v7525 = vcombine.low %v4848, %v5010
        %v7527 = vunpack.c.l.s4 1983009808
        %v7528 = vunpack.c.0.s8 %v7527
        %v7529 = vlaneseq
        %v7530 = vshrl.u32 %v7529, 7
        %v7531 = vsub.s32 %v7528, %v7530
        %v7532 = vrot.slane %v7525, %v7531
        %v7533 = vcombine.low %v7508, %v7516
        %v7535 = vunpack.c.l.s4 1934713408
        %v7536 = vunpack.c.0.s8 %v7535
        %v7537 = vlaneseq
        %v7538 = vshrl.u32 %v7537, 7
        %v7539 = vsub.s32 %v7536, %v7538
        %v7540 = vrot.slane %v7533, %v7539
        %v7541 = vcombine.low %v7524, %v7532
        %v7543 = vunpack.c.l.s4 1934713408
        %v7544 = vunpack.c.0.s8 %v7543
        %v7545 = vlaneseq
        %v7546 = vshrl.u32 %v7545, 7
        %v7547 = vsub.s32 %v7544, %v7546
        %v7548 = vrot.slane %v7541, %v7547
        %v7549 = vcombine.low %v7540, %v7548
        %v7550 = vcombine.high %v7540, %v7548
        %v7551 = vcombine.low %v5091, %v5253
        %v7553 = vunpack.c.l.s4 1983009808
        %v7554 = vunpack.c.0.s8 %v7553
        %v7555 = vlaneseq
        %v7556 = vshrl.u32 %v7555, 7
        %v7557 = vsub.s32 %v7554, %v7556
        %v7558 = vrot.slane %v7551, %v7557
        %v7559 = vcombine.low %v5172, %v5334
        %v7561 = vunpack.c.l.s4 1983009808
        %v7562 = vunpack.c.0.s8 %v7561
        %v7563 = vlaneseq
        %v7564 = vshrl.u32 %v7563, 7
        %v7565 = vsub.s32 %v7562, %v7564
        %v7566 = vrot.slane %v7559, %v7565
        %v7567 = vcombine.low %v5415, %v5577
        %v7569 = vunpack.c.l.s4 1983009808
        %v7570 = vunpack.c.0.s8 %v7569
        %v7571 = vlaneseq
        %v7572 = vshrl.u32 %v7571, 7
        %v7573 = vsub.s32 %v7570, %v7572
        %v7574 = vrot.slane %v7567, %v7573
        %v7575 = vcombine.low %v5496, %v5658
        %v7577 = vunpack.c.l.s4 1983009808
        %v7578 = vunpack.c.0.s8 %v7577
        %v7579 = vlaneseq
        %v7580 = vshrl.u32 %v7579, 7
        %v7581 = vsub.s32 %v7578, %v7580
        %v7582 = vrot.slane %v7575, %v7581
        %v7583 = vcombine.low %v7558, %v7566
        %v7585 = vunpack.c.l.s4 1934713408
        %v7586 = vunpack.c.0.s8 %v7585
        %v7587 = vlaneseq
        %v7588 = vshrl.u32 %v7587, 7
        %v7589 = vsub.s32 %v7586, %v7588
        %v7590 = vrot.slane %v7583, %v7589
        %v7591 = vcombine.low %v7574, %v7582
        %v7593 = vunpack.c.l.s4 1934713408
        %v7594 = vunpack.c.0.s8 %v7593
        %v7595 = vlaneseq
        %v7596 = vshrl.u32 %v7595, 7
        %v7597 = vsub.s32 %v7594, %v7596
        %v7598 = vrot.slane %v7591, %v7597
        %v7599 = vcombine.low %v7590, %v7598
        %v7600 = vcombine.high %v7590, %v7598
        %v7601 = vcombine.low %v5739, %v5901
        %v7603 = vunpack.c.l.s4 1983009808
        %v7604 = vunpack.c.0.s8 %v7603
        %v7605 = vlaneseq
        %v7606 = vshrl.u32 %v7605, 7
        %v7607 = vsub.s32 %v7604, %v7606
        %v7608 = vrot.slane %v7601, %v7607
        %v7609 = vcombine.low %v5820, %v5982
        %v7611 = vunpack.c.l.s4 1983009808
        %v7612 = vunpack.c.0.s8 %v7611
        %v7613 = vlaneseq
        %v7614 = vshrl.u32 %v7613, 7
        %v7615 = vsub.s32 %v7612, %v7614
        %v7616 = vrot.slane %v7609, %v7615
        %v7617 = vcombine.low %v6063, %v6225
        %v7619 = vunpack.c.l.s4 1983009808
        %v7620 = vunpack.c.0.s8 %v7619
        %v7621 = vlaneseq
        %v7622 = vshrl.u32 %v7621, 7
        %v7623 = vsub.s32 %v7620, %v7622
        %v7624 = vrot.slane %v7617, %v7623
        %v7625 = vcombine.low %v6144, %v6306
        %v7627 = vunpack.c.l.s4 1983009808
        %v7628 = vunpack.c.0.s8 %v7627
        %v7629 = vlaneseq
        %v7630 = vshrl.u32 %v7629, 7
        %v7631 = vsub.s32 %v7628, %v7630
        %v7632 = vrot.slane %v7625, %v7631
        %v7633 = vcombine.low %v7608, %v7616
        %v7635 = vunpack.c.l.s4 1934713408
        %v7636 = vunpack.c.0.s8 %v7635
        %v7637 = vlaneseq
        %v7638 = vshrl.u32 %v7637, 7
        %v7639 = vsub.s32 %v7636, %v7638
        %v7640 = vrot.slane %v7633, %v7639
        %v7641 = vcombine.low %v7624, %v7632
        %v7643 = vunpack.c.l.s4 1934713408
        %v7644 = vunpack.c.0.s8 %v7643
        %v7645 = vlaneseq
        %v7646 = vshrl.u32 %v7645, 7
        %v7647 = vsub.s32 %v7644, %v7646
        %v7648 = vrot.slane %v7641, %v7647
        %v7649 = vcombine.low %v7640, %v7648
        %v7650 = vcombine.high %v7640, %v7648
        %v7651 = vcombine.low %v6387, %v6549
        %v7653 = vunpack.c.l.s4 1983009808
        %v7654 = vunpack.c.0.s8 %v7653
        %v7655 = vlaneseq
        %v7656 = vshrl.u32 %v7655, 7
        %v7657 = vsub.s32 %v7654, %v7656
        %v7658 = vrot.slane %v7651, %v7657
        %v7659 = vcombine.low %v6468, %v6630
        %v7661 = vunpack.c.l.s4 1983009808
        %v7662 = vunpack.c.0.s8 %v7661
        %v7663 = vlaneseq
        %v7664 = vshrl.u32 %v7663, 7
        %v7665 = vsub.s32 %v7662, %v7664
        %v7666 = vrot.slane %v7659, %v7665
        %v7667 = vcombine.low %v6711, %v6873
        %v7669 = vunpack.c.l.s4 1983009808
        %v7670 = vunpack.c.0.s8 %v7669
        %v7671 = vlaneseq
        %v7672 = vshrl.u32 %v7671, 7
        %v7673 = vsub.s32 %v7670, %v7672
        %v7674 = vrot.slane %v7667, %v7673
        %v7675 = vcombine.low %v6792, %v6954
        %v7677 = vunpack.c.l.s4 1983009808
        %v7678 = vunpack.c.0.s8 %v7677
        %v7679 = vlaneseq
        %v7680 = vshrl.u32 %v7679, 7
        %v7681 = vsub.s32 %v7678, %v7680
        %v7682 = vrot.slane %v7675, %v7681
        %v7683 = vcombine.low %v7658, %v7666
        %v7685 = vunpack.c.l.s4 1934713408
        %v7686 = vunpack.c.0.s8 %v7685
        %v7687 = vlaneseq
        %v7688 = vshrl.u32 %v7687, 7
        %v7689 = vsub.s32 %v7686, %v7688
        %v7690 = vrot.slane %v7683, %v7689
        %v7691 = vcombine.low %v7674, %v7682
        %v7693 = vunpack.c.l.s4 1934713408
        %v7694 = vunpack.c.0.s8 %v7693
        %v7695 = vlaneseq
        %v7696 = vshrl.u32 %v7695, 7
        %v7697 = vsub.s32 %v7694, %v7696
        %v7698 = vrot.slane %v7691, %v7697
        %v7699 = vcombine.low %v7690, %v7698
        %v7700 = vcombine.high %v7690, %v7698
        %v7701 = vcombine.low %v7085, %v7087
        %v7702 = vcombine.high %v7085, %v7087
        %v7704 = vunpack.c.l.s4 1983009808
        %v7705 = vunpack.c.0.s8 %v7704
        %v7706 = vlaneseq
        %v7707 = vshrl.u32 %v7706, 7
        %v7708 = vsub.s32 %v7705, %v7707
        %v7709 = vrot.slane %v7701, %v7708
        %v7711 = vunpack.c.l.s4 1983009808
        %v7712 = vunpack.c.0.s8 %v7711
        %v7713 = vlaneseq
        %v7714 = vshrl.u32 %v7713, 7
        %v7715 = vsub.s32 %v7712, %v7714
        %v7716 = vrot.slane %v7702, %v7715
        %v7717 = vcombine.low %v7086, %v7088
        %v7718 = vcombine.high %v7086, %v7088
        %v7720 = vunpack.c.l.s4 1983009808
        %v7721 = vunpack.c.0.s8 %v7720
        %v7722 = vlaneseq
        %v7723 = vshrl.u32 %v7722, 7
        %v7724 = vsub.s32 %v7721, %v7723
        %v7725 = vrot.slane %v7717, %v7724
        %v7727 = vunpack.c.l.s4 1983009808
        %v7728 = vunpack.c.0.s8 %v7727
        %v7729 = vlaneseq
        %v7730 = vshrl.u32 %v7729, 7
        %v7731 = vsub.s32 %v7728, %v7730
        %v7732 = vrot.slane %v7718, %v7731
        %v7733 = vcombine.low %v7089, %v7091
        %v7734 = vcombine.high %v7089, %v7091
        %v7736 = vunpack.c.l.s4 1983009808
        %v7737 = vunpack.c.0.s8 %v7736
        %v7738 = vlaneseq
        %v7739 = vshrl.u32 %v7738, 7
        %v7740 = vsub.s32 %v7737, %v7739
        %v7741 = vrot.slane %v7733, %v7740
        %v7743 = vunpack.c.l.s4 1983009808
        %v7744 = vunpack.c.0.s8 %v7743
        %v7745 = vlaneseq
        %v7746 = vshrl.u32 %v7745, 7
        %v7747 = vsub.s32 %v7744, %v7746
        %v7748 = vrot.slane %v7734, %v7747
        %v7749 = vcombine.low %v7090, %v7092
        %v7750 = vcombine.high %v7090, %v7092
        %v7752 = vunpack.c.l.s4 1983009808
        %v7753 = vunpack.c.0.s8 %v7752
        %v7754 = vlaneseq
        %v7755 = vshrl.u32 %v7754, 7
        %v7756 = vsub.s32 %v7753, %v7755
        %v7757 = vrot.slane %v7749, %v7756
        %v7759 = vunpack.c.l.s4 1983009808
        %v7760 = vunpack.c.0.s8 %v7759
        %v7761 = vlaneseq
        %v7762 = vshrl.u32 %v7761, 7
        %v7763 = vsub.s32 %v7760, %v7762
        %v7764 = vrot.slane %v7750, %v7763
        %v7765 = vcombine.low %v7709, %v7725
        %v7766 = vcombine.high %v7709, %v7725
        %v7768 = vunpack.c.l.s4 1934713408
        %v7769 = vunpack.c.0.s8 %v7768
        %v7770 = vlaneseq
        %v7771 = vshrl.u32 %v7770, 7
        %v7772 = vsub.s32 %v7769, %v7771
        %v7773 = vrot.slane %v7765, %v7772
        %v7775 = vunpack.c.l.s4 1934713408
        %v7776 = vunpack.c.0.s8 %v7775
        %v7777 = vlaneseq
        %v7778 = vshrl.u32 %v7777, 7
        %v7779 = vsub.s32 %v7776, %v7778
        %v7780 = vrot.slane %v7766, %v7779
        %v7781 = vcombine.low %v7716, %v7732
        %v7782 = vcombine.high %v7716, %v7732
        %v7784 = vunpack.c.l.s4 1934713408
        %v7785 = vunpack.c.0.s8 %v7784
        %v7786 = vlaneseq
        %v7787 = vshrl.u32 %v7786, 7
        %v7788 = vsub.s32 %v7785, %v7787
        %v7789 = vrot.slane %v7781, %v7788
        %v7791 = vunpack.c.l.s4 1934713408
        %v7792 = vunpack.c.0.s8 %v7791
        %v7793 = vlaneseq
        %v7794 = vshrl.u32 %v7793, 7
        %v7795 = vsub.s32 %v7792, %v7794
        %v7796 = vrot.slane %v7782, %v7795
        %v7797 = vcombine.low %v7741, %v7757
        %v7798 = vcombine.high %v7741, %v7757
        %v7800 = vunpack.c.l.s4 1934713408
        %v7801 = vunpack.c.0.s8 %v7800
        %v7802 = vlaneseq
        %v7803 = vshrl.u32 %v7802, 7
        %v7804 = vsub.s32 %v7801, %v7803
        %v7805 = vrot.slane %v7797, %v7804
        %v7807 = vunpack.c.l.s4 1934713408
        %v7808 = vunpack.c.0.s8 %v7807
        %v7809 = vlaneseq
        %v7810 = vshrl.u32 %v7809, 7
        %v7811 = vsub.s32 %v7808, %v7810
        %v7812 = vrot.slane %v7798, %v7811
        %v7813 = vcombine.low %v7748, %v7764
        %v7814 = vcombine.high %v7748, %v7764
        %v7816 = vunpack.c.l.s4 1934713408
        %v7817 = vunpack.c.0.s8 %v7816
        %v7818 = vlaneseq
        %v7819 = vshrl.u32 %v7818, 7
        %v7820 = vsub.s32 %v7817, %v7819
        %v7821 = vrot.slane %v7813, %v7820
        %v7823 = vunpack.c.l.s4 1934713408
        %v7824 = vunpack.c.0.s8 %v7823
        %v7825 = vlaneseq
        %v7826 = vshrl.u32 %v7825, 7
        %v7827 = vsub.s32 %v7824, %v7826
        %v7828 = vrot.slane %v7814, %v7827
        %v7829 = vcombine.low %v7773, %v7805
        %v7830 = vcombine.high %v7773, %v7805
        %v7831 = vcombine.low %v7780, %v7812
        %v7832 = vcombine.high %v7780, %v7812
        %v7833 = vcombine.low %v7789, %v7821
        %v7834 = vcombine.high %v7789, %v7821
        %v7835 = vcombine.low %v7796, %v7828
        %v7836 = vcombine.high %v7796, %v7828
        %v7837 = vcombine.high %v7549, 0.0
        %v7839 = vunpack.c.l.s4 1983009808
        %v7840 = vunpack.c.0.s8 %v7839
        %v7841 = vlaneseq
        %v7842 = vshrl.u32 %v7841, 7
        %v7843 = vsub.s32 %v7840, %v7842
        %v7844 = vrot.slane %v7549, %v7843
        %v7846 = vunpack.c.l.s4 1983009808
        %v7847 = vunpack.c.0.s8 %v7846
        %v7848 = vlaneseq
        %v7849 = vshrl.u32 %v7848, 7
        %v7850 = vsub.s32 %v7847, %v7849
        %v7851 = vrot.slane %v7837, %v7850
        %v7852 = vcombine.high %v7550, 0.0
        %v7854 = vunpack.c.l.s4 1983009808
        %v7855 = vunpack.c.0.s8 %v7854
        %v7856 = vlaneseq
        %v7857 = vshrl.u32 %v7856, 7
        %v7858 = vsub.s32 %v7855, %v7857
        %v7859 = vrot.slane %v7550, %v7858
        %v7861 = vunpack.c.l.s4 1983009808
        %v7862 = vunpack.c.0.s8 %v7861
        %v7863 = vlaneseq
        %v7864 = vshrl.u32 %v7863, 7
        %v7865 = vsub.s32 %v7862, %v7864
        %v7866 = vrot.slane %v7852, %v7865
        %v7867 = vcombine.low %v7844, %v7859
        %v7868 = vcombine.high %v7844, %v7859
        %v7870 = vunpack.c.l.s4 1934713408
        %v7871 = vunpack.c.0.s8 %v7870
        %v7872 = vlaneseq
        %v7873 = vshrl.u32 %v7872, 7
        %v7874 = vsub.s32 %v7871, %v7873
        %v7875 = vrot.slane %v7867, %v7874
        %v7877 = vunpack.c.l.s4 1934713408
        %v7878 = vunpack.c.0.s8 %v7877
        %v7879 = vlaneseq
        %v7880 = vshrl.u32 %v7879, 7
        %v7881 = vsub.s32 %v7878, %v7880
        %v7882 = vrot.slane %v7868, %v7881
        %v7883 = vcombine.low %v7851, %v7866
        %v7884 = vcombine.high %v7851, %v7866
        %v7886 = vunpack.c.l.s4 1934713408
        %v7887 = vunpack.c.0.s8 %v7886
        %v7888 = vlaneseq
        %v7889 = vshrl.u32 %v7888, 7
        %v7890 = vsub.s32 %v7887, %v7889
        %v7891 = vrot.slane %v7883, %v7890
        %v7893 = vunpack.c.l.s4 1934713408
        %v7894 = vunpack.c.0.s8 %v7893
        %v7895 = vlaneseq
        %v7896 = vshrl.u32 %v7895, 7
        %v7897 = vsub.s32 %v7894, %v7896
        %v7898 = vrot.slane %v7884, %v7897
        %v7899 = vcombine.high %v7875, 0.0
        %v7900 = vcombine.high %v7882, 0.0
        %v7901 = vcombine.high %v7891, 0.0
        %v7902 = vcombine.high %v7898, 0.0
        %v7903 = vcombine.low %v7221, %v7223
        %v7904 = vcombine.high %v7221, %v7223
        %v7906 = vunpack.c.l.s4 1983009808
        %v7907 = vunpack.c.0.s8 %v7906
        %v7908 = vlaneseq
        %v7909 = vshrl.u32 %v7908, 7
        %v7910 = vsub.s32 %v7907, %v7909
        %v7911 = vrot.slane %v7903, %v7910
        %v7913 = vunpack.c.l.s4 1983009808
        %v7914 = vunpack.c.0.s8 %v7913
        %v7915 = vlaneseq
        %v7916 = vshrl.u32 %v7915, 7
        %v7917 = vsub.s32 %v7914, %v7916
        %v7918 = vrot.slane %v7904, %v7917
        %v7919 = vcombine.low %v7222, %v7224
        %v7920 = vcombine.high %v7222, %v7224
        %v7922 = vunpack.c.l.s4 1983009808
        %v7923 = vunpack.c.0.s8 %v7922
        %v7924 = vlaneseq
        %v7925 = vshrl.u32 %v7924, 7
        %v7926 = vsub.s32 %v7923, %v7925
        %v7927 = vrot.slane %v7919, %v7926
        %v7929 = vunpack.c.l.s4 1983009808
        %v7930 = vunpack.c.0.s8 %v7929
        %v7931 = vlaneseq
        %v7932 = vshrl.u32 %v7931, 7
        %v7933 = vsub.s32 %v7930, %v7932
        %v7934 = vrot.slane %v7920, %v7933
        %v7935 = vcombine.low %v7225, %v7227
        %v7936 = vcombine.high %v7225, %v7227
        %v7938 = vunpack.c.l.s4 1983009808
        %v7939 = vunpack.c.0.s8 %v7938
        %v7940 = vlaneseq
        %v7941 = vshrl.u32 %v7940, 7
        %v7942 = vsub.s32 %v7939, %v7941
        %v7943 = vrot.slane %v7935, %v7942
        %v7945 = vunpack.c.l.s4 1983009808
        %v7946 = vunpack.c.0.s8 %v7945
        %v7947 = vlaneseq
        %v7948 = vshrl.u32 %v7947, 7
        %v7949 = vsub.s32 %v7946, %v7948
        %v7950 = vrot.slane %v7936, %v7949
        %v7951 = vcombine.low %v7226, %v7228
        %v7952 = vcombine.high %v7226, %v7228
        %v7954 = vunpack.c.l.s4 1983009808
        %v7955 = vunpack.c.0.s8 %v7954
        %v7956 = vlaneseq
        %v7957 = vshrl.u32 %v7956, 7
        %v7958 = vsub.s32 %v7955, %v7957
        %v7959 = vrot.slane %v7951, %v7958
        %v7961 = vunpack.c.l.s4 1983009808
        %v7962 = vunpack.c.0.s8 %v7961
        %v7963 = vlaneseq
        %v7964 = vshrl.u32 %v7963, 7
        %v7965 = vsub.s32 %v7962, %v7964
        %v7966 = vrot.slane %v7952, %v7965
        %v7967 = vcombine.low %v7911, %v7927
        %v7968 = vcombine.high %v7911, %v7927
        %v7970 = vunpack.c.l.s4 1934713408
        %v7971 = vunpack.c.0.s8 %v7970
        %v7972 = vlaneseq
        %v7973 = vshrl.u32 %v7972, 7
        %v7974 = vsub.s32 %v7971, %v7973
        %v7975 = vrot.slane %v7967, %v7974
        %v7977 = vunpack.c.l.s4 1934713408
        %v7978 = vunpack.c.0.s8 %v7977
        %v7979 = vlaneseq
        %v7980 = vshrl.u32 %v7979, 7
        %v7981 = vsub.s32 %v7978, %v7980
        %v7982 = vrot.slane %v7968, %v7981
        %v7983 = vcombine.low %v7918, %v7934
        %v7984 = vcombine.high %v7918, %v7934
        %v7986 = vunpack.c.l.s4 1934713408
        %v7987 = vunpack.c.0.s8 %v7986
        %v7988 = vlaneseq
        %v7989 = vshrl.u32 %v7988, 7
        %v7990 = vsub.s32 %v7987, %v7989
        %v7991 = vrot.slane %v7983, %v7990
        %v7993 = vunpack.c.l.s4 1934713408
        %v7994 = vunpack.c.0.s8 %v7993
        %v7995 = vlaneseq
        %v7996 = vshrl.u32 %v7995, 7
        %v7997 = vsub.s32 %v7994, %v7996
        %v7998 = vrot.slane %v7984, %v7997
        %v7999 = vcombine.low %v7943, %v7959
        %v8000 = vcombine.high %v7943, %v7959
        %v8002 = vunpack.c.l.s4 1934713408
        %v8003 = vunpack.c.0.s8 %v8002
        %v8004 = vlaneseq
        %v8005 = vshrl.u32 %v8004, 7
        %v8006 = vsub.s32 %v8003, %v8005
        %v8007 = vrot.slane %v7999, %v8006
        %v8009 = vunpack.c.l.s4 1934713408
        %v8010 = vunpack.c.0.s8 %v8009
        %v8011 = vlaneseq
        %v8012 = vshrl.u32 %v8011, 7
        %v8013 = vsub.s32 %v8010, %v8012
        %v8014 = vrot.slane %v8000, %v8013
        %v8015 = vcombine.low %v7950, %v7966
        %v8016 = vcombine.high %v7950, %v7966
        %v8018 = vunpack.c.l.s4 1934713408
        %v8019 = vunpack.c.0.s8 %v8018
        %v8020 = vlaneseq
        %v8021 = vshrl.u32 %v8020, 7
        %v8022 = vsub.s32 %v8019, %v8021
        %v8023 = vrot.slane %v8015, %v8022
        %v8025 = vunpack.c.l.s4 1934713408
        %v8026 = vunpack.c.0.s8 %v8025
        %v8027 = vlaneseq
        %v8028 = vshrl.u32 %v8027, 7
        %v8029 = vsub.s32 %v8026, %v8028
        %v8030 = vrot.slane %v8016, %v8029
        %v8031 = vcombine.low %v7975, %v8007
        %v8032 = vcombine.high %v7975, %v8007
        %v8033 = vcombine.low %v7982, %v8014
        %v8034 = vcombine.high %v7982, %v8014
        %v8035 = vcombine.low %v7991, %v8023
        %v8036 = vcombine.high %v7991, %v8023
        %v8037 = vcombine.low %v7998, %v8030
        %v8038 = vcombine.high %v7998, %v8030
        %v8039 = vcombine.high %v7599, 0.0
        %v8041 = vunpack.c.l.s4 1983009808
        %v8042 = vunpack.c.0.s8 %v8041
        %v8043 = vlaneseq
        %v8044 = vshrl.u32 %v8043, 7
        %v8045 = vsub.s32 %v8042, %v8044
        %v8046 = vrot.slane %v7599, %v8045
        %v8048 = vunpack.c.l.s4 1983009808
        %v8049 = vunpack.c.0.s8 %v8048
        %v8050 = vlaneseq
        %v8051 = vshrl.u32 %v8050, 7
        %v8052 = vsub.s32 %v8049, %v8051
        %v8053 = vrot.slane %v8039, %v8052
        %v8054 = vcombine.high %v7600, 0.0
        %v8056 = vunpack.c.l.s4 1983009808
        %v8057 = vunpack.c.0.s8 %v8056
        %v8058 = vlaneseq
        %v8059 = vshrl.u32 %v8058, 7
        %v8060 = vsub.s32 %v8057, %v8059
        %v8061 = vrot.slane %v7600, %v8060
        %v8063 = vunpack.c.l.s4 1983009808
        %v8064 = vunpack.c.0.s8 %v8063
        %v8065 = vlaneseq
        %v8066 = vshrl.u32 %v8065, 7
        %v8067 = vsub.s32 %v8064, %v8066
        %v8068 = vrot.slane %v8054, %v8067
        %v8069 = vcombine.low %v8046, %v8061
        %v8070 = vcombine.high %v8046, %v8061
        %v8072 = vunpack.c.l.s4 1934713408
        %v8073 = vunpack.c.0.s8 %v8072
        %v8074 = vlaneseq
        %v8075 = vshrl.u32 %v8074, 7
        %v8076 = vsub.s32 %v8073, %v8075
        %v8077 = vrot.slane %v8069, %v8076
        %v8079 = vunpack.c.l.s4 1934713408
        %v8080 = vunpack.c.0.s8 %v8079
        %v8081 = vlaneseq
        %v8082 = vshrl.u32 %v8081, 7
        %v8083 = vsub.s32 %v8080, %v8082
        %v8084 = vrot.slane %v8070, %v8083
        %v8085 = vcombine.low %v8053, %v8068
        %v8086 = vcombine.high %v8053, %v8068
        %v8088 = vunpack.c.l.s4 1934713408
        %v8089 = vunpack.c.0.s8 %v8088
        %v8090 = vlaneseq
        %v8091 = vshrl.u32 %v8090, 7
        %v8092 = vsub.s32 %v8089, %v8091
        %v8093 = vrot.slane %v8085, %v8092
        %v8095 = vunpack.c.l.s4 1934713408
        %v8096 = vunpack.c.0.s8 %v8095
        %v8097 = vlaneseq
        %v8098 = vshrl.u32 %v8097, 7
        %v8099 = vsub.s32 %v8096, %v8098
        %v8100 = vrot.slane %v8086, %v8099
        %v8101 = vcombine.high %v8077, 0.0
        %v8102 = vcombine.high %v8084, 0.0
        %v8103 = vcombine.high %v8093, 0.0
        %v8104 = vcombine.high %v8100, 0.0
        %v8105 = vcombine.low %v7357, %v7359
        %v8106 = vcombine.high %v7357, %v7359
        %v8108 = vunpack.c.l.s4 1983009808
        %v8109 = vunpack.c.0.s8 %v8108
        %v8110 = vlaneseq
        %v8111 = vshrl.u32 %v8110, 7
        %v8112 = vsub.s32 %v8109, %v8111
        %v8113 = vrot.slane %v8105, %v8112
        %v8115 = vunpack.c.l.s4 1983009808
        %v8116 = vunpack.c.0.s8 %v8115
        %v8117 = vlaneseq
        %v8118 = vshrl.u32 %v8117, 7
        %v8119 = vsub.s32 %v8116, %v8118
        %v8120 = vrot.slane %v8106, %v8119
        %v8121 = vcombine.low %v7358, %v7360
        %v8122 = vcombine.high %v7358, %v7360
        %v8124 = vunpack.c.l.s4 1983009808
        %v8125 = vunpack.c.0.s8 %v8124
        %v8126 = vlaneseq
        %v8127 = vshrl.u32 %v8126, 7
        %v8128 = vsub.s32 %v8125, %v8127
        %v8129 = vrot.slane %v8121, %v8128
        %v8131 = vunpack.c.l.s4 1983009808
        %v8132 = vunpack.c.0.s8 %v8131
        %v8133 = vlaneseq
        %v8134 = vshrl.u32 %v8133, 7
        %v8135 = vsub.s32 %v8132, %v8134
        %v8136 = vrot.slane %v8122, %v8135
        %v8137 = vcombine.low %v7361, %v7363
        %v8138 = vcombine.high %v7361, %v7363
        %v8140 = vunpack.c.l.s4 1983009808
        %v8141 = vunpack.c.0.s8 %v8140
        %v8142 = vlaneseq
        %v8143 = vshrl.u32 %v8142, 7
        %v8144 = vsub.s32 %v8141, %v8143
        %v8145 = vrot.slane %v8137, %v8144
        %v8147 = vunpack.c.l.s4 1983009808
        %v8148 = vunpack.c.0.s8 %v8147
        %v8149 = vlaneseq
        %v8150 = vshrl.u32 %v8149, 7
        %v8151 = vsub.s32 %v8148, %v8150
        %v8152 = vrot.slane %v8138, %v8151
        %v8153 = vcombine.low %v7362, %v7364
        %v8154 = vcombine.high %v7362, %v7364
        %v8156 = vunpack.c.l.s4 1983009808
        %v8157 = vunpack.c.0.s8 %v8156
        %v8158 = vlaneseq
        %v8159 = vshrl.u32 %v8158, 7
        %v8160 = vsub.s32 %v8157, %v8159
        %v8161 = vrot.slane %v8153, %v8160
        %v8163 = vunpack.c.l.s4 1983009808
        %v8164 = vunpack.c.0.s8 %v8163
        %v8165 = vlaneseq
        %v8166 = vshrl.u32 %v8165, 7
        %v8167 = vsub.s32 %v8164, %v8166
        %v8168 = vrot.slane %v8154, %v8167
        %v8169 = vcombine.low %v8113, %v8129
        %v8170 = vcombine.high %v8113, %v8129
        %v8172 = vunpack.c.l.s4 1934713408
        %v8173 = vunpack.c.0.s8 %v8172
        %v8174 = vlaneseq
        %v8175 = vshrl.u32 %v8174, 7
        %v8176 = vsub.s32 %v8173, %v8175
        %v8177 = vrot.slane %v8169, %v8176
        %v8179 = vunpack.c.l.s4 1934713408
        %v8180 = vunpack.c.0.s8 %v8179
        %v8181 = vlaneseq
        %v8182 = vshrl.u32 %v8181, 7
        %v8183 = vsub.s32 %v8180, %v8182
        %v8184 = vrot.slane %v8170, %v8183
        %v8185 = vcombine.low %v8120, %v8136
        %v8186 = vcombine.high %v8120, %v8136
        %v8188 = vunpack.c.l.s4 1934713408
        %v8189 = vunpack.c.0.s8 %v8188
        %v8190 = vlaneseq
        %v8191 = vshrl.u32 %v8190, 7
        %v8192 = vsub.s32 %v8189, %v8191
        %v8193 = vrot.slane %v8185, %v8192
        %v8195 = vunpack.c.l.s4 1934713408
        %v8196 = vunpack.c.0.s8 %v8195
        %v8197 = vlaneseq
        %v8198 = vshrl.u32 %v8197, 7
        %v8199 = vsub.s32 %v8196, %v8198
        %v8200 = vrot.slane %v8186, %v8199
        %v8201 = vcombine.low %v8145, %v8161
        %v8202 = vcombine.high %v8145, %v8161
        %v8204 = vunpack.c.l.s4 1934713408
        %v8205 = vunpack.c.0.s8 %v8204
        %v8206 = vlaneseq
        %v8207 = vshrl.u32 %v8206, 7
        %v8208 = vsub.s32 %v8205, %v8207
        %v8209 = vrot.slane %v8201, %v8208
        %v8211 = vunpack.c.l.s4 1934713408
        %v8212 = vunpack.c.0.s8 %v8211
        %v8213 = vlaneseq
        %v8214 = vshrl.u32 %v8213, 7
        %v8215 = vsub.s32 %v8212, %v8214
        %v8216 = vrot.slane %v8202, %v8215
        %v8217 = vcombine.low %v8152, %v8168
        %v8218 = vcombine.high %v8152, %v8168
        %v8220 = vunpack.c.l.s4 1934713408
        %v8221 = vunpack.c.0.s8 %v8220
        %v8222 = vlaneseq
        %v8223 = vshrl.u32 %v8222, 7
        %v8224 = vsub.s32 %v8221, %v8223
        %v8225 = vrot.slane %v8217, %v8224
        %v8227 = vunpack.c.l.s4 1934713408
        %v8228 = vunpack.c.0.s8 %v8227
        %v8229 = vlaneseq
        %v8230 = vshrl.u32 %v8229, 7
        %v8231 = vsub.s32 %v8228, %v8230
        %v8232 = vrot.slane %v8218, %v8231
        %v8233 = vcombine.low %v8177, %v8209
        %v8234 = vcombine.high %v8177, %v8209
        %v8235 = vcombine.low %v8184, %v8216
        %v8236 = vcombine.high %v8184, %v8216
        %v8237 = vcombine.low %v8193, %v8225
        %v8238 = vcombine.high %v8193, %v8225
        %v8239 = vcombine.low %v8200, %v8232
        %v8240 = vcombine.high %v8200, %v8232
        %v8241 = vcombine.high %v7649, 0.0
        %v8243 = vunpack.c.l.s4 1983009808
        %v8244 = vunpack.c.0.s8 %v8243
        %v8245 = vlaneseq
        %v8246 = vshrl.u32 %v8245, 7
        %v8247 = vsub.s32 %v8244, %v8246
        %v8248 = vrot.slane %v7649, %v8247
        %v8250 = vunpack.c.l.s4 1983009808
        %v8251 = vunpack.c.0.s8 %v8250
        %v8252 = vlaneseq
        %v8253 = vshrl.u32 %v8252, 7
        %v8254 = vsub.s32 %v8251, %v8253
        %v8255 = vrot.slane %v8241, %v8254
        %v8256 = vcombine.high %v7650, 0.0
        %v8258 = vunpack.c.l.s4 1983009808
        %v8259 = vunpack.c.0.s8 %v8258
        %v8260 = vlaneseq
        %v8261 = vshrl.u32 %v8260, 7
        %v8262 = vsub.s32 %v8259, %v8261
        %v8263 = vrot.slane %v7650, %v8262
        %v8265 = vunpack.c.l.s4 1983009808
        %v8266 = vunpack.c.0.s8 %v8265
        %v8267 = vlaneseq
        %v8268 = vshrl.u32 %v8267, 7
        %v8269 = vsub.s32 %v8266, %v8268
        %v8270 = vrot.slane %v8256, %v8269
        %v8271 = vcombine.low %v8248, %v8263
        %v8272 = vcombine.high %v8248, %v8263
        %v8274 = vunpack.c.l.s4 1934713408
        %v8275 = vunpack.c.0.s8 %v8274
        %v8276 = vlaneseq
        %v8277 = vshrl.u32 %v8276, 7
        %v8278 = vsub.s32 %v8275, %v8277
        %v8279 = vrot.slane %v8271, %v8278
        %v8281 = vunpack.c.l.s4 1934713408
        %v8282 = vunpack.c.0.s8 %v8281
        %v8283 = vlaneseq
        %v8284 = vshrl.u32 %v8283, 7
        %v8285 = vsub.s32 %v8282, %v8284
        %v8286 = vrot.slane %v8272, %v8285
        %v8287 = vcombine.low %v8255, %v8270
        %v8288 = vcombine.high %v8255, %v8270
        %v8290 = vunpack.c.l.s4 1934713408
        %v8291 = vunpack.c.0.s8 %v8290
        %v8292 = vlaneseq
        %v8293 = vshrl.u32 %v8292, 7
        %v8294 = vsub.s32 %v8291, %v8293
        %v8295 = vrot.slane %v8287, %v8294
        %v8297 = vunpack.c.l.s4 1934713408
        %v8298 = vunpack.c.0.s8 %v8297
        %v8299 = vlaneseq
        %v8300 = vshrl.u32 %v8299, 7
        %v8301 = vsub.s32 %v8298, %v8300
        %v8302 = vrot.slane %v8288, %v8301
        %v8303 = vcombine.high %v8279, 0.0
        %v8304 = vcombine.high %v8286, 0.0
        %v8305 = vcombine.high %v8295, 0.0
        %v8306 = vcombine.high %v8302, 0.0
        %v8307 = vcombine.low %v7493, %v7495
        %v8308 = vcombine.high %v7493, %v7495
        %v8310 = vunpack.c.l.s4 1983009808
        %v8311 = vunpack.c.0.s8 %v8310
        %v8312 = vlaneseq
        %v8313 = vshrl.u32 %v8312, 7
        %v8314 = vsub.s32 %v8311, %v8313
        %v8315 = vrot.slane %v8307, %v8314
        %v8317 = vunpack.c.l.s4 1983009808
        %v8318 = vunpack.c.0.s8 %v8317
        %v8319 = vlaneseq
        %v8320 = vshrl.u32 %v8319, 7
        %v8321 = vsub.s32 %v8318, %v8320
        %v8322 = vrot.slane %v8308, %v8321
        %v8323 = vcombine.low %v7494, %v7496
        %v8324 = vcombine.high %v7494, %v7496
        %v8326 = vunpack.c.l.s4 1983009808
        %v8327 = vunpack.c.0.s8 %v8326
        %v8328 = vlaneseq
        %v8329 = vshrl.u32 %v8328, 7
        %v8330 = vsub.s32 %v8327, %v8329
        %v8331 = vrot.slane %v8323, %v8330
        %v8333 = vunpack.c.l.s4 1983009808
        %v8334 = vunpack.c.0.s8 %v8333
        %v8335 = vlaneseq
        %v8336 = vshrl.u32 %v8335, 7
        %v8337 = vsub.s32 %v8334, %v8336
        %v8338 = vrot.slane %v8324, %v8337
        %v8339 = vcombine.low %v7497, %v7499
        %v8340 = vcombine.high %v7497, %v7499
        %v8342 = vunpack.c.l.s4 1983009808
        %v8343 = vunpack.c.0.s8 %v8342
        %v8344 = vlaneseq
        %v8345 = vshrl.u32 %v8344, 7
        %v8346 = vsub.s32 %v8343, %v8345
        %v8347 = vrot.slane %v8339, %v8346
        %v8349 = vunpack.c.l.s4 1983009808
        %v8350 = vunpack.c.0.s8 %v8349
        %v8351 = vlaneseq
        %v8352 = vshrl.u32 %v8351, 7
        %v8353 = vsub.s32 %v8350, %v8352
        %v8354 = vrot.slane %v8340, %v8353
        %v8355 = vcombine.low %v7498, %v7500
        %v8356 = vcombine.high %v7498, %v7500
        %v8358 = vunpack.c.l.s4 1983009808
        %v8359 = vunpack.c.0.s8 %v8358
        %v8360 = vlaneseq
        %v8361 = vshrl.u32 %v8360, 7
        %v8362 = vsub.s32 %v8359, %v8361
        %v8363 = vrot.slane %v8355, %v8362
        %v8365 = vunpack.c.l.s4 1983009808
        %v8366 = vunpack.c.0.s8 %v8365
        %v8367 = vlaneseq
        %v8368 = vshrl.u32 %v8367, 7
        %v8369 = vsub.s32 %v8366, %v8368
        %v8370 = vrot.slane %v8356, %v8369
        %v8371 = vcombine.low %v8315, %v8331
        %v8372 = vcombine.high %v8315, %v8331
        %v8374 = vunpack.c.l.s4 1934713408
        %v8375 = vunpack.c.0.s8 %v8374
        %v8376 = vlaneseq
        %v8377 = vshrl.u32 %v8376, 7
        %v8378 = vsub.s32 %v8375, %v8377
        %v8379 = vrot.slane %v8371, %v8378
        %v8381 = vunpack.c.l.s4 1934713408
        %v8382 = vunpack.c.0.s8 %v8381
        %v8383 = vlaneseq
        %v8384 = vshrl.u32 %v8383, 7
        %v8385 = vsub.s32 %v8382, %v8384
        %v8386 = vrot.slane %v8372, %v8385
        %v8387 = vcombine.low %v8322, %v8338
        %v8388 = vcombine.high %v8322, %v8338
        %v8390 = vunpack.c.l.s4 1934713408
        %v8391 = vunpack.c.0.s8 %v8390
        %v8392 = vlaneseq
        %v8393 = vshrl.u32 %v8392, 7
        %v8394 = vsub.s32 %v8391, %v8393
        %v8395 = vrot.slane %v8387, %v8394
        %v8397 = vunpack.c.l.s4 1934713408
        %v8398 = vunpack.c.0.s8 %v8397
        %v8399 = vlaneseq
        %v8400 = vshrl.u32 %v8399, 7
        %v8401 = vsub.s32 %v8398, %v8400
        %v8402 = vrot.slane %v8388, %v8401
        %v8403 = vcombine.low %v8347, %v8363
        %v8404 = vcombine.high %v8347, %v8363
        %v8406 = vunpack.c.l.s4 1934713408
        %v8407 = vunpack.c.0.s8 %v8406
        %v8408 = vlaneseq
        %v8409 = vshrl.u32 %v8408, 7
        %v8410 = vsub.s32 %v8407, %v8409
        %v8411 = vrot.slane %v8403, %v8410
        %v8413 = vunpack.c.l.s4 1934713408
        %v8414 = vunpack.c.0.s8 %v8413
        %v8415 = vlaneseq
        %v8416 = vshrl.u32 %v8415, 7
        %v8417 = vsub.s32 %v8414, %v8416
        %v8418 = vrot.slane %v8404, %v8417
        %v8419 = vcombine.low %v8354, %v8370
        %v8420 = vcombine.high %v8354, %v8370
        %v8422 = vunpack.c.l.s4 1934713408
        %v8423 = vunpack.c.0.s8 %v8422
        %v8424 = vlaneseq
        %v8425 = vshrl.u32 %v8424, 7
        %v8426 = vsub.s32 %v8423, %v8425
        %v8427 = vrot.slane %v8419, %v8426
        %v8429 = vunpack.c.l.s4 1934713408
        %v8430 = vunpack.c.0.s8 %v8429
        %v8431 = vlaneseq
        %v8432 = vshrl.u32 %v8431, 7
        %v8433 = vsub.s32 %v8430, %v8432
        %v8434 = vrot.slane %v8420, %v8433
        %v8435 = vcombine.low %v8379, %v8411
        %v8436 = vcombine.high %v8379, %v8411
        %v8437 = vcombine.low %v8386, %v8418
        %v8438 = vcombine.high %v8386, %v8418
        %v8439 = vcombine.low %v8395, %v8427
        %v8440 = vcombine.high %v8395, %v8427
        %v8441 = vcombine.low %v8402, %v8434
        %v8442 = vcombine.high %v8402, %v8434
        %v8443 = vcombine.high %v7699, 0.0
        %v8445 = vunpack.c.l.s4 1983009808
        %v8446 = vunpack.c.0.s8 %v8445
        %v8447 = vlaneseq
        %v8448 = vshrl.u32 %v8447, 7
        %v8449 = vsub.s32 %v8446, %v8448
        %v8450 = vrot.slane %v7699, %v8449
        %v8452 = vunpack.c.l.s4 1983009808
        %v8453 = vunpack.c.0.s8 %v8452
        %v8454 = vlaneseq
        %v8455 = vshrl.u32 %v8454, 7
        %v8456 = vsub.s32 %v8453, %v8455
        %v8457 = vrot.slane %v8443, %v8456
        %v8458 = vcombine.high %v7700, 0.0
        %v8460 = vunpack.c.l.s4 1983009808
        %v8461 = vunpack.c.0.s8 %v8460
        %v8462 = vlaneseq
        %v8463 = vshrl.u32 %v8462, 7
        %v8464 = vsub.s32 %v8461, %v8463
        %v8465 = vrot.slane %v7700, %v8464
        %v8467 = vunpack.c.l.s4 1983009808
        %v8468 = vunpack.c.0.s8 %v8467
        %v8469 = vlaneseq
        %v8470 = vshrl.u32 %v8469, 7
        %v8471 = vsub.s32 %v8468, %v8470
        %v8472 = vrot.slane %v8458, %v8471
        %v8473 = vcombine.low %v8450, %v8465
        %v8474 = vcombine.high %v8450, %v8465
        %v8476 = vunpack.c.l.s4 1934713408
        %v8477 = vunpack.c.0.s8 %v8476
        %v8478 = vlaneseq
        %v8479 = vshrl.u32 %v8478, 7
        %v8480 = vsub.s32 %v8477, %v8479
        %v8481 = vrot.slane %v8473, %v8480
        %v8483 = vunpack.c.l.s4 1934713408
        %v8484 = vunpack.c.0.s8 %v8483
        %v8485 = vlaneseq
        %v8486 = vshrl.u32 %v8485, 7
        %v8487 = vsub.s32 %v8484, %v8486
        %v8488 = vrot.slane %v8474, %v8487
        %v8489 = vcombine.low %v8457, %v8472
        %v8490 = vcombine.high %v8457, %v8472
        %v8492 = vunpack.c.l.s4 1934713408
        %v8493 = vunpack.c.0.s8 %v8492
        %v8494 = vlaneseq
        %v8495 = vshrl.u32 %v8494, 7
        %v8496 = vsub.s32 %v8493, %v8495
        %v8497 = vrot.slane %v8489, %v8496
        %v8499 = vunpack.c.l.s4 1934713408
        %v8500 = vunpack.c.0.s8 %v8499
        %v8501 = vlaneseq
        %v8502 = vshrl.u32 %v8501, 7
        %v8503 = vsub.s32 %v8500, %v8502
        %v8504 = vrot.slane %v8490, %v8503
        %v8505 = vcombine.high %v8481, 0.0
        %v8506 = vcombine.high %v8488, 0.0
        %v8507 = vcombine.high %v8497, 0.0
        %v8508 = vcombine.high %v8504, 0.0
        %8511 = vrot.lane.b32.xlu0 %v7830, 32
        %v8512 = vpop.permute.xlu0 %8511
        %8513 = vrot.lane.b32.xlu0 %v7899, 32
        %v8514 = vpop.permute.xlu0 %8513
        %8519 = vrot.lane.b32.xlu0 %v7831, 64
        %v8520 = vpop.permute.xlu0 %8519
        %8521 = vrot.lane.b32.xlu0 %v7882, 64
        %v8522 = vpop.permute.xlu0 %8521
        %8527 = vrot.lane.b32.xlu0 %v7832, 96
        %v8528 = vpop.permute.xlu0 %8527
        %8529 = vrot.lane.b32.xlu0 %v7900, 96
        %v8530 = vpop.permute.xlu0 %8529
        %8535 = vrot.lane.b32.xlu0 %v7834, 32
        %v8536 = vpop.permute.xlu0 %8535
        %8537 = vrot.lane.b32.xlu0 %v7901, 32
        %v8538 = vpop.permute.xlu0 %8537
        %8543 = vrot.lane.b32.xlu0 %v7835, 64
        %v8544 = vpop.permute.xlu0 %8543
        %8545 = vrot.lane.b32.xlu0 %v7898, 64
        %v8546 = vpop.permute.xlu0 %8545
        %8551 = vrot.lane.b32.xlu0 %v7836, 96
        %v8552 = vpop.permute.xlu0 %8551
        %8553 = vrot.lane.b32.xlu0 %v7902, 96
        %v8554 = vpop.permute.xlu0 %8553
        %8559 = vrot.lane.b32.xlu0 %v8032, 32
        %v8560 = vpop.permute.xlu0 %8559
        %8561 = vrot.lane.b32.xlu0 %v8101, 32
        %v8562 = vpop.permute.xlu0 %8561
        %8567 = vrot.lane.b32.xlu0 %v8033, 64
        %v8568 = vpop.permute.xlu0 %8567
        %8569 = vrot.lane.b32.xlu0 %v8084, 64
        %v8570 = vpop.permute.xlu0 %8569
        %8575 = vrot.lane.b32.xlu0 %v8034, 96
        %v8576 = vpop.permute.xlu0 %8575
        %8577 = vrot.lane.b32.xlu0 %v8102, 96
        %v8578 = vpop.permute.xlu0 %8577
        %8583 = vrot.lane.b32.xlu0 %v8036, 32
        %v8584 = vpop.permute.xlu0 %8583
        %8585 = vrot.lane.b32.xlu0 %v8103, 32
        %v8586 = vpop.permute.xlu0 %8585
        %8591 = vrot.lane.b32.xlu0 %v8037, 64
        %v8592 = vpop.permute.xlu0 %8591
        %8593 = vrot.lane.b32.xlu0 %v8100, 64
        %v8594 = vpop.permute.xlu0 %8593
        %8599 = vrot.lane.b32.xlu0 %v8038, 96
        %v8600 = vpop.permute.xlu0 %8599
        %8601 = vrot.lane.b32.xlu0 %v8104, 96
        %v8602 = vpop.permute.xlu0 %8601
        %8607 = vrot.lane.b32.xlu0 %v8234, 32
        %v8608 = vpop.permute.xlu0 %8607
        %8609 = vrot.lane.b32.xlu0 %v8303, 32
        %v8610 = vpop.permute.xlu0 %8609
        %8615 = vrot.lane.b32.xlu0 %v8235, 64
        %v8616 = vpop.permute.xlu0 %8615
        %8617 = vrot.lane.b32.xlu0 %v8286, 64
        %v8618 = vpop.permute.xlu0 %8617
        %8623 = vrot.lane.b32.xlu0 %v8236, 96
        %v8624 = vpop.permute.xlu0 %8623
        %8625 = vrot.lane.b32.xlu0 %v8304, 96
        %v8626 = vpop.permute.xlu0 %8625
        %8631 = vrot.lane.b32.xlu0 %v8238, 32
        %v8632 = vpop.permute.xlu0 %8631
        %8633 = vrot.lane.b32.xlu0 %v8305, 32
        %v8634 = vpop.permute.xlu0 %8633
        %8639 = vrot.lane.b32.xlu0 %v8239, 64
        %v8640 = vpop.permute.xlu0 %8639
        %8641 = vrot.lane.b32.xlu0 %v8302, 64
        %v8642 = vpop.permute.xlu0 %8641
        %8647 = vrot.lane.b32.xlu0 %v8240, 96
        %v8648 = vpop.permute.xlu0 %8647
        %8649 = vrot.lane.b32.xlu0 %v8306, 96
        %v8650 = vpop.permute.xlu0 %8649
        %8655 = vrot.lane.b32.xlu0 %v8436, 32
        %v8656 = vpop.permute.xlu0 %8655
        %8657 = vrot.lane.b32.xlu0 %v8505, 32
        %v8658 = vpop.permute.xlu0 %8657
        %8663 = vrot.lane.b32.xlu0 %v8437, 64
        %v8664 = vpop.permute.xlu0 %8663
        %8665 = vrot.lane.b32.xlu0 %v8488, 64
        %v8666 = vpop.permute.xlu0 %8665
        %8671 = vrot.lane.b32.xlu0 %v8438, 96
        %v8672 = vpop.permute.xlu0 %8671
        %8673 = vrot.lane.b32.xlu0 %v8506, 96
        %v8674 = vpop.permute.xlu0 %8673
        %8679 = vrot.lane.b32.xlu0 %v8440, 32
        %v8680 = vpop.permute.xlu0 %8679
        %8681 = vrot.lane.b32.xlu0 %v8507, 32
        %v8682 = vpop.permute.xlu0 %8681
        %8687 = vrot.lane.b32.xlu0 %v8441, 64
        %v8688 = vpop.permute.xlu0 %8687
        %8689 = vrot.lane.b32.xlu0 %v8504, 64
        %v8690 = vpop.permute.xlu0 %8689
        %8695 = vrot.lane.b32.xlu0 %v8442, 96
        %v8696 = vpop.permute.xlu0 %8695
        %8697 = vrot.lane.b32.xlu0 %v8508, 96
        %v8698 = vpop.permute.xlu0 %8697
        %v8701 = vsel %vm538, %v7829, %v8512
        %v8702 = vsel %vm538, %v7875, %v8514
        %vm8703 = vcmask 523264
        %v8704 = vsel %vm8703, %v8701, %v8520
        %v8705 = vsel %vm8703, %v8702, %v8522
        %vm8706 = vcmask 785408
        %v8707 = vsel %vm8706, %v8704, %v8528
        %v8708 = vsel %vm8706, %v8705, %v8530
        %v8709 = vsel %vm538, %v7833, %v8536
        %v8710 = vsel %vm538, %v7891, %v8538
        %v8711 = vsel %vm8703, %v8709, %v8544
        %v8712 = vsel %vm8703, %v8710, %v8546
        %v8713 = vsel %vm8706, %v8711, %v8552
        %v8714 = vsel %vm8706, %v8712, %v8554
        %v8715 = vsel %vm538, %v8031, %v8560
        %v8716 = vsel %vm538, %v8077, %v8562
        %v8717 = vsel %vm8703, %v8715, %v8568
        %v8718 = vsel %vm8703, %v8716, %v8570
        %v8719 = vsel %vm8706, %v8717, %v8576
        %v8720 = vsel %vm8706, %v8718, %v8578
        %v8721 = vsel %vm538, %v8035, %v8584
        %v8722 = vsel %vm538, %v8093, %v8586
        %v8723 = vsel %vm8703, %v8721, %v8592
        %v8724 = vsel %vm8703, %v8722, %v8594
        %v8725 = vsel %vm8706, %v8723, %v8600
        %v8726 = vsel %vm8706, %v8724, %v8602
        %v8727 = vsel %vm538, %v8233, %v8608
        %v8728 = vsel %vm538, %v8279, %v8610
        %v8729 = vsel %vm8703, %v8727, %v8616
        %v8730 = vsel %vm8703, %v8728, %v8618
        %v8731 = vsel %vm8706, %v8729, %v8624
        %v8732 = vsel %vm8706, %v8730, %v8626
        %v8733 = vsel %vm538, %v8237, %v8632
        %v8734 = vsel %vm538, %v8295, %v8634
        %v8735 = vsel %vm8703, %v8733, %v8640
        %v8736 = vsel %vm8703, %v8734, %v8642
        %v8737 = vsel %vm8706, %v8735, %v8648
        %v8738 = vsel %vm8706, %v8736, %v8650
        %v8739 = vsel %vm538, %v8435, %v8656
        %v8740 = vsel %vm538, %v8481, %v8658
        %v8741 = vsel %vm8703, %v8739, %v8664
        %v8742 = vsel %vm8703, %v8740, %v8666
        %v8743 = vsel %vm8706, %v8741, %v8672
        %v8744 = vsel %vm8706, %v8742, %v8674
        %v8745 = vsel %vm538, %v8439, %v8680
        %v8746 = vsel %vm538, %v8497, %v8682
        %v8747 = vsel %vm8703, %v8745, %v8688
        %v8748 = vsel %vm8703, %v8746, %v8690
        %v8749 = vsel %vm8706, %v8747, %v8696
        %v8750 = vsel %vm8706, %v8748, %v8698
        %8751 = vst [vmem:[%s277] sm:$0xff] %v8707
        %8752 = vst [vmem:[%s277 + $0x8] sm:$0xff] %v8713
        %8753 = vst [vmem:[%s277 + $0x10] sm:$0xff] %v8719
        %8754 = vst [vmem:[%s277 + $0x18] sm:$0xff] %v8725
        %8755 = vst [vmem:[%s277 + $0x20] sm:$0xff] %v8731
        %8756 = vst [vmem:[%s277 + $0x28] sm:$0xff] %v8737
        %8757 = vst [vmem:[%s277 + $0x30] sm:$0xff] %v8743
        %8758 = vst [vmem:[%s277 + $0x38] sm:$0xff] %v8749
        %8759 = vst [vmem:[%s277 + $0x40] sm:$0x3] %v8708
        %8760 = vst [vmem:[%s277 + $0x48] sm:$0x3] %v8714
        %8761 = vst [vmem:[%s277 + $0x50] sm:$0x3] %v8720
        %8762 = vst [vmem:[%s277 + $0x58] sm:$0x3] %v8726
        %8763 = vst [vmem:[%s277 + $0x60] sm:$0x3] %v8732
        %8764 = vst [vmem:[%s277 + $0x68] sm:$0x3] %v8738
        %8765 = vst [vmem:[%s277 + $0x70] sm:$0x3] %v8744
        %8766 = vst [vmem:[%s277 + $0x78] sm:$0x3] %v8750
        %p8767 = scmp.lt.s32.totalorder %s21, 7
        %s8768 = scalar_select %p8767, %s21, 7
        %s8769 = smul.addr %s8768, 16
        %s8770 = smul.addr %s8769, 8
        %s8771 = scalar_lea.vmem %s4, %s8770
        // Predicated region
        $region45: #{tpu_custom_call.1} parent=35 // pred_check
          %p8772 = pneg %p138
        $region46: #{tpu_custom_call.1} parent=35 // pred_check_branch
          %8774 = sbr.rel (%p8772) target = $region48
        $region47: #{tpu_custom_call.1} parent=35 // pred_region
          _
        $region48: #{tpu_custom_call.1} parent=35 // pred_fallthru
          _
      $region36: #{tpu_custom_call.1} parent=5 // pred_fallthru
        _
      %p8775 = scmp.le.s32.totalorder 2, %s16
      // Predicated region
      $region49: #{tpu_custom_call.1} parent=5 // pred_check
        %p8776 = pneg %p8775
      $region50: #{tpu_custom_call.1} parent=5 // pred_check_branch
        %8778 = sbr.rel (%p8776) target = $region52
      $region51: #{tpu_custom_call.1} parent=5 // pred_region
        %s8779 = ssub.s32 %s16, 2
        // Predicated region
        $region53: #{tpu_custom_call.1} parent=51 // pred_check
          %p8780 = pneg %p144
        $region54: #{tpu_custom_call.1} parent=51 // pred_check_branch
          %8782 = sbr.rel (%p8780) target = $region56
        $region55: #{tpu_custom_call.1} parent=51 // pred_region
          %p8783 = scmp.lt.s32.totalorder %s22, 7
          %s8784 = scalar_select %p8783, %s22, 7
          %s8785 = smul.addr %s8784, 16
          %s8786 = smul.addr %s8785, 8
          %s8787 = scalar_lea.vmem %s4, %s8786
        $region56: #{tpu_custom_call.1} parent=51 // pred_fallthru
          _
      $region52: #{tpu_custom_call.1} parent=5 // pred_fallthru
        _
    $region6: #{tpu_custom_call.1} parent=1 // loop_footer
      %s20 = sadd.s32 1, %s16
    $region7: #{tpu_custom_call.1} parent=1 // loop_footer_branch
      %15 = sbr.rel target = $region3
    $region8: #{tpu_custom_call.1} parent=1 // loop_exit
      _
    %8788 = vsyncpa [#allocation3], 1
    %s8789 = scalar_lea.sflag [#allocation3], 1
    %8790 = vsyncpa %s8789, 1
    %8791 = vsyncpa [#allocation5], 1
    %s8792 = scalar_lea.sflag [#allocation5], 1
    %8793 = vsyncpa %s8792, 1

</llo_original>
